<compile_context>
chip_gen: v6e
topology: v6e:2x2x1
jax: 0.10.0
libtpu: 0.0.40
codegen_flags: <defaults>
</compile_context>

<pallas_src>
import functools

import numpy as np

import jax
import jax.numpy as jnp
from jax import lax
from jax.experimental import pallas as pl
from jax.experimental.pallas import tpu as pltpu


# ---------------------------------------------------------------------------
# Small helpers
# ---------------------------------------------------------------------------
def _round_up(x, m):
    return (x + m - 1) // m * m


def _derived_dims(cfg):
    k, s, p = cfg["kernel_size"], cfg["stride"], cfg["padding"]
    f_in = cfg["latent_size"] + cfg["num_classes"]
    return {
        "T": 1 + (p + s - 1) // s,          # taps/axis in sub-pixel form
        "Q": -(-cfg["img_size"] // s),      # phase blocks/axis of final ConvT
        "f_pad": _round_up(f_in, 8),
        "cout_pad": _round_up(max(cfg["in_channels"], 128), 128),
        "c_last": cfg["hidden_dims_rev"][-1],
    }


# ---------------------------------------------------------------------------
# Pallas kernels
# ---------------------------------------------------------------------------
def _fused_small_stage_kernel(*refs, n_blocks):
    """head Linear + all ConvTranspose/BN/LeakyReLU blocks, spatial folded
    into the matmul N dim (weights precomputed as dense matrices)."""
    z_ref, wh_ref, bh_ref = refs[:3]
    out_ref = refs[-1]
    # decoder_input Linear (kept in f32: tiny K, largest rel-error source).
    a = jnp.dot(z_ref[...], wh_ref[...], preferred_element_type=jnp.float32)
    a = a + bh_ref[...]
    # ConvTranspose2d + folded BatchNorm2d + LeakyReLU blocks.
    for i in range(n_blocks):
        w_ref, s_ref, t_ref = refs[3 + 3 * i:6 + 3 * i]
        y = jnp.dot(a.astype(jnp.bfloat16), w_ref[...],
                    preferred_element_type=jnp.float32)
        y = y * s_ref[...] + t_ref[...]          # folded BN / bias (f32)
        a = jnp.where(y >= 0.0, y, 0.01 * y)     # LeakyReLU (f32)
    out_ref[...] = a.astype(out_ref.dtype)


def _matmul_affine_act_kernel(x_ref, w_ref, s_ref, t_ref, o_ref, *, activation):
    """out = act(x @ w * scale + shift); single deep-K MXU matmul."""
    y = jnp.dot(x_ref[...], w_ref[...], preferred_element_type=jnp.float32)
    y = y * s_ref[...] + t_ref[...]
    if activation == "leaky_relu":
        y = jnp.where(y >= 0.0, y, 0.01 * y)
    elif activation == "tanh":
        y = jnp.tanh(y)
    o_ref[...] = y.astype(o_ref.dtype)


def _vmem_specs(n):
    return [pl.BlockSpec(memory_space=pltpu.MemorySpace.VMEM)] * n


def _matmul_affine_act(x, w, scale, shift, *, activation, out_dtype,
                       row_tiles=1):
    m, kdim = x.shape
    n = w.shape[1]
    kern = functools.partial(_matmul_affine_act_kernel, activation=activation)
    if row_tiles <= 1:
        return pl.pallas_call(
            kern,
            out_shape=jax.ShapeDtypeStruct((m, n), out_dtype),
            in_specs=_vmem_specs(4),
            out_specs=pl.BlockSpec(memory_space=pltpu.MemorySpace.VMEM),
        )(x, w, scale, shift)
    assert m % row_tiles == 0
    tm = m // row_tiles
    return pl.pallas_call(
        kern,
        out_shape=jax.ShapeDtypeStruct((m, n), out_dtype),
        grid=(row_tiles,),
        in_specs=[
            pl.BlockSpec((tm, kdim), lambda i: (i, 0)),
            pl.BlockSpec((kdim, n), lambda i: (0, 0)),   # weight resident
            pl.BlockSpec((1, n), lambda i: (0, 0)),
            pl.BlockSpec((1, n), lambda i: (0, 0)),
        ],
        out_specs=pl.BlockSpec((tm, n), lambda i: (i, 0)),
        compiler_params=pltpu.CompilerParams(
            dimension_semantics=("parallel",)),
    )(x, w, scale, shift)


# ---------------------------------------------------------------------------
# Decoder forward (Pallas path)
# ---------------------------------------------------------------------------
def decoder_forward(z, labels, kp, cfg):
    b = z.shape[0]
    k, s = cfg["kernel_size"], cfg["stride"]
    c_img = cfg["in_channels"]
    h_img = cfg["img_size"]
    hd_rev = cfg["hidden_dims_rev"]
    n_blocks = len(hd_rev) - 1
    dd = _derived_dims(cfg)
    q, t, c_last = dd["Q"], dd["T"], dd["c_last"]
    m_pad = max(8, _round_up(b, 8))

    # ---- input assembly ----------------------------------------------------
    y = jax.nn.one_hot(labels, cfg["num_classes"], dtype=jnp.float32)
    zc = jnp.concatenate([z, y], axis=1)
    zc = jnp.pad(zc, ((0, m_pad - b), (0, dd["f_pad"] - zc.shape[1])))

    # ---- call 1: head Linear + all decoder ConvT/BN/LeakyReLU blocks --------
    args = [zc, kp["wh"], kp["bh"]]
    for i in range(n_blocks):
        args += [kp["w_dec"][i], kp["s_dec"][i], kp["t_dec"][i]]
    pat = pl.pallas_call(
        functools.partial(_fused_small_stage_kernel, n_blocks=n_blocks),
        out_shape=jax.ShapeDtypeStruct((m_pad, q * q * t * t * c_last),
                                       jnp.bfloat16),
        in_specs=_vmem_specs(len(args)),
        out_specs=pl.BlockSpec(memory_space=pltpu.MemorySpace.VMEM),
    )(*args)
    # rows (b, qh, qw), cols (dh, dw, ci): TxT sub-pixel im2col patches
    pat = pat[:b].reshape(b * q * q, t * t * c_last)

    # ---- call 2: final ConvTranspose in sub-pixel (pixel-shuffle) form ------
    ph = _matmul_affine_act(pat, kp["w_ct"], kp["s_ct"], kp["t_ct"],
                            activation="leaky_relu", out_dtype=jnp.bfloat16)

    # depth-to-space + crop + pad + im2col for the final conv (tiny XLA glue)
    ph = ph.reshape(b, q, q, s, s, c_last).transpose(0, 1, 3, 2, 4, 5)
    amap = ph.reshape(b, q * s, q * s, c_last)[:, :h_img, :h_img, :]
    pc = (k - 1) // 2
    amap = jnp.pad(amap, ((0, 0), (pc, pc), (pc, pc), (0, 0)))
    patches = jnp.concatenate(
        [amap[:, kh:kh + h_img, kw:kw + h_img, :]
         for kh in range(k) for kw in range(k)], axis=-1)
    patches = patches.reshape(b * h_img * h_img, k * k * c_last)

    # ---- call 3: final Conv2d (+bias) + Tanh, C_out padded to 128 lanes -----
    o = _matmul_affine_act(patches, kp["w_conv"], kp["s_conv"], kp["t_conv"],
                           activation="tanh", out_dtype=jnp.float32,
                           row_tiles=2)
    o = o[:, :c_img].reshape(b, h_img, h_img, c_img)
    return o.transpose(0, 3, 1, 2)   # NCHW, like the PyTorch module


# ---------------------------------------------------------------------------
# Weight preparation (one-time, host-side numpy)
# ---------------------------------------------------------------------------
def _convt_pixel_pairs(h_in, h_out, k, s, p):
    """For each output pixel oh, the list of contributing (ih, kh) pairs."""
    pairs = []
    for oh in range(h_out):
        cur = []
        for kh in range(k):
            num = oh + p - kh
            if num % s == 0 and 0 <= num // s < h_in:
                cur.append((num // s, kh))
        pairs.append(cur)
    return pairs


def _convt_as_matrix(w, h_in, h_out, k, s, p):
    """ConvTranspose2d (no bias) as a dense matrix:
    [(ih,iw,ci) = h_in^2*Cin] x [(oh,ow,co) = h_out^2*Cout]."""
    cin, cout = w.shape[0], w.shape[1]
    pairs = _convt_pixel_pairs(h_in, h_out, k, s, p)
    m = np.zeros((h_in, h_in, cin, h_out, h_out, cout), np.float32)
    for oh in range(h_out):
        for ih, kh in pairs[oh]:
            for ow in range(h_out):
                for iw, kw in pairs[ow]:
                    m[ih, iw, :, oh, ow, :] += w[:, :, kh, kw]
    return m.reshape(h_in * h_in * cin, h_out * h_out * cout)


def _dup_for_ct_patches(mat, h, cout, q, t):
    """Duplicate output columns of `mat` into the TxT sub-pixel im2col patch
    layout (qh, qw, dh, dw, co) needed by the final ConvTranspose."""
    kdim = mat.shape[0]
    m3 = mat.reshape(kdim, h, h, cout)
    hp = q + t - 1
    m3p = np.zeros((kdim, hp, hp, cout), np.float32)
    m3p[:, :h, :h, :] = m3
    out = np.zeros((kdim, q, q, t, t, cout), np.float32)
    for qh in range(q):
        for qw in range(q):
            for dh in range(t):
                for dw in range(t):
                    out[:, qh, qw, dh, dw, :] = m3p[:, qh + dh, qw + dw, :]
    return out.reshape(kdim, q * q * t * t * cout)


def _dup_shift_for_ct_patches(shift, h, q, t):
    cout = shift.shape[0]
    out = np.zeros((q, q, t, t, cout), np.float32)
    for qh in range(q):
        for qw in range(q):
            for dh in range(t):
                for dw in range(t):
                    if qh + dh < h and qw + dw < h:
                        out[qh, qw, dh, dw, :] = shift
    return out.reshape(-1)


def _ct_subpixel_matrix(w, k, s, p, t):
    """Final ConvTranspose as a stride-1 TxT correlation to s*s*Cout
    sub-pixel channels: [(dh,dw,ci)] x [(rh,rw,co)]."""
    cin, cout = w.shape[0], w.shape[1]
    m = np.zeros((t, t, cin, s, s, cout), np.float32)
    for dh in range(t):
        for rh in range(s):
            kh = rh + p - s * dh
            if not 0 <= kh < k:
                continue
            for dw in range(t):
                for rw in range(s):
                    kw = rw + p - s * dw
                    if not 0 <= kw < k:
                        continue
                    m[dh, dw, :, rh, rw, :] += w[:, :, kh, kw]
    return m.reshape(t * t * cin, s * s * cout)


def prepare_kernel_params(params, cfg, eps=1e-5):
    k, s, p = cfg["kernel_size"], cfg["stride"], cfg["padding"]
    hd_rev = cfg["hidden_dims_rev"]
    opad = cfg["output_padding"]
    n0 = cfg["n"]
    n_blocks = len(hd_rev) - 1
    dd = _derived_dims(cfg)
    q, t = dd["Q"], dd["T"]

    # sub-pixel decomposition assumes each output pixel only reads input rows
    # q .. q+T-1 of the final ConvTranspose input.
    assert k <= p + s, "sub-pixel lowering assumes kernel_size <= padding + stride"

    sizes = [n0]
    for i in range(n_blocks + 1):
        sizes.append((sizes[i] - 1) * s - 2 * p + k + opad[i])
    assert sizes[-1] == cfg["img_size"]
    h_last = sizes[n_blocks]
    assert q * s >= cfg["img_size"] and q + t - 1 >= h_last

    def bn_fold(pr):
        g = np.asarray(pr["gamma"], np.float32)
        v = np.asarray(pr["var"], np.float32)
        sc = g / np.sqrt(v + eps)
        sh = (np.asarray(pr["beta"], np.float32)
              + sc * (np.asarray(pr["b"], np.float32)
                      - np.asarray(pr["mean"], np.float32)))
        return sc, sh

    kp = {}

    # head Linear: pad K; reorder output columns (C,h,w) -> (h,w,C).
    wh = np.asarray(params["head"]["w"], np.float32)
    bh = np.asarray(params["head"]["b"], np.float32)
    f_in = wh.shape[0]
    c0 = hd_rev[0]
    whp = np.zeros((dd["f_pad"], wh.shape[1]), np.float32)
    whp[:f_in] = wh
    whp = whp.reshape(dd["f_pad"], c0, n0, n0).transpose(0, 2, 3, 1)
    kp["wh"] = jnp.asarray(whp.reshape(dd["f_pad"], -1))        # f32 on purpose
    kp["bh"] = jnp.asarray(
        bh.reshape(c0, n0, n0).transpose(1, 2, 0).reshape(1, -1))

    # decoder ConvTranspose blocks as dense matrices (spatial folded into N).
    w_dec, s_dec, t_dec = [], [], []
    for i in range(n_blocks):
        pr = params[f"dec{i}"]
        w = np.asarray(pr["w"], np.float32)                      # [Cin,Cout,k,k]
        h_in, h_out = sizes[i], sizes[i + 1]
        mat = _convt_as_matrix(w, h_in, h_out, k, s, p)
        sc, sh = bn_fold(pr)
        if i == n_blocks - 1:
            mat = _dup_for_ct_patches(mat, h_out, w.shape[1], q, t)
            scv = np.tile(sc, q * q * t * t)
            shv = _dup_shift_for_ct_patches(sh, h_out, q, t)
        else:
            scv = np.tile(sc, h_out * h_out)
            shv = np.tile(sh, h_out * h_out)
        w_dec.append(jnp.asarray(mat, jnp.bfloat16))
        s_dec.append(jnp.asarray(scv[None, :], jnp.float32))
        t_dec.append(jnp.asarray(shv[None, :], jnp.float32))
    kp["w_dec"], kp["s_dec"], kp["t_dec"] = w_dec, s_dec, t_dec

    # final ConvTranspose in sub-pixel (pixel-shuffle) form.
    pr = params["final_ct"]
    kp["w_ct"] = jnp.asarray(
        _ct_subpixel_matrix(np.asarray(pr["w"], np.float32), k, s, p, t),
        jnp.bfloat16)
    sc, sh = bn_fold(pr)
    kp["s_ct"] = jnp.asarray(np.tile(sc, s * s)[None, :], jnp.float32)
    kp["t_ct"] = jnp.asarray(np.tile(sh, s * s)[None, :], jnp.float32)

    # final Conv2d: im2col weight with C_out zero-padded to 128 lanes.
    pr = params["final_conv"]
    w = np.asarray(pr["w"], np.float32)                          # [Cout,Cin,k,k]
    cout, cin = w.shape[0], w.shape[1]
    wcv = np.zeros((k, k, cin, dd["cout_pad"]), np.float32)
    wcv[:, :, :, :cout] = np.transpose(w, (2, 3, 1, 0))
    kp["w_conv"] = jnp.asarray(wcv.reshape(k * k * cin, dd["cout_pad"]),
                               jnp.bfloat16)
    bias = np.zeros((dd["cout_pad"],), np.float32)
    bias[:cout] = np.asarray(pr["b"], np.float32)
    kp["s_conv"] = jnp.asarray(np.ones((1, dd["cout_pad"]), np.float32))
    kp["t_conv"] = jnp.asarray(bias[None, :])
    return kp


# ---------------------------------------------------------------------------
# Parameter construction
# ---------------------------------------------------------------------------
def _decoder_geometry(img_size, num_layers, k, s, p):
    n = img_size
    output_padding = []
    for _ in range(num_layers):
        tmp = n + 2 * p - k + s
        n = tmp // s
        output_padding.append(tmp - s * n)
    output_padding.reverse()
    return n, output_padding


def init_params(key, *, in_channels, num_classes, latent_size, hidden_dims,
                img_size, kernel_size=5, stride=3, padding=2):
    n, opad = _decoder_geometry(img_size, len(hidden_dims),
                                kernel_size, stride, padding)
    hd_rev = list(reversed(hidden_dims))
    keys = jax.random.split(key, 32)
    ki = iter(keys)

    def _normal(shape, scale):
        return scale * jax.random.normal(next(ki), shape, jnp.float32)

    def _bn(c):
        return {"gamma": 1.0 + 0.1 * jax.random.normal(next(ki), (c,), jnp.float32),
                "beta": 0.1 * jax.random.normal(next(ki), (c,), jnp.float32),
                "mean": jnp.zeros((c,), jnp.float32),
                "var": jnp.ones((c,), jnp.float32)}

    params = {}
    kk = kernel_size
    f_in = latent_size + num_classes
    c0 = hidden_dims[-1]                      # pre-reverse, as in the ctor
    params["head"] = {"w": _normal((f_in, c0 * n * n), f_in ** -0.5),
                      "b": _normal((c0 * n * n,), 0.02)}
    for i in range(len(hd_rev) - 1):
        cin, cout = hd_rev[i], hd_rev[i + 1]
        params[f"dec{i}"] = {"w": _normal((cin, cout, kk, kk), (cin * kk * kk) ** -0.5),
                             "b": _normal((cout,), 0.02), **_bn(cout)}
    cin = hd_rev[-1]
    params["final_ct"] = {"w": _normal((cin, cin, kk, kk), (cin * kk * kk) ** -0.5),
                          "b": _normal((cin,), 0.02), **_bn(cin)}
    params["final_conv"] = {"w": _normal((in_channels, cin, kk, kk), (cin * kk * kk) ** -0.5),
                            "b": _normal((in_channels,), 0.02)}
    cfg = {"n": n, "output_padding": opad, "hidden_dims_rev": hd_rev,
           "num_classes": num_classes, "kernel_size": kernel_size,
           "stride": stride, "padding": padding, "in_channels": in_channels,
           "img_size": img_size, "latent_size": latent_size}
    return params, cfg


# ---------------------------------------------------------------------------
# Pure-JAX f32 reference (lhs-dilated conv == ConvTranspose2d)
# ---------------------------------------------------------------------------
def reference_forward(z, labels, params, cfg, eps=1e-5):
    k, s, p = cfg["kernel_size"], cfg["stride"], cfg["padding"]
    hd_rev = cfg["hidden_dims_rev"]
    n0 = cfg["n"]
    opad = cfg["output_padding"]
    b = z.shape[0]

    def conv_t(x, wpt, bias, op):
        wf = jnp.transpose(wpt[:, :, ::-1, ::-1], (2, 3, 0, 1))
        pad = ((k - 1 - p, k - 1 - p + op),) * 2
        out = lax.conv_general_dilated(x, wf, window_strides=(1, 1), padding=pad,
                                       lhs_dilation=(s, s),
                                       dimension_numbers=("NHWC", "HWIO", "NHWC"))
        return out + bias

    def conv(x, wpt, bias):
        wf = jnp.transpose(wpt, (2, 3, 1, 0))
        pad = (((k - 1) // 2, (k - 1) // 2),) * 2
        out = lax.conv_general_dilated(x, wf, window_strides=(1, 1), padding=pad,
                                       dimension_numbers=("NHWC", "HWIO", "NHWC"))
        return out + bias

    def bn(x, pr):
        return pr["gamma"] * (x - pr["mean"]) / jnp.sqrt(pr["var"] + eps) + pr["beta"]

    def lrelu(x):
        return jnp.where(x >= 0.0, x, 0.01 * x)

    y = jax.nn.one_hot(labels, cfg["num_classes"], dtype=jnp.float32)
    h = jnp.concatenate([z, y], axis=1) @ params["head"]["w"] + params["head"]["b"]
    x = h.reshape(b, hd_rev[0], n0, n0).transpose(0, 2, 3, 1)
    for i in range(len(hd_rev) - 1):
        pr = params[f"dec{i}"]
        x = lrelu(bn(conv_t(x, pr["w"], pr["b"], opad[i]), pr))
    pr = params["final_ct"]
    x = lrelu(bn(conv_t(x, pr["w"], pr["b"], opad[-1]), pr))
    pr = params["final_conv"]
    x = jnp.tanh(conv(x, pr["w"], pr["b"]))
    return x.transpose(0, 3, 1, 2)


if __name__ == "__main__":
    key = jax.random.PRNGKey(0)
    k_z, k_lbl, k_p = jax.random.split(key, 3)

    B = 2
    IN_CHANNELS = 4
    NUM_CLASSES = 10
    LATENT = 32
    HIDDEN_DIMS = [32, 64, 128, 256]
    IMG_SIZE = 16          # decoder upsamples 1 -> 1 -> 2 -> 6 -> 16

    params, cfg = init_params(k_p, in_channels=IN_CHANNELS,
                              num_classes=NUM_CLASSES, latent_size=LATENT,
                              hidden_dims=HIDDEN_DIMS, img_size=IMG_SIZE)
    kparams = prepare_kernel_params(params, cfg)

    z = jax.random.normal(k_z, (B, LATENT), jnp.float32)
    labels = jax.random.randint(k_lbl, (B,), 0, NUM_CLASSES)

    fwd = jax.jit(functools.partial(decoder_forward, cfg=cfg))
    out = fwd(z, labels, kparams)
    jax.block_until_ready(out)

    ref = reference_forward(z, labels, params, cfg)
    assert out.shape == (B, IN_CHANNELS, IMG_SIZE, IMG_SIZE), out.shape
    assert bool(jnp.all(jnp.isfinite(out)))
    # bf16 matmul operands vs f32 reference -> relaxed tolerance
    assert jnp.allclose(out, ref, atol=2e-2, rtol=2e-2), \
        float(jnp.max(jnp.abs(out - ref)))

    print("KERNEL_OK")
</pallas_src>

<mosaic_0001>
module attributes {stable_mosaic.version = 11 : i64} {
  func.func @_fused_small_stage_kernel(%arg0: memref<8x48xf32, #tpu.memory_space<vmem>>, %arg1: memref<48x256xf32, #tpu.memory_space<vmem>>, %arg2: memref<1x256xf32, #tpu.memory_space<vmem>>, %arg3: memref<256x128xbf16, #tpu.memory_space<vmem>>, %arg4: memref<1x128xf32, #tpu.memory_space<vmem>>, %arg5: memref<1x128xf32, #tpu.memory_space<vmem>>, %arg6: memref<128x256xbf16, #tpu.memory_space<vmem>>, %arg7: memref<1x256xf32, #tpu.memory_space<vmem>>, %arg8: memref<1x256xf32, #tpu.memory_space<vmem>>, %arg9: memref<256x4608xbf16, #tpu.memory_space<vmem>>, %arg10: memref<1x4608xf32, #tpu.memory_space<vmem>>, %arg11: memref<1x4608xf32, #tpu.memory_space<vmem>>, %arg12: memref<8x4608xbf16, #tpu.memory_space<vmem>>) attributes {dimension_semantics = [], scalar_prefetch = 0 : i64, scratch_operands = 0 : i64, tpu.core_type = #tpu.core_type<tc>} {
    %c0 = arith.constant 0 : index
    %c0_0 = arith.constant 0 : index
    %0 = vector.load %arg0[%c0, %c0_0] : memref<8x48xf32, #tpu.memory_space<vmem>>, vector<8x48xf32>
    %c0_1 = arith.constant 0 : index
    %c0_2 = arith.constant 0 : index
    %1 = vector.load %arg1[%c0_1, %c0_2] : memref<48x256xf32, #tpu.memory_space<vmem>>, vector<48x256xf32>
    %cst = arith.constant dense<0.000000e+00> : vector<8x256xf32>
    %2 = tpu.matmul %0, %1, %cst {dimension_numbers = #tpu.dot_dimension_numbers<[1], [0], [0], [1], [0, 0, 1, 1], [], []>} : vector<8x48xf32>, vector<48x256xf32>, vector<8x256xf32> -> vector<8x256xf32>
    %c0_3 = arith.constant 0 : index
    %c0_4 = arith.constant 0 : index
    %3 = vector.load %arg2[%c0_3, %c0_4] : memref<1x256xf32, #tpu.memory_space<vmem>>, vector<1x256xf32>
    %4 = vector.broadcast %3 : vector<1x256xf32> to vector<8x256xf32>
    %5 = arith.addf %2, %4 : vector<8x256xf32>
    %6 = arith.truncf %5 : vector<8x256xf32> to vector<8x256xbf16>
    %c0_5 = arith.constant 0 : index
    %c0_6 = arith.constant 0 : index
    %7 = vector.load %arg3[%c0_5, %c0_6] : memref<256x128xbf16, #tpu.memory_space<vmem>>, vector<256x128xbf16>
    %cst_7 = arith.constant dense<0.000000e+00> : vector<8x128xf32>
    %8 = tpu.matmul %6, %7, %cst_7 {dimension_numbers = #tpu.dot_dimension_numbers<[1], [0], [0], [1], [0, 0, 1, 1], [], []>} : vector<8x256xbf16>, vector<256x128xbf16>, vector<8x128xf32> -> vector<8x128xf32>
    %c0_8 = arith.constant 0 : index
    %c0_9 = arith.constant 0 : index
    %9 = vector.load %arg4[%c0_8, %c0_9] : memref<1x128xf32, #tpu.memory_space<vmem>>, vector<1x128xf32>
    %10 = vector.broadcast %9 : vector<1x128xf32> to vector<8x128xf32>
    %11 = arith.mulf %8, %10 : vector<8x128xf32>
    %c0_10 = arith.constant 0 : index
    %c0_11 = arith.constant 0 : index
    %12 = vector.load %arg5[%c0_10, %c0_11] : memref<1x128xf32, #tpu.memory_space<vmem>>, vector<1x128xf32>
    %13 = vector.broadcast %12 : vector<1x128xf32> to vector<8x128xf32>
    %14 = arith.addf %11, %13 : vector<8x128xf32>
    %cst_12 = arith.constant 0.000000e+00 : f32
    %15 = vector.broadcast %cst_12 : f32 to vector<8x128xf32>
    %16 = arith.cmpf oge, %14, %15 : vector<8x128xf32>
    %cst_13 = arith.constant 0.00999999977 : f32
    %17 = vector.broadcast %cst_13 : f32 to vector<8x128xf32>
    %18 = arith.mulf %17, %14 : vector<8x128xf32>
    %19 = arith.select %16, %14, %18 : vector<8x128xi1>, vector<8x128xf32>
    %20 = arith.truncf %19 : vector<8x128xf32> to vector<8x128xbf16>
    %c0_14 = arith.constant 0 : index
    %c0_15 = arith.constant 0 : index
    %21 = vector.load %arg6[%c0_14, %c0_15] : memref<128x256xbf16, #tpu.memory_space<vmem>>, vector<128x256xbf16>
    %cst_16 = arith.constant dense<0.000000e+00> : vector<8x256xf32>
    %22 = tpu.matmul %20, %21, %cst_16 {dimension_numbers = #tpu.dot_dimension_numbers<[1], [0], [0], [1], [0, 0, 1, 1], [], []>} : vector<8x128xbf16>, vector<128x256xbf16>, vector<8x256xf32> -> vector<8x256xf32>
    %c0_17 = arith.constant 0 : index
    %c0_18 = arith.constant 0 : index
    %23 = vector.load %arg7[%c0_17, %c0_18] : memref<1x256xf32, #tpu.memory_space<vmem>>, vector<1x256xf32>
    %24 = vector.broadcast %23 : vector<1x256xf32> to vector<8x256xf32>
    %25 = arith.mulf %22, %24 : vector<8x256xf32>
    %c0_19 = arith.constant 0 : index
    %c0_20 = arith.constant 0 : index
    %26 = vector.load %arg8[%c0_19, %c0_20] : memref<1x256xf32, #tpu.memory_space<vmem>>, vector<1x256xf32>
    %27 = vector.broadcast %26 : vector<1x256xf32> to vector<8x256xf32>
    %28 = arith.addf %25, %27 : vector<8x256xf32>
    %cst_21 = arith.constant 0.000000e+00 : f32
    %29 = vector.broadcast %cst_21 : f32 to vector<8x256xf32>
    %30 = arith.cmpf oge, %28, %29 : vector<8x256xf32>
    %cst_22 = arith.constant 0.00999999977 : f32
    %31 = vector.broadcast %cst_22 : f32 to vector<8x256xf32>
    %32 = arith.mulf %31, %28 : vector<8x256xf32>
    %33 = arith.select %30, %28, %32 : vector<8x256xi1>, vector<8x256xf32>
    %34 = arith.truncf %33 : vector<8x256xf32> to vector<8x256xbf16>
    %c0_23 = arith.constant 0 : index
    %c0_24 = arith.constant 0 : index
    %35 = vector.load %arg9[%c0_23, %c0_24] : memref<256x4608xbf16, #tpu.memory_space<vmem>>, vector<256x4608xbf16>
    %cst_25 = arith.constant dense<0.000000e+00> : vector<8x4608xf32>
    %36 = tpu.matmul %34, %35, %cst_25 {dimension_numbers = #tpu.dot_dimension_numbers<[1], [0], [0], [1], [0, 0, 1, 1], [], []>} : vector<8x256xbf16>, vector<256x4608xbf16>, vector<8x4608xf32> -> vector<8x4608xf32>
    %c0_26 = arith.constant 0 : index
    %c0_27 = arith.constant 0 : index
    %37 = vector.load %arg10[%c0_26, %c0_27] : memref<1x4608xf32, #tpu.memory_space<vmem>>, vector<1x4608xf32>
    %38 = vector.broadcast %37 : vector<1x4608xf32> to vector<8x4608xf32>
    %39 = arith.mulf %36, %38 : vector<8x4608xf32>
    %c0_28 = arith.constant 0 : index
    %c0_29 = arith.constant 0 : index
    %40 = vector.load %arg11[%c0_28, %c0_29] : memref<1x4608xf32, #tpu.memory_space<vmem>>, vector<1x4608xf32>
    %41 = vector.broadcast %40 : vector<1x4608xf32> to vector<8x4608xf32>
    %42 = arith.addf %39, %41 : vector<8x4608xf32>
    %cst_30 = arith.constant 0.000000e+00 : f32
    %43 = vector.broadcast %cst_30 : f32 to vector<8x4608xf32>
    %44 = arith.cmpf oge, %42, %43 : vector<8x4608xf32>
    %cst_31 = arith.constant 0.00999999977 : f32
    %45 = vector.broadcast %cst_31 : f32 to vector<8x4608xf32>
    %46 = arith.mulf %45, %42 : vector<8x4608xf32>
    %47 = arith.select %44, %42, %46 : vector<8x4608xi1>, vector<8x4608xf32>
    %48 = arith.truncf %47 : vector<8x4608xf32> to vector<8x4608xbf16>
    %c0_32 = arith.constant 0 : index
    %c0_33 = arith.constant 0 : index
    %49 = vector.load %arg12[%c0_32, %c0_33] : memref<8x4608xbf16, #tpu.memory_space<vmem>>, vector<8x4608xbf16>
    tpu.vector_store %arg12[%c0_32, %c0_33], %48 {strides = array<i32>} : memref<8x4608xbf16, #tpu.memory_space<vmem>>, vector<8x4608xbf16>,
    return
  }
}

module attributes {stable_mosaic.version = 11 : i64} {
  func.func @_matmul_affine_act_kernel(%arg0: memref<72x128xbf16, #tpu.memory_space<vmem>>, %arg1: memref<128x288xbf16, #tpu.memory_space<vmem>>, %arg2: memref<1x288xf32, #tpu.memory_space<vmem>>, %arg3: memref<1x288xf32, #tpu.memory_space<vmem>>, %arg4: memref<72x288xbf16, #tpu.memory_space<vmem>>) attributes {dimension_semantics = [], scalar_prefetch = 0 : i64, scratch_operands = 0 : i64, tpu.core_type = #tpu.core_type<tc>} {
    %c0 = arith.constant 0 : index
    %c0_0 = arith.constant 0 : index
    %0 = vector.load %arg0[%c0, %c0_0] : memref<72x128xbf16, #tpu.memory_space<vmem>>, vector<72x128xbf16>
    %c0_1 = arith.constant 0 : index
    %c0_2 = arith.constant 0 : index
    %1 = vector.load %arg1[%c0_1, %c0_2] : memref<128x288xbf16, #tpu.memory_space<vmem>>, vector<128x288xbf16>
    %cst = arith.constant dense<0.000000e+00> : vector<72x288xf32>
    %2 = tpu.matmul %0, %1, %cst {dimension_numbers = #tpu.dot_dimension_numbers<[1], [0], [0], [1], [0, 0, 1, 1], [], []>} : vector<72x128xbf16>, vector<128x288xbf16>, vector<72x288xf32> -> vector<72x288xf32>
    %c0_3 = arith.constant 0 : index
    %c0_4 = arith.constant 0 : index
    %3 = vector.load %arg2[%c0_3, %c0_4] : memref<1x288xf32, #tpu.memory_space<vmem>>, vector<1x288xf32>
    %4 = vector.broadcast %3 : vector<1x288xf32> to vector<72x288xf32>
    %5 = arith.mulf %2, %4 : vector<72x288xf32>
    %c0_5 = arith.constant 0 : index
    %c0_6 = arith.constant 0 : index
    %6 = vector.load %arg3[%c0_5, %c0_6] : memref<1x288xf32, #tpu.memory_space<vmem>>, vector<1x288xf32>
    %7 = vector.broadcast %6 : vector<1x288xf32> to vector<72x288xf32>
    %8 = arith.addf %5, %7 : vector<72x288xf32>
    %cst_7 = arith.constant 0.000000e+00 : f32
    %9 = vector.broadcast %cst_7 : f32 to vector<72x288xf32>
    %10 = arith.cmpf oge, %8, %9 : vector<72x288xf32>
    %cst_8 = arith.constant 0.00999999977 : f32
    %11 = vector.broadcast %cst_8 : f32 to vector<72x288xf32>
    %12 = arith.mulf %11, %8 : vector<72x288xf32>
    %13 = arith.select %10, %8, %12 : vector<72x288xi1>, vector<72x288xf32>
    %14 = arith.truncf %13 : vector<72x288xf32> to vector<72x288xbf16>
    %c0_9 = arith.constant 0 : index
    %c0_10 = arith.constant 0 : index
    %15 = vector.load %arg4[%c0_9, %c0_10] : memref<72x288xbf16, #tpu.memory_space<vmem>>, vector<72x288xbf16>
    tpu.vector_store %arg4[%c0_9, %c0_10], %14 {strides = array<i32>} : memref<72x288xbf16, #tpu.memory_space<vmem>>, vector<72x288xbf16>,
    return
  }
}

module attributes {stable_mosaic.version = 11 : i64} {
  func.func @_matmul_affine_act_kernel(%arg0: i32, %arg1: memref<256x800xbf16, #tpu.memory_space<vmem>>, %arg2: memref<800x128xbf16, #tpu.memory_space<vmem>>, %arg3: memref<1x128xf32, #tpu.memory_space<vmem>>, %arg4: memref<1x128xf32, #tpu.memory_space<vmem>>, %arg5: memref<256x128xf32, #tpu.memory_space<vmem>>) attributes {dimension_semantics = [#tpu.dimension_semantics<parallel>], iteration_bounds = array<i64: 2>, scalar_prefetch = 0 : i64, scratch_operands = 0 : i64, tpu.core_type = #tpu.core_type<tc>, window_params = [{transform_indices = @transform_0, window_bounds = array<i64: 256, 800>}, {pipeline_mode = #tpu.pipeline_mode<synchronous>, transform_indices = @transform_1, window_bounds = array<i64: 800, 128>}, {pipeline_mode = #tpu.pipeline_mode<synchronous>, transform_indices = @transform_2, window_bounds = array<i64: 1, 128>}, {pipeline_mode = #tpu.pipeline_mode<synchronous>, transform_indices = @transform_3, window_bounds = array<i64: 1, 128>}, {transform_indices = @transform_4, window_bounds = array<i64: 256, 128>}]} {
    %c0 = arith.constant 0 : index
    %c0_0 = arith.constant 0 : index
    %0 = vector.load %arg1[%c0, %c0_0] : memref<256x800xbf16, #tpu.memory_space<vmem>>, vector<256x800xbf16>
    %c0_1 = arith.constant 0 : index
    %c0_2 = arith.constant 0 : index
    %1 = vector.load %arg2[%c0_1, %c0_2] : memref<800x128xbf16, #tpu.memory_space<vmem>>, vector<800x128xbf16>
    %cst = arith.constant dense<0.000000e+00> : vector<256x128xf32>
    %2 = tpu.matmul %0, %1, %cst {dimension_numbers = #tpu.dot_dimension_numbers<[1], [0], [0], [1], [0, 0, 1, 1], [], []>} : vector<256x800xbf16>, vector<800x128xbf16>, vector<256x128xf32> -> vector<256x128xf32>
    %c0_3 = arith.constant 0 : index
    %c0_4 = arith.constant 0 : index
    %3 = vector.load %arg3[%c0_3, %c0_4] : memref<1x128xf32, #tpu.memory_space<vmem>>, vector<1x128xf32>
    %4 = vector.broadcast %3 : vector<1x128xf32> to vector<256x128xf32>
    %5 = arith.mulf %2, %4 : vector<256x128xf32>
    %c0_5 = arith.constant 0 : index
    %c0_6 = arith.constant 0 : index
    %6 = vector.load %arg4[%c0_5, %c0_6] : memref<1x128xf32, #tpu.memory_space<vmem>>, vector<1x128xf32>
    %7 = vector.broadcast %6 : vector<1x128xf32> to vector<256x128xf32>
    %8 = arith.addf %5, %7 : vector<256x128xf32>
    %9 = math.tanh %8 : vector<256x128xf32>
    %c0_7 = arith.constant 0 : index
    %c0_8 = arith.constant 0 : index
    %10 = vector.load %arg5[%c0_7, %c0_8] : memref<256x128xf32, #tpu.memory_space<vmem>>, vector<256x128xf32>
    tpu.vector_store %arg5[%c0_7, %c0_8], %9 {strides = array<i32>} : memref<256x128xf32, #tpu.memory_space<vmem>>, vector<256x128xf32>,
    return
  }
  func.func @transform_0(%arg0: i32) -> (i32, i32) {
    %c0_i32 = arith.constant 0 : i32
    %c0_i32_0 = arith.constant 0 : i32
    return %arg0, %c0_i32 : i32, i32
  }
  func.func @transform_1(%arg0: i32) -> (i32, i32) {
    %c0_i32 = arith.constant 0 : i32
    %c0_i32_0 = arith.constant 0 : i32
    %c0_i32_1 = arith.constant 0 : i32
    return %c0_i32, %c0_i32_0 : i32, i32
  }
  func.func @transform_2(%arg0: i32) -> (i32, i32) {
    %c0_i32 = arith.constant 0 : i32
    %c0_i32_0 = arith.constant 0 : i32
    %c0_i32_1 = arith.constant 0 : i32
    return %c0_i32, %c0_i32_0 : i32, i32
  }
  func.func @transform_3(%arg0: i32) -> (i32, i32) {
    %c0_i32 = arith.constant 0 : i32
    %c0_i32_0 = arith.constant 0 : i32
    %c0_i32_1 = arith.constant 0 : i32
    return %c0_i32, %c0_i32_0 : i32, i32
  }
  func.func @transform_4(%arg0: i32) -> (i32, i32) {
    %c0_i32 = arith.constant 0 : i32
    %c0_i32_0 = arith.constant 0 : i32
    return %arg0, %c0_i32 : i32, i32
  }
}

</mosaic_0001>

<llo_original>
// kernel: decoder_forward.4
$region0: #{decoder_forward.4}
  #allocation0 [shape = 'u32[]', space=smem, size = 0x4, offset = 0x4, fixed_abs, tag = 'smem constant byte address 0x4 - core index']
  #allocation1 [shape = 'u32[144,128]{1,0:T(1,128)}', space=vmem, size = 0x12000, scoped, tag = 'internal scratch']
  %s0 = inlined_call_operand.vmem [shape: bf16[72,128], index: 0, kind: input, shape index: {}]
  %s1 = inlined_call_operand.vmem [shape: bf16[128,288], index: 1, kind: input, shape index: {}]
  %s2 = inlined_call_operand.vmem [shape: f32[1,288], index: 2, kind: input, shape index: {}]
  %s3 = inlined_call_operand.vmem [shape: f32[1,288], index: 3, kind: input, shape index: {}]
  %s4 = inlined_call_operand.vmem [shape: bf16[72,288], index: 4, kind: output, shape index: {}]
  %s5 = sld [smem:[#allocation0]]
  $region26: #{decoder_forward.4} parent=0
    _
  %s7 = ssub.s32 1, %s5
  %s8 = scalar_select 0, %s7, %s5
  // Predicated region
  $region2: #{decoder_forward.4} parent=0 // pred_check
    _
  $region3: #{decoder_forward.4} parent=0 // pred_check_branch
    %10 = sbr.rel (0) target = $region5
  $region4: #{decoder_forward.4} parent=0 // pred_region
    _
  $region5: #{decoder_forward.4} parent=0 // pred_fallthru
    _
  // Predicated region
  $region6: #{decoder_forward.4} parent=0 // pred_check
    _
  $region7: #{decoder_forward.4} parent=0 // pred_check_branch
    %12 = sbr.rel (0) target = $region9
  $region8: #{decoder_forward.4} parent=0 // pred_region
    _
  $region9: #{decoder_forward.4} parent=0 // pred_fallthru
    _
  // Predicated region
  $region10: #{decoder_forward.4} parent=0 // pred_check
    _
  $region11: #{decoder_forward.4} parent=0 // pred_check_branch
    %14 = sbr.rel (0) target = $region13
  $region12: #{decoder_forward.4} parent=0 // pred_region
    _
  $region13: #{decoder_forward.4} parent=0 // pred_fallthru
    _
  // Predicated region
  $region14: #{decoder_forward.4} parent=0 // pred_check
    _
  $region15: #{decoder_forward.4} parent=0 // pred_check_branch
    %16 = sbr.rel (0) target = $region17
  $region16: #{decoder_forward.4} parent=0 // pred_region
    _
  $region17: #{decoder_forward.4} parent=0 // pred_fallthru
    _
  %v18 = vld [vmem:[%s0] sm:$0xf]
  %v19 = vld [vmem:[%s0 + $0x4] sm:$0xf]
  %v20 = vld [vmem:[%s0 + $0x8] sm:$0xf]
  %v21 = vld [vmem:[%s0 + $0xc] sm:$0xf]
  %v22 = vld [vmem:[%s0 + $0x10] sm:$0xf]
  %v23 = vld [vmem:[%s0 + $0x14] sm:$0xf]
  %v24 = vld [vmem:[%s0 + $0x18] sm:$0xf]
  %v25 = vld [vmem:[%s0 + $0x1c] sm:$0xf]
  %v26 = vld [vmem:[%s0 + $0x20] sm:$0xf]
  %v27 = vld [vmem:[%s1] sm:$0xff]
  %v28 = vld [vmem:[%s1 + $0x8] sm:$0xf]
  %v29 = vld [vmem:[%s1 + $0xc] sm:$0xff]
  %v30 = vld [vmem:[%s1 + $0x14] sm:$0xf]
  %v31 = vld [vmem:[%s1 + $0x18] sm:$0xff]
  %v32 = vld [vmem:[%s1 + $0x20] sm:$0xf]
  %v33 = vld [vmem:[%s1 + $0x24] sm:$0xff]
  %v34 = vld [vmem:[%s1 + $0x2c] sm:$0xf]
  %v35 = vld [vmem:[%s1 + $0x30] sm:$0xff]
  %v36 = vld [vmem:[%s1 + $0x38] sm:$0xf]
  %v37 = vld [vmem:[%s1 + $0x3c] sm:$0xff]
  %v38 = vld [vmem:[%s1 + $0x44] sm:$0xf]
  %v39 = vld [vmem:[%s1 + $0x48] sm:$0xff]
  %v40 = vld [vmem:[%s1 + $0x50] sm:$0xf]
  %v41 = vld [vmem:[%s1 + $0x54] sm:$0xff]
  %v42 = vld [vmem:[%s1 + $0x5c] sm:$0xf]
  %v43 = vld [vmem:[%s1 + $0x60] sm:$0xff]
  %v44 = vld [vmem:[%s1 + $0x68] sm:$0xf]
  %v45 = vld [vmem:[%s1 + $0x6c] sm:$0xff]
  %v46 = vld [vmem:[%s1 + $0x74] sm:$0xf]
  %v47 = vld [vmem:[%s1 + $0x78] sm:$0xff]
  %v48 = vld [vmem:[%s1 + $0x80] sm:$0xf]
  %v49 = vld [vmem:[%s1 + $0x84] sm:$0xff]
  %v50 = vld [vmem:[%s1 + $0x8c] sm:$0xf]
  %v51 = vld [vmem:[%s1 + $0x90] sm:$0xff]
  %v52 = vld [vmem:[%s1 + $0x98] sm:$0xf]
  %v53 = vld [vmem:[%s1 + $0x9c] sm:$0xff]
  %v54 = vld [vmem:[%s1 + $0xa4] sm:$0xf]
  %v55 = vld [vmem:[%s1 + $0xa8] sm:$0xff]
  %v56 = vld [vmem:[%s1 + $0xb0] sm:$0xf]
  %v57 = vld [vmem:[%s1 + $0xb4] sm:$0xff]
  %v58 = vld [vmem:[%s1 + $0xbc] sm:$0xf]
  %v68 = vunpack.c.l.b16 %v18
  %v69 = vunpack.c.l.b16 %v19
  %v70 = vunpack.c.l.b16 %v20
  %v71 = vunpack.c.l.b16 %v21
  %v72 = vunpack.c.l.b16 %v22
  %v73 = vunpack.c.l.b16 %v23
  %v74 = vunpack.c.l.b16 %v24
  %v75 = vunpack.c.l.b16 %v25
  %v76 = vunpack.c.l.b16 %v26
  %v77 = vpack.c.b16 %v69, %v68
  %v78 = vpack.c.b16 %v71, %v70
  %v79 = vpack.c.b16 %v73, %v72
  %v80 = vpack.c.b16 %v75, %v74
  %v81 = vpack.c.b16 %v76, %v76
  %v119 = vunpack.c.l.b16 %v27
  %v120 = vunpack.c.h.b16 %v27
  %v121 = vunpack.c.l.b16 %v28
  %v122 = vunpack.c.l.b16 %v29
  %v123 = vunpack.c.h.b16 %v29
  %v124 = vunpack.c.l.b16 %v30
  %v125 = vunpack.c.l.b16 %v31
  %v126 = vunpack.c.h.b16 %v31
  %v127 = vunpack.c.l.b16 %v32
  %v128 = vunpack.c.l.b16 %v33
  %v129 = vunpack.c.h.b16 %v33
  %v130 = vunpack.c.l.b16 %v34
  %v131 = vunpack.c.l.b16 %v35
  %v132 = vunpack.c.h.b16 %v35
  %v133 = vunpack.c.l.b16 %v36
  %v134 = vunpack.c.l.b16 %v37
  %v135 = vunpack.c.h.b16 %v37
  %v136 = vunpack.c.l.b16 %v38
  %v137 = vunpack.c.l.b16 %v39
  %v138 = vunpack.c.h.b16 %v39
  %v139 = vunpack.c.l.b16 %v40
  %v140 = vunpack.c.l.b16 %v41
  %v141 = vunpack.c.h.b16 %v41
  %v142 = vunpack.c.l.b16 %v42
  %v143 = vunpack.c.l.b16 %v43
  %v144 = vunpack.c.h.b16 %v43
  %v145 = vunpack.c.l.b16 %v44
  %v146 = vunpack.c.l.b16 %v45
  %v147 = vunpack.c.h.b16 %v45
  %v148 = vunpack.c.l.b16 %v46
  %v149 = vunpack.c.l.b16 %v47
  %v150 = vunpack.c.h.b16 %v47
  %v151 = vunpack.c.l.b16 %v48
  %v152 = vunpack.c.l.b16 %v49
  %v153 = vunpack.c.h.b16 %v49
  %v154 = vunpack.c.l.b16 %v50
  %v155 = vunpack.c.l.b16 %v51
  %v156 = vunpack.c.h.b16 %v51
  %v157 = vunpack.c.l.b16 %v52
  %v158 = vunpack.c.l.b16 %v53
  %v159 = vunpack.c.h.b16 %v53
  %v160 = vunpack.c.l.b16 %v54
  %v161 = vunpack.c.l.b16 %v55
  %v162 = vunpack.c.h.b16 %v55
  %v163 = vunpack.c.l.b16 %v56
  %v164 = vunpack.c.l.b16 %v57
  %v165 = vunpack.c.h.b16 %v57
  %v166 = vunpack.c.l.b16 %v58
  %v167 = vpack.c.b16 %v122, %v119
  %v168 = vpack.c.b16 %v123, %v120
  %v169 = vpack.c.b16 %v124, %v121
  %v170 = vpack.c.b16 %v128, %v125
  %v171 = vpack.c.b16 %v129, %v126
  %v172 = vpack.c.b16 %v130, %v127
  %v173 = vpack.c.b16 %v134, %v131
  %v174 = vpack.c.b16 %v135, %v132
  %v175 = vpack.c.b16 %v136, %v133
  %v176 = vpack.c.b16 %v140, %v137
  %v177 = vpack.c.b16 %v141, %v138
  %v178 = vpack.c.b16 %v142, %v139
  %v179 = vpack.c.b16 %v146, %v143
  %v180 = vpack.c.b16 %v147, %v144
  %v181 = vpack.c.b16 %v148, %v145
  %v182 = vpack.c.b16 %v152, %v149
  %v183 = vpack.c.b16 %v153, %v150
  %v184 = vpack.c.b16 %v154, %v151
  %v185 = vpack.c.b16 %v158, %v155
  %v186 = vpack.c.b16 %v159, %v156
  %v187 = vpack.c.b16 %v160, %v157
  %v188 = vpack.c.b16 %v164, %v161
  %v189 = vpack.c.b16 %v165, %v162
  %v190 = vpack.c.b16 %v166, %v163
  %215 = vmatprep.subr.bf16.mxu0 %v189
  %216 = vmatpush1.bf16.msra.mxu0 %v188
  %217 = vmatprep.subr.bf16.mxu0 %v186
  %218 = vmatpush1.bf16.msra.mxu0 %v185
  %219 = vmatprep.subr.bf16.mxu0 %v183
  %220 = vmatpush1.bf16.msra.mxu0 %v182
  %221 = vmatprep.subr.bf16.mxu0 %v180
  %222 = vmatpush1.bf16.msra.mxu0 %v179
  %223 = vmatprep.subr.bf16.mxu0 %v177
  %224 = vmatpush1.bf16.msra.mxu0 %v176
  %225 = vmatprep.subr.bf16.mxu0 %v174
  %226 = vmatpush1.bf16.msra.mxu0 %v173
  %227 = vmatprep.subr.bf16.mxu0 %v171
  %228 = vmatpush1.bf16.msra.mxu0 %v170
  %229 = vmatprep.subr.bf16.mxu0 %v168
  %230 = vmatpush1.bf16.msra.mxu0 %v167
  %231 = vmatprep.subr.bf16.mxu0 0
  %232 = vmatpush2.bf16.msra.mxu0 0
  %233 = vmatprep.subr.bf16.mxu0 0
  %234 = vmatpush2.bf16.msra.mxu0 0
  %235 = vmatprep.subr.bf16.mxu0 0
  %236 = vmatpush2.bf16.msra.mxu0 0
  %237 = vmatprep.subr.bf16.mxu0 0
  %238 = vmatpush2.bf16.msra.mxu0 0
  %239 = vmatprep.subr.bf16.mxu0 0
  %240 = vmatpush2.bf16.msra.mxu0 0
  %241 = vmatprep.subr.bf16.mxu0 0
  %242 = vmatpush2.bf16.msra.mxu0 0
  %243 = vmatprep.subr.bf16.mxu0 0
  %244 = vmatpush2.bf16.msra.mxu0 0
  %245 = vmatprep.subr.bf16.mxu0 0
  %246 = vmatpush2.bf16.msra.mxu0 0
  %247 = vmatprep.mubr.bf16.mxu0 0
  %248 = vmatmul.mubr.bf16.gmra.mxu0 %v77
  %v249 = vpop.f32.mrf.mxu0
  %v250 = vadd.f32 0.0, %v249
  %v251 = vpop.f32.mrf.mxu0
  %v252 = vadd.f32 0.0, %v251
  %v253 = vpop.f32.mrf.mxu0
  %v254 = vadd.f32 0.0, %v253
  %v255 = vpop.f32.mrf.mxu0
  %v256 = vadd.f32 0.0, %v255
  %257 = vmatprep.mubr.bf16.mxu0 0
  %258 = vmatmul.mubr.bf16.gmra.mxu0 %v78
  %v259 = vpop.f32.mrf.mxu0
  %v260 = vadd.f32 0.0, %v259
  %v261 = vpop.f32.mrf.mxu0
  %v262 = vadd.f32 0.0, %v261
  %v263 = vpop.f32.mrf.mxu0
  %v264 = vadd.f32 0.0, %v263
  %v265 = vpop.f32.mrf.mxu0
  %v266 = vadd.f32 0.0, %v265
  %267 = vmatprep.mubr.bf16.mxu0 0
  %268 = vmatmul.mubr.bf16.gmra.mxu0 %v79
  %v269 = vpop.f32.mrf.mxu0
  %v270 = vadd.f32 0.0, %v269
  %v271 = vpop.f32.mrf.mxu0
  %v272 = vadd.f32 0.0, %v271
  %v273 = vpop.f32.mrf.mxu0
  %v274 = vadd.f32 0.0, %v273
  %v275 = vpop.f32.mrf.mxu0
  %v276 = vadd.f32 0.0, %v275
  %277 = vmatprep.mubr.bf16.mxu0 0
  %278 = vmatmul.mubr.bf16.gmra.mxu0 %v80
  %v279 = vpop.f32.mrf.mxu0
  %v280 = vadd.f32 0.0, %v279
  %v281 = vpop.f32.mrf.mxu0
  %v282 = vadd.f32 0.0, %v281
  %v283 = vpop.f32.mrf.mxu0
  %v284 = vadd.f32 0.0, %v283
  %v285 = vpop.f32.mrf.mxu0
  %v286 = vadd.f32 0.0, %v285
  %287 = vmatprep.mubr.bf16.mxu0 0
  %288 = vmatmul.mubr.bf16.gmra.mxu0 %v81
  %v289 = vpop.f32.mrf.mxu0
  %v290 = vadd.f32 0.0, %v289
  %v291 = vpop.f32.mrf.mxu0
  %v292 = vadd.f32 0.0, %v291
  %v293 = vpop.f32.mrf.mxu0
  %v294 = vpop.f32.mrf.mxu0
  %295 = vdwg.mxu0
  %296 = vmatprep.subr.bf16.mxu0 0
  %297 = vmatpush1.bf16.msra.mxu0 %v190
  %298 = vmatprep.subr.bf16.mxu0 0
  %299 = vmatpush1.bf16.msra.mxu0 %v187
  %300 = vmatprep.subr.bf16.mxu0 0
  %301 = vmatpush1.bf16.msra.mxu0 %v184
  %302 = vmatprep.subr.bf16.mxu0 0
  %303 = vmatpush1.bf16.msra.mxu0 %v181
  %304 = vmatprep.subr.bf16.mxu0 0
  %305 = vmatpush1.bf16.msra.mxu0 %v178
  %306 = vmatprep.subr.bf16.mxu0 0
  %307 = vmatpush1.bf16.msra.mxu0 %v175
  %308 = vmatprep.subr.bf16.mxu0 0
  %309 = vmatpush1.bf16.msra.mxu0 %v172
  %310 = vmatprep.subr.bf16.mxu0 0
  %311 = vmatpush1.bf16.msra.mxu0 %v169
  %312 = vmatprep.subr.bf16.mxu0 0
  %313 = vmatpush2.bf16.msra.mxu0 0
  %314 = vmatprep.subr.bf16.mxu0 0
  %315 = vmatpush2.bf16.msra.mxu0 0
  %316 = vmatprep.subr.bf16.mxu0 0
  %317 = vmatpush2.bf16.msra.mxu0 0
  %318 = vmatprep.subr.bf16.mxu0 0
  %319 = vmatpush2.bf16.msra.mxu0 0
  %320 = vmatprep.subr.bf16.mxu0 0
  %321 = vmatpush2.bf16.msra.mxu0 0
  %322 = vmatprep.subr.bf16.mxu0 0
  %323 = vmatpush2.bf16.msra.mxu0 0
  %324 = vmatprep.subr.bf16.mxu0 0
  %325 = vmatpush2.bf16.msra.mxu0 0
  %326 = vmatprep.subr.bf16.mxu0 0
  %327 = vmatpush2.bf16.msra.mxu0 0
  %328 = vmatprep.mubr.bf16.mxu0 0
  %329 = vmatmul.mubr.bf16.gmra.mxu0 %v77
  %v330 = vpop.f32.mrf.mxu0
  %v331 = vadd.f32 0.0, %v330
  %v332 = vpop.f32.mrf.mxu0
  %v333 = vpop.f32.mrf.mxu0
  %v334 = vadd.f32 0.0, %v333
  %v335 = vpop.f32.mrf.mxu0
  %336 = vmatprep.mubr.bf16.mxu0 0
  %337 = vmatmul.mubr.bf16.gmra.mxu0 %v78
  %v338 = vpop.f32.mrf.mxu0
  %v339 = vadd.f32 0.0, %v338
  %v340 = vpop.f32.mrf.mxu0
  %v341 = vpop.f32.mrf.mxu0
  %v342 = vadd.f32 0.0, %v341
  %v343 = vpop.f32.mrf.mxu0
  %344 = vmatprep.mubr.bf16.mxu0 0
  %345 = vmatmul.mubr.bf16.gmra.mxu0 %v79
  %v346 = vpop.f32.mrf.mxu0
  %v347 = vadd.f32 0.0, %v346
  %v348 = vpop.f32.mrf.mxu0
  %v349 = vpop.f32.mrf.mxu0
  %v350 = vadd.f32 0.0, %v349
  %v351 = vpop.f32.mrf.mxu0
  %352 = vmatprep.mubr.bf16.mxu0 0
  %353 = vmatmul.mubr.bf16.gmra.mxu0 %v80
  %v354 = vpop.f32.mrf.mxu0
  %v355 = vadd.f32 0.0, %v354
  %v356 = vpop.f32.mrf.mxu0
  %v357 = vpop.f32.mrf.mxu0
  %v358 = vadd.f32 0.0, %v357
  %v359 = vpop.f32.mrf.mxu0
  %360 = vmatprep.mubr.bf16.mxu0 0
  %361 = vmatmul.mubr.bf16.gmra.mxu0 %v81
  %v362 = vpop.f32.mrf.mxu0
  %v363 = vadd.f32 0.0, %v362
  %v364 = vpop.f32.mrf.mxu0
  %v365 = vpop.f32.mrf.mxu0
  %v366 = vpop.f32.mrf.mxu0
  %367 = vdwg.mxu0
  %v368 = vld [vmem:[%s2] sm:$0x7]
  %v370 = vlaneseq
  %v371 = vshrl.u32 %v370, 7
  %v372 = vsub.s32 0, %v371
  %v373 = vrot.slane %v368, %v372
  %v374 = vlaneseq
  %v375 = vshrl.u32 %v374, 7
  %v376 = vsub.s32 1, %v375
  %v377 = vrot.slane %v368, %v376
  %v378 = vlaneseq
  %v379 = vshrl.u32 %v378, 7
  %v380 = vsub.s32 2, %v379
  %v381 = vrot.slane %v368, %v380
  %v385 = vmul.f32 %v250, %v373
  %v386 = vmul.f32 %v252, %v377
  %v387 = vmul.f32 %v331, %v381
  %v388 = vmul.f32 %v254, %v373
  %v389 = vmul.f32 %v256, %v377
  %v390 = vmul.f32 %v334, %v381
  %v391 = vmul.f32 %v260, %v373
  %v392 = vmul.f32 %v262, %v377
  %v393 = vmul.f32 %v339, %v381
  %v394 = vmul.f32 %v264, %v373
  %v395 = vmul.f32 %v266, %v377
  %v396 = vmul.f32 %v342, %v381
  %v397 = vmul.f32 %v270, %v373
  %v398 = vmul.f32 %v272, %v377
  %v399 = vmul.f32 %v347, %v381
  %v400 = vmul.f32 %v274, %v373
  %v401 = vmul.f32 %v276, %v377
  %v402 = vmul.f32 %v350, %v381
  %v403 = vmul.f32 %v280, %v373
  %v404 = vmul.f32 %v282, %v377
  %v405 = vmul.f32 %v355, %v381
  %v406 = vmul.f32 %v284, %v373
  %v407 = vmul.f32 %v286, %v377
  %v408 = vmul.f32 %v358, %v381
  %v409 = vmul.f32 %v290, %v373
  %v410 = vmul.f32 %v292, %v377
  %v411 = vmul.f32 %v363, %v381
  %v412 = vld [vmem:[%s3] sm:$0x7]
  %v414 = vlaneseq
  %v415 = vshrl.u32 %v414, 7
  %v416 = vsub.s32 0, %v415
  %v417 = vrot.slane %v412, %v416
  %v418 = vlaneseq
  %v419 = vshrl.u32 %v418, 7
  %v420 = vsub.s32 1, %v419
  %v421 = vrot.slane %v412, %v420
  %v422 = vlaneseq
  %v423 = vshrl.u32 %v422, 7
  %v424 = vsub.s32 2, %v423
  %v425 = vrot.slane %v412, %v424
  %v429 = vadd.f32 %v385, %v417
  %v430 = vadd.f32 %v386, %v421
  %v431 = vadd.f32 %v387, %v425
  %v432 = vadd.f32 %v388, %v417
  %v433 = vadd.f32 %v389, %v421
  %v434 = vadd.f32 %v390, %v425
  %v435 = vadd.f32 %v391, %v417
  %v436 = vadd.f32 %v392, %v421
  %v437 = vadd.f32 %v393, %v425
  %v438 = vadd.f32 %v394, %v417
  %v439 = vadd.f32 %v395, %v421
  %v440 = vadd.f32 %v396, %v425
  %v441 = vadd.f32 %v397, %v417
  %v442 = vadd.f32 %v398, %v421
  %v443 = vadd.f32 %v399, %v425
  %v444 = vadd.f32 %v400, %v417
  %v445 = vadd.f32 %v401, %v421
  %v446 = vadd.f32 %v402, %v425
  %v447 = vadd.f32 %v403, %v417
  %v448 = vadd.f32 %v404, %v421
  %v449 = vadd.f32 %v405, %v425
  %v450 = vadd.f32 %v406, %v417
  %v451 = vadd.f32 %v407, %v421
  %v452 = vadd.f32 %v408, %v425
  %v453 = vadd.f32 %v409, %v417
  %v454 = vadd.f32 %v410, %v421
  %v455 = vadd.f32 %v411, %v425
  %vm456 = vcmp.ge.f32.partialorder %v429, 0.0
  %vm457 = vcmp.ge.f32.partialorder %v430, 0.0
  %vm458 = vcmp.ge.f32.partialorder %v431, 0.0
  %vm459 = vcmp.ge.f32.partialorder %v432, 0.0
  %vm460 = vcmp.ge.f32.partialorder %v433, 0.0
  %vm461 = vcmp.ge.f32.partialorder %v434, 0.0
  %vm462 = vcmp.ge.f32.partialorder %v435, 0.0
  %vm463 = vcmp.ge.f32.partialorder %v436, 0.0
  %vm464 = vcmp.ge.f32.partialorder %v437, 0.0
  %vm465 = vcmp.ge.f32.partialorder %v438, 0.0
  %vm466 = vcmp.ge.f32.partialorder %v439, 0.0
  %vm467 = vcmp.ge.f32.partialorder %v440, 0.0
  %vm468 = vcmp.ge.f32.partialorder %v441, 0.0
  %vm469 = vcmp.ge.f32.partialorder %v442, 0.0
  %vm470 = vcmp.ge.f32.partialorder %v443, 0.0
  %vm471 = vcmp.ge.f32.partialorder %v444, 0.0
  %vm472 = vcmp.ge.f32.partialorder %v445, 0.0
  %vm473 = vcmp.ge.f32.partialorder %v446, 0.0
  %vm474 = vcmp.ge.f32.partialorder %v447, 0.0
  %vm475 = vcmp.ge.f32.partialorder %v448, 0.0
  %vm476 = vcmp.ge.f32.partialorder %v449, 0.0
  %vm477 = vcmp.ge.f32.partialorder %v450, 0.0
  %vm478 = vcmp.ge.f32.partialorder %v451, 0.0
  %vm479 = vcmp.ge.f32.partialorder %v452, 0.0
  %vm480 = vcmp.ge.f32.partialorder %v453, 0.0
  %vm481 = vcmp.ge.f32.partialorder %v454, 0.0
  %vm482 = vcmp.ge.f32.partialorder %v455, 0.0
  %v483 = vmul.f32 %v429, 0.01
  %v484 = vmul.f32 %v430, 0.01
  %v485 = vmul.f32 %v431, 0.01
  %v486 = vmul.f32 %v432, 0.01
  %v487 = vmul.f32 %v433, 0.01
  %v488 = vmul.f32 %v434, 0.01
  %v489 = vmul.f32 %v435, 0.01
  %v490 = vmul.f32 %v436, 0.01
  %v491 = vmul.f32 %v437, 0.01
  %v492 = vmul.f32 %v438, 0.01
  %v493 = vmul.f32 %v439, 0.01
  %v494 = vmul.f32 %v440, 0.01
  %v495 = vmul.f32 %v441, 0.01
  %v496 = vmul.f32 %v442, 0.01
  %v497 = vmul.f32 %v443, 0.01
  %v498 = vmul.f32 %v444, 0.01
  %v499 = vmul.f32 %v445, 0.01
  %v500 = vmul.f32 %v446, 0.01
  %v501 = vmul.f32 %v447, 0.01
  %v502 = vmul.f32 %v448, 0.01
  %v503 = vmul.f32 %v449, 0.01
  %v504 = vmul.f32 %v450, 0.01
  %v505 = vmul.f32 %v451, 0.01
  %v506 = vmul.f32 %v452, 0.01
  %v507 = vmul.f32 %v453, 0.01
  %v508 = vmul.f32 %v454, 0.01
  %v509 = vmul.f32 %v455, 0.01
  %v510 = vsel %vm456, %v429, %v483
  %v511 = vsel %vm457, %v430, %v484
  %v512 = vsel %vm458, %v431, %v485
  %v513 = vsel %vm459, %v432, %v486
  %v514 = vsel %vm460, %v433, %v487
  %v515 = vsel %vm461, %v434, %v488
  %v516 = vsel %vm462, %v435, %v489
  %v517 = vsel %vm463, %v436, %v490
  %v518 = vsel %vm464, %v437, %v491
  %v519 = vsel %vm465, %v438, %v492
  %v520 = vsel %vm466, %v439, %v493
  %v521 = vsel %vm467, %v440, %v494
  %v522 = vsel %vm468, %v441, %v495
  %v523 = vsel %vm469, %v442, %v496
  %v524 = vsel %vm470, %v443, %v497
  %v525 = vsel %vm471, %v444, %v498
  %v526 = vsel %vm472, %v445, %v499
  %v527 = vsel %vm473, %v446, %v500
  %v528 = vsel %vm474, %v447, %v501
  %v529 = vsel %vm475, %v448, %v502
  %v530 = vsel %vm476, %v449, %v503
  %v531 = vsel %vm477, %v450, %v504
  %v532 = vsel %vm478, %v451, %v505
  %v533 = vsel %vm479, %v452, %v506
  %v534 = vsel %vm480, %v453, %v507
  %v535 = vsel %vm481, %v454, %v508
  %v536 = vsel %vm482, %v455, %v509
  %v537 = vpack.c.bf16 %v513, %v510
  %v538 = vpack.c.bf16 %v514, %v511
  %v539 = vpack.c.bf16 %v515, %v512
  %v540 = vpack.c.bf16 %v519, %v516
  %v541 = vpack.c.bf16 %v520, %v517
  %v542 = vpack.c.bf16 %v521, %v518
  %v543 = vpack.c.bf16 %v525, %v522
  %v544 = vpack.c.bf16 %v526, %v523
  %v545 = vpack.c.bf16 %v527, %v524
  %v546 = vpack.c.bf16 %v531, %v528
  %v547 = vpack.c.bf16 %v532, %v529
  %v548 = vpack.c.bf16 %v533, %v530
  %v549 = vpack.c.bf16 %v534, %v534
  %v550 = vpack.c.bf16 %v535, %v535
  %v551 = vpack.c.bf16 %v536, %v536
  %v567 = vunpack.c.l.b16 %v537
  %v568 = vunpack.c.l.b16 %v538
  %v569 = vunpack.c.l.b16 %v539
  %v570 = vunpack.c.h.b16 %v537
  %v571 = vunpack.c.h.b16 %v538
  %v572 = vunpack.c.h.b16 %v539
  %v573 = vunpack.c.l.b16 %v540
  %v574 = vunpack.c.l.b16 %v541
  %v575 = vunpack.c.l.b16 %v542
  %v576 = vunpack.c.h.b16 %v540
  %v577 = vunpack.c.h.b16 %v541
  %v578 = vunpack.c.h.b16 %v542
  %v579 = vunpack.c.l.b16 %v543
  %v580 = vunpack.c.l.b16 %v544
  %v581 = vunpack.c.l.b16 %v545
  %v582 = vunpack.c.h.b16 %v543
  %v583 = vunpack.c.h.b16 %v544
  %v584 = vunpack.c.h.b16 %v545
  %v585 = vunpack.c.l.b16 %v546
  %v586 = vunpack.c.l.b16 %v547
  %v587 = vunpack.c.l.b16 %v548
  %v588 = vunpack.c.h.b16 %v546
  %v589 = vunpack.c.h.b16 %v547
  %v590 = vunpack.c.h.b16 %v548
  %v591 = vunpack.c.l.b16 %v549
  %v592 = vunpack.c.l.b16 %v550
  %v593 = vunpack.c.l.b16 %v551
  %v594 = vpack.c.b16 %v568, %v567
  %v595 = vpack.c.b16 %v569, %v569
  %v596 = vpack.c.b16 %v571, %v570
  %v597 = vpack.c.b16 %v572, %v572
  %v598 = vpack.c.b16 %v574, %v573
  %v599 = vpack.c.b16 %v575, %v575
  %v600 = vpack.c.b16 %v577, %v576
  %v601 = vpack.c.b16 %v578, %v578
  %v602 = vpack.c.b16 %v580, %v579
  %v603 = vpack.c.b16 %v581, %v581
  %v604 = vpack.c.b16 %v583, %v582
  %v605 = vpack.c.b16 %v584, %v584
  %v606 = vpack.c.b16 %v586, %v585
  %v607 = vpack.c.b16 %v587, %v587
  %v608 = vpack.c.b16 %v589, %v588
  %v609 = vpack.c.b16 %v590, %v590
  %v610 = vpack.c.b16 %v592, %v591
  %v611 = vpack.c.b16 %v593, %v593
  %630 = vst [vmem:[%s4] sm:$0xff] %v594
  %vm631 = vcmask 257024
  %632 = vst.msk [vmem:[%s4 + $0x8] sm:$0xf] %vm631, %v595
  %633 = vst [vmem:[%s4 + $0xc] sm:$0xff] %v596
  %634 = vst.msk [vmem:[%s4 + $0x14] sm:$0xf] %vm631, %v597
  %635 = vst [vmem:[%s4 + $0x18] sm:$0xff] %v598
  %636 = vst.msk [vmem:[%s4 + $0x20] sm:$0xf] %vm631, %v599
  %637 = vst [vmem:[%s4 + $0x24] sm:$0xff] %v600
  %638 = vst.msk [vmem:[%s4 + $0x2c] sm:$0xf] %vm631, %v601
  %639 = vst [vmem:[%s4 + $0x30] sm:$0xff] %v602
  %640 = vst.msk [vmem:[%s4 + $0x38] sm:$0xf] %vm631, %v603
  %641 = vst [vmem:[%s4 + $0x3c] sm:$0xff] %v604
  %642 = vst.msk [vmem:[%s4 + $0x44] sm:$0xf] %vm631, %v605
  %643 = vst [vmem:[%s4 + $0x48] sm:$0xff] %v606
  %644 = vst.msk [vmem:[%s4 + $0x50] sm:$0xf] %vm631, %v607
  %645 = vst [vmem:[%s4 + $0x54] sm:$0xff] %v608
  %646 = vst.msk [vmem:[%s4 + $0x5c] sm:$0xf] %vm631, %v609
  %647 = vst [vmem:[%s4 + $0x60] sm:$0xff] %v610
  %648 = vst.msk [vmem:[%s4 + $0x68] sm:$0xf] %vm631, %v611
  // Predicated region
  $region18: #{decoder_forward.4} parent=0 // pred_check
    _
  $region19: #{decoder_forward.4} parent=0 // pred_check_branch
    %650 = sbr.rel (0) target = $region21
  $region20: #{decoder_forward.4} parent=0 // pred_region
    _
  $region21: #{decoder_forward.4} parent=0 // pred_fallthru
    _
  // Predicated region
  $region22: #{decoder_forward.4} parent=0 // pred_check
    _
  $region23: #{decoder_forward.4} parent=0 // pred_check_branch
    %652 = sbr.rel (0) target = $region25
  $region24: #{decoder_forward.4} parent=0 // pred_region
    _
  $region25: #{decoder_forward.4} parent=0 // pred_fallthru
    _

// kernel: decoder_forward.3
$region0: #{decoder_forward.3}
  #allocation0 [shape = 'u32[]', space=smem, size = 0x4, offset = 0x4, fixed_abs, tag = 'smem constant byte address 0x4 - core index']
  #allocation1 [shape = 'u32[144,128]{1,0:T(1,128)}', space=vmem, size = 0x12000, scoped, tag = 'internal scratch']
  %s0 = inlined_call_operand.vmem [shape: f32[8,48], index: 0, kind: input, shape index: {}]
  %s1 = inlined_call_operand.hbm [shape: f32[48,256], index: 1, kind: input, shape index: {}]
  %s2 = inlined_call_operand.hbm [shape: f32[1,256], index: 2, kind: input, shape index: {}]
  %s3 = inlined_call_operand.hbm [shape: bf16[256,128], index: 3, kind: input, shape index: {}]
  %s4 = inlined_call_operand.hbm [shape: f32[1,128], index: 4, kind: input, shape index: {}]
  %s5 = inlined_call_operand.hbm [shape: f32[1,128], index: 5, kind: input, shape index: {}]
  %s6 = inlined_call_operand.hbm [shape: bf16[128,256], index: 6, kind: input, shape index: {}]
  %s7 = inlined_call_operand.hbm [shape: f32[1,256], index: 7, kind: input, shape index: {}]
  %s8 = inlined_call_operand.hbm [shape: f32[1,256], index: 8, kind: input, shape index: {}]
  %s9 = inlined_call_operand.hbm [shape: bf16[256,4608], index: 9, kind: input, shape index: {}]
  %s10 = inlined_call_operand.hbm [shape: f32[1,4608], index: 10, kind: input, shape index: {}]
  %s11 = inlined_call_operand.hbm [shape: f32[1,4608], index: 11, kind: input, shape index: {}]
  %s12 = inlined_call_operand.vmem [shape: bf16[8,4608], index: 12, kind: output, shape index: {}]
  %s13 = sld [smem:[#allocation0]]
  $region102: #{decoder_forward.3} parent=0
    _
  %s15 = ssub.s32 1, %s13
  %s16 = scalar_select 0, %s15, %s13
  $region1: #{decoder_forward.3} parent=0
    #allocation2 [shape = 'u8[49152]{0}', space=vmem, size = 0xc000, scoped, tag = 'input window, operand 1, single buffered']
    #allocation3 [shape = 's32[1]{0}', space=sflag, size = 0x4, scoped, tag = 'scoped memory for decoder_forward.3']
    #allocation4 [shape = 'u8[1024]{0}', space=vmem, size = 0x400, scoped, tag = 'input window, operand 2, single buffered']
    #allocation5 [shape = 's32[1]{0}', space=sflag, size = 0x4, scoped, tag = 'scoped memory for decoder_forward.3']
    #allocation6 [shape = 'u8[65536]{0}', space=vmem, size = 0x10000, scoped, tag = 'input window, operand 3, single buffered']
    #allocation7 [shape = 'u8[512]{0}', space=vmem, size = 0x400, scoped, tag = 'input window, operand 4, single buffered']
    #allocation8 [shape = 's32[1]{0}', space=sflag, size = 0x4, scoped, tag = 'scoped memory for decoder_forward.3']
    #allocation9 [shape = 'u8[512]{0}', space=vmem, size = 0x400, scoped, tag = 'input window, operand 5, single buffered']
    #allocation10 [shape = 'u8[65536]{0}', space=vmem, size = 0x10000, scoped, tag = 'input window, operand 6, single buffered']
    #allocation11 [shape = 's32[1]{0}', space=sflag, size = 0x4, scoped, tag = 'scoped memory for decoder_forward.3']
    #allocation12 [shape = 'u8[1024]{0}', space=vmem, size = 0x400, scoped, tag = 'input window, operand 7, single buffered']
    #allocation13 [shape = 'u8[1024]{0}', space=vmem, size = 0x400, scoped, tag = 'input window, operand 8, single buffered']
    #allocation14 [shape = 's32[1]{0}', space=sflag, size = 0x4, scoped, tag = 'scoped memory for decoder_forward.3']
    #allocation15 [shape = 'u8[2359296]{0}', space=vmem, size = 0x240000, scoped, tag = 'input window, operand 9, single buffered']
    #allocation16 [shape = 'u8[18432]{0}', space=vmem, size = 0x4800, scoped, tag = 'input window, operand 10, single buffered']
    #allocation17 [shape = 's32[1]{0}', space=sflag, size = 0x4, scoped, tag = 'scoped memory for decoder_forward.3']
    #allocation18 [shape = 'u8[18432]{0}', space=vmem, size = 0x4800, scoped, tag = 'input window, operand 11, single buffered']
    %17 = vsyncpa [#allocation3], 0
    %18 = vsyncpa [#allocation5], 0
    %19 = vsyncpa [#allocation8], 0
    %20 = vsyncpa [#allocation11], 0
    %21 = vsyncpa [#allocation14], 0
    %22 = vsyncpa [#allocation17], 0
    // Predicated region
    $region2: #{decoder_forward.3} parent=1 // pred_check
      _
    $region3: #{decoder_forward.3} parent=1 // pred_check_branch
      %24 = sbr.rel (0) target = $region5
    $region4: #{decoder_forward.3} parent=1 // pred_region
      _
    $region5: #{decoder_forward.3} parent=1 // pred_fallthru
      _
    // Predicated region
    $region6: #{decoder_forward.3} parent=1 // pred_check
      _
    $region7: #{decoder_forward.3} parent=1 // pred_check_branch
      %26 = sbr.rel (0) target = $region9
    $region8: #{decoder_forward.3} parent=1 // pred_region
      %s28 = ssub.s32 1536, 1536
      %29 = vsyncadd [#allocation3], %s28
      %s30 = sshll.u32 [#allocation2], 4
      %s31 = int_to_ptr.vmem [resolvable:$true] %s30
      %36 = dma.hbm_to_vmem [thread:$0]  %s1, 1536, %s31, [#allocation3], 256, 256, 16
    $region9: #{decoder_forward.3} parent=1 // pred_fallthru
      _
    // Predicated region
    $region10: #{decoder_forward.3} parent=1 // pred_check
      _
    $region11: #{decoder_forward.3} parent=1 // pred_check_branch
      %38 = sbr.rel (0) target = $region13
    $region12: #{decoder_forward.3} parent=1 // pred_region
      %s40 = ssub.s32 32, 32
      %41 = vsyncadd [#allocation5], %s40
      %s43 = sshll.u32 [#allocation4], 4
      %s44 = int_to_ptr.vmem [resolvable:$true] %s43
      %46 = dma.hbm_to_vmem [thread:$0]  %s2, 32, %s44, [#allocation5]
    $region13: #{decoder_forward.3} parent=1 // pred_fallthru
      _
    // Predicated region
    $region14: #{decoder_forward.3} parent=1 // pred_check
      _
    $region15: #{decoder_forward.3} parent=1 // pred_check_branch
      %48 = sbr.rel (0) target = $region17
    $region16: #{decoder_forward.3} parent=1 // pred_region
      %s50 = ssub.s32 2048, 2048
      %51 = vsyncadd [#allocation5], %s50
      %s52 = sshll.u32 [#allocation6], 4
      %s53 = int_to_ptr.vmem [resolvable:$true] %s52
      %58 = dma.hbm_to_vmem [thread:$0]  %s3, 2048, %s53, [#allocation5], 64, 64, 4
    $region17: #{decoder_forward.3} parent=1 // pred_fallthru
      _
    // Predicated region
    $region18: #{decoder_forward.3} parent=1 // pred_check
      _
    $region19: #{decoder_forward.3} parent=1 // pred_check_branch
      %60 = sbr.rel (0) target = $region21
    $region20: #{decoder_forward.3} parent=1 // pred_region
      %s62 = ssub.s32 16, 16
      %63 = vsyncadd [#allocation8], %s62
      %s65 = sshll.u32 [#allocation7], 4
      %s66 = int_to_ptr.vmem [resolvable:$true] %s65
      %68 = dma.hbm_to_vmem [thread:$0]  %s4, 16, %s66, [#allocation8]
    $region21: #{decoder_forward.3} parent=1 // pred_fallthru
      _
    // Predicated region
    $region22: #{decoder_forward.3} parent=1 // pred_check
      _
    $region23: #{decoder_forward.3} parent=1 // pred_check_branch
      %70 = sbr.rel (0) target = $region25
    $region24: #{decoder_forward.3} parent=1 // pred_region
      %s72 = ssub.s32 16, 16
      %73 = vsyncadd [#allocation8], %s72
      %s75 = sshll.u32 [#allocation9], 4
      %s76 = int_to_ptr.vmem [resolvable:$true] %s75
      %78 = dma.hbm_to_vmem [thread:$0]  %s5, 16, %s76, [#allocation8]
    $region25: #{decoder_forward.3} parent=1 // pred_fallthru
      _
    // Predicated region
    $region26: #{decoder_forward.3} parent=1 // pred_check
      _
    $region27: #{decoder_forward.3} parent=1 // pred_check_branch
      %80 = sbr.rel (0) target = $region29
    $region28: #{decoder_forward.3} parent=1 // pred_region
      %s82 = ssub.s32 2048, 2048
      %83 = vsyncadd [#allocation11], %s82
      %s84 = sshll.u32 [#allocation10], 4
      %s85 = int_to_ptr.vmem [resolvable:$true] %s84
      %90 = dma.hbm_to_vmem [thread:$0]  %s6, 2048, %s85, [#allocation11], 128, 128, 8
    $region29: #{decoder_forward.3} parent=1 // pred_fallthru
      _
    // Predicated region
    $region30: #{decoder_forward.3} parent=1 // pred_check
      _
    $region31: #{decoder_forward.3} parent=1 // pred_check_branch
      %92 = sbr.rel (0) target = $region33
    $region32: #{decoder_forward.3} parent=1 // pred_region
      %s94 = ssub.s32 32, 32
      %95 = vsyncadd [#allocation11], %s94
      %s97 = sshll.u32 [#allocation12], 4
      %s98 = int_to_ptr.vmem [resolvable:$true] %s97
      %100 = dma.hbm_to_vmem [thread:$0]  %s7, 32, %s98, [#allocation11]
    $region33: #{decoder_forward.3} parent=1 // pred_fallthru
      _
    // Predicated region
    $region34: #{decoder_forward.3} parent=1 // pred_check
      _
    $region35: #{decoder_forward.3} parent=1 // pred_check_branch
      %102 = sbr.rel (0) target = $region37
    $region36: #{decoder_forward.3} parent=1 // pred_region
      %s104 = ssub.s32 32, 32
      %105 = vsyncadd [#allocation14], %s104
      %s107 = sshll.u32 [#allocation13], 4
      %s108 = int_to_ptr.vmem [resolvable:$true] %s107
      %110 = dma.hbm_to_vmem [thread:$0]  %s8, 32, %s108, [#allocation14]
    $region37: #{decoder_forward.3} parent=1 // pred_fallthru
      _
    // Predicated region
    $region38: #{decoder_forward.3} parent=1 // pred_check
      _
    $region39: #{decoder_forward.3} parent=1 // pred_check_branch
      %112 = sbr.rel (0) target = $region41
    $region40: #{decoder_forward.3} parent=1 // pred_region
      %s114 = ssub.s32 73728, 73728
      %115 = vsyncadd [#allocation14], %s114
      %s116 = sshll.u32 [#allocation15], 4
      %s117 = int_to_ptr.vmem [resolvable:$true] %s116
      %122 = dma.hbm_to_vmem [thread:$0]  %s9, 73728, %s117, [#allocation14], 2304, 2304, 144
    $region41: #{decoder_forward.3} parent=1 // pred_fallthru
      _
    // Predicated region
    $region42: #{decoder_forward.3} parent=1 // pred_check
      _
    $region43: #{decoder_forward.3} parent=1 // pred_check_branch
      %124 = sbr.rel (0) target = $region45
    $region44: #{decoder_forward.3} parent=1 // pred_region
      %s126 = ssub.s32 576, 576
      %127 = vsyncadd [#allocation17], %s126
      %s129 = sshll.u32 [#allocation16], 4
      %s130 = int_to_ptr.vmem [resolvable:$true] %s129
      %132 = dma.hbm_to_vmem [thread:$0]  %s10, 576, %s130, [#allocation17]
    $region45: #{decoder_forward.3} parent=1 // pred_fallthru
      _
    // Predicated region
    $region46: #{decoder_forward.3} parent=1 // pred_check
      _
    $region47: #{decoder_forward.3} parent=1 // pred_check_branch
      %134 = sbr.rel (0) target = $region49
    $region48: #{decoder_forward.3} parent=1 // pred_region
      %s136 = ssub.s32 576, 576
      %137 = vsyncadd [#allocation17], %s136
      %s139 = sshll.u32 [#allocation18], 4
      %s140 = int_to_ptr.vmem [resolvable:$true] %s139
      %142 = dma.hbm_to_vmem [thread:$0]  %s11, 576, %s140, [#allocation17]
    $region49: #{decoder_forward.3} parent=1 // pred_fallthru
      _
    // Predicated region
    $region50: #{decoder_forward.3} parent=1 // pred_check
      _
    $region51: #{decoder_forward.3} parent=1 // pred_check_branch
      %144 = sbr.rel (0) target = $region53
    $region52: #{decoder_forward.3} parent=1 // pred_region
      %145 = dma.done [#allocation3], 1536
    $region53: #{decoder_forward.3} parent=1 // pred_fallthru
      _
    // Predicated region
    $region54: #{decoder_forward.3} parent=1 // pred_check
      _
    $region55: #{decoder_forward.3} parent=1 // pred_check_branch
      %147 = sbr.rel (0) target = $region57
    $region56: #{decoder_forward.3} parent=1 // pred_region
      %148 = dma.done [#allocation5], 32
    $region57: #{decoder_forward.3} parent=1 // pred_fallthru
      _
    // Predicated region
    $region58: #{decoder_forward.3} parent=1 // pred_check
      _
    $region59: #{decoder_forward.3} parent=1 // pred_check_branch
      %150 = sbr.rel (0) target = $region61
    $region60: #{decoder_forward.3} parent=1 // pred_region
      %151 = dma.done [#allocation5], 2048
    $region61: #{decoder_forward.3} parent=1 // pred_fallthru
      _
    // Predicated region
    $region62: #{decoder_forward.3} parent=1 // pred_check
      _
    $region63: #{decoder_forward.3} parent=1 // pred_check_branch
      %153 = sbr.rel (0) target = $region65
    $region64: #{decoder_forward.3} parent=1 // pred_region
      %154 = dma.done [#allocation8], 16
    $region65: #{decoder_forward.3} parent=1 // pred_fallthru
      _
    // Predicated region
    $region66: #{decoder_forward.3} parent=1 // pred_check
      _
    $region67: #{decoder_forward.3} parent=1 // pred_check_branch
      %156 = sbr.rel (0) target = $region69
    $region68: #{decoder_forward.3} parent=1 // pred_region
      %157 = dma.done [#allocation8], 16
    $region69: #{decoder_forward.3} parent=1 // pred_fallthru
      _
    // Predicated region
    $region70: #{decoder_forward.3} parent=1 // pred_check
      _
    $region71: #{decoder_forward.3} parent=1 // pred_check_branch
      %159 = sbr.rel (0) target = $region73
    $region72: #{decoder_forward.3} parent=1 // pred_region
      %160 = dma.done [#allocation11], 2048
    $region73: #{decoder_forward.3} parent=1 // pred_fallthru
      _
    // Predicated region
    $region74: #{decoder_forward.3} parent=1 // pred_check
      _
    $region75: #{decoder_forward.3} parent=1 // pred_check_branch
      %162 = sbr.rel (0) target = $region77
    $region76: #{decoder_forward.3} parent=1 // pred_region
      %163 = dma.done [#allocation11], 32
    $region77: #{decoder_forward.3} parent=1 // pred_fallthru
      _
    // Predicated region
    $region78: #{decoder_forward.3} parent=1 // pred_check
      _
    $region79: #{decoder_forward.3} parent=1 // pred_check_branch
      %165 = sbr.rel (0) target = $region81
    $region80: #{decoder_forward.3} parent=1 // pred_region
      %166 = dma.done [#allocation14], 32
    $region81: #{decoder_forward.3} parent=1 // pred_fallthru
      _
    // Predicated region
    $region82: #{decoder_forward.3} parent=1 // pred_check
      _
    $region83: #{decoder_forward.3} parent=1 // pred_check_branch
      %168 = sbr.rel (0) target = $region85
    $region84: #{decoder_forward.3} parent=1 // pred_region
      %169 = dma.done [#allocation14], 73728
    $region85: #{decoder_forward.3} parent=1 // pred_fallthru
      _
    // Predicated region
    $region86: #{decoder_forward.3} parent=1 // pred_check
      _
    $region87: #{decoder_forward.3} parent=1 // pred_check_branch
      %171 = sbr.rel (0) target = $region89
    $region88: #{decoder_forward.3} parent=1 // pred_region
      %172 = dma.done [#allocation17], 576
    $region89: #{decoder_forward.3} parent=1 // pred_fallthru
      _
    // Predicated region
    $region90: #{decoder_forward.3} parent=1 // pred_check
      _
    $region91: #{decoder_forward.3} parent=1 // pred_check_branch
      %174 = sbr.rel (0) target = $region93
    $region92: #{decoder_forward.3} parent=1 // pred_region
      %175 = dma.done [#allocation17], 576
    $region93: #{decoder_forward.3} parent=1 // pred_fallthru
      _
    %v177 = vld [vmem:[%s0] sm:$0xff]
    %v178 = vld [vmem:[#allocation2] sm:$0xff]
    %v179 = vld [vmem:[#allocation2 + $0x8] sm:$0xff]
    %v180 = vld [vmem:[#allocation2 + $0x10] sm:$0xff]
    %v181 = vld [vmem:[#allocation2 + $0x18] sm:$0xff]
    %v182 = vld [vmem:[#allocation2 + $0x20] sm:$0xff]
    %v183 = vld [vmem:[#allocation2 + $0x28] sm:$0xff]
    %v184 = vld [vmem:[#allocation2 + $0x30] sm:$0xff]
    %v185 = vld [vmem:[#allocation2 + $0x38] sm:$0xff]
    %v186 = vld [vmem:[#allocation2 + $0x40] sm:$0xff]
    %v187 = vld [vmem:[#allocation2 + $0x48] sm:$0xff]
    %v188 = vld [vmem:[#allocation2 + $0x50] sm:$0xff]
    %v189 = vld [vmem:[#allocation2 + $0x58] sm:$0xff]
    %v190 = vld [vmem:[#allocation4] sm:$0x3]
    %v192 = vlaneseq
    %v193 = vshrl.u32 %v192, 7
    %v194 = vsub.s32 0, %v193
    %v195 = vrot.slane %v190, %v194
    %v196 = vlaneseq
    %v197 = vshrl.u32 %v196, 7
    %v198 = vsub.s32 1, %v197
    %v199 = vrot.slane %v190, %v198
    %vm202 = vcmask 392192
    %v204 = vsel %vm202, %v177, 0
    %206 = vmatprep.subr.mxu0 0.0
    %207 = vmatpush1.msra.mxu0 0.0
    %208 = vmatprep.subr.mxu0 0.0
    %209 = vmatpush1.msra.mxu0 0.0
    %210 = vmatprep.subr.mxu0 0.0
    %211 = vmatpush1.msra.mxu0 0.0
    %212 = vmatprep.subr.mxu0 0.0
    %213 = vmatpush1.msra.mxu0 0.0
    %214 = vmatprep.subr.mxu0 0.0
    %215 = vmatpush1.msra.mxu0 0.0
    %216 = vmatprep.subr.mxu0 0.0
    %217 = vmatpush1.msra.mxu0 0.0
    %218 = vmatprep.subr.mxu0 0.0
    %219 = vmatpush1.msra.mxu0 0.0
    %220 = vmatprep.subr.mxu0 0.0
    %221 = vmatpush1.msra.mxu0 0.0
    %222 = vmatprep.subr.mxu0 0.0
    %223 = vmatpush1.msra.mxu0 0.0
    %224 = vmatprep.subr.mxu0 0.0
    %225 = vmatpush1.msra.mxu0 0.0
    %226 = vmatprep.subr.mxu0 %v189
    %227 = vmatpush1.msra.mxu0 %v188
    %228 = vmatprep.subr.mxu0 %v187
    %229 = vmatpush1.msra.mxu0 %v186
    %230 = vmatprep.subr.mxu0 %v185
    %231 = vmatpush1.msra.mxu0 %v184
    %232 = vmatprep.subr.mxu0 %v183
    %233 = vmatpush1.msra.mxu0 %v182
    %234 = vmatprep.subr.mxu0 %v181
    %235 = vmatpush1.msra.mxu0 %v180
    %236 = vmatprep.subr.mxu0 %v179
    %237 = vmatpush1.msra.mxu0 %v178
    %238 = vmatprep.subr.mxu0 0.0
    %239 = vmatpush2.msra.mxu0 0.0
    %240 = vmatprep.subr.mxu0 0.0
    %241 = vmatpush2.msra.mxu0 0.0
    %242 = vmatprep.subr.mxu0 0.0
    %243 = vmatpush2.msra.mxu0 0.0
    %244 = vmatprep.subr.mxu0 0.0
    %245 = vmatpush2.msra.mxu0 0.0
    %246 = vmatprep.subr.mxu0 0.0
    %247 = vmatpush2.msra.mxu0 0.0
    %248 = vmatprep.subr.mxu0 0.0
    %249 = vmatpush2.msra.mxu0 0.0
    %250 = vmatprep.subr.mxu0 0.0
    %251 = vmatpush2.msra.mxu0 0.0
    %252 = vmatprep.subr.mxu0 0.0
    %253 = vmatpush2.msra.mxu0 0.0
    %254 = vmatprep.subr.mxu0 0.0
    %255 = vmatpush2.msra.mxu0 0.0
    %256 = vmatprep.subr.mxu0 0.0
    %257 = vmatpush2.msra.mxu0 0.0
    %258 = vmatprep.subr.mxu0 0.0
    %259 = vmatpush2.msra.mxu0 0.0
    %260 = vmatprep.subr.mxu0 0.0
    %261 = vmatpush2.msra.mxu0 0.0
    %262 = vmatprep.subr.mxu0 0.0
    %263 = vmatpush2.msra.mxu0 0.0
    %264 = vmatprep.subr.mxu0 0.0
    %265 = vmatpush2.msra.mxu0 0.0
    %266 = vmatprep.subr.mxu0 0.0
    %267 = vmatpush2.msra.mxu0 0.0
    %268 = vmatprep.subr.mxu0 0.0
    %269 = vmatpush2.msra.mxu0 0.0
    %270 = vmatprep.mubr.f32.mxu0 0.0
    %271 = vmatmul.mubr.f32.gmra.mxu0 %v204
    %v272 = vpop.f32.mrf.mxu0
    %v273 = vadd.f32 %v195, %v272
    %v274 = vpop.f32.mrf.mxu0
    %v275 = vadd.f32 %v199, %v274
    %276 = vdwg.mxu0
    %v277 = vpack.c.bf16 %v273, %v273
    %v278 = vpack.c.bf16 %v275, %v275
    %v279 = vld [vmem:[#allocation6] sm:$0xf]
    %v280 = vld [vmem:[#allocation6 + $0x4] sm:$0xf]
    %v281 = vld [vmem:[#allocation6 + $0x8] sm:$0xf]
    %v282 = vld [vmem:[#allocation6 + $0xc] sm:$0xf]
    %v283 = vld [vmem:[#allocation6 + $0x10] sm:$0xf]
    %v284 = vld [vmem:[#allocation6 + $0x14] sm:$0xf]
    %v285 = vld [vmem:[#allocation6 + $0x18] sm:$0xf]
    %v286 = vld [vmem:[#allocation6 + $0x1c] sm:$0xf]
    %v287 = vld [vmem:[#allocation6 + $0x20] sm:$0xf]
    %v288 = vld [vmem:[#allocation6 + $0x24] sm:$0xf]
    %v289 = vld [vmem:[#allocation6 + $0x28] sm:$0xf]
    %v290 = vld [vmem:[#allocation6 + $0x2c] sm:$0xf]
    %v291 = vld [vmem:[#allocation6 + $0x30] sm:$0xf]
    %v292 = vld [vmem:[#allocation6 + $0x34] sm:$0xf]
    %v293 = vld [vmem:[#allocation6 + $0x38] sm:$0xf]
    %v294 = vld [vmem:[#allocation6 + $0x3c] sm:$0xf]
    %v295 = vld [vmem:[#allocation6 + $0x40] sm:$0xf]
    %v296 = vld [vmem:[#allocation6 + $0x44] sm:$0xf]
    %v297 = vld [vmem:[#allocation6 + $0x48] sm:$0xf]
    %v298 = vld [vmem:[#allocation6 + $0x4c] sm:$0xf]
    %v299 = vld [vmem:[#allocation6 + $0x50] sm:$0xf]
    %v300 = vld [vmem:[#allocation6 + $0x54] sm:$0xf]
    %v301 = vld [vmem:[#allocation6 + $0x58] sm:$0xf]
    %v302 = vld [vmem:[#allocation6 + $0x5c] sm:$0xf]
    %v303 = vld [vmem:[#allocation6 + $0x60] sm:$0xf]
    %v304 = vld [vmem:[#allocation6 + $0x64] sm:$0xf]
    %v305 = vld [vmem:[#allocation6 + $0x68] sm:$0xf]
    %v306 = vld [vmem:[#allocation6 + $0x6c] sm:$0xf]
    %v307 = vld [vmem:[#allocation6 + $0x70] sm:$0xf]
    %v308 = vld [vmem:[#allocation6 + $0x74] sm:$0xf]
    %v309 = vld [vmem:[#allocation6 + $0x78] sm:$0xf]
    %v310 = vld [vmem:[#allocation6 + $0x7c] sm:$0xf]
    %v343 = vunpack.c.l.b16 %v279
    %v344 = vunpack.c.l.b16 %v280
    %v345 = vunpack.c.l.b16 %v281
    %v346 = vunpack.c.l.b16 %v282
    %v347 = vunpack.c.l.b16 %v283
    %v348 = vunpack.c.l.b16 %v284
    %v349 = vunpack.c.l.b16 %v285
    %v350 = vunpack.c.l.b16 %v286
    %v351 = vunpack.c.l.b16 %v287
    %v352 = vunpack.c.l.b16 %v288
    %v353 = vunpack.c.l.b16 %v289
    %v354 = vunpack.c.l.b16 %v290
    %v355 = vunpack.c.l.b16 %v291
    %v356 = vunpack.c.l.b16 %v292
    %v357 = vunpack.c.l.b16 %v293
    %v358 = vunpack.c.l.b16 %v294
    %v359 = vunpack.c.l.b16 %v295
    %v360 = vunpack.c.l.b16 %v296
    %v361 = vunpack.c.l.b16 %v297
    %v362 = vunpack.c.l.b16 %v298
    %v363 = vunpack.c.l.b16 %v299
    %v364 = vunpack.c.l.b16 %v300
    %v365 = vunpack.c.l.b16 %v301
    %v366 = vunpack.c.l.b16 %v302
    %v367 = vunpack.c.l.b16 %v303
    %v368 = vunpack.c.l.b16 %v304
    %v369 = vunpack.c.l.b16 %v305
    %v370 = vunpack.c.l.b16 %v306
    %v371 = vunpack.c.l.b16 %v307
    %v372 = vunpack.c.l.b16 %v308
    %v373 = vunpack.c.l.b16 %v309
    %v374 = vunpack.c.l.b16 %v310
    %v375 = vpack.c.b16 %v344, %v343
    %v376 = vpack.c.b16 %v346, %v345
    %v377 = vpack.c.b16 %v348, %v347
    %v378 = vpack.c.b16 %v350, %v349
    %v379 = vpack.c.b16 %v352, %v351
    %v380 = vpack.c.b16 %v354, %v353
    %v381 = vpack.c.b16 %v356, %v355
    %v382 = vpack.c.b16 %v358, %v357
    %v383 = vpack.c.b16 %v360, %v359
    %v384 = vpack.c.b16 %v362, %v361
    %v385 = vpack.c.b16 %v364, %v363
    %v386 = vpack.c.b16 %v366, %v365
    %v387 = vpack.c.b16 %v368, %v367
    %v388 = vpack.c.b16 %v370, %v369
    %v389 = vpack.c.b16 %v372, %v371
    %v390 = vpack.c.b16 %v374, %v373
    %407 = vmatprep.subr.bf16.mxu0 0
    %408 = vmatpush1.bf16.msra.mxu0 %v382
    %409 = vmatprep.subr.bf16.mxu0 0
    %410 = vmatpush1.bf16.msra.mxu0 %v381
    %411 = vmatprep.subr.bf16.mxu0 0
    %412 = vmatpush1.bf16.msra.mxu0 %v380
    %413 = vmatprep.subr.bf16.mxu0 0
    %414 = vmatpush1.bf16.msra.mxu0 %v379
    %415 = vmatprep.subr.bf16.mxu0 0
    %416 = vmatpush1.bf16.msra.mxu0 %v378
    %417 = vmatprep.subr.bf16.mxu0 0
    %418 = vmatpush1.bf16.msra.mxu0 %v377
    %419 = vmatprep.subr.bf16.mxu0 0
    %420 = vmatpush1.bf16.msra.mxu0 %v376
    %421 = vmatprep.subr.bf16.mxu0 0
    %422 = vmatpush1.bf16.msra.mxu0 %v375
    %423 = vmatprep.subr.bf16.mxu0 0
    %424 = vmatpush2.bf16.msra.mxu0 %v390
    %425 = vmatprep.subr.bf16.mxu0 0
    %426 = vmatpush2.bf16.msra.mxu0 %v389
    %427 = vmatprep.subr.bf16.mxu0 0
    %428 = vmatpush2.bf16.msra.mxu0 %v388
    %429 = vmatprep.subr.bf16.mxu0 0
    %430 = vmatpush2.bf16.msra.mxu0 %v387
    %431 = vmatprep.subr.bf16.mxu0 0
    %432 = vmatpush2.bf16.msra.mxu0 %v386
    %433 = vmatprep.subr.bf16.mxu0 0
    %434 = vmatpush2.bf16.msra.mxu0 %v385
    %435 = vmatprep.subr.bf16.mxu0 0
    %436 = vmatpush2.bf16.msra.mxu0 %v384
    %437 = vmatprep.subr.bf16.mxu0 0
    %438 = vmatpush2.bf16.msra.mxu0 %v383
    %439 = vmatprep.mubr.bf16.mxu0 %v278
    %440 = vmatmul.mubr.bf16.gmra.mxu0 %v277
    %v441 = vpop.f32.mrf.mxu0
    %v442 = vadd.f32 0.0, %v441
    %v443 = vpop.f32.mrf.mxu0
    %v444 = vpop.f32.mrf.mxu0
    %v445 = vpop.f32.mrf.mxu0
    %446 = vdwg.mxu0
    %v447 = vld [vmem:[#allocation7] sm:$0x1]
    %v449 = vlaneseq
    %v450 = vshrl.u32 %v449, 7
    %v451 = vsub.s32 0, %v450
    %v452 = vrot.slane %v447, %v451
    %v454 = vmul.f32 %v442, %v452
    %v455 = vld [vmem:[#allocation9] sm:$0x1]
    %v457 = vlaneseq
    %v458 = vshrl.u32 %v457, 7
    %v459 = vsub.s32 0, %v458
    %v460 = vrot.slane %v455, %v459
    %v462 = vadd.f32 %v454, %v460
    %vm463 = vcmp.ge.f32.partialorder %v462, 0.0
    %v464 = vmul.f32 %v462, 0.01
    %v465 = vsel %vm463, %v462, %v464
    %v466 = vpack.c.bf16 %v465, %v465
    %v467 = vld [vmem:[#allocation10] sm:$0xff]
    %v468 = vld [vmem:[#allocation10 + $0x8] sm:$0xff]
    %v469 = vld [vmem:[#allocation10 + $0x10] sm:$0xff]
    %v470 = vld [vmem:[#allocation10 + $0x18] sm:$0xff]
    %v471 = vld [vmem:[#allocation10 + $0x20] sm:$0xff]
    %v472 = vld [vmem:[#allocation10 + $0x28] sm:$0xff]
    %v473 = vld [vmem:[#allocation10 + $0x30] sm:$0xff]
    %v474 = vld [vmem:[#allocation10 + $0x38] sm:$0xff]
    %v475 = vld [vmem:[#allocation10 + $0x40] sm:$0xff]
    %v476 = vld [vmem:[#allocation10 + $0x48] sm:$0xff]
    %v477 = vld [vmem:[#allocation10 + $0x50] sm:$0xff]
    %v478 = vld [vmem:[#allocation10 + $0x58] sm:$0xff]
    %v479 = vld [vmem:[#allocation10 + $0x60] sm:$0xff]
    %v480 = vld [vmem:[#allocation10 + $0x68] sm:$0xff]
    %v481 = vld [vmem:[#allocation10 + $0x70] sm:$0xff]
    %v482 = vld [vmem:[#allocation10 + $0x78] sm:$0xff]
    %v499 = vunpack.c.l.b16 %v467
    %v500 = vunpack.c.h.b16 %v467
    %v501 = vunpack.c.l.b16 %v468
    %v502 = vunpack.c.h.b16 %v468
    %v503 = vunpack.c.l.b16 %v469
    %v504 = vunpack.c.h.b16 %v469
    %v505 = vunpack.c.l.b16 %v470
    %v506 = vunpack.c.h.b16 %v470
    %v507 = vunpack.c.l.b16 %v471
    %v508 = vunpack.c.h.b16 %v471
    %v509 = vunpack.c.l.b16 %v472
    %v510 = vunpack.c.h.b16 %v472
    %v511 = vunpack.c.l.b16 %v473
    %v512 = vunpack.c.h.b16 %v473
    %v513 = vunpack.c.l.b16 %v474
    %v514 = vunpack.c.h.b16 %v474
    %v515 = vunpack.c.l.b16 %v475
    %v516 = vunpack.c.h.b16 %v475
    %v517 = vunpack.c.l.b16 %v476
    %v518 = vunpack.c.h.b16 %v476
    %v519 = vunpack.c.l.b16 %v477
    %v520 = vunpack.c.h.b16 %v477
    %v521 = vunpack.c.l.b16 %v478
    %v522 = vunpack.c.h.b16 %v478
    %v523 = vunpack.c.l.b16 %v479
    %v524 = vunpack.c.h.b16 %v479
    %v525 = vunpack.c.l.b16 %v480
    %v526 = vunpack.c.h.b16 %v480
    %v527 = vunpack.c.l.b16 %v481
    %v528 = vunpack.c.h.b16 %v481
    %v529 = vunpack.c.l.b16 %v482
    %v530 = vunpack.c.h.b16 %v482
    %v531 = vpack.c.b16 %v501, %v499
    %v532 = vpack.c.b16 %v502, %v500
    %v533 = vpack.c.b16 %v505, %v503
    %v534 = vpack.c.b16 %v506, %v504
    %v535 = vpack.c.b16 %v509, %v507
    %v536 = vpack.c.b16 %v510, %v508
    %v537 = vpack.c.b16 %v513, %v511
    %v538 = vpack.c.b16 %v514, %v512
    %v539 = vpack.c.b16 %v517, %v515
    %v540 = vpack.c.b16 %v518, %v516
    %v541 = vpack.c.b16 %v521, %v519
    %v542 = vpack.c.b16 %v522, %v520
    %v543 = vpack.c.b16 %v525, %v523
    %v544 = vpack.c.b16 %v526, %v524
    %v545 = vpack.c.b16 %v529, %v527
    %v546 = vpack.c.b16 %v530, %v528
    %563 = vmatprep.subr.bf16.mxu0 %v546
    %564 = vmatpush1.bf16.msra.mxu0 %v545
    %565 = vmatprep.subr.bf16.mxu0 %v544
    %566 = vmatpush1.bf16.msra.mxu0 %v543
    %567 = vmatprep.subr.bf16.mxu0 %v542
    %568 = vmatpush1.bf16.msra.mxu0 %v541
    %569 = vmatprep.subr.bf16.mxu0 %v540
    %570 = vmatpush1.bf16.msra.mxu0 %v539
    %571 = vmatprep.subr.bf16.mxu0 %v538
    %572 = vmatpush1.bf16.msra.mxu0 %v537
    %573 = vmatprep.subr.bf16.mxu0 %v536
    %574 = vmatpush1.bf16.msra.mxu0 %v535
    %575 = vmatprep.subr.bf16.mxu0 %v534
    %576 = vmatpush1.bf16.msra.mxu0 %v533
    %577 = vmatprep.subr.bf16.mxu0 %v532
    %578 = vmatpush1.bf16.msra.mxu0 %v531
    %579 = vmatprep.subr.bf16.mxu0 0
    %580 = vmatpush2.bf16.msra.mxu0 0
    %581 = vmatprep.subr.bf16.mxu0 0
    %582 = vmatpush2.bf16.msra.mxu0 0
    %583 = vmatprep.subr.bf16.mxu0 0
    %584 = vmatpush2.bf16.msra.mxu0 0
    %585 = vmatprep.subr.bf16.mxu0 0
    %586 = vmatpush2.bf16.msra.mxu0 0
    %587 = vmatprep.subr.bf16.mxu0 0
    %588 = vmatpush2.bf16.msra.mxu0 0
    %589 = vmatprep.subr.bf16.mxu0 0
    %590 = vmatpush2.bf16.msra.mxu0 0
    %591 = vmatprep.subr.bf16.mxu0 0
    %592 = vmatpush2.bf16.msra.mxu0 0
    %593 = vmatprep.subr.bf16.mxu0 0
    %594 = vmatpush2.bf16.msra.mxu0 0
    %595 = vmatprep.mubr.bf16.mxu0 0
    %596 = vmatmul.mubr.bf16.gmra.mxu0 %v466
    %v597 = vpop.f32.mrf.mxu0
    %v598 = vadd.f32 0.0, %v597
    %v599 = vpop.f32.mrf.mxu0
    %v600 = vadd.f32 0.0, %v599
    %v601 = vpop.f32.mrf.mxu0
    %v602 = vpop.f32.mrf.mxu0
    %603 = vdwg.mxu0
    %v604 = vld [vmem:[#allocation12] sm:$0x3]
    %v606 = vlaneseq
    %v607 = vshrl.u32 %v606, 7
    %v608 = vsub.s32 0, %v607
    %v609 = vrot.slane %v604, %v608
    %v610 = vlaneseq
    %v611 = vshrl.u32 %v610, 7
    %v612 = vsub.s32 1, %v611
    %v613 = vrot.slane %v604, %v612
    %v616 = vmul.f32 %v598, %v609
    %v617 = vmul.f32 %v600, %v613
    %v618 = vld [vmem:[#allocation13] sm:$0x3]
    %v620 = vlaneseq
    %v621 = vshrl.u32 %v620, 7
    %v622 = vsub.s32 0, %v621
    %v623 = vrot.slane %v618, %v622
    %v624 = vlaneseq
    %v625 = vshrl.u32 %v624, 7
    %v626 = vsub.s32 1, %v625
    %v627 = vrot.slane %v618, %v626
    %v630 = vadd.f32 %v616, %v623
    %v631 = vadd.f32 %v617, %v627
    %vm632 = vcmp.ge.f32.partialorder %v630, 0.0
    %vm633 = vcmp.ge.f32.partialorder %v631, 0.0
    %v634 = vmul.f32 %v630, 0.01
    %v635 = vmul.f32 %v631, 0.01
    %v636 = vsel %vm632, %v630, %v634
    %v637 = vsel %vm633, %v631, %v635
    %v638 = vpack.c.bf16 %v636, %v636
    %v639 = vpack.c.bf16 %v637, %v637
    %v640 = vld [vmem:[#allocation15] sm:$0xff]
    %v641 = vld [vmem:[#allocation15 + $0x8] sm:$0xff]
    %v642 = vld [vmem:[#allocation15 + $0x10] sm:$0xff]
    %v643 = vld [vmem:[#allocation15 + $0x18] sm:$0xff]
    %v644 = vld [vmem:[#allocation15 + $0x20] sm:$0xff]
    %v645 = vld [vmem:[#allocation15 + $0x28] sm:$0xff]
    %v646 = vld [vmem:[#allocation15 + $0x30] sm:$0xff]
    %v647 = vld [vmem:[#allocation15 + $0x38] sm:$0xff]
    %v648 = vld [vmem:[#allocation15 + $0x40] sm:$0xff]
    %v649 = vld [vmem:[#allocation15 + $0x48] sm:$0xff]
    %v650 = vld [vmem:[#allocation15 + $0x50] sm:$0xff]
    %v651 = vld [vmem:[#allocation15 + $0x58] sm:$0xff]
    %v652 = vld [vmem:[#allocation15 + $0x60] sm:$0xff]
    %v653 = vld [vmem:[#allocation15 + $0x68] sm:$0xff]
    %v654 = vld [vmem:[#allocation15 + $0x70] sm:$0xff]
    %v655 = vld [vmem:[#allocation15 + $0x78] sm:$0xff]
    %v656 = vld [vmem:[#allocation15 + $0x80] sm:$0xff]
    %v657 = vld [vmem:[#allocation15 + $0x88] sm:$0xff]
    %v658 = vld [vmem:[#allocation15 + $0x90] sm:$0xff]
    %v659 = vld [vmem:[#allocation15 + $0x98] sm:$0xff]
    %v660 = vld [vmem:[#allocation15 + $0xa0] sm:$0xff]
    %v661 = vld [vmem:[#allocation15 + $0xa8] sm:$0xff]
    %v662 = vld [vmem:[#allocation15 + $0xb0] sm:$0xff]
    %v663 = vld [vmem:[#allocation15 + $0xb8] sm:$0xff]
    %v664 = vld [vmem:[#allocation15 + $0xc0] sm:$0xff]
    %v665 = vld [vmem:[#allocation15 + $0xc8] sm:$0xff]
    %v666 = vld [vmem:[#allocation15 + $0xd0] sm:$0xff]
    %v667 = vld [vmem:[#allocation15 + $0xd8] sm:$0xff]
    %v668 = vld [vmem:[#allocation15 + $0xe0] sm:$0xff]
    %v669 = vld [vmem:[#allocation15 + $0xe8] sm:$0xff]
    %v670 = vld [vmem:[#allocation15 + $0xf0] sm:$0xff]
    %v671 = vld [vmem:[#allocation15 + $0xf8] sm:$0xff]
    %v672 = vld [vmem:[#allocation15 + $0x100] sm:$0xff]
    %v673 = vld [vmem:[#allocation15 + $0x108] sm:$0xff]
    %v674 = vld [vmem:[#allocation15 + $0x110] sm:$0xff]
    %v675 = vld [vmem:[#allocation15 + $0x118] sm:$0xff]
    %v676 = vld [vmem:[#allocation15 + $0x120] sm:$0xff]
    %v677 = vld [vmem:[#allocation15 + $0x128] sm:$0xff]
    %v678 = vld [vmem:[#allocation15 + $0x130] sm:$0xff]
    %v679 = vld [vmem:[#allocation15 + $0x138] sm:$0xff]
    %v680 = vld [vmem:[#allocation15 + $0x140] sm:$0xff]
    %v681 = vld [vmem:[#allocation15 + $0x148] sm:$0xff]
    %v682 = vld [vmem:[#allocation15 + $0x150] sm:$0xff]
    %v683 = vld [vmem:[#allocation15 + $0x158] sm:$0xff]
    %v684 = vld [vmem:[#allocation15 + $0x160] sm:$0xff]
    %v685 = vld [vmem:[#allocation15 + $0x168] sm:$0xff]
    %v686 = vld [vmem:[#allocation15 + $0x170] sm:$0xff]
    %v687 = vld [vmem:[#allocation15 + $0x178] sm:$0xff]
    %v688 = vld [vmem:[#allocation15 + $0x180] sm:$0xff]
    %v689 = vld [vmem:[#allocation15 + $0x188] sm:$0xff]
    %v690 = vld [vmem:[#allocation15 + $0x190] sm:$0xff]
    %v691 = vld [vmem:[#allocation15 + $0x198] sm:$0xff]
    %v692 = vld [vmem:[#allocation15 + $0x1a0] sm:$0xff]
    %v693 = vld [vmem:[#allocation15 + $0x1a8] sm:$0xff]
    %v694 = vld [vmem:[#allocation15 + $0x1b0] sm:$0xff]
    %v695 = vld [vmem:[#allocation15 + $0x1b8] sm:$0xff]
    %v696 = vld [vmem:[#allocation15 + $0x1c0] sm:$0xff]
    %v697 = vld [vmem:[#allocation15 + $0x1c8] sm:$0xff]
    %v698 = vld [vmem:[#allocation15 + $0x1d0] sm:$0xff]
    %v699 = vld [vmem:[#allocation15 + $0x1d8] sm:$0xff]
    %v700 = vld [vmem:[#allocation15 + $0x1e0] sm:$0xff]
    %v701 = vld [vmem:[#allocation15 + $0x1e8] sm:$0xff]
    %v702 = vld [vmem:[#allocation15 + $0x1f0] sm:$0xff]
    %v703 = vld [vmem:[#allocation15 + $0x1f8] sm:$0xff]
    %v704 = vld [vmem:[#allocation15 + $0x200] sm:$0xff]
    %v705 = vld [vmem:[#allocation15 + $0x208] sm:$0xff]
    %v706 = vld [vmem:[#allocation15 + $0x210] sm:$0xff]
    %v707 = vld [vmem:[#allocation15 + $0x218] sm:$0xff]
    %v708 = vld [vmem:[#allocation15 + $0x220] sm:$0xff]
    %v709 = vld [vmem:[#allocation15 + $0x228] sm:$0xff]
    %v710 = vld [vmem:[#allocation15 + $0x230] sm:$0xff]
    %v711 = vld [vmem:[#allocation15 + $0x238] sm:$0xff]
    %v712 = vld [vmem:[#allocation15 + $0x240] sm:$0xff]
    %v713 = vld [vmem:[#allocation15 + $0x248] sm:$0xff]
    %v714 = vld [vmem:[#allocation15 + $0x250] sm:$0xff]
    %v715 = vld [vmem:[#allocation15 + $0x258] sm:$0xff]
    %v716 = vld [vmem:[#allocation15 + $0x260] sm:$0xff]
    %v717 = vld [vmem:[#allocation15 + $0x268] sm:$0xff]
    %v718 = vld [vmem:[#allocation15 + $0x270] sm:$0xff]
    %v719 = vld [vmem:[#allocation15 + $0x278] sm:$0xff]
    %v720 = vld [vmem:[#allocation15 + $0x280] sm:$0xff]
    %v721 = vld [vmem:[#allocation15 + $0x288] sm:$0xff]
    %v722 = vld [vmem:[#allocation15 + $0x290] sm:$0xff]
    %v723 = vld [vmem:[#allocation15 + $0x298] sm:$0xff]
    %v724 = vld [vmem:[#allocation15 + $0x2a0] sm:$0xff]
    %v725 = vld [vmem:[#allocation15 + $0x2a8] sm:$0xff]
    %v726 = vld [vmem:[#allocation15 + $0x2b0] sm:$0xff]
    %v727 = vld [vmem:[#allocation15 + $0x2b8] sm:$0xff]
    %v728 = vld [vmem:[#allocation15 + $0x2c0] sm:$0xff]
    %v729 = vld [vmem:[#allocation15 + $0x2c8] sm:$0xff]
    %v730 = vld [vmem:[#allocation15 + $0x2d0] sm:$0xff]
    %v731 = vld [vmem:[#allocation15 + $0x2d8] sm:$0xff]
    %v732 = vld [vmem:[#allocation15 + $0x2e0] sm:$0xff]
    %v733 = vld [vmem:[#allocation15 + $0x2e8] sm:$0xff]
    %v734 = vld [vmem:[#allocation15 + $0x2f0] sm:$0xff]
    %v735 = vld [vmem:[#allocation15 + $0x2f8] sm:$0xff]
    %v736 = vld [vmem:[#allocation15 + $0x300] sm:$0xff]
    %v737 = vld [vmem:[#allocation15 + $0x308] sm:$0xff]
    %v738 = vld [vmem:[#allocation15 + $0x310] sm:$0xff]
    %v739 = vld [vmem:[#allocation15 + $0x318] sm:$0xff]
    %v740 = vld [vmem:[#allocation15 + $0x320] sm:$0xff]
    %v741 = vld [vmem:[#allocation15 + $0x328] sm:$0xff]
    %v742 = vld [vmem:[#allocation15 + $0x330] sm:$0xff]
    %v743 = vld [vmem:[#allocation15 + $0x338] sm:$0xff]
    %v744 = vld [vmem:[#allocation15 + $0x340] sm:$0xff]
    %v745 = vld [vmem:[#allocation15 + $0x348] sm:$0xff]
    %v746 = vld [vmem:[#allocation15 + $0x350] sm:$0xff]
    %v747 = vld [vmem:[#allocation15 + $0x358] sm:$0xff]
    %v748 = vld [vmem:[#allocation15 + $0x360] sm:$0xff]
    %v749 = vld [vmem:[#allocation15 + $0x368] sm:$0xff]
    %v750 = vld [vmem:[#allocation15 + $0x370] sm:$0xff]
    %v751 = vld [vmem:[#allocation15 + $0x378] sm:$0xff]
    %v752 = vld [vmem:[#allocation15 + $0x380] sm:$0xff]
    %v753 = vld [vmem:[#allocation15 + $0x388] sm:$0xff]
    %v754 = vld [vmem:[#allocation15 + $0x390] sm:$0xff]
    %v755 = vld [vmem:[#allocation15 + $0x398] sm:$0xff]
    %v756 = vld [vmem:[#allocation15 + $0x3a0] sm:$0xff]
    %v757 = vld [vmem:[#allocation15 + $0x3a8] sm:$0xff]
    %v758 = vld [vmem:[#allocation15 + $0x3b0] sm:$0xff]
    %v759 = vld [vmem:[#allocation15 + $0x3b8] sm:$0xff]
    %v760 = vld [vmem:[#allocation15 + $0x3c0] sm:$0xff]
    %v761 = vld [vmem:[#allocation15 + $0x3c8] sm:$0xff]
    %v762 = vld [vmem:[#allocation15 + $0x3d0] sm:$0xff]
    %v763 = vld [vmem:[#allocation15 + $0x3d8] sm:$0xff]
    %v764 = vld [vmem:[#allocation15 + $0x3e0] sm:$0xff]
    %v765 = vld [vmem:[#allocation15 + $0x3e8] sm:$0xff]
    %v766 = vld [vmem:[#allocation15 + $0x3f0] sm:$0xff]
    %v767 = vld [vmem:[#allocation15 + $0x3f8] sm:$0xff]
    %v768 = vld [vmem:[#allocation15 + $0x400] sm:$0xff]
    %v769 = vld [vmem:[#allocation15 + $0x408] sm:$0xff]
    %v770 = vld [vmem:[#allocation15 + $0x410] sm:$0xff]
    %v771 = vld [vmem:[#allocation15 + $0x418] sm:$0xff]
    %v772 = vld [vmem:[#allocation15 + $0x420] sm:$0xff]
    %v773 = vld [vmem:[#allocation15 + $0x428] sm:$0xff]
    %v774 = vld [vmem:[#allocation15 + $0x430] sm:$0xff]
    %v775 = vld [vmem:[#allocation15 + $0x438] sm:$0xff]
    %v776 = vld [vmem:[#allocation15 + $0x440] sm:$0xff]
    %v777 = vld [vmem:[#allocation15 + $0x448] sm:$0xff]
    %v778 = vld [vmem:[#allocation15 + $0x450] sm:$0xff]
    %v779 = vld [vmem:[#allocation15 + $0x458] sm:$0xff]
    %v780 = vld [vmem:[#allocation15 + $0x460] sm:$0xff]
    %v781 = vld [vmem:[#allocation15 + $0x468] sm:$0xff]
    %v782 = vld [vmem:[#allocation15 + $0x470] sm:$0xff]
    %v783 = vld [vmem:[#allocation15 + $0x478] sm:$0xff]
    %v784 = vld [vmem:[#allocation15 + $0x480] sm:$0xff]
    %v785 = vld [vmem:[#allocation15 + $0x488] sm:$0xff]
    %v786 = vld [vmem:[#allocation15 + $0x490] sm:$0xff]
    %v787 = vld [vmem:[#allocation15 + $0x498] sm:$0xff]
    %v788 = vld [vmem:[#allocation15 + $0x4a0] sm:$0xff]
    %v789 = vld [vmem:[#allocation15 + $0x4a8] sm:$0xff]
    %v790 = vld [vmem:[#allocation15 + $0x4b0] sm:$0xff]
    %v791 = vld [vmem:[#allocation15 + $0x4b8] sm:$0xff]
    %v792 = vld [vmem:[#allocation15 + $0x4c0] sm:$0xff]
    %v793 = vld [vmem:[#allocation15 + $0x4c8] sm:$0xff]
    %v794 = vld [vmem:[#allocation15 + $0x4d0] sm:$0xff]
    %v795 = vld [vmem:[#allocation15 + $0x4d8] sm:$0xff]
    %v796 = vld [vmem:[#allocation15 + $0x4e0] sm:$0xff]
    %v797 = vld [vmem:[#allocation15 + $0x4e8] sm:$0xff]
    %v798 = vld [vmem:[#allocation15 + $0x4f0] sm:$0xff]
    %v799 = vld [vmem:[#allocation15 + $0x4f8] sm:$0xff]
    %v800 = vld [vmem:[#allocation15 + $0x500] sm:$0xff]
    %v801 = vld [vmem:[#allocation15 + $0x508] sm:$0xff]
    %v802 = vld [vmem:[#allocation15 + $0x510] sm:$0xff]
    %v803 = vld [vmem:[#allocation15 + $0x518] sm:$0xff]
    %v804 = vld [vmem:[#allocation15 + $0x520] sm:$0xff]
    %v805 = vld [vmem:[#allocation15 + $0x528] sm:$0xff]
    %v806 = vld [vmem:[#allocation15 + $0x530] sm:$0xff]
    %v807 = vld [vmem:[#allocation15 + $0x538] sm:$0xff]
    %v808 = vld [vmem:[#allocation15 + $0x540] sm:$0xff]
    %v809 = vld [vmem:[#allocation15 + $0x548] sm:$0xff]
    %v810 = vld [vmem:[#allocation15 + $0x550] sm:$0xff]
    %v811 = vld [vmem:[#allocation15 + $0x558] sm:$0xff]
    %v812 = vld [vmem:[#allocation15 + $0x560] sm:$0xff]
    %v813 = vld [vmem:[#allocation15 + $0x568] sm:$0xff]
    %v814 = vld [vmem:[#allocation15 + $0x570] sm:$0xff]
    %v815 = vld [vmem:[#allocation15 + $0x578] sm:$0xff]
    %v816 = vld [vmem:[#allocation15 + $0x580] sm:$0xff]
    %v817 = vld [vmem:[#allocation15 + $0x588] sm:$0xff]
    %v818 = vld [vmem:[#allocation15 + $0x590] sm:$0xff]
    %v819 = vld [vmem:[#allocation15 + $0x598] sm:$0xff]
    %v820 = vld [vmem:[#allocation15 + $0x5a0] sm:$0xff]
    %v821 = vld [vmem:[#allocation15 + $0x5a8] sm:$0xff]
    %v822 = vld [vmem:[#allocation15 + $0x5b0] sm:$0xff]
    %v823 = vld [vmem:[#allocation15 + $0x5b8] sm:$0xff]
    %v824 = vld [vmem:[#allocation15 + $0x5c0] sm:$0xff]
    %v825 = vld [vmem:[#allocation15 + $0x5c8] sm:$0xff]
    %v826 = vld [vmem:[#allocation15 + $0x5d0] sm:$0xff]
    %v827 = vld [vmem:[#allocation15 + $0x5d8] sm:$0xff]
    %v828 = vld [vmem:[#allocation15 + $0x5e0] sm:$0xff]
    %v829 = vld [vmem:[#allocation15 + $0x5e8] sm:$0xff]
    %v830 = vld [vmem:[#allocation15 + $0x5f0] sm:$0xff]
    %v831 = vld [vmem:[#allocation15 + $0x5f8] sm:$0xff]
    %v832 = vld [vmem:[#allocation15 + $0x600] sm:$0xff]
    %v833 = vld [vmem:[#allocation15 + $0x608] sm:$0xff]
    %v834 = vld [vmem:[#allocation15 + $0x610] sm:$0xff]
    %v835 = vld [vmem:[#allocation15 + $0x618] sm:$0xff]
    %v836 = vld [vmem:[#allocation15 + $0x620] sm:$0xff]
    %v837 = vld [vmem:[#allocation15 + $0x628] sm:$0xff]
    %v838 = vld [vmem:[#allocation15 + $0x630] sm:$0xff]
    %v839 = vld [vmem:[#allocation15 + $0x638] sm:$0xff]
    %v840 = vld [vmem:[#allocation15 + $0x640] sm:$0xff]
    %v841 = vld [vmem:[#allocation15 + $0x648] sm:$0xff]
    %v842 = vld [vmem:[#allocation15 + $0x650] sm:$0xff]
    %v843 = vld [vmem:[#allocation15 + $0x658] sm:$0xff]
    %v844 = vld [vmem:[#allocation15 + $0x660] sm:$0xff]
    %v845 = vld [vmem:[#allocation15 + $0x668] sm:$0xff]
    %v846 = vld [vmem:[#allocation15 + $0x670] sm:$0xff]
    %v847 = vld [vmem:[#allocation15 + $0x678] sm:$0xff]
    %v848 = vld [vmem:[#allocation15 + $0x680] sm:$0xff]
    %v849 = vld [vmem:[#allocation15 + $0x688] sm:$0xff]
    %v850 = vld [vmem:[#allocation15 + $0x690] sm:$0xff]
    %v851 = vld [vmem:[#allocation15 + $0x698] sm:$0xff]
    %v852 = vld [vmem:[#allocation15 + $0x6a0] sm:$0xff]
    %v853 = vld [vmem:[#allocation15 + $0x6a8] sm:$0xff]
    %v854 = vld [vmem:[#allocation15 + $0x6b0] sm:$0xff]
    %v855 = vld [vmem:[#allocation15 + $0x6b8] sm:$0xff]
    %v856 = vld [vmem:[#allocation15 + $0x6c0] sm:$0xff]
    %v857 = vld [vmem:[#allocation15 + $0x6c8] sm:$0xff]
    %v858 = vld [vmem:[#allocation15 + $0x6d0] sm:$0xff]
    %v859 = vld [vmem:[#allocation15 + $0x6d8] sm:$0xff]
    %v860 = vld [vmem:[#allocation15 + $0x6e0] sm:$0xff]
    %v861 = vld [vmem:[#allocation15 + $0x6e8] sm:$0xff]
    %v862 = vld [vmem:[#allocation15 + $0x6f0] sm:$0xff]
    %v863 = vld [vmem:[#allocation15 + $0x6f8] sm:$0xff]
    %v864 = vld [vmem:[#allocation15 + $0x700] sm:$0xff]
    %v865 = vld [vmem:[#allocation15 + $0x708] sm:$0xff]
    %v866 = vld [vmem:[#allocation15 + $0x710] sm:$0xff]
    %v867 = vld [vmem:[#allocation15 + $0x718] sm:$0xff]
    %v868 = vld [vmem:[#allocation15 + $0x720] sm:$0xff]
    %v869 = vld [vmem:[#allocation15 + $0x728] sm:$0xff]
    %v870 = vld [vmem:[#allocation15 + $0x730] sm:$0xff]
    %v871 = vld [vmem:[#allocation15 + $0x738] sm:$0xff]
    %v872 = vld [vmem:[#allocation15 + $0x740] sm:$0xff]
    %v873 = vld [vmem:[#allocation15 + $0x748] sm:$0xff]
    %v874 = vld [vmem:[#allocation15 + $0x750] sm:$0xff]
    %v875 = vld [vmem:[#allocation15 + $0x758] sm:$0xff]
    %v876 = vld [vmem:[#allocation15 + $0x760] sm:$0xff]
    %v877 = vld [vmem:[#allocation15 + $0x768] sm:$0xff]
    %v878 = vld [vmem:[#allocation15 + $0x770] sm:$0xff]
    %v879 = vld [vmem:[#allocation15 + $0x778] sm:$0xff]
    %v880 = vld [vmem:[#allocation15 + $0x780] sm:$0xff]
    %v881 = vld [vmem:[#allocation15 + $0x788] sm:$0xff]
    %v882 = vld [vmem:[#allocation15 + $0x790] sm:$0xff]
    %v883 = vld [vmem:[#allocation15 + $0x798] sm:$0xff]
    %v884 = vld [vmem:[#allocation15 + $0x7a0] sm:$0xff]
    %v885 = vld [vmem:[#allocation15 + $0x7a8] sm:$0xff]
    %v886 = vld [vmem:[#allocation15 + $0x7b0] sm:$0xff]
    %v887 = vld [vmem:[#allocation15 + $0x7b8] sm:$0xff]
    %v888 = vld [vmem:[#allocation15 + $0x7c0] sm:$0xff]
    %v889 = vld [vmem:[#allocation15 + $0x7c8] sm:$0xff]
    %v890 = vld [vmem:[#allocation15 + $0x7d0] sm:$0xff]
    %v891 = vld [vmem:[#allocation15 + $0x7d8] sm:$0xff]
    %v892 = vld [vmem:[#allocation15 + $0x7e0] sm:$0xff]
    %v893 = vld [vmem:[#allocation15 + $0x7e8] sm:$0xff]
    %v894 = vld [vmem:[#allocation15 + $0x7f0] sm:$0xff]
    %v895 = vld [vmem:[#allocation15 + $0x7f8] sm:$0xff]
    %v896 = vld [vmem:[#allocation15 + $0x800] sm:$0xff]
    %v897 = vld [vmem:[#allocation15 + $0x808] sm:$0xff]
    %v898 = vld [vmem:[#allocation15 + $0x810] sm:$0xff]
    %v899 = vld [vmem:[#allocation15 + $0x818] sm:$0xff]
    %v900 = vld [vmem:[#allocation15 + $0x820] sm:$0xff]
    %v901 = vld [vmem:[#allocation15 + $0x828] sm:$0xff]
    %v902 = vld [vmem:[#allocation15 + $0x830] sm:$0xff]
    %v903 = vld [vmem:[#allocation15 + $0x838] sm:$0xff]
    %v904 = vld [vmem:[#allocation15 + $0x840] sm:$0xff]
    %v905 = vld [vmem:[#allocation15 + $0x848] sm:$0xff]
    %v906 = vld [vmem:[#allocation15 + $0x850] sm:$0xff]
    %v907 = vld [vmem:[#allocation15 + $0x858] sm:$0xff]
    %v908 = vld [vmem:[#allocation15 + $0x860] sm:$0xff]
    %v909 = vld [vmem:[#allocation15 + $0x868] sm:$0xff]
    %v910 = vld [vmem:[#allocation15 + $0x870] sm:$0xff]
    %v911 = vld [vmem:[#allocation15 + $0x878] sm:$0xff]
    %v912 = vld [vmem:[#allocation15 + $0x880] sm:$0xff]
    %v913 = vld [vmem:[#allocation15 + $0x888] sm:$0xff]
    %v914 = vld [vmem:[#allocation15 + $0x890] sm:$0xff]
    %v915 = vld [vmem:[#allocation15 + $0x898] sm:$0xff]
    %v916 = vld [vmem:[#allocation15 + $0x8a0] sm:$0xff]
    %v917 = vld [vmem:[#allocation15 + $0x8a8] sm:$0xff]
    %v918 = vld [vmem:[#allocation15 + $0x8b0] sm:$0xff]
    %v919 = vld [vmem:[#allocation15 + $0x8b8] sm:$0xff]
    %v920 = vld [vmem:[#allocation15 + $0x8c0] sm:$0xff]
    %v921 = vld [vmem:[#allocation15 + $0x8c8] sm:$0xff]
    %v922 = vld [vmem:[#allocation15 + $0x8d0] sm:$0xff]
    %v923 = vld [vmem:[#allocation15 + $0x8d8] sm:$0xff]
    %v924 = vld [vmem:[#allocation15 + $0x8e0] sm:$0xff]
    %v925 = vld [vmem:[#allocation15 + $0x8e8] sm:$0xff]
    %v926 = vld [vmem:[#allocation15 + $0x8f0] sm:$0xff]
    %v927 = vld [vmem:[#allocation15 + $0x8f8] sm:$0xff]
    %v928 = vld [vmem:[#allocation15 + $0x900] sm:$0xff]
    %v929 = vld [vmem:[#allocation15 + $0x908] sm:$0xff]
    %v930 = vld [vmem:[#allocation15 + $0x910] sm:$0xff]
    %v931 = vld [vmem:[#allocation15 + $0x918] sm:$0xff]
    %v932 = vld [vmem:[#allocation15 + $0x920] sm:$0xff]
    %v933 = vld [vmem:[#allocation15 + $0x928] sm:$0xff]
    %v934 = vld [vmem:[#allocation15 + $0x930] sm:$0xff]
    %v935 = vld [vmem:[#allocation15 + $0x938] sm:$0xff]
    %v936 = vld [vmem:[#allocation15 + $0x940] sm:$0xff]
    %v937 = vld [vmem:[#allocation15 + $0x948] sm:$0xff]
    %v938 = vld [vmem:[#allocation15 + $0x950] sm:$0xff]
    %v939 = vld [vmem:[#allocation15 + $0x958] sm:$0xff]
    %v940 = vld [vmem:[#allocation15 + $0x960] sm:$0xff]
    %v941 = vld [vmem:[#allocation15 + $0x968] sm:$0xff]
    %v942 = vld [vmem:[#allocation15 + $0x970] sm:$0xff]
    %v943 = vld [vmem:[#allocation15 + $0x978] sm:$0xff]
    %v944 = vld [vmem:[#allocation15 + $0x980] sm:$0xff]
    %v945 = vld [vmem:[#allocation15 + $0x988] sm:$0xff]
    %v946 = vld [vmem:[#allocation15 + $0x990] sm:$0xff]
    %v947 = vld [vmem:[#allocation15 + $0x998] sm:$0xff]
    %v948 = vld [vmem:[#allocation15 + $0x9a0] sm:$0xff]
    %v949 = vld [vmem:[#allocation15 + $0x9a8] sm:$0xff]
    %v950 = vld [vmem:[#allocation15 + $0x9b0] sm:$0xff]
    %v951 = vld [vmem:[#allocation15 + $0x9b8] sm:$0xff]
    %v952 = vld [vmem:[#allocation15 + $0x9c0] sm:$0xff]
    %v953 = vld [vmem:[#allocation15 + $0x9c8] sm:$0xff]
    %v954 = vld [vmem:[#allocation15 + $0x9d0] sm:$0xff]
    %v955 = vld [vmem:[#allocation15 + $0x9d8] sm:$0xff]
    %v956 = vld [vmem:[#allocation15 + $0x9e0] sm:$0xff]
    %v957 = vld [vmem:[#allocation15 + $0x9e8] sm:$0xff]
    %v958 = vld [vmem:[#allocation15 + $0x9f0] sm:$0xff]
    %v959 = vld [vmem:[#allocation15 + $0x9f8] sm:$0xff]
    %v960 = vld [vmem:[#allocation15 + $0xa00] sm:$0xff]
    %v961 = vld [vmem:[#allocation15 + $0xa08] sm:$0xff]
    %v962 = vld [vmem:[#allocation15 + $0xa10] sm:$0xff]
    %v963 = vld [vmem:[#allocation15 + $0xa18] sm:$0xff]
    %v964 = vld [vmem:[#allocation15 + $0xa20] sm:$0xff]
    %v965 = vld [vmem:[#allocation15 + $0xa28] sm:$0xff]
    %v966 = vld [vmem:[#allocation15 + $0xa30] sm:$0xff]
    %v967 = vld [vmem:[#allocation15 + $0xa38] sm:$0xff]
    %v968 = vld [vmem:[#allocation15 + $0xa40] sm:$0xff]
    %v969 = vld [vmem:[#allocation15 + $0xa48] sm:$0xff]
    %v970 = vld [vmem:[#allocation15 + $0xa50] sm:$0xff]
    %v971 = vld [vmem:[#allocation15 + $0xa58] sm:$0xff]
    %v972 = vld [vmem:[#allocation15 + $0xa60] sm:$0xff]
    %v973 = vld [vmem:[#allocation15 + $0xa68] sm:$0xff]
    %v974 = vld [vmem:[#allocation15 + $0xa70] sm:$0xff]
    %v975 = vld [vmem:[#allocation15 + $0xa78] sm:$0xff]
    %v976 = vld [vmem:[#allocation15 + $0xa80] sm:$0xff]
    %v977 = vld [vmem:[#allocation15 + $0xa88] sm:$0xff]
    %v978 = vld [vmem:[#allocation15 + $0xa90] sm:$0xff]
    %v979 = vld [vmem:[#allocation15 + $0xa98] sm:$0xff]
    %v980 = vld [vmem:[#allocation15 + $0xaa0] sm:$0xff]
    %v981 = vld [vmem:[#allocation15 + $0xaa8] sm:$0xff]
    %v982 = vld [vmem:[#allocation15 + $0xab0] sm:$0xff]
    %v983 = vld [vmem:[#allocation15 + $0xab8] sm:$0xff]
    %v984 = vld [vmem:[#allocation15 + $0xac0] sm:$0xff]
    %v985 = vld [vmem:[#allocation15 + $0xac8] sm:$0xff]
    %v986 = vld [vmem:[#allocation15 + $0xad0] sm:$0xff]
    %v987 = vld [vmem:[#allocation15 + $0xad8] sm:$0xff]
    %v988 = vld [vmem:[#allocation15 + $0xae0] sm:$0xff]
    %v989 = vld [vmem:[#allocation15 + $0xae8] sm:$0xff]
    %v990 = vld [vmem:[#allocation15 + $0xaf0] sm:$0xff]
    %v991 = vld [vmem:[#allocation15 + $0xaf8] sm:$0xff]
    %v992 = vld [vmem:[#allocation15 + $0xb00] sm:$0xff]
    %v993 = vld [vmem:[#allocation15 + $0xb08] sm:$0xff]
    %v994 = vld [vmem:[#allocation15 + $0xb10] sm:$0xff]
    %v995 = vld [vmem:[#allocation15 + $0xb18] sm:$0xff]
    %v996 = vld [vmem:[#allocation15 + $0xb20] sm:$0xff]
    %v997 = vld [vmem:[#allocation15 + $0xb28] sm:$0xff]
    %v998 = vld [vmem:[#allocation15 + $0xb30] sm:$0xff]
    %v999 = vld [vmem:[#allocation15 + $0xb38] sm:$0xff]
    %v1000 = vld [vmem:[#allocation15 + $0xb40] sm:$0xff]
    %v1001 = vld [vmem:[#allocation15 + $0xb48] sm:$0xff]
    %v1002 = vld [vmem:[#allocation15 + $0xb50] sm:$0xff]
    %v1003 = vld [vmem:[#allocation15 + $0xb58] sm:$0xff]
    %v1004 = vld [vmem:[#allocation15 + $0xb60] sm:$0xff]
    %v1005 = vld [vmem:[#allocation15 + $0xb68] sm:$0xff]
    %v1006 = vld [vmem:[#allocation15 + $0xb70] sm:$0xff]
    %v1007 = vld [vmem:[#allocation15 + $0xb78] sm:$0xff]
    %v1008 = vld [vmem:[#allocation15 + $0xb80] sm:$0xff]
    %v1009 = vld [vmem:[#allocation15 + $0xb88] sm:$0xff]
    %v1010 = vld [vmem:[#allocation15 + $0xb90] sm:$0xff]
    %v1011 = vld [vmem:[#allocation15 + $0xb98] sm:$0xff]
    %v1012 = vld [vmem:[#allocation15 + $0xba0] sm:$0xff]
    %v1013 = vld [vmem:[#allocation15 + $0xba8] sm:$0xff]
    %v1014 = vld [vmem:[#allocation15 + $0xbb0] sm:$0xff]
    %v1015 = vld [vmem:[#allocation15 + $0xbb8] sm:$0xff]
    %v1016 = vld [vmem:[#allocation15 + $0xbc0] sm:$0xff]
    %v1017 = vld [vmem:[#allocation15 + $0xbc8] sm:$0xff]
    %v1018 = vld [vmem:[#allocation15 + $0xbd0] sm:$0xff]
    %v1019 = vld [vmem:[#allocation15 + $0xbd8] sm:$0xff]
    %v1020 = vld [vmem:[#allocation15 + $0xbe0] sm:$0xff]
    %v1021 = vld [vmem:[#allocation15 + $0xbe8] sm:$0xff]
    %v1022 = vld [vmem:[#allocation15 + $0xbf0] sm:$0xff]
    %v1023 = vld [vmem:[#allocation15 + $0xbf8] sm:$0xff]
    %v1024 = vld [vmem:[#allocation15 + $0xc00] sm:$0xff]
    %v1025 = vld [vmem:[#allocation15 + $0xc08] sm:$0xff]
    %v1026 = vld [vmem:[#allocation15 + $0xc10] sm:$0xff]
    %v1027 = vld [vmem:[#allocation15 + $0xc18] sm:$0xff]
    %v1028 = vld [vmem:[#allocation15 + $0xc20] sm:$0xff]
    %v1029 = vld [vmem:[#allocation15 + $0xc28] sm:$0xff]
    %v1030 = vld [vmem:[#allocation15 + $0xc30] sm:$0xff]
    %v1031 = vld [vmem:[#allocation15 + $0xc38] sm:$0xff]
    %v1032 = vld [vmem:[#allocation15 + $0xc40] sm:$0xff]
    %v1033 = vld [vmem:[#allocation15 + $0xc48] sm:$0xff]
    %v1034 = vld [vmem:[#allocation15 + $0xc50] sm:$0xff]
    %v1035 = vld [vmem:[#allocation15 + $0xc58] sm:$0xff]
    %v1036 = vld [vmem:[#allocation15 + $0xc60] sm:$0xff]
    %v1037 = vld [vmem:[#allocation15 + $0xc68] sm:$0xff]
    %v1038 = vld [vmem:[#allocation15 + $0xc70] sm:$0xff]
    %v1039 = vld [vmem:[#allocation15 + $0xc78] sm:$0xff]
    %v1040 = vld [vmem:[#allocation15 + $0xc80] sm:$0xff]
    %v1041 = vld [vmem:[#allocation15 + $0xc88] sm:$0xff]
    %v1042 = vld [vmem:[#allocation15 + $0xc90] sm:$0xff]
    %v1043 = vld [vmem:[#allocation15 + $0xc98] sm:$0xff]
    %v1044 = vld [vmem:[#allocation15 + $0xca0] sm:$0xff]
    %v1045 = vld [vmem:[#allocation15 + $0xca8] sm:$0xff]
    %v1046 = vld [vmem:[#allocation15 + $0xcb0] sm:$0xff]
    %v1047 = vld [vmem:[#allocation15 + $0xcb8] sm:$0xff]
    %v1048 = vld [vmem:[#allocation15 + $0xcc0] sm:$0xff]
    %v1049 = vld [vmem:[#allocation15 + $0xcc8] sm:$0xff]
    %v1050 = vld [vmem:[#allocation15 + $0xcd0] sm:$0xff]
    %v1051 = vld [vmem:[#allocation15 + $0xcd8] sm:$0xff]
    %v1052 = vld [vmem:[#allocation15 + $0xce0] sm:$0xff]
    %v1053 = vld [vmem:[#allocation15 + $0xce8] sm:$0xff]
    %v1054 = vld [vmem:[#allocation15 + $0xcf0] sm:$0xff]
    %v1055 = vld [vmem:[#allocation15 + $0xcf8] sm:$0xff]
    %v1056 = vld [vmem:[#allocation15 + $0xd00] sm:$0xff]
    %v1057 = vld [vmem:[#allocation15 + $0xd08] sm:$0xff]
    %v1058 = vld [vmem:[#allocation15 + $0xd10] sm:$0xff]
    %v1059 = vld [vmem:[#allocation15 + $0xd18] sm:$0xff]
    %v1060 = vld [vmem:[#allocation15 + $0xd20] sm:$0xff]
    %v1061 = vld [vmem:[#allocation15 + $0xd28] sm:$0xff]
    %v1062 = vld [vmem:[#allocation15 + $0xd30] sm:$0xff]
    %v1063 = vld [vmem:[#allocation15 + $0xd38] sm:$0xff]
    %v1064 = vld [vmem:[#allocation15 + $0xd40] sm:$0xff]
    %v1065 = vld [vmem:[#allocation15 + $0xd48] sm:$0xff]
    %v1066 = vld [vmem:[#allocation15 + $0xd50] sm:$0xff]
    %v1067 = vld [vmem:[#allocation15 + $0xd58] sm:$0xff]
    %v1068 = vld [vmem:[#allocation15 + $0xd60] sm:$0xff]
    %v1069 = vld [vmem:[#allocation15 + $0xd68] sm:$0xff]
    %v1070 = vld [vmem:[#allocation15 + $0xd70] sm:$0xff]
    %v1071 = vld [vmem:[#allocation15 + $0xd78] sm:$0xff]
    %v1072 = vld [vmem:[#allocation15 + $0xd80] sm:$0xff]
    %v1073 = vld [vmem:[#allocation15 + $0xd88] sm:$0xff]
    %v1074 = vld [vmem:[#allocation15 + $0xd90] sm:$0xff]
    %v1075 = vld [vmem:[#allocation15 + $0xd98] sm:$0xff]
    %v1076 = vld [vmem:[#allocation15 + $0xda0] sm:$0xff]
    %v1077 = vld [vmem:[#allocation15 + $0xda8] sm:$0xff]
    %v1078 = vld [vmem:[#allocation15 + $0xdb0] sm:$0xff]
    %v1079 = vld [vmem:[#allocation15 + $0xdb8] sm:$0xff]
    %v1080 = vld [vmem:[#allocation15 + $0xdc0] sm:$0xff]
    %v1081 = vld [vmem:[#allocation15 + $0xdc8] sm:$0xff]
    %v1082 = vld [vmem:[#allocation15 + $0xdd0] sm:$0xff]
    %v1083 = vld [vmem:[#allocation15 + $0xdd8] sm:$0xff]
    %v1084 = vld [vmem:[#allocation15 + $0xde0] sm:$0xff]
    %v1085 = vld [vmem:[#allocation15 + $0xde8] sm:$0xff]
    %v1086 = vld [vmem:[#allocation15 + $0xdf0] sm:$0xff]
    %v1087 = vld [vmem:[#allocation15 + $0xdf8] sm:$0xff]
    %v1088 = vld [vmem:[#allocation15 + $0xe00] sm:$0xff]
    %v1089 = vld [vmem:[#allocation15 + $0xe08] sm:$0xff]
    %v1090 = vld [vmem:[#allocation15 + $0xe10] sm:$0xff]
    %v1091 = vld [vmem:[#allocation15 + $0xe18] sm:$0xff]
    %v1092 = vld [vmem:[#allocation15 + $0xe20] sm:$0xff]
    %v1093 = vld [vmem:[#allocation15 + $0xe28] sm:$0xff]
    %v1094 = vld [vmem:[#allocation15 + $0xe30] sm:$0xff]
    %v1095 = vld [vmem:[#allocation15 + $0xe38] sm:$0xff]
    %v1096 = vld [vmem:[#allocation15 + $0xe40] sm:$0xff]
    %v1097 = vld [vmem:[#allocation15 + $0xe48] sm:$0xff]
    %v1098 = vld [vmem:[#allocation15 + $0xe50] sm:$0xff]
    %v1099 = vld [vmem:[#allocation15 + $0xe58] sm:$0xff]
    %v1100 = vld [vmem:[#allocation15 + $0xe60] sm:$0xff]
    %v1101 = vld [vmem:[#allocation15 + $0xe68] sm:$0xff]
    %v1102 = vld [vmem:[#allocation15 + $0xe70] sm:$0xff]
    %v1103 = vld [vmem:[#allocation15 + $0xe78] sm:$0xff]
    %v1104 = vld [vmem:[#allocation15 + $0xe80] sm:$0xff]
    %v1105 = vld [vmem:[#allocation15 + $0xe88] sm:$0xff]
    %v1106 = vld [vmem:[#allocation15 + $0xe90] sm:$0xff]
    %v1107 = vld [vmem:[#allocation15 + $0xe98] sm:$0xff]
    %v1108 = vld [vmem:[#allocation15 + $0xea0] sm:$0xff]
    %v1109 = vld [vmem:[#allocation15 + $0xea8] sm:$0xff]
    %v1110 = vld [vmem:[#allocation15 + $0xeb0] sm:$0xff]
    %v1111 = vld [vmem:[#allocation15 + $0xeb8] sm:$0xff]
    %v1112 = vld [vmem:[#allocation15 + $0xec0] sm:$0xff]
    %v1113 = vld [vmem:[#allocation15 + $0xec8] sm:$0xff]
    %v1114 = vld [vmem:[#allocation15 + $0xed0] sm:$0xff]
    %v1115 = vld [vmem:[#allocation15 + $0xed8] sm:$0xff]
    %v1116 = vld [vmem:[#allocation15 + $0xee0] sm:$0xff]
    %v1117 = vld [vmem:[#allocation15 + $0xee8] sm:$0xff]
    %v1118 = vld [vmem:[#allocation15 + $0xef0] sm:$0xff]
    %v1119 = vld [vmem:[#allocation15 + $0xef8] sm:$0xff]
    %v1120 = vld [vmem:[#allocation15 + $0xf00] sm:$0xff]
    %v1121 = vld [vmem:[#allocation15 + $0xf08] sm:$0xff]
    %v1122 = vld [vmem:[#allocation15 + $0xf10] sm:$0xff]
    %v1123 = vld [vmem:[#allocation15 + $0xf18] sm:$0xff]
    %v1124 = vld [vmem:[#allocation15 + $0xf20] sm:$0xff]
    %v1125 = vld [vmem:[#allocation15 + $0xf28] sm:$0xff]
    %v1126 = vld [vmem:[#allocation15 + $0xf30] sm:$0xff]
    %v1127 = vld [vmem:[#allocation15 + $0xf38] sm:$0xff]
    %v1128 = vld [vmem:[#allocation15 + $0xf40] sm:$0xff]
    %v1129 = vld [vmem:[#allocation15 + $0xf48] sm:$0xff]
    %v1130 = vld [vmem:[#allocation15 + $0xf50] sm:$0xff]
    %v1131 = vld [vmem:[#allocation15 + $0xf58] sm:$0xff]
    %v1132 = vld [vmem:[#allocation15 + $0xf60] sm:$0xff]
    %v1133 = vld [vmem:[#allocation15 + $0xf68] sm:$0xff]
    %v1134 = vld [vmem:[#allocation15 + $0xf70] sm:$0xff]
    %v1135 = vld [vmem:[#allocation15 + $0xf78] sm:$0xff]
    %v1136 = vld [vmem:[#allocation15 + $0xf80] sm:$0xff]
    %v1137 = vld [vmem:[#allocation15 + $0xf88] sm:$0xff]
    %v1138 = vld [vmem:[#allocation15 + $0xf90] sm:$0xff]
    %v1139 = vld [vmem:[#allocation15 + $0xf98] sm:$0xff]
    %v1140 = vld [vmem:[#allocation15 + $0xfa0] sm:$0xff]
    %v1141 = vld [vmem:[#allocation15 + $0xfa8] sm:$0xff]
    %v1142 = vld [vmem:[#allocation15 + $0xfb0] sm:$0xff]
    %v1143 = vld [vmem:[#allocation15 + $0xfb8] sm:$0xff]
    %v1144 = vld [vmem:[#allocation15 + $0xfc0] sm:$0xff]
    %v1145 = vld [vmem:[#allocation15 + $0xfc8] sm:$0xff]
    %v1146 = vld [vmem:[#allocation15 + $0xfd0] sm:$0xff]
    %v1147 = vld [vmem:[#allocation15 + $0xfd8] sm:$0xff]
    %v1148 = vld [vmem:[#allocation15 + $0xfe0] sm:$0xff]
    %v1149 = vld [vmem:[#allocation15 + $0xfe8] sm:$0xff]
    %v1150 = vld [vmem:[#allocation15 + $0xff0] sm:$0xff]
    %v1151 = vld [vmem:[#allocation15 + $0xff8] sm:$0xff]
    %v1152 = vld [vmem:[#allocation15 + $0x1000] sm:$0xff]
    %v1153 = vld [vmem:[#allocation15 + $0x1008] sm:$0xff]
    %v1154 = vld [vmem:[#allocation15 + $0x1010] sm:$0xff]
    %v1155 = vld [vmem:[#allocation15 + $0x1018] sm:$0xff]
    %v1156 = vld [vmem:[#allocation15 + $0x1020] sm:$0xff]
    %v1157 = vld [vmem:[#allocation15 + $0x1028] sm:$0xff]
    %v1158 = vld [vmem:[#allocation15 + $0x1030] sm:$0xff]
    %v1159 = vld [vmem:[#allocation15 + $0x1038] sm:$0xff]
    %v1160 = vld [vmem:[#allocation15 + $0x1040] sm:$0xff]
    %v1161 = vld [vmem:[#allocation15 + $0x1048] sm:$0xff]
    %v1162 = vld [vmem:[#allocation15 + $0x1050] sm:$0xff]
    %v1163 = vld [vmem:[#allocation15 + $0x1058] sm:$0xff]
    %v1164 = vld [vmem:[#allocation15 + $0x1060] sm:$0xff]
    %v1165 = vld [vmem:[#allocation15 + $0x1068] sm:$0xff]
    %v1166 = vld [vmem:[#allocation15 + $0x1070] sm:$0xff]
    %v1167 = vld [vmem:[#allocation15 + $0x1078] sm:$0xff]
    %v1168 = vld [vmem:[#allocation15 + $0x1080] sm:$0xff]
    %v1169 = vld [vmem:[#allocation15 + $0x1088] sm:$0xff]
    %v1170 = vld [vmem:[#allocation15 + $0x1090] sm:$0xff]
    %v1171 = vld [vmem:[#allocation15 + $0x1098] sm:$0xff]
    %v1172 = vld [vmem:[#allocation15 + $0x10a0] sm:$0xff]
    %v1173 = vld [vmem:[#allocation15 + $0x10a8] sm:$0xff]
    %v1174 = vld [vmem:[#allocation15 + $0x10b0] sm:$0xff]
    %v1175 = vld [vmem:[#allocation15 + $0x10b8] sm:$0xff]
    %v1176 = vld [vmem:[#allocation15 + $0x10c0] sm:$0xff]
    %v1177 = vld [vmem:[#allocation15 + $0x10c8] sm:$0xff]
    %v1178 = vld [vmem:[#allocation15 + $0x10d0] sm:$0xff]
    %v1179 = vld [vmem:[#allocation15 + $0x10d8] sm:$0xff]
    %v1180 = vld [vmem:[#allocation15 + $0x10e0] sm:$0xff]
    %v1181 = vld [vmem:[#allocation15 + $0x10e8] sm:$0xff]
    %v1182 = vld [vmem:[#allocation15 + $0x10f0] sm:$0xff]
    %v1183 = vld [vmem:[#allocation15 + $0x10f8] sm:$0xff]
    %v1184 = vld [vmem:[#allocation15 + $0x1100] sm:$0xff]
    %v1185 = vld [vmem:[#allocation15 + $0x1108] sm:$0xff]
    %v1186 = vld [vmem:[#allocation15 + $0x1110] sm:$0xff]
    %v1187 = vld [vmem:[#allocation15 + $0x1118] sm:$0xff]
    %v1188 = vld [vmem:[#allocation15 + $0x1120] sm:$0xff]
    %v1189 = vld [vmem:[#allocation15 + $0x1128] sm:$0xff]
    %v1190 = vld [vmem:[#allocation15 + $0x1130] sm:$0xff]
    %v1191 = vld [vmem:[#allocation15 + $0x1138] sm:$0xff]
    %v1192 = vld [vmem:[#allocation15 + $0x1140] sm:$0xff]
    %v1193 = vld [vmem:[#allocation15 + $0x1148] sm:$0xff]
    %v1194 = vld [vmem:[#allocation15 + $0x1150] sm:$0xff]
    %v1195 = vld [vmem:[#allocation15 + $0x1158] sm:$0xff]
    %v1196 = vld [vmem:[#allocation15 + $0x1160] sm:$0xff]
    %v1197 = vld [vmem:[#allocation15 + $0x1168] sm:$0xff]
    %v1198 = vld [vmem:[#allocation15 + $0x1170] sm:$0xff]
    %v1199 = vld [vmem:[#allocation15 + $0x1178] sm:$0xff]
    %v1200 = vld [vmem:[#allocation15 + $0x1180] sm:$0xff]
    %v1201 = vld [vmem:[#allocation15 + $0x1188] sm:$0xff]
    %v1202 = vld [vmem:[#allocation15 + $0x1190] sm:$0xff]
    %v1203 = vld [vmem:[#allocation15 + $0x1198] sm:$0xff]
    %v1204 = vld [vmem:[#allocation15 + $0x11a0] sm:$0xff]
    %v1205 = vld [vmem:[#allocation15 + $0x11a8] sm:$0xff]
    %v1206 = vld [vmem:[#allocation15 + $0x11b0] sm:$0xff]
    %v1207 = vld [vmem:[#allocation15 + $0x11b8] sm:$0xff]
    %v1208 = vld [vmem:[#allocation15 + $0x11c0] sm:$0xff]
    %v1209 = vld [vmem:[#allocation15 + $0x11c8] sm:$0xff]
    %v1210 = vld [vmem:[#allocation15 + $0x11d0] sm:$0xff]
    %v1211 = vld [vmem:[#allocation15 + $0x11d8] sm:$0xff]
    %v1212 = vld [vmem:[#allocation15 + $0x11e0] sm:$0xff]
    %v1213 = vld [vmem:[#allocation15 + $0x11e8] sm:$0xff]
    %v1214 = vld [vmem:[#allocation15 + $0x11f0] sm:$0xff]
    %v1215 = vld [vmem:[#allocation15 + $0x11f8] sm:$0xff]
    %v1792 = vunpack.c.l.b16 %v640
    %v1793 = vunpack.c.h.b16 %v640
    %v1794 = vunpack.c.l.b16 %v641
    %v1795 = vunpack.c.h.b16 %v641
    %v1796 = vunpack.c.l.b16 %v642
    %v1797 = vunpack.c.h.b16 %v642
    %v1798 = vunpack.c.l.b16 %v643
    %v1799 = vunpack.c.h.b16 %v643
    %v1800 = vunpack.c.l.b16 %v644
    %v1801 = vunpack.c.h.b16 %v644
    %v1802 = vunpack.c.l.b16 %v645
    %v1803 = vunpack.c.h.b16 %v645
    %v1804 = vunpack.c.l.b16 %v646
    %v1805 = vunpack.c.h.b16 %v646
    %v1806 = vunpack.c.l.b16 %v647
    %v1807 = vunpack.c.h.b16 %v647
    %v1808 = vunpack.c.l.b16 %v648
    %v1809 = vunpack.c.h.b16 %v648
    %v1810 = vunpack.c.l.b16 %v649
    %v1811 = vunpack.c.h.b16 %v649
    %v1812 = vunpack.c.l.b16 %v650
    %v1813 = vunpack.c.h.b16 %v650
    %v1814 = vunpack.c.l.b16 %v651
    %v1815 = vunpack.c.h.b16 %v651
    %v1816 = vunpack.c.l.b16 %v652
    %v1817 = vunpack.c.h.b16 %v652
    %v1818 = vunpack.c.l.b16 %v653
    %v1819 = vunpack.c.h.b16 %v653
    %v1820 = vunpack.c.l.b16 %v654
    %v1821 = vunpack.c.h.b16 %v654
    %v1822 = vunpack.c.l.b16 %v655
    %v1823 = vunpack.c.h.b16 %v655
    %v1824 = vunpack.c.l.b16 %v656
    %v1825 = vunpack.c.h.b16 %v656
    %v1826 = vunpack.c.l.b16 %v657
    %v1827 = vunpack.c.h.b16 %v657
    %v1828 = vunpack.c.l.b16 %v658
    %v1829 = vunpack.c.h.b16 %v658
    %v1830 = vunpack.c.l.b16 %v659
    %v1831 = vunpack.c.h.b16 %v659
    %v1832 = vunpack.c.l.b16 %v660
    %v1833 = vunpack.c.h.b16 %v660
    %v1834 = vunpack.c.l.b16 %v661
    %v1835 = vunpack.c.h.b16 %v661
    %v1836 = vunpack.c.l.b16 %v662
    %v1837 = vunpack.c.h.b16 %v662
    %v1838 = vunpack.c.l.b16 %v663
    %v1839 = vunpack.c.h.b16 %v663
    %v1840 = vunpack.c.l.b16 %v664
    %v1841 = vunpack.c.h.b16 %v664
    %v1842 = vunpack.c.l.b16 %v665
    %v1843 = vunpack.c.h.b16 %v665
    %v1844 = vunpack.c.l.b16 %v666
    %v1845 = vunpack.c.h.b16 %v666
    %v1846 = vunpack.c.l.b16 %v667
    %v1847 = vunpack.c.h.b16 %v667
    %v1848 = vunpack.c.l.b16 %v668
    %v1849 = vunpack.c.h.b16 %v668
    %v1850 = vunpack.c.l.b16 %v669
    %v1851 = vunpack.c.h.b16 %v669
    %v1852 = vunpack.c.l.b16 %v670
    %v1853 = vunpack.c.h.b16 %v670
    %v1854 = vunpack.c.l.b16 %v671
    %v1855 = vunpack.c.h.b16 %v671
    %v1856 = vunpack.c.l.b16 %v672
    %v1857 = vunpack.c.h.b16 %v672
    %v1858 = vunpack.c.l.b16 %v673
    %v1859 = vunpack.c.h.b16 %v673
    %v1860 = vunpack.c.l.b16 %v674
    %v1861 = vunpack.c.h.b16 %v674
    %v1862 = vunpack.c.l.b16 %v675
    %v1863 = vunpack.c.h.b16 %v675
    %v1864 = vunpack.c.l.b16 %v676
    %v1865 = vunpack.c.h.b16 %v676
    %v1866 = vunpack.c.l.b16 %v677
    %v1867 = vunpack.c.h.b16 %v677
    %v1868 = vunpack.c.l.b16 %v678
    %v1869 = vunpack.c.h.b16 %v678
    %v1870 = vunpack.c.l.b16 %v679
    %v1871 = vunpack.c.h.b16 %v679
    %v1872 = vunpack.c.l.b16 %v680
    %v1873 = vunpack.c.h.b16 %v680
    %v1874 = vunpack.c.l.b16 %v681
    %v1875 = vunpack.c.h.b16 %v681
    %v1876 = vunpack.c.l.b16 %v682
    %v1877 = vunpack.c.h.b16 %v682
    %v1878 = vunpack.c.l.b16 %v683
    %v1879 = vunpack.c.h.b16 %v683
    %v1880 = vunpack.c.l.b16 %v684
    %v1881 = vunpack.c.h.b16 %v684
    %v1882 = vunpack.c.l.b16 %v685
    %v1883 = vunpack.c.h.b16 %v685
    %v1884 = vunpack.c.l.b16 %v686
    %v1885 = vunpack.c.h.b16 %v686
    %v1886 = vunpack.c.l.b16 %v687
    %v1887 = vunpack.c.h.b16 %v687
    %v1888 = vunpack.c.l.b16 %v688
    %v1889 = vunpack.c.h.b16 %v688
    %v1890 = vunpack.c.l.b16 %v689
    %v1891 = vunpack.c.h.b16 %v689
    %v1892 = vunpack.c.l.b16 %v690
    %v1893 = vunpack.c.h.b16 %v690
    %v1894 = vunpack.c.l.b16 %v691
    %v1895 = vunpack.c.h.b16 %v691
    %v1896 = vunpack.c.l.b16 %v692
    %v1897 = vunpack.c.h.b16 %v692
    %v1898 = vunpack.c.l.b16 %v693
    %v1899 = vunpack.c.h.b16 %v693
    %v1900 = vunpack.c.l.b16 %v694
    %v1901 = vunpack.c.h.b16 %v694
    %v1902 = vunpack.c.l.b16 %v695
    %v1903 = vunpack.c.h.b16 %v695
    %v1904 = vunpack.c.l.b16 %v696
    %v1905 = vunpack.c.h.b16 %v696
    %v1906 = vunpack.c.l.b16 %v697
    %v1907 = vunpack.c.h.b16 %v697
    %v1908 = vunpack.c.l.b16 %v698
    %v1909 = vunpack.c.h.b16 %v698
    %v1910 = vunpack.c.l.b16 %v699
    %v1911 = vunpack.c.h.b16 %v699
    %v1912 = vunpack.c.l.b16 %v700
    %v1913 = vunpack.c.h.b16 %v700
    %v1914 = vunpack.c.l.b16 %v701
    %v1915 = vunpack.c.h.b16 %v701
    %v1916 = vunpack.c.l.b16 %v702
    %v1917 = vunpack.c.h.b16 %v702
    %v1918 = vunpack.c.l.b16 %v703
    %v1919 = vunpack.c.h.b16 %v703
    %v1920 = vunpack.c.l.b16 %v704
    %v1921 = vunpack.c.h.b16 %v704
    %v1922 = vunpack.c.l.b16 %v705
    %v1923 = vunpack.c.h.b16 %v705
    %v1924 = vunpack.c.l.b16 %v706
    %v1925 = vunpack.c.h.b16 %v706
    %v1926 = vunpack.c.l.b16 %v707
    %v1927 = vunpack.c.h.b16 %v707
    %v1928 = vunpack.c.l.b16 %v708
    %v1929 = vunpack.c.h.b16 %v708
    %v1930 = vunpack.c.l.b16 %v709
    %v1931 = vunpack.c.h.b16 %v709
    %v1932 = vunpack.c.l.b16 %v710
    %v1933 = vunpack.c.h.b16 %v710
    %v1934 = vunpack.c.l.b16 %v711
    %v1935 = vunpack.c.h.b16 %v711
    %v1936 = vunpack.c.l.b16 %v712
    %v1937 = vunpack.c.h.b16 %v712
    %v1938 = vunpack.c.l.b16 %v713
    %v1939 = vunpack.c.h.b16 %v713
    %v1940 = vunpack.c.l.b16 %v714
    %v1941 = vunpack.c.h.b16 %v714
    %v1942 = vunpack.c.l.b16 %v715
    %v1943 = vunpack.c.h.b16 %v715
    %v1944 = vunpack.c.l.b16 %v716
    %v1945 = vunpack.c.h.b16 %v716
    %v1946 = vunpack.c.l.b16 %v717
    %v1947 = vunpack.c.h.b16 %v717
    %v1948 = vunpack.c.l.b16 %v718
    %v1949 = vunpack.c.h.b16 %v718
    %v1950 = vunpack.c.l.b16 %v719
    %v1951 = vunpack.c.h.b16 %v719
    %v1952 = vunpack.c.l.b16 %v720
    %v1953 = vunpack.c.h.b16 %v720
    %v1954 = vunpack.c.l.b16 %v721
    %v1955 = vunpack.c.h.b16 %v721
    %v1956 = vunpack.c.l.b16 %v722
    %v1957 = vunpack.c.h.b16 %v722
    %v1958 = vunpack.c.l.b16 %v723
    %v1959 = vunpack.c.h.b16 %v723
    %v1960 = vunpack.c.l.b16 %v724
    %v1961 = vunpack.c.h.b16 %v724
    %v1962 = vunpack.c.l.b16 %v725
    %v1963 = vunpack.c.h.b16 %v725
    %v1964 = vunpack.c.l.b16 %v726
    %v1965 = vunpack.c.h.b16 %v726
    %v1966 = vunpack.c.l.b16 %v727
    %v1967 = vunpack.c.h.b16 %v727
    %v1968 = vunpack.c.l.b16 %v728
    %v1969 = vunpack.c.h.b16 %v728
    %v1970 = vunpack.c.l.b16 %v729
    %v1971 = vunpack.c.h.b16 %v729
    %v1972 = vunpack.c.l.b16 %v730
    %v1973 = vunpack.c.h.b16 %v730
    %v1974 = vunpack.c.l.b16 %v731
    %v1975 = vunpack.c.h.b16 %v731
    %v1976 = vunpack.c.l.b16 %v732
    %v1977 = vunpack.c.h.b16 %v732
    %v1978 = vunpack.c.l.b16 %v733
    %v1979 = vunpack.c.h.b16 %v733
    %v1980 = vunpack.c.l.b16 %v734
    %v1981 = vunpack.c.h.b16 %v734
    %v1982 = vunpack.c.l.b16 %v735
    %v1983 = vunpack.c.h.b16 %v735
    %v1984 = vunpack.c.l.b16 %v736
    %v1985 = vunpack.c.h.b16 %v736
    %v1986 = vunpack.c.l.b16 %v737
    %v1987 = vunpack.c.h.b16 %v737
    %v1988 = vunpack.c.l.b16 %v738
    %v1989 = vunpack.c.h.b16 %v738
    %v1990 = vunpack.c.l.b16 %v739
    %v1991 = vunpack.c.h.b16 %v739
    %v1992 = vunpack.c.l.b16 %v740
    %v1993 = vunpack.c.h.b16 %v740
    %v1994 = vunpack.c.l.b16 %v741
    %v1995 = vunpack.c.h.b16 %v741
    %v1996 = vunpack.c.l.b16 %v742
    %v1997 = vunpack.c.h.b16 %v742
    %v1998 = vunpack.c.l.b16 %v743
    %v1999 = vunpack.c.h.b16 %v743
    %v2000 = vunpack.c.l.b16 %v744
    %v2001 = vunpack.c.h.b16 %v744
    %v2002 = vunpack.c.l.b16 %v745
    %v2003 = vunpack.c.h.b16 %v745
    %v2004 = vunpack.c.l.b16 %v746
    %v2005 = vunpack.c.h.b16 %v746
    %v2006 = vunpack.c.l.b16 %v747
    %v2007 = vunpack.c.h.b16 %v747
    %v2008 = vunpack.c.l.b16 %v748
    %v2009 = vunpack.c.h.b16 %v748
    %v2010 = vunpack.c.l.b16 %v749
    %v2011 = vunpack.c.h.b16 %v749
    %v2012 = vunpack.c.l.b16 %v750
    %v2013 = vunpack.c.h.b16 %v750
    %v2014 = vunpack.c.l.b16 %v751
    %v2015 = vunpack.c.h.b16 %v751
    %v2016 = vunpack.c.l.b16 %v752
    %v2017 = vunpack.c.h.b16 %v752
    %v2018 = vunpack.c.l.b16 %v753
    %v2019 = vunpack.c.h.b16 %v753
    %v2020 = vunpack.c.l.b16 %v754
    %v2021 = vunpack.c.h.b16 %v754
    %v2022 = vunpack.c.l.b16 %v755
    %v2023 = vunpack.c.h.b16 %v755
    %v2024 = vunpack.c.l.b16 %v756
    %v2025 = vunpack.c.h.b16 %v756
    %v2026 = vunpack.c.l.b16 %v757
    %v2027 = vunpack.c.h.b16 %v757
    %v2028 = vunpack.c.l.b16 %v758
    %v2029 = vunpack.c.h.b16 %v758
    %v2030 = vunpack.c.l.b16 %v759
    %v2031 = vunpack.c.h.b16 %v759
    %v2032 = vunpack.c.l.b16 %v760
    %v2033 = vunpack.c.h.b16 %v760
    %v2034 = vunpack.c.l.b16 %v761
    %v2035 = vunpack.c.h.b16 %v761
    %v2036 = vunpack.c.l.b16 %v762
    %v2037 = vunpack.c.h.b16 %v762
    %v2038 = vunpack.c.l.b16 %v763
    %v2039 = vunpack.c.h.b16 %v763
    %v2040 = vunpack.c.l.b16 %v764
    %v2041 = vunpack.c.h.b16 %v764
    %v2042 = vunpack.c.l.b16 %v765
    %v2043 = vunpack.c.h.b16 %v765
    %v2044 = vunpack.c.l.b16 %v766
    %v2045 = vunpack.c.h.b16 %v766
    %v2046 = vunpack.c.l.b16 %v767
    %v2047 = vunpack.c.h.b16 %v767
    %v2048 = vunpack.c.l.b16 %v768
    %v2049 = vunpack.c.h.b16 %v768
    %v2050 = vunpack.c.l.b16 %v769
    %v2051 = vunpack.c.h.b16 %v769
    %v2052 = vunpack.c.l.b16 %v770
    %v2053 = vunpack.c.h.b16 %v770
    %v2054 = vunpack.c.l.b16 %v771
    %v2055 = vunpack.c.h.b16 %v771
    %v2056 = vunpack.c.l.b16 %v772
    %v2057 = vunpack.c.h.b16 %v772
    %v2058 = vunpack.c.l.b16 %v773
    %v2059 = vunpack.c.h.b16 %v773
    %v2060 = vunpack.c.l.b16 %v774
    %v2061 = vunpack.c.h.b16 %v774
    %v2062 = vunpack.c.l.b16 %v775
    %v2063 = vunpack.c.h.b16 %v775
    %v2064 = vunpack.c.l.b16 %v776
    %v2065 = vunpack.c.h.b16 %v776
    %v2066 = vunpack.c.l.b16 %v777
    %v2067 = vunpack.c.h.b16 %v777
    %v2068 = vunpack.c.l.b16 %v778
    %v2069 = vunpack.c.h.b16 %v778
    %v2070 = vunpack.c.l.b16 %v779
    %v2071 = vunpack.c.h.b16 %v779
    %v2072 = vunpack.c.l.b16 %v780
    %v2073 = vunpack.c.h.b16 %v780
    %v2074 = vunpack.c.l.b16 %v781
    %v2075 = vunpack.c.h.b16 %v781
    %v2076 = vunpack.c.l.b16 %v782
    %v2077 = vunpack.c.h.b16 %v782
    %v2078 = vunpack.c.l.b16 %v783
    %v2079 = vunpack.c.h.b16 %v783
    %v2080 = vunpack.c.l.b16 %v784
    %v2081 = vunpack.c.h.b16 %v784
    %v2082 = vunpack.c.l.b16 %v785
    %v2083 = vunpack.c.h.b16 %v785
    %v2084 = vunpack.c.l.b16 %v786
    %v2085 = vunpack.c.h.b16 %v786
    %v2086 = vunpack.c.l.b16 %v787
    %v2087 = vunpack.c.h.b16 %v787
    %v2088 = vunpack.c.l.b16 %v788
    %v2089 = vunpack.c.h.b16 %v788
    %v2090 = vunpack.c.l.b16 %v789
    %v2091 = vunpack.c.h.b16 %v789
    %v2092 = vunpack.c.l.b16 %v790
    %v2093 = vunpack.c.h.b16 %v790
    %v2094 = vunpack.c.l.b16 %v791
    %v2095 = vunpack.c.h.b16 %v791
    %v2096 = vunpack.c.l.b16 %v792
    %v2097 = vunpack.c.h.b16 %v792
    %v2098 = vunpack.c.l.b16 %v793
    %v2099 = vunpack.c.h.b16 %v793
    %v2100 = vunpack.c.l.b16 %v794
    %v2101 = vunpack.c.h.b16 %v794
    %v2102 = vunpack.c.l.b16 %v795
    %v2103 = vunpack.c.h.b16 %v795
    %v2104 = vunpack.c.l.b16 %v796
    %v2105 = vunpack.c.h.b16 %v796
    %v2106 = vunpack.c.l.b16 %v797
    %v2107 = vunpack.c.h.b16 %v797
    %v2108 = vunpack.c.l.b16 %v798
    %v2109 = vunpack.c.h.b16 %v798
    %v2110 = vunpack.c.l.b16 %v799
    %v2111 = vunpack.c.h.b16 %v799
    %v2112 = vunpack.c.l.b16 %v800
    %v2113 = vunpack.c.h.b16 %v800
    %v2114 = vunpack.c.l.b16 %v801
    %v2115 = vunpack.c.h.b16 %v801
    %v2116 = vunpack.c.l.b16 %v802
    %v2117 = vunpack.c.h.b16 %v802
    %v2118 = vunpack.c.l.b16 %v803
    %v2119 = vunpack.c.h.b16 %v803
    %v2120 = vunpack.c.l.b16 %v804
    %v2121 = vunpack.c.h.b16 %v804
    %v2122 = vunpack.c.l.b16 %v805
    %v2123 = vunpack.c.h.b16 %v805
    %v2124 = vunpack.c.l.b16 %v806
    %v2125 = vunpack.c.h.b16 %v806
    %v2126 = vunpack.c.l.b16 %v807
    %v2127 = vunpack.c.h.b16 %v807
    %v2128 = vunpack.c.l.b16 %v808
    %v2129 = vunpack.c.h.b16 %v808
    %v2130 = vunpack.c.l.b16 %v809
    %v2131 = vunpack.c.h.b16 %v809
    %v2132 = vunpack.c.l.b16 %v810
    %v2133 = vunpack.c.h.b16 %v810
    %v2134 = vunpack.c.l.b16 %v811
    %v2135 = vunpack.c.h.b16 %v811
    %v2136 = vunpack.c.l.b16 %v812
    %v2137 = vunpack.c.h.b16 %v812
    %v2138 = vunpack.c.l.b16 %v813
    %v2139 = vunpack.c.h.b16 %v813
    %v2140 = vunpack.c.l.b16 %v814
    %v2141 = vunpack.c.h.b16 %v814
    %v2142 = vunpack.c.l.b16 %v815
    %v2143 = vunpack.c.h.b16 %v815
    %v2144 = vunpack.c.l.b16 %v816
    %v2145 = vunpack.c.h.b16 %v816
    %v2146 = vunpack.c.l.b16 %v817
    %v2147 = vunpack.c.h.b16 %v817
    %v2148 = vunpack.c.l.b16 %v818
    %v2149 = vunpack.c.h.b16 %v818
    %v2150 = vunpack.c.l.b16 %v819
    %v2151 = vunpack.c.h.b16 %v819
    %v2152 = vunpack.c.l.b16 %v820
    %v2153 = vunpack.c.h.b16 %v820
    %v2154 = vunpack.c.l.b16 %v821
    %v2155 = vunpack.c.h.b16 %v821
    %v2156 = vunpack.c.l.b16 %v822
    %v2157 = vunpack.c.h.b16 %v822
    %v2158 = vunpack.c.l.b16 %v823
    %v2159 = vunpack.c.h.b16 %v823
    %v2160 = vunpack.c.l.b16 %v824
    %v2161 = vunpack.c.h.b16 %v824
    %v2162 = vunpack.c.l.b16 %v825
    %v2163 = vunpack.c.h.b16 %v825
    %v2164 = vunpack.c.l.b16 %v826
    %v2165 = vunpack.c.h.b16 %v826
    %v2166 = vunpack.c.l.b16 %v827
    %v2167 = vunpack.c.h.b16 %v827
    %v2168 = vunpack.c.l.b16 %v828
    %v2169 = vunpack.c.h.b16 %v828
    %v2170 = vunpack.c.l.b16 %v829
    %v2171 = vunpack.c.h.b16 %v829
    %v2172 = vunpack.c.l.b16 %v830
    %v2173 = vunpack.c.h.b16 %v830
    %v2174 = vunpack.c.l.b16 %v831
    %v2175 = vunpack.c.h.b16 %v831
    %v2176 = vunpack.c.l.b16 %v832
    %v2177 = vunpack.c.h.b16 %v832
    %v2178 = vunpack.c.l.b16 %v833
    %v2179 = vunpack.c.h.b16 %v833
    %v2180 = vunpack.c.l.b16 %v834
    %v2181 = vunpack.c.h.b16 %v834
    %v2182 = vunpack.c.l.b16 %v835
    %v2183 = vunpack.c.h.b16 %v835
    %v2184 = vunpack.c.l.b16 %v836
    %v2185 = vunpack.c.h.b16 %v836
    %v2186 = vunpack.c.l.b16 %v837
    %v2187 = vunpack.c.h.b16 %v837
    %v2188 = vunpack.c.l.b16 %v838
    %v2189 = vunpack.c.h.b16 %v838
    %v2190 = vunpack.c.l.b16 %v839
    %v2191 = vunpack.c.h.b16 %v839
    %v2192 = vunpack.c.l.b16 %v840
    %v2193 = vunpack.c.h.b16 %v840
    %v2194 = vunpack.c.l.b16 %v841
    %v2195 = vunpack.c.h.b16 %v841
    %v2196 = vunpack.c.l.b16 %v842
    %v2197 = vunpack.c.h.b16 %v842
    %v2198 = vunpack.c.l.b16 %v843
    %v2199 = vunpack.c.h.b16 %v843
    %v2200 = vunpack.c.l.b16 %v844
    %v2201 = vunpack.c.h.b16 %v844
    %v2202 = vunpack.c.l.b16 %v845
    %v2203 = vunpack.c.h.b16 %v845
    %v2204 = vunpack.c.l.b16 %v846
    %v2205 = vunpack.c.h.b16 %v846
    %v2206 = vunpack.c.l.b16 %v847
    %v2207 = vunpack.c.h.b16 %v847
    %v2208 = vunpack.c.l.b16 %v848
    %v2209 = vunpack.c.h.b16 %v848
    %v2210 = vunpack.c.l.b16 %v849
    %v2211 = vunpack.c.h.b16 %v849
    %v2212 = vunpack.c.l.b16 %v850
    %v2213 = vunpack.c.h.b16 %v850
    %v2214 = vunpack.c.l.b16 %v851
    %v2215 = vunpack.c.h.b16 %v851
    %v2216 = vunpack.c.l.b16 %v852
    %v2217 = vunpack.c.h.b16 %v852
    %v2218 = vunpack.c.l.b16 %v853
    %v2219 = vunpack.c.h.b16 %v853
    %v2220 = vunpack.c.l.b16 %v854
    %v2221 = vunpack.c.h.b16 %v854
    %v2222 = vunpack.c.l.b16 %v855
    %v2223 = vunpack.c.h.b16 %v855
    %v2224 = vunpack.c.l.b16 %v856
    %v2225 = vunpack.c.h.b16 %v856
    %v2226 = vunpack.c.l.b16 %v857
    %v2227 = vunpack.c.h.b16 %v857
    %v2228 = vunpack.c.l.b16 %v858
    %v2229 = vunpack.c.h.b16 %v858
    %v2230 = vunpack.c.l.b16 %v859
    %v2231 = vunpack.c.h.b16 %v859
    %v2232 = vunpack.c.l.b16 %v860
    %v2233 = vunpack.c.h.b16 %v860
    %v2234 = vunpack.c.l.b16 %v861
    %v2235 = vunpack.c.h.b16 %v861
    %v2236 = vunpack.c.l.b16 %v862
    %v2237 = vunpack.c.h.b16 %v862
    %v2238 = vunpack.c.l.b16 %v863
    %v2239 = vunpack.c.h.b16 %v863
    %v2240 = vunpack.c.l.b16 %v864
    %v2241 = vunpack.c.h.b16 %v864
    %v2242 = vunpack.c.l.b16 %v865
    %v2243 = vunpack.c.h.b16 %v865
    %v2244 = vunpack.c.l.b16 %v866
    %v2245 = vunpack.c.h.b16 %v866
    %v2246 = vunpack.c.l.b16 %v867
    %v2247 = vunpack.c.h.b16 %v867
    %v2248 = vunpack.c.l.b16 %v868
    %v2249 = vunpack.c.h.b16 %v868
    %v2250 = vunpack.c.l.b16 %v869
    %v2251 = vunpack.c.h.b16 %v869
    %v2252 = vunpack.c.l.b16 %v870
    %v2253 = vunpack.c.h.b16 %v870
    %v2254 = vunpack.c.l.b16 %v871
    %v2255 = vunpack.c.h.b16 %v871
    %v2256 = vunpack.c.l.b16 %v872
    %v2257 = vunpack.c.h.b16 %v872
    %v2258 = vunpack.c.l.b16 %v873
    %v2259 = vunpack.c.h.b16 %v873
    %v2260 = vunpack.c.l.b16 %v874
    %v2261 = vunpack.c.h.b16 %v874
    %v2262 = vunpack.c.l.b16 %v875
    %v2263 = vunpack.c.h.b16 %v875
    %v2264 = vunpack.c.l.b16 %v876
    %v2265 = vunpack.c.h.b16 %v876
    %v2266 = vunpack.c.l.b16 %v877
    %v2267 = vunpack.c.h.b16 %v877
    %v2268 = vunpack.c.l.b16 %v878
    %v2269 = vunpack.c.h.b16 %v878
    %v2270 = vunpack.c.l.b16 %v879
    %v2271 = vunpack.c.h.b16 %v879
    %v2272 = vunpack.c.l.b16 %v880
    %v2273 = vunpack.c.h.b16 %v880
    %v2274 = vunpack.c.l.b16 %v881
    %v2275 = vunpack.c.h.b16 %v881
    %v2276 = vunpack.c.l.b16 %v882
    %v2277 = vunpack.c.h.b16 %v882
    %v2278 = vunpack.c.l.b16 %v883
    %v2279 = vunpack.c.h.b16 %v883
    %v2280 = vunpack.c.l.b16 %v884
    %v2281 = vunpack.c.h.b16 %v884
    %v2282 = vunpack.c.l.b16 %v885
    %v2283 = vunpack.c.h.b16 %v885
    %v2284 = vunpack.c.l.b16 %v886
    %v2285 = vunpack.c.h.b16 %v886
    %v2286 = vunpack.c.l.b16 %v887
    %v2287 = vunpack.c.h.b16 %v887
    %v2288 = vunpack.c.l.b16 %v888
    %v2289 = vunpack.c.h.b16 %v888
    %v2290 = vunpack.c.l.b16 %v889
    %v2291 = vunpack.c.h.b16 %v889
    %v2292 = vunpack.c.l.b16 %v890
    %v2293 = vunpack.c.h.b16 %v890
    %v2294 = vunpack.c.l.b16 %v891
    %v2295 = vunpack.c.h.b16 %v891
    %v2296 = vunpack.c.l.b16 %v892
    %v2297 = vunpack.c.h.b16 %v892
    %v2298 = vunpack.c.l.b16 %v893
    %v2299 = vunpack.c.h.b16 %v893
    %v2300 = vunpack.c.l.b16 %v894
    %v2301 = vunpack.c.h.b16 %v894
    %v2302 = vunpack.c.l.b16 %v895
    %v2303 = vunpack.c.h.b16 %v895
    %v2304 = vunpack.c.l.b16 %v896
    %v2305 = vunpack.c.h.b16 %v896
    %v2306 = vunpack.c.l.b16 %v897
    %v2307 = vunpack.c.h.b16 %v897
    %v2308 = vunpack.c.l.b16 %v898
    %v2309 = vunpack.c.h.b16 %v898
    %v2310 = vunpack.c.l.b16 %v899
    %v2311 = vunpack.c.h.b16 %v899
    %v2312 = vunpack.c.l.b16 %v900
    %v2313 = vunpack.c.h.b16 %v900
    %v2314 = vunpack.c.l.b16 %v901
    %v2315 = vunpack.c.h.b16 %v901
    %v2316 = vunpack.c.l.b16 %v902
    %v2317 = vunpack.c.h.b16 %v902
    %v2318 = vunpack.c.l.b16 %v903
    %v2319 = vunpack.c.h.b16 %v903
    %v2320 = vunpack.c.l.b16 %v904
    %v2321 = vunpack.c.h.b16 %v904
    %v2322 = vunpack.c.l.b16 %v905
    %v2323 = vunpack.c.h.b16 %v905
    %v2324 = vunpack.c.l.b16 %v906
    %v2325 = vunpack.c.h.b16 %v906
    %v2326 = vunpack.c.l.b16 %v907
    %v2327 = vunpack.c.h.b16 %v907
    %v2328 = vunpack.c.l.b16 %v908
    %v2329 = vunpack.c.h.b16 %v908
    %v2330 = vunpack.c.l.b16 %v909
    %v2331 = vunpack.c.h.b16 %v909
    %v2332 = vunpack.c.l.b16 %v910
    %v2333 = vunpack.c.h.b16 %v910
    %v2334 = vunpack.c.l.b16 %v911
    %v2335 = vunpack.c.h.b16 %v911
    %v2336 = vunpack.c.l.b16 %v912
    %v2337 = vunpack.c.h.b16 %v912
    %v2338 = vunpack.c.l.b16 %v913
    %v2339 = vunpack.c.h.b16 %v913
    %v2340 = vunpack.c.l.b16 %v914
    %v2341 = vunpack.c.h.b16 %v914
    %v2342 = vunpack.c.l.b16 %v915
    %v2343 = vunpack.c.h.b16 %v915
    %v2344 = vunpack.c.l.b16 %v916
    %v2345 = vunpack.c.h.b16 %v916
    %v2346 = vunpack.c.l.b16 %v917
    %v2347 = vunpack.c.h.b16 %v917
    %v2348 = vunpack.c.l.b16 %v918
    %v2349 = vunpack.c.h.b16 %v918
    %v2350 = vunpack.c.l.b16 %v919
    %v2351 = vunpack.c.h.b16 %v919
    %v2352 = vunpack.c.l.b16 %v920
    %v2353 = vunpack.c.h.b16 %v920
    %v2354 = vunpack.c.l.b16 %v921
    %v2355 = vunpack.c.h.b16 %v921
    %v2356 = vunpack.c.l.b16 %v922
    %v2357 = vunpack.c.h.b16 %v922
    %v2358 = vunpack.c.l.b16 %v923
    %v2359 = vunpack.c.h.b16 %v923
    %v2360 = vunpack.c.l.b16 %v924
    %v2361 = vunpack.c.h.b16 %v924
    %v2362 = vunpack.c.l.b16 %v925
    %v2363 = vunpack.c.h.b16 %v925
    %v2364 = vunpack.c.l.b16 %v926
    %v2365 = vunpack.c.h.b16 %v926
    %v2366 = vunpack.c.l.b16 %v927
    %v2367 = vunpack.c.h.b16 %v927
    %v2368 = vunpack.c.l.b16 %v928
    %v2369 = vunpack.c.h.b16 %v928
    %v2370 = vunpack.c.l.b16 %v929
    %v2371 = vunpack.c.h.b16 %v929
    %v2372 = vunpack.c.l.b16 %v930
    %v2373 = vunpack.c.h.b16 %v930
    %v2374 = vunpack.c.l.b16 %v931
    %v2375 = vunpack.c.h.b16 %v931
    %v2376 = vunpack.c.l.b16 %v932
    %v2377 = vunpack.c.h.b16 %v932
    %v2378 = vunpack.c.l.b16 %v933
    %v2379 = vunpack.c.h.b16 %v933
    %v2380 = vunpack.c.l.b16 %v934
    %v2381 = vunpack.c.h.b16 %v934
    %v2382 = vunpack.c.l.b16 %v935
    %v2383 = vunpack.c.h.b16 %v935
    %v2384 = vunpack.c.l.b16 %v936
    %v2385 = vunpack.c.h.b16 %v936
    %v2386 = vunpack.c.l.b16 %v937
    %v2387 = vunpack.c.h.b16 %v937
    %v2388 = vunpack.c.l.b16 %v938
    %v2389 = vunpack.c.h.b16 %v938
    %v2390 = vunpack.c.l.b16 %v939
    %v2391 = vunpack.c.h.b16 %v939
    %v2392 = vunpack.c.l.b16 %v940
    %v2393 = vunpack.c.h.b16 %v940
    %v2394 = vunpack.c.l.b16 %v941
    %v2395 = vunpack.c.h.b16 %v941
    %v2396 = vunpack.c.l.b16 %v942
    %v2397 = vunpack.c.h.b16 %v942
    %v2398 = vunpack.c.l.b16 %v943
    %v2399 = vunpack.c.h.b16 %v943
    %v2400 = vunpack.c.l.b16 %v944
    %v2401 = vunpack.c.h.b16 %v944
    %v2402 = vunpack.c.l.b16 %v945
    %v2403 = vunpack.c.h.b16 %v945
    %v2404 = vunpack.c.l.b16 %v946
    %v2405 = vunpack.c.h.b16 %v946
    %v2406 = vunpack.c.l.b16 %v947
    %v2407 = vunpack.c.h.b16 %v947
    %v2408 = vunpack.c.l.b16 %v948
    %v2409 = vunpack.c.h.b16 %v948
    %v2410 = vunpack.c.l.b16 %v949
    %v2411 = vunpack.c.h.b16 %v949
    %v2412 = vunpack.c.l.b16 %v950
    %v2413 = vunpack.c.h.b16 %v950
    %v2414 = vunpack.c.l.b16 %v951
    %v2415 = vunpack.c.h.b16 %v951
    %v2416 = vunpack.c.l.b16 %v952
    %v2417 = vunpack.c.h.b16 %v952
    %v2418 = vunpack.c.l.b16 %v953
    %v2419 = vunpack.c.h.b16 %v953
    %v2420 = vunpack.c.l.b16 %v954
    %v2421 = vunpack.c.h.b16 %v954
    %v2422 = vunpack.c.l.b16 %v955
    %v2423 = vunpack.c.h.b16 %v955
    %v2424 = vunpack.c.l.b16 %v956
    %v2425 = vunpack.c.h.b16 %v956
    %v2426 = vunpack.c.l.b16 %v957
    %v2427 = vunpack.c.h.b16 %v957
    %v2428 = vunpack.c.l.b16 %v958
    %v2429 = vunpack.c.h.b16 %v958
    %v2430 = vunpack.c.l.b16 %v959
    %v2431 = vunpack.c.h.b16 %v959
    %v2432 = vunpack.c.l.b16 %v960
    %v2433 = vunpack.c.h.b16 %v960
    %v2434 = vunpack.c.l.b16 %v961
    %v2435 = vunpack.c.h.b16 %v961
    %v2436 = vunpack.c.l.b16 %v962
    %v2437 = vunpack.c.h.b16 %v962
    %v2438 = vunpack.c.l.b16 %v963
    %v2439 = vunpack.c.h.b16 %v963
    %v2440 = vunpack.c.l.b16 %v964
    %v2441 = vunpack.c.h.b16 %v964
    %v2442 = vunpack.c.l.b16 %v965
    %v2443 = vunpack.c.h.b16 %v965
    %v2444 = vunpack.c.l.b16 %v966
    %v2445 = vunpack.c.h.b16 %v966
    %v2446 = vunpack.c.l.b16 %v967
    %v2447 = vunpack.c.h.b16 %v967
    %v2448 = vunpack.c.l.b16 %v968
    %v2449 = vunpack.c.h.b16 %v968
    %v2450 = vunpack.c.l.b16 %v969
    %v2451 = vunpack.c.h.b16 %v969
    %v2452 = vunpack.c.l.b16 %v970
    %v2453 = vunpack.c.h.b16 %v970
    %v2454 = vunpack.c.l.b16 %v971
    %v2455 = vunpack.c.h.b16 %v971
    %v2456 = vunpack.c.l.b16 %v972
    %v2457 = vunpack.c.h.b16 %v972
    %v2458 = vunpack.c.l.b16 %v973
    %v2459 = vunpack.c.h.b16 %v973
    %v2460 = vunpack.c.l.b16 %v974
    %v2461 = vunpack.c.h.b16 %v974
    %v2462 = vunpack.c.l.b16 %v975
    %v2463 = vunpack.c.h.b16 %v975
    %v2464 = vunpack.c.l.b16 %v976
    %v2465 = vunpack.c.h.b16 %v976
    %v2466 = vunpack.c.l.b16 %v977
    %v2467 = vunpack.c.h.b16 %v977
    %v2468 = vunpack.c.l.b16 %v978
    %v2469 = vunpack.c.h.b16 %v978
    %v2470 = vunpack.c.l.b16 %v979
    %v2471 = vunpack.c.h.b16 %v979
    %v2472 = vunpack.c.l.b16 %v980
    %v2473 = vunpack.c.h.b16 %v980
    %v2474 = vunpack.c.l.b16 %v981
    %v2475 = vunpack.c.h.b16 %v981
    %v2476 = vunpack.c.l.b16 %v982
    %v2477 = vunpack.c.h.b16 %v982
    %v2478 = vunpack.c.l.b16 %v983
    %v2479 = vunpack.c.h.b16 %v983
    %v2480 = vunpack.c.l.b16 %v984
    %v2481 = vunpack.c.h.b16 %v984
    %v2482 = vunpack.c.l.b16 %v985
    %v2483 = vunpack.c.h.b16 %v985
    %v2484 = vunpack.c.l.b16 %v986
    %v2485 = vunpack.c.h.b16 %v986
    %v2486 = vunpack.c.l.b16 %v987
    %v2487 = vunpack.c.h.b16 %v987
    %v2488 = vunpack.c.l.b16 %v988
    %v2489 = vunpack.c.h.b16 %v988
    %v2490 = vunpack.c.l.b16 %v989
    %v2491 = vunpack.c.h.b16 %v989
    %v2492 = vunpack.c.l.b16 %v990
    %v2493 = vunpack.c.h.b16 %v990
    %v2494 = vunpack.c.l.b16 %v991
    %v2495 = vunpack.c.h.b16 %v991
    %v2496 = vunpack.c.l.b16 %v992
    %v2497 = vunpack.c.h.b16 %v992
    %v2498 = vunpack.c.l.b16 %v993
    %v2499 = vunpack.c.h.b16 %v993
    %v2500 = vunpack.c.l.b16 %v994
    %v2501 = vunpack.c.h.b16 %v994
    %v2502 = vunpack.c.l.b16 %v995
    %v2503 = vunpack.c.h.b16 %v995
    %v2504 = vunpack.c.l.b16 %v996
    %v2505 = vunpack.c.h.b16 %v996
    %v2506 = vunpack.c.l.b16 %v997
    %v2507 = vunpack.c.h.b16 %v997
    %v2508 = vunpack.c.l.b16 %v998
    %v2509 = vunpack.c.h.b16 %v998
    %v2510 = vunpack.c.l.b16 %v999
    %v2511 = vunpack.c.h.b16 %v999
    %v2512 = vunpack.c.l.b16 %v1000
    %v2513 = vunpack.c.h.b16 %v1000
    %v2514 = vunpack.c.l.b16 %v1001
    %v2515 = vunpack.c.h.b16 %v1001
    %v2516 = vunpack.c.l.b16 %v1002
    %v2517 = vunpack.c.h.b16 %v1002
    %v2518 = vunpack.c.l.b16 %v1003
    %v2519 = vunpack.c.h.b16 %v1003
    %v2520 = vunpack.c.l.b16 %v1004
    %v2521 = vunpack.c.h.b16 %v1004
    %v2522 = vunpack.c.l.b16 %v1005
    %v2523 = vunpack.c.h.b16 %v1005
    %v2524 = vunpack.c.l.b16 %v1006
    %v2525 = vunpack.c.h.b16 %v1006
    %v2526 = vunpack.c.l.b16 %v1007
    %v2527 = vunpack.c.h.b16 %v1007
    %v2528 = vunpack.c.l.b16 %v1008
    %v2529 = vunpack.c.h.b16 %v1008
    %v2530 = vunpack.c.l.b16 %v1009
    %v2531 = vunpack.c.h.b16 %v1009
    %v2532 = vunpack.c.l.b16 %v1010
    %v2533 = vunpack.c.h.b16 %v1010
    %v2534 = vunpack.c.l.b16 %v1011
    %v2535 = vunpack.c.h.b16 %v1011
    %v2536 = vunpack.c.l.b16 %v1012
    %v2537 = vunpack.c.h.b16 %v1012
    %v2538 = vunpack.c.l.b16 %v1013
    %v2539 = vunpack.c.h.b16 %v1013
    %v2540 = vunpack.c.l.b16 %v1014
    %v2541 = vunpack.c.h.b16 %v1014
    %v2542 = vunpack.c.l.b16 %v1015
    %v2543 = vunpack.c.h.b16 %v1015
    %v2544 = vunpack.c.l.b16 %v1016
    %v2545 = vunpack.c.h.b16 %v1016
    %v2546 = vunpack.c.l.b16 %v1017
    %v2547 = vunpack.c.h.b16 %v1017
    %v2548 = vunpack.c.l.b16 %v1018
    %v2549 = vunpack.c.h.b16 %v1018
    %v2550 = vunpack.c.l.b16 %v1019
    %v2551 = vunpack.c.h.b16 %v1019
    %v2552 = vunpack.c.l.b16 %v1020
    %v2553 = vunpack.c.h.b16 %v1020
    %v2554 = vunpack.c.l.b16 %v1021
    %v2555 = vunpack.c.h.b16 %v1021
    %v2556 = vunpack.c.l.b16 %v1022
    %v2557 = vunpack.c.h.b16 %v1022
    %v2558 = vunpack.c.l.b16 %v1023
    %v2559 = vunpack.c.h.b16 %v1023
    %v2560 = vunpack.c.l.b16 %v1024
    %v2561 = vunpack.c.h.b16 %v1024
    %v2562 = vunpack.c.l.b16 %v1025
    %v2563 = vunpack.c.h.b16 %v1025
    %v2564 = vunpack.c.l.b16 %v1026
    %v2565 = vunpack.c.h.b16 %v1026
    %v2566 = vunpack.c.l.b16 %v1027
    %v2567 = vunpack.c.h.b16 %v1027
    %v2568 = vunpack.c.l.b16 %v1028
    %v2569 = vunpack.c.h.b16 %v1028
    %v2570 = vunpack.c.l.b16 %v1029
    %v2571 = vunpack.c.h.b16 %v1029
    %v2572 = vunpack.c.l.b16 %v1030
    %v2573 = vunpack.c.h.b16 %v1030
    %v2574 = vunpack.c.l.b16 %v1031
    %v2575 = vunpack.c.h.b16 %v1031
    %v2576 = vunpack.c.l.b16 %v1032
    %v2577 = vunpack.c.h.b16 %v1032
    %v2578 = vunpack.c.l.b16 %v1033
    %v2579 = vunpack.c.h.b16 %v1033
    %v2580 = vunpack.c.l.b16 %v1034
    %v2581 = vunpack.c.h.b16 %v1034
    %v2582 = vunpack.c.l.b16 %v1035
    %v2583 = vunpack.c.h.b16 %v1035
    %v2584 = vunpack.c.l.b16 %v1036
    %v2585 = vunpack.c.h.b16 %v1036
    %v2586 = vunpack.c.l.b16 %v1037
    %v2587 = vunpack.c.h.b16 %v1037
    %v2588 = vunpack.c.l.b16 %v1038
    %v2589 = vunpack.c.h.b16 %v1038
    %v2590 = vunpack.c.l.b16 %v1039
    %v2591 = vunpack.c.h.b16 %v1039
    %v2592 = vunpack.c.l.b16 %v1040
    %v2593 = vunpack.c.h.b16 %v1040
    %v2594 = vunpack.c.l.b16 %v1041
    %v2595 = vunpack.c.h.b16 %v1041
    %v2596 = vunpack.c.l.b16 %v1042
    %v2597 = vunpack.c.h.b16 %v1042
    %v2598 = vunpack.c.l.b16 %v1043
    %v2599 = vunpack.c.h.b16 %v1043
    %v2600 = vunpack.c.l.b16 %v1044
    %v2601 = vunpack.c.h.b16 %v1044
    %v2602 = vunpack.c.l.b16 %v1045
    %v2603 = vunpack.c.h.b16 %v1045
    %v2604 = vunpack.c.l.b16 %v1046
    %v2605 = vunpack.c.h.b16 %v1046
    %v2606 = vunpack.c.l.b16 %v1047
    %v2607 = vunpack.c.h.b16 %v1047
    %v2608 = vunpack.c.l.b16 %v1048
    %v2609 = vunpack.c.h.b16 %v1048
    %v2610 = vunpack.c.l.b16 %v1049
    %v2611 = vunpack.c.h.b16 %v1049
    %v2612 = vunpack.c.l.b16 %v1050
    %v2613 = vunpack.c.h.b16 %v1050
    %v2614 = vunpack.c.l.b16 %v1051
    %v2615 = vunpack.c.h.b16 %v1051
    %v2616 = vunpack.c.l.b16 %v1052
    %v2617 = vunpack.c.h.b16 %v1052
    %v2618 = vunpack.c.l.b16 %v1053
    %v2619 = vunpack.c.h.b16 %v1053
    %v2620 = vunpack.c.l.b16 %v1054
    %v2621 = vunpack.c.h.b16 %v1054
    %v2622 = vunpack.c.l.b16 %v1055
    %v2623 = vunpack.c.h.b16 %v1055
    %v2624 = vunpack.c.l.b16 %v1056
    %v2625 = vunpack.c.h.b16 %v1056
    %v2626 = vunpack.c.l.b16 %v1057
    %v2627 = vunpack.c.h.b16 %v1057
    %v2628 = vunpack.c.l.b16 %v1058
    %v2629 = vunpack.c.h.b16 %v1058
    %v2630 = vunpack.c.l.b16 %v1059
    %v2631 = vunpack.c.h.b16 %v1059
    %v2632 = vunpack.c.l.b16 %v1060
    %v2633 = vunpack.c.h.b16 %v1060
    %v2634 = vunpack.c.l.b16 %v1061
    %v2635 = vunpack.c.h.b16 %v1061
    %v2636 = vunpack.c.l.b16 %v1062
    %v2637 = vunpack.c.h.b16 %v1062
    %v2638 = vunpack.c.l.b16 %v1063
    %v2639 = vunpack.c.h.b16 %v1063
    %v2640 = vunpack.c.l.b16 %v1064
    %v2641 = vunpack.c.h.b16 %v1064
    %v2642 = vunpack.c.l.b16 %v1065
    %v2643 = vunpack.c.h.b16 %v1065
    %v2644 = vunpack.c.l.b16 %v1066
    %v2645 = vunpack.c.h.b16 %v1066
    %v2646 = vunpack.c.l.b16 %v1067
    %v2647 = vunpack.c.h.b16 %v1067
    %v2648 = vunpack.c.l.b16 %v1068
    %v2649 = vunpack.c.h.b16 %v1068
    %v2650 = vunpack.c.l.b16 %v1069
    %v2651 = vunpack.c.h.b16 %v1069
    %v2652 = vunpack.c.l.b16 %v1070
    %v2653 = vunpack.c.h.b16 %v1070
    %v2654 = vunpack.c.l.b16 %v1071
    %v2655 = vunpack.c.h.b16 %v1071
    %v2656 = vunpack.c.l.b16 %v1072
    %v2657 = vunpack.c.h.b16 %v1072
    %v2658 = vunpack.c.l.b16 %v1073
    %v2659 = vunpack.c.h.b16 %v1073
    %v2660 = vunpack.c.l.b16 %v1074
    %v2661 = vunpack.c.h.b16 %v1074
    %v2662 = vunpack.c.l.b16 %v1075
    %v2663 = vunpack.c.h.b16 %v1075
    %v2664 = vunpack.c.l.b16 %v1076
    %v2665 = vunpack.c.h.b16 %v1076
    %v2666 = vunpack.c.l.b16 %v1077
    %v2667 = vunpack.c.h.b16 %v1077
    %v2668 = vunpack.c.l.b16 %v1078
    %v2669 = vunpack.c.h.b16 %v1078
    %v2670 = vunpack.c.l.b16 %v1079
    %v2671 = vunpack.c.h.b16 %v1079
    %v2672 = vunpack.c.l.b16 %v1080
    %v2673 = vunpack.c.h.b16 %v1080
    %v2674 = vunpack.c.l.b16 %v1081
    %v2675 = vunpack.c.h.b16 %v1081
    %v2676 = vunpack.c.l.b16 %v1082
    %v2677 = vunpack.c.h.b16 %v1082
    %v2678 = vunpack.c.l.b16 %v1083
    %v2679 = vunpack.c.h.b16 %v1083
    %v2680 = vunpack.c.l.b16 %v1084
    %v2681 = vunpack.c.h.b16 %v1084
    %v2682 = vunpack.c.l.b16 %v1085
    %v2683 = vunpack.c.h.b16 %v1085
    %v2684 = vunpack.c.l.b16 %v1086
    %v2685 = vunpack.c.h.b16 %v1086
    %v2686 = vunpack.c.l.b16 %v1087
    %v2687 = vunpack.c.h.b16 %v1087
    %v2688 = vunpack.c.l.b16 %v1088
    %v2689 = vunpack.c.h.b16 %v1088
    %v2690 = vunpack.c.l.b16 %v1089
    %v2691 = vunpack.c.h.b16 %v1089
    %v2692 = vunpack.c.l.b16 %v1090
    %v2693 = vunpack.c.h.b16 %v1090
    %v2694 = vunpack.c.l.b16 %v1091
    %v2695 = vunpack.c.h.b16 %v1091
    %v2696 = vunpack.c.l.b16 %v1092
    %v2697 = vunpack.c.h.b16 %v1092
    %v2698 = vunpack.c.l.b16 %v1093
    %v2699 = vunpack.c.h.b16 %v1093
    %v2700 = vunpack.c.l.b16 %v1094
    %v2701 = vunpack.c.h.b16 %v1094
    %v2702 = vunpack.c.l.b16 %v1095
    %v2703 = vunpack.c.h.b16 %v1095
    %v2704 = vunpack.c.l.b16 %v1096
    %v2705 = vunpack.c.h.b16 %v1096
    %v2706 = vunpack.c.l.b16 %v1097
    %v2707 = vunpack.c.h.b16 %v1097
    %v2708 = vunpack.c.l.b16 %v1098
    %v2709 = vunpack.c.h.b16 %v1098
    %v2710 = vunpack.c.l.b16 %v1099
    %v2711 = vunpack.c.h.b16 %v1099
    %v2712 = vunpack.c.l.b16 %v1100
    %v2713 = vunpack.c.h.b16 %v1100
    %v2714 = vunpack.c.l.b16 %v1101
    %v2715 = vunpack.c.h.b16 %v1101
    %v2716 = vunpack.c.l.b16 %v1102
    %v2717 = vunpack.c.h.b16 %v1102
    %v2718 = vunpack.c.l.b16 %v1103
    %v2719 = vunpack.c.h.b16 %v1103
    %v2720 = vunpack.c.l.b16 %v1104
    %v2721 = vunpack.c.h.b16 %v1104
    %v2722 = vunpack.c.l.b16 %v1105
    %v2723 = vunpack.c.h.b16 %v1105
    %v2724 = vunpack.c.l.b16 %v1106
    %v2725 = vunpack.c.h.b16 %v1106
    %v2726 = vunpack.c.l.b16 %v1107
    %v2727 = vunpack.c.h.b16 %v1107
    %v2728 = vunpack.c.l.b16 %v1108
    %v2729 = vunpack.c.h.b16 %v1108
    %v2730 = vunpack.c.l.b16 %v1109
    %v2731 = vunpack.c.h.b16 %v1109
    %v2732 = vunpack.c.l.b16 %v1110
    %v2733 = vunpack.c.h.b16 %v1110
    %v2734 = vunpack.c.l.b16 %v1111
    %v2735 = vunpack.c.h.b16 %v1111
    %v2736 = vunpack.c.l.b16 %v1112
    %v2737 = vunpack.c.h.b16 %v1112
    %v2738 = vunpack.c.l.b16 %v1113
    %v2739 = vunpack.c.h.b16 %v1113
    %v2740 = vunpack.c.l.b16 %v1114
    %v2741 = vunpack.c.h.b16 %v1114
    %v2742 = vunpack.c.l.b16 %v1115
    %v2743 = vunpack.c.h.b16 %v1115
    %v2744 = vunpack.c.l.b16 %v1116
    %v2745 = vunpack.c.h.b16 %v1116
    %v2746 = vunpack.c.l.b16 %v1117
    %v2747 = vunpack.c.h.b16 %v1117
    %v2748 = vunpack.c.l.b16 %v1118
    %v2749 = vunpack.c.h.b16 %v1118
    %v2750 = vunpack.c.l.b16 %v1119
    %v2751 = vunpack.c.h.b16 %v1119
    %v2752 = vunpack.c.l.b16 %v1120
    %v2753 = vunpack.c.h.b16 %v1120
    %v2754 = vunpack.c.l.b16 %v1121
    %v2755 = vunpack.c.h.b16 %v1121
    %v2756 = vunpack.c.l.b16 %v1122
    %v2757 = vunpack.c.h.b16 %v1122
    %v2758 = vunpack.c.l.b16 %v1123
    %v2759 = vunpack.c.h.b16 %v1123
    %v2760 = vunpack.c.l.b16 %v1124
    %v2761 = vunpack.c.h.b16 %v1124
    %v2762 = vunpack.c.l.b16 %v1125
    %v2763 = vunpack.c.h.b16 %v1125
    %v2764 = vunpack.c.l.b16 %v1126
    %v2765 = vunpack.c.h.b16 %v1126
    %v2766 = vunpack.c.l.b16 %v1127
    %v2767 = vunpack.c.h.b16 %v1127
    %v2768 = vunpack.c.l.b16 %v1128
    %v2769 = vunpack.c.h.b16 %v1128
    %v2770 = vunpack.c.l.b16 %v1129
    %v2771 = vunpack.c.h.b16 %v1129
    %v2772 = vunpack.c.l.b16 %v1130
    %v2773 = vunpack.c.h.b16 %v1130
    %v2774 = vunpack.c.l.b16 %v1131
    %v2775 = vunpack.c.h.b16 %v1131
    %v2776 = vunpack.c.l.b16 %v1132
    %v2777 = vunpack.c.h.b16 %v1132
    %v2778 = vunpack.c.l.b16 %v1133
    %v2779 = vunpack.c.h.b16 %v1133
    %v2780 = vunpack.c.l.b16 %v1134
    %v2781 = vunpack.c.h.b16 %v1134
    %v2782 = vunpack.c.l.b16 %v1135
    %v2783 = vunpack.c.h.b16 %v1135
    %v2784 = vunpack.c.l.b16 %v1136
    %v2785 = vunpack.c.h.b16 %v1136
    %v2786 = vunpack.c.l.b16 %v1137
    %v2787 = vunpack.c.h.b16 %v1137
    %v2788 = vunpack.c.l.b16 %v1138
    %v2789 = vunpack.c.h.b16 %v1138
    %v2790 = vunpack.c.l.b16 %v1139
    %v2791 = vunpack.c.h.b16 %v1139
    %v2792 = vunpack.c.l.b16 %v1140
    %v2793 = vunpack.c.h.b16 %v1140
    %v2794 = vunpack.c.l.b16 %v1141
    %v2795 = vunpack.c.h.b16 %v1141
    %v2796 = vunpack.c.l.b16 %v1142
    %v2797 = vunpack.c.h.b16 %v1142
    %v2798 = vunpack.c.l.b16 %v1143
    %v2799 = vunpack.c.h.b16 %v1143
    %v2800 = vunpack.c.l.b16 %v1144
    %v2801 = vunpack.c.h.b16 %v1144
    %v2802 = vunpack.c.l.b16 %v1145
    %v2803 = vunpack.c.h.b16 %v1145
    %v2804 = vunpack.c.l.b16 %v1146
    %v2805 = vunpack.c.h.b16 %v1146
    %v2806 = vunpack.c.l.b16 %v1147
    %v2807 = vunpack.c.h.b16 %v1147
    %v2808 = vunpack.c.l.b16 %v1148
    %v2809 = vunpack.c.h.b16 %v1148
    %v2810 = vunpack.c.l.b16 %v1149
    %v2811 = vunpack.c.h.b16 %v1149
    %v2812 = vunpack.c.l.b16 %v1150
    %v2813 = vunpack.c.h.b16 %v1150
    %v2814 = vunpack.c.l.b16 %v1151
    %v2815 = vunpack.c.h.b16 %v1151
    %v2816 = vunpack.c.l.b16 %v1152
    %v2817 = vunpack.c.h.b16 %v1152
    %v2818 = vunpack.c.l.b16 %v1153
    %v2819 = vunpack.c.h.b16 %v1153
    %v2820 = vunpack.c.l.b16 %v1154
    %v2821 = vunpack.c.h.b16 %v1154
    %v2822 = vunpack.c.l.b16 %v1155
    %v2823 = vunpack.c.h.b16 %v1155
    %v2824 = vunpack.c.l.b16 %v1156
    %v2825 = vunpack.c.h.b16 %v1156
    %v2826 = vunpack.c.l.b16 %v1157
    %v2827 = vunpack.c.h.b16 %v1157
    %v2828 = vunpack.c.l.b16 %v1158
    %v2829 = vunpack.c.h.b16 %v1158
    %v2830 = vunpack.c.l.b16 %v1159
    %v2831 = vunpack.c.h.b16 %v1159
    %v2832 = vunpack.c.l.b16 %v1160
    %v2833 = vunpack.c.h.b16 %v1160
    %v2834 = vunpack.c.l.b16 %v1161
    %v2835 = vunpack.c.h.b16 %v1161
    %v2836 = vunpack.c.l.b16 %v1162
    %v2837 = vunpack.c.h.b16 %v1162
    %v2838 = vunpack.c.l.b16 %v1163
    %v2839 = vunpack.c.h.b16 %v1163
    %v2840 = vunpack.c.l.b16 %v1164
    %v2841 = vunpack.c.h.b16 %v1164
    %v2842 = vunpack.c.l.b16 %v1165
    %v2843 = vunpack.c.h.b16 %v1165
    %v2844 = vunpack.c.l.b16 %v1166
    %v2845 = vunpack.c.h.b16 %v1166
    %v2846 = vunpack.c.l.b16 %v1167
    %v2847 = vunpack.c.h.b16 %v1167
    %v2848 = vunpack.c.l.b16 %v1168
    %v2849 = vunpack.c.h.b16 %v1168
    %v2850 = vunpack.c.l.b16 %v1169
    %v2851 = vunpack.c.h.b16 %v1169
    %v2852 = vunpack.c.l.b16 %v1170
    %v2853 = vunpack.c.h.b16 %v1170
    %v2854 = vunpack.c.l.b16 %v1171
    %v2855 = vunpack.c.h.b16 %v1171
    %v2856 = vunpack.c.l.b16 %v1172
    %v2857 = vunpack.c.h.b16 %v1172
    %v2858 = vunpack.c.l.b16 %v1173
    %v2859 = vunpack.c.h.b16 %v1173
    %v2860 = vunpack.c.l.b16 %v1174
    %v2861 = vunpack.c.h.b16 %v1174
    %v2862 = vunpack.c.l.b16 %v1175
    %v2863 = vunpack.c.h.b16 %v1175
    %v2864 = vunpack.c.l.b16 %v1176
    %v2865 = vunpack.c.h.b16 %v1176
    %v2866 = vunpack.c.l.b16 %v1177
    %v2867 = vunpack.c.h.b16 %v1177
    %v2868 = vunpack.c.l.b16 %v1178
    %v2869 = vunpack.c.h.b16 %v1178
    %v2870 = vunpack.c.l.b16 %v1179
    %v2871 = vunpack.c.h.b16 %v1179
    %v2872 = vunpack.c.l.b16 %v1180
    %v2873 = vunpack.c.h.b16 %v1180
    %v2874 = vunpack.c.l.b16 %v1181
    %v2875 = vunpack.c.h.b16 %v1181
    %v2876 = vunpack.c.l.b16 %v1182
    %v2877 = vunpack.c.h.b16 %v1182
    %v2878 = vunpack.c.l.b16 %v1183
    %v2879 = vunpack.c.h.b16 %v1183
    %v2880 = vunpack.c.l.b16 %v1184
    %v2881 = vunpack.c.h.b16 %v1184
    %v2882 = vunpack.c.l.b16 %v1185
    %v2883 = vunpack.c.h.b16 %v1185
    %v2884 = vunpack.c.l.b16 %v1186
    %v2885 = vunpack.c.h.b16 %v1186
    %v2886 = vunpack.c.l.b16 %v1187
    %v2887 = vunpack.c.h.b16 %v1187
    %v2888 = vunpack.c.l.b16 %v1188
    %v2889 = vunpack.c.h.b16 %v1188
    %v2890 = vunpack.c.l.b16 %v1189
    %v2891 = vunpack.c.h.b16 %v1189
    %v2892 = vunpack.c.l.b16 %v1190
    %v2893 = vunpack.c.h.b16 %v1190
    %v2894 = vunpack.c.l.b16 %v1191
    %v2895 = vunpack.c.h.b16 %v1191
    %v2896 = vunpack.c.l.b16 %v1192
    %v2897 = vunpack.c.h.b16 %v1192
    %v2898 = vunpack.c.l.b16 %v1193
    %v2899 = vunpack.c.h.b16 %v1193
    %v2900 = vunpack.c.l.b16 %v1194
    %v2901 = vunpack.c.h.b16 %v1194
    %v2902 = vunpack.c.l.b16 %v1195
    %v2903 = vunpack.c.h.b16 %v1195
    %v2904 = vunpack.c.l.b16 %v1196
    %v2905 = vunpack.c.h.b16 %v1196
    %v2906 = vunpack.c.l.b16 %v1197
    %v2907 = vunpack.c.h.b16 %v1197
    %v2908 = vunpack.c.l.b16 %v1198
    %v2909 = vunpack.c.h.b16 %v1198
    %v2910 = vunpack.c.l.b16 %v1199
    %v2911 = vunpack.c.h.b16 %v1199
    %v2912 = vunpack.c.l.b16 %v1200
    %v2913 = vunpack.c.h.b16 %v1200
    %v2914 = vunpack.c.l.b16 %v1201
    %v2915 = vunpack.c.h.b16 %v1201
    %v2916 = vunpack.c.l.b16 %v1202
    %v2917 = vunpack.c.h.b16 %v1202
    %v2918 = vunpack.c.l.b16 %v1203
    %v2919 = vunpack.c.h.b16 %v1203
    %v2920 = vunpack.c.l.b16 %v1204
    %v2921 = vunpack.c.h.b16 %v1204
    %v2922 = vunpack.c.l.b16 %v1205
    %v2923 = vunpack.c.h.b16 %v1205
    %v2924 = vunpack.c.l.b16 %v1206
    %v2925 = vunpack.c.h.b16 %v1206
    %v2926 = vunpack.c.l.b16 %v1207
    %v2927 = vunpack.c.h.b16 %v1207
    %v2928 = vunpack.c.l.b16 %v1208
    %v2929 = vunpack.c.h.b16 %v1208
    %v2930 = vunpack.c.l.b16 %v1209
    %v2931 = vunpack.c.h.b16 %v1209
    %v2932 = vunpack.c.l.b16 %v1210
    %v2933 = vunpack.c.h.b16 %v1210
    %v2934 = vunpack.c.l.b16 %v1211
    %v2935 = vunpack.c.h.b16 %v1211
    %v2936 = vunpack.c.l.b16 %v1212
    %v2937 = vunpack.c.h.b16 %v1212
    %v2938 = vunpack.c.l.b16 %v1213
    %v2939 = vunpack.c.h.b16 %v1213
    %v2940 = vunpack.c.l.b16 %v1214
    %v2941 = vunpack.c.h.b16 %v1214
    %v2942 = vunpack.c.l.b16 %v1215
    %v2943 = vunpack.c.h.b16 %v1215
    %v2944 = vpack.c.b16 %v1828, %v1792
    %v2945 = vpack.c.b16 %v1829, %v1793
    %v2946 = vpack.c.b16 %v1830, %v1794
    %v2947 = vpack.c.b16 %v1831, %v1795
    %v2948 = vpack.c.b16 %v1832, %v1796
    %v2949 = vpack.c.b16 %v1833, %v1797
    %v2950 = vpack.c.b16 %v1834, %v1798
    %v2951 = vpack.c.b16 %v1835, %v1799
    %v2952 = vpack.c.b16 %v1836, %v1800
    %v2953 = vpack.c.b16 %v1837, %v1801
    %v2954 = vpack.c.b16 %v1838, %v1802
    %v2955 = vpack.c.b16 %v1839, %v1803
    %v2956 = vpack.c.b16 %v1840, %v1804
    %v2957 = vpack.c.b16 %v1841, %v1805
    %v2958 = vpack.c.b16 %v1842, %v1806
    %v2959 = vpack.c.b16 %v1843, %v1807
    %v2960 = vpack.c.b16 %v1844, %v1808
    %v2961 = vpack.c.b16 %v1845, %v1809
    %v2962 = vpack.c.b16 %v1846, %v1810
    %v2963 = vpack.c.b16 %v1847, %v1811
    %v2964 = vpack.c.b16 %v1848, %v1812
    %v2965 = vpack.c.b16 %v1849, %v1813
    %v2966 = vpack.c.b16 %v1850, %v1814
    %v2967 = vpack.c.b16 %v1851, %v1815
    %v2968 = vpack.c.b16 %v1852, %v1816
    %v2969 = vpack.c.b16 %v1853, %v1817
    %v2970 = vpack.c.b16 %v1854, %v1818
    %v2971 = vpack.c.b16 %v1855, %v1819
    %v2972 = vpack.c.b16 %v1856, %v1820
    %v2973 = vpack.c.b16 %v1857, %v1821
    %v2974 = vpack.c.b16 %v1858, %v1822
    %v2975 = vpack.c.b16 %v1859, %v1823
    %v2976 = vpack.c.b16 %v1860, %v1824
    %v2977 = vpack.c.b16 %v1861, %v1825
    %v2978 = vpack.c.b16 %v1862, %v1826
    %v2979 = vpack.c.b16 %v1863, %v1827
    %v2980 = vpack.c.b16 %v1900, %v1864
    %v2981 = vpack.c.b16 %v1901, %v1865
    %v2982 = vpack.c.b16 %v1902, %v1866
    %v2983 = vpack.c.b16 %v1903, %v1867
    %v2984 = vpack.c.b16 %v1904, %v1868
    %v2985 = vpack.c.b16 %v1905, %v1869
    %v2986 = vpack.c.b16 %v1906, %v1870
    %v2987 = vpack.c.b16 %v1907, %v1871
    %v2988 = vpack.c.b16 %v1908, %v1872
    %v2989 = vpack.c.b16 %v1909, %v1873
    %v2990 = vpack.c.b16 %v1910, %v1874
    %v2991 = vpack.c.b16 %v1911, %v1875
    %v2992 = vpack.c.b16 %v1912, %v1876
    %v2993 = vpack.c.b16 %v1913, %v1877
    %v2994 = vpack.c.b16 %v1914, %v1878
    %v2995 = vpack.c.b16 %v1915, %v1879
    %v2996 = vpack.c.b16 %v1916, %v1880
    %v2997 = vpack.c.b16 %v1917, %v1881
    %v2998 = vpack.c.b16 %v1918, %v1882
    %v2999 = vpack.c.b16 %v1919, %v1883
    %v3000 = vpack.c.b16 %v1920, %v1884
    %v3001 = vpack.c.b16 %v1921, %v1885
    %v3002 = vpack.c.b16 %v1922, %v1886
    %v3003 = vpack.c.b16 %v1923, %v1887
    %v3004 = vpack.c.b16 %v1924, %v1888
    %v3005 = vpack.c.b16 %v1925, %v1889
    %v3006 = vpack.c.b16 %v1926, %v1890
    %v3007 = vpack.c.b16 %v1927, %v1891
    %v3008 = vpack.c.b16 %v1928, %v1892
    %v3009 = vpack.c.b16 %v1929, %v1893
    %v3010 = vpack.c.b16 %v1930, %v1894
    %v3011 = vpack.c.b16 %v1931, %v1895
    %v3012 = vpack.c.b16 %v1932, %v1896
    %v3013 = vpack.c.b16 %v1933, %v1897
    %v3014 = vpack.c.b16 %v1934, %v1898
    %v3015 = vpack.c.b16 %v1935, %v1899
    %v3016 = vpack.c.b16 %v1972, %v1936
    %v3017 = vpack.c.b16 %v1973, %v1937
    %v3018 = vpack.c.b16 %v1974, %v1938
    %v3019 = vpack.c.b16 %v1975, %v1939
    %v3020 = vpack.c.b16 %v1976, %v1940
    %v3021 = vpack.c.b16 %v1977, %v1941
    %v3022 = vpack.c.b16 %v1978, %v1942
    %v3023 = vpack.c.b16 %v1979, %v1943
    %v3024 = vpack.c.b16 %v1980, %v1944
    %v3025 = vpack.c.b16 %v1981, %v1945
    %v3026 = vpack.c.b16 %v1982, %v1946
    %v3027 = vpack.c.b16 %v1983, %v1947
    %v3028 = vpack.c.b16 %v1984, %v1948
    %v3029 = vpack.c.b16 %v1985, %v1949
    %v3030 = vpack.c.b16 %v1986, %v1950
    %v3031 = vpack.c.b16 %v1987, %v1951
    %v3032 = vpack.c.b16 %v1988, %v1952
    %v3033 = vpack.c.b16 %v1989, %v1953
    %v3034 = vpack.c.b16 %v1990, %v1954
    %v3035 = vpack.c.b16 %v1991, %v1955
    %v3036 = vpack.c.b16 %v1992, %v1956
    %v3037 = vpack.c.b16 %v1993, %v1957
    %v3038 = vpack.c.b16 %v1994, %v1958
    %v3039 = vpack.c.b16 %v1995, %v1959
    %v3040 = vpack.c.b16 %v1996, %v1960
    %v3041 = vpack.c.b16 %v1997, %v1961
    %v3042 = vpack.c.b16 %v1998, %v1962
    %v3043 = vpack.c.b16 %v1999, %v1963
    %v3044 = vpack.c.b16 %v2000, %v1964
    %v3045 = vpack.c.b16 %v2001, %v1965
    %v3046 = vpack.c.b16 %v2002, %v1966
    %v3047 = vpack.c.b16 %v2003, %v1967
    %v3048 = vpack.c.b16 %v2004, %v1968
    %v3049 = vpack.c.b16 %v2005, %v1969
    %v3050 = vpack.c.b16 %v2006, %v1970
    %v3051 = vpack.c.b16 %v2007, %v1971
    %v3052 = vpack.c.b16 %v2044, %v2008
    %v3053 = vpack.c.b16 %v2045, %v2009
    %v3054 = vpack.c.b16 %v2046, %v2010
    %v3055 = vpack.c.b16 %v2047, %v2011
    %v3056 = vpack.c.b16 %v2048, %v2012
    %v3057 = vpack.c.b16 %v2049, %v2013
    %v3058 = vpack.c.b16 %v2050, %v2014
    %v3059 = vpack.c.b16 %v2051, %v2015
    %v3060 = vpack.c.b16 %v2052, %v2016
    %v3061 = vpack.c.b16 %v2053, %v2017
    %v3062 = vpack.c.b16 %v2054, %v2018
    %v3063 = vpack.c.b16 %v2055, %v2019
    %v3064 = vpack.c.b16 %v2056, %v2020
    %v3065 = vpack.c.b16 %v2057, %v2021
    %v3066 = vpack.c.b16 %v2058, %v2022
    %v3067 = vpack.c.b16 %v2059, %v2023
    %v3068 = vpack.c.b16 %v2060, %v2024
    %v3069 = vpack.c.b16 %v2061, %v2025
    %v3070 = vpack.c.b16 %v2062, %v2026
    %v3071 = vpack.c.b16 %v2063, %v2027
    %v3072 = vpack.c.b16 %v2064, %v2028
    %v3073 = vpack.c.b16 %v2065, %v2029
    %v3074 = vpack.c.b16 %v2066, %v2030
    %v3075 = vpack.c.b16 %v2067, %v2031
    %v3076 = vpack.c.b16 %v2068, %v2032
    %v3077 = vpack.c.b16 %v2069, %v2033
    %v3078 = vpack.c.b16 %v2070, %v2034
    %v3079 = vpack.c.b16 %v2071, %v2035
    %v3080 = vpack.c.b16 %v2072, %v2036
    %v3081 = vpack.c.b16 %v2073, %v2037
    %v3082 = vpack.c.b16 %v2074, %v2038
    %v3083 = vpack.c.b16 %v2075, %v2039
    %v3084 = vpack.c.b16 %v2076, %v2040
    %v3085 = vpack.c.b16 %v2077, %v2041
    %v3086 = vpack.c.b16 %v2078, %v2042
    %v3087 = vpack.c.b16 %v2079, %v2043
    %v3088 = vpack.c.b16 %v2116, %v2080
    %v3089 = vpack.c.b16 %v2117, %v2081
    %v3090 = vpack.c.b16 %v2118, %v2082
    %v3091 = vpack.c.b16 %v2119, %v2083
    %v3092 = vpack.c.b16 %v2120, %v2084
    %v3093 = vpack.c.b16 %v2121, %v2085
    %v3094 = vpack.c.b16 %v2122, %v2086
    %v3095 = vpack.c.b16 %v2123, %v2087
    %v3096 = vpack.c.b16 %v2124, %v2088
    %v3097 = vpack.c.b16 %v2125, %v2089
    %v3098 = vpack.c.b16 %v2126, %v2090
    %v3099 = vpack.c.b16 %v2127, %v2091
    %v3100 = vpack.c.b16 %v2128, %v2092
    %v3101 = vpack.c.b16 %v2129, %v2093
    %v3102 = vpack.c.b16 %v2130, %v2094
    %v3103 = vpack.c.b16 %v2131, %v2095
    %v3104 = vpack.c.b16 %v2132, %v2096
    %v3105 = vpack.c.b16 %v2133, %v2097
    %v3106 = vpack.c.b16 %v2134, %v2098
    %v3107 = vpack.c.b16 %v2135, %v2099
    %v3108 = vpack.c.b16 %v2136, %v2100
    %v3109 = vpack.c.b16 %v2137, %v2101
    %v3110 = vpack.c.b16 %v2138, %v2102
    %v3111 = vpack.c.b16 %v2139, %v2103
    %v3112 = vpack.c.b16 %v2140, %v2104
    %v3113 = vpack.c.b16 %v2141, %v2105
    %v3114 = vpack.c.b16 %v2142, %v2106
    %v3115 = vpack.c.b16 %v2143, %v2107
    %v3116 = vpack.c.b16 %v2144, %v2108
    %v3117 = vpack.c.b16 %v2145, %v2109
    %v3118 = vpack.c.b16 %v2146, %v2110
    %v3119 = vpack.c.b16 %v2147, %v2111
    %v3120 = vpack.c.b16 %v2148, %v2112
    %v3121 = vpack.c.b16 %v2149, %v2113
    %v3122 = vpack.c.b16 %v2150, %v2114
    %v3123 = vpack.c.b16 %v2151, %v2115
    %v3124 = vpack.c.b16 %v2188, %v2152
    %v3125 = vpack.c.b16 %v2189, %v2153
    %v3126 = vpack.c.b16 %v2190, %v2154
    %v3127 = vpack.c.b16 %v2191, %v2155
    %v3128 = vpack.c.b16 %v2192, %v2156
    %v3129 = vpack.c.b16 %v2193, %v2157
    %v3130 = vpack.c.b16 %v2194, %v2158
    %v3131 = vpack.c.b16 %v2195, %v2159
    %v3132 = vpack.c.b16 %v2196, %v2160
    %v3133 = vpack.c.b16 %v2197, %v2161
    %v3134 = vpack.c.b16 %v2198, %v2162
    %v3135 = vpack.c.b16 %v2199, %v2163
    %v3136 = vpack.c.b16 %v2200, %v2164
    %v3137 = vpack.c.b16 %v2201, %v2165
    %v3138 = vpack.c.b16 %v2202, %v2166
    %v3139 = vpack.c.b16 %v2203, %v2167
    %v3140 = vpack.c.b16 %v2204, %v2168
    %v3141 = vpack.c.b16 %v2205, %v2169
    %v3142 = vpack.c.b16 %v2206, %v2170
    %v3143 = vpack.c.b16 %v2207, %v2171
    %v3144 = vpack.c.b16 %v2208, %v2172
    %v3145 = vpack.c.b16 %v2209, %v2173
    %v3146 = vpack.c.b16 %v2210, %v2174
    %v3147 = vpack.c.b16 %v2211, %v2175
    %v3148 = vpack.c.b16 %v2212, %v2176
    %v3149 = vpack.c.b16 %v2213, %v2177
    %v3150 = vpack.c.b16 %v2214, %v2178
    %v3151 = vpack.c.b16 %v2215, %v2179
    %v3152 = vpack.c.b16 %v2216, %v2180
    %v3153 = vpack.c.b16 %v2217, %v2181
    %v3154 = vpack.c.b16 %v2218, %v2182
    %v3155 = vpack.c.b16 %v2219, %v2183
    %v3156 = vpack.c.b16 %v2220, %v2184
    %v3157 = vpack.c.b16 %v2221, %v2185
    %v3158 = vpack.c.b16 %v2222, %v2186
    %v3159 = vpack.c.b16 %v2223, %v2187
    %v3160 = vpack.c.b16 %v2260, %v2224
    %v3161 = vpack.c.b16 %v2261, %v2225
    %v3162 = vpack.c.b16 %v2262, %v2226
    %v3163 = vpack.c.b16 %v2263, %v2227
    %v3164 = vpack.c.b16 %v2264, %v2228
    %v3165 = vpack.c.b16 %v2265, %v2229
    %v3166 = vpack.c.b16 %v2266, %v2230
    %v3167 = vpack.c.b16 %v2267, %v2231
    %v3168 = vpack.c.b16 %v2268, %v2232
    %v3169 = vpack.c.b16 %v2269, %v2233
    %v3170 = vpack.c.b16 %v2270, %v2234
    %v3171 = vpack.c.b16 %v2271, %v2235
    %v3172 = vpack.c.b16 %v2272, %v2236
    %v3173 = vpack.c.b16 %v2273, %v2237
    %v3174 = vpack.c.b16 %v2274, %v2238
    %v3175 = vpack.c.b16 %v2275, %v2239
    %v3176 = vpack.c.b16 %v2276, %v2240
    %v3177 = vpack.c.b16 %v2277, %v2241
    %v3178 = vpack.c.b16 %v2278, %v2242
    %v3179 = vpack.c.b16 %v2279, %v2243
    %v3180 = vpack.c.b16 %v2280, %v2244
    %v3181 = vpack.c.b16 %v2281, %v2245
    %v3182 = vpack.c.b16 %v2282, %v2246
    %v3183 = vpack.c.b16 %v2283, %v2247
    %v3184 = vpack.c.b16 %v2284, %v2248
    %v3185 = vpack.c.b16 %v2285, %v2249
    %v3186 = vpack.c.b16 %v2286, %v2250
    %v3187 = vpack.c.b16 %v2287, %v2251
    %v3188 = vpack.c.b16 %v2288, %v2252
    %v3189 = vpack.c.b16 %v2289, %v2253
    %v3190 = vpack.c.b16 %v2290, %v2254
    %v3191 = vpack.c.b16 %v2291, %v2255
    %v3192 = vpack.c.b16 %v2292, %v2256
    %v3193 = vpack.c.b16 %v2293, %v2257
    %v3194 = vpack.c.b16 %v2294, %v2258
    %v3195 = vpack.c.b16 %v2295, %v2259
    %v3196 = vpack.c.b16 %v2332, %v2296
    %v3197 = vpack.c.b16 %v2333, %v2297
    %v3198 = vpack.c.b16 %v2334, %v2298
    %v3199 = vpack.c.b16 %v2335, %v2299
    %v3200 = vpack.c.b16 %v2336, %v2300
    %v3201 = vpack.c.b16 %v2337, %v2301
    %v3202 = vpack.c.b16 %v2338, %v2302
    %v3203 = vpack.c.b16 %v2339, %v2303
    %v3204 = vpack.c.b16 %v2340, %v2304
    %v3205 = vpack.c.b16 %v2341, %v2305
    %v3206 = vpack.c.b16 %v2342, %v2306
    %v3207 = vpack.c.b16 %v2343, %v2307
    %v3208 = vpack.c.b16 %v2344, %v2308
    %v3209 = vpack.c.b16 %v2345, %v2309
    %v3210 = vpack.c.b16 %v2346, %v2310
    %v3211 = vpack.c.b16 %v2347, %v2311
    %v3212 = vpack.c.b16 %v2348, %v2312
    %v3213 = vpack.c.b16 %v2349, %v2313
    %v3214 = vpack.c.b16 %v2350, %v2314
    %v3215 = vpack.c.b16 %v2351, %v2315
    %v3216 = vpack.c.b16 %v2352, %v2316
    %v3217 = vpack.c.b16 %v2353, %v2317
    %v3218 = vpack.c.b16 %v2354, %v2318
    %v3219 = vpack.c.b16 %v2355, %v2319
    %v3220 = vpack.c.b16 %v2356, %v2320
    %v3221 = vpack.c.b16 %v2357, %v2321
    %v3222 = vpack.c.b16 %v2358, %v2322
    %v3223 = vpack.c.b16 %v2359, %v2323
    %v3224 = vpack.c.b16 %v2360, %v2324
    %v3225 = vpack.c.b16 %v2361, %v2325
    %v3226 = vpack.c.b16 %v2362, %v2326
    %v3227 = vpack.c.b16 %v2363, %v2327
    %v3228 = vpack.c.b16 %v2364, %v2328
    %v3229 = vpack.c.b16 %v2365, %v2329
    %v3230 = vpack.c.b16 %v2366, %v2330
    %v3231 = vpack.c.b16 %v2367, %v2331
    %v3232 = vpack.c.b16 %v2404, %v2368
    %v3233 = vpack.c.b16 %v2405, %v2369
    %v3234 = vpack.c.b16 %v2406, %v2370
    %v3235 = vpack.c.b16 %v2407, %v2371
    %v3236 = vpack.c.b16 %v2408, %v2372
    %v3237 = vpack.c.b16 %v2409, %v2373
    %v3238 = vpack.c.b16 %v2410, %v2374
    %v3239 = vpack.c.b16 %v2411, %v2375
    %v3240 = vpack.c.b16 %v2412, %v2376
    %v3241 = vpack.c.b16 %v2413, %v2377
    %v3242 = vpack.c.b16 %v2414, %v2378
    %v3243 = vpack.c.b16 %v2415, %v2379
    %v3244 = vpack.c.b16 %v2416, %v2380
    %v3245 = vpack.c.b16 %v2417, %v2381
    %v3246 = vpack.c.b16 %v2418, %v2382
    %v3247 = vpack.c.b16 %v2419, %v2383
    %v3248 = vpack.c.b16 %v2420, %v2384
    %v3249 = vpack.c.b16 %v2421, %v2385
    %v3250 = vpack.c.b16 %v2422, %v2386
    %v3251 = vpack.c.b16 %v2423, %v2387
    %v3252 = vpack.c.b16 %v2424, %v2388
    %v3253 = vpack.c.b16 %v2425, %v2389
    %v3254 = vpack.c.b16 %v2426, %v2390
    %v3255 = vpack.c.b16 %v2427, %v2391
    %v3256 = vpack.c.b16 %v2428, %v2392
    %v3257 = vpack.c.b16 %v2429, %v2393
    %v3258 = vpack.c.b16 %v2430, %v2394
    %v3259 = vpack.c.b16 %v2431, %v2395
    %v3260 = vpack.c.b16 %v2432, %v2396
    %v3261 = vpack.c.b16 %v2433, %v2397
    %v3262 = vpack.c.b16 %v2434, %v2398
    %v3263 = vpack.c.b16 %v2435, %v2399
    %v3264 = vpack.c.b16 %v2436, %v2400
    %v3265 = vpack.c.b16 %v2437, %v2401
    %v3266 = vpack.c.b16 %v2438, %v2402
    %v3267 = vpack.c.b16 %v2439, %v2403
    %v3268 = vpack.c.b16 %v2476, %v2440
    %v3269 = vpack.c.b16 %v2477, %v2441
    %v3270 = vpack.c.b16 %v2478, %v2442
    %v3271 = vpack.c.b16 %v2479, %v2443
    %v3272 = vpack.c.b16 %v2480, %v2444
    %v3273 = vpack.c.b16 %v2481, %v2445
    %v3274 = vpack.c.b16 %v2482, %v2446
    %v3275 = vpack.c.b16 %v2483, %v2447
    %v3276 = vpack.c.b16 %v2484, %v2448
    %v3277 = vpack.c.b16 %v2485, %v2449
    %v3278 = vpack.c.b16 %v2486, %v2450
    %v3279 = vpack.c.b16 %v2487, %v2451
    %v3280 = vpack.c.b16 %v2488, %v2452
    %v3281 = vpack.c.b16 %v2489, %v2453
    %v3282 = vpack.c.b16 %v2490, %v2454
    %v3283 = vpack.c.b16 %v2491, %v2455
    %v3284 = vpack.c.b16 %v2492, %v2456
    %v3285 = vpack.c.b16 %v2493, %v2457
    %v3286 = vpack.c.b16 %v2494, %v2458
    %v3287 = vpack.c.b16 %v2495, %v2459
    %v3288 = vpack.c.b16 %v2496, %v2460
    %v3289 = vpack.c.b16 %v2497, %v2461
    %v3290 = vpack.c.b16 %v2498, %v2462
    %v3291 = vpack.c.b16 %v2499, %v2463
    %v3292 = vpack.c.b16 %v2500, %v2464
    %v3293 = vpack.c.b16 %v2501, %v2465
    %v3294 = vpack.c.b16 %v2502, %v2466
    %v3295 = vpack.c.b16 %v2503, %v2467
    %v3296 = vpack.c.b16 %v2504, %v2468
    %v3297 = vpack.c.b16 %v2505, %v2469
    %v3298 = vpack.c.b16 %v2506, %v2470
    %v3299 = vpack.c.b16 %v2507, %v2471
    %v3300 = vpack.c.b16 %v2508, %v2472
    %v3301 = vpack.c.b16 %v2509, %v2473
    %v3302 = vpack.c.b16 %v2510, %v2474
    %v3303 = vpack.c.b16 %v2511, %v2475
    %v3304 = vpack.c.b16 %v2548, %v2512
    %v3305 = vpack.c.b16 %v2549, %v2513
    %v3306 = vpack.c.b16 %v2550, %v2514
    %v3307 = vpack.c.b16 %v2551, %v2515
    %v3308 = vpack.c.b16 %v2552, %v2516
    %v3309 = vpack.c.b16 %v2553, %v2517
    %v3310 = vpack.c.b16 %v2554, %v2518
    %v3311 = vpack.c.b16 %v2555, %v2519
    %v3312 = vpack.c.b16 %v2556, %v2520
    %v3313 = vpack.c.b16 %v2557, %v2521
    %v3314 = vpack.c.b16 %v2558, %v2522
    %v3315 = vpack.c.b16 %v2559, %v2523
    %v3316 = vpack.c.b16 %v2560, %v2524
    %v3317 = vpack.c.b16 %v2561, %v2525
    %v3318 = vpack.c.b16 %v2562, %v2526
    %v3319 = vpack.c.b16 %v2563, %v2527
    %v3320 = vpack.c.b16 %v2564, %v2528
    %v3321 = vpack.c.b16 %v2565, %v2529
    %v3322 = vpack.c.b16 %v2566, %v2530
    %v3323 = vpack.c.b16 %v2567, %v2531
    %v3324 = vpack.c.b16 %v2568, %v2532
    %v3325 = vpack.c.b16 %v2569, %v2533
    %v3326 = vpack.c.b16 %v2570, %v2534
    %v3327 = vpack.c.b16 %v2571, %v2535
    %v3328 = vpack.c.b16 %v2572, %v2536
    %v3329 = vpack.c.b16 %v2573, %v2537
    %v3330 = vpack.c.b16 %v2574, %v2538
    %v3331 = vpack.c.b16 %v2575, %v2539
    %v3332 = vpack.c.b16 %v2576, %v2540
    %v3333 = vpack.c.b16 %v2577, %v2541
    %v3334 = vpack.c.b16 %v2578, %v2542
    %v3335 = vpack.c.b16 %v2579, %v2543
    %v3336 = vpack.c.b16 %v2580, %v2544
    %v3337 = vpack.c.b16 %v2581, %v2545
    %v3338 = vpack.c.b16 %v2582, %v2546
    %v3339 = vpack.c.b16 %v2583, %v2547
    %v3340 = vpack.c.b16 %v2620, %v2584
    %v3341 = vpack.c.b16 %v2621, %v2585
    %v3342 = vpack.c.b16 %v2622, %v2586
    %v3343 = vpack.c.b16 %v2623, %v2587
    %v3344 = vpack.c.b16 %v2624, %v2588
    %v3345 = vpack.c.b16 %v2625, %v2589
    %v3346 = vpack.c.b16 %v2626, %v2590
    %v3347 = vpack.c.b16 %v2627, %v2591
    %v3348 = vpack.c.b16 %v2628, %v2592
    %v3349 = vpack.c.b16 %v2629, %v2593
    %v3350 = vpack.c.b16 %v2630, %v2594
    %v3351 = vpack.c.b16 %v2631, %v2595
    %v3352 = vpack.c.b16 %v2632, %v2596
    %v3353 = vpack.c.b16 %v2633, %v2597
    %v3354 = vpack.c.b16 %v2634, %v2598
    %v3355 = vpack.c.b16 %v2635, %v2599
    %v3356 = vpack.c.b16 %v2636, %v2600
    %v3357 = vpack.c.b16 %v2637, %v2601
    %v3358 = vpack.c.b16 %v2638, %v2602
    %v3359 = vpack.c.b16 %v2639, %v2603
    %v3360 = vpack.c.b16 %v2640, %v2604
    %v3361 = vpack.c.b16 %v2641, %v2605
    %v3362 = vpack.c.b16 %v2642, %v2606
    %v3363 = vpack.c.b16 %v2643, %v2607
    %v3364 = vpack.c.b16 %v2644, %v2608
    %v3365 = vpack.c.b16 %v2645, %v2609
    %v3366 = vpack.c.b16 %v2646, %v2610
    %v3367 = vpack.c.b16 %v2647, %v2611
    %v3368 = vpack.c.b16 %v2648, %v2612
    %v3369 = vpack.c.b16 %v2649, %v2613
    %v3370 = vpack.c.b16 %v2650, %v2614
    %v3371 = vpack.c.b16 %v2651, %v2615
    %v3372 = vpack.c.b16 %v2652, %v2616
    %v3373 = vpack.c.b16 %v2653, %v2617
    %v3374 = vpack.c.b16 %v2654, %v2618
    %v3375 = vpack.c.b16 %v2655, %v2619
    %v3376 = vpack.c.b16 %v2692, %v2656
    %v3377 = vpack.c.b16 %v2693, %v2657
    %v3378 = vpack.c.b16 %v2694, %v2658
    %v3379 = vpack.c.b16 %v2695, %v2659
    %v3380 = vpack.c.b16 %v2696, %v2660
    %v3381 = vpack.c.b16 %v2697, %v2661
    %v3382 = vpack.c.b16 %v2698, %v2662
    %v3383 = vpack.c.b16 %v2699, %v2663
    %v3384 = vpack.c.b16 %v2700, %v2664
    %v3385 = vpack.c.b16 %v2701, %v2665
    %v3386 = vpack.c.b16 %v2702, %v2666
    %v3387 = vpack.c.b16 %v2703, %v2667
    %v3388 = vpack.c.b16 %v2704, %v2668
    %v3389 = vpack.c.b16 %v2705, %v2669
    %v3390 = vpack.c.b16 %v2706, %v2670
    %v3391 = vpack.c.b16 %v2707, %v2671
    %v3392 = vpack.c.b16 %v2708, %v2672
    %v3393 = vpack.c.b16 %v2709, %v2673
    %v3394 = vpack.c.b16 %v2710, %v2674
    %v3395 = vpack.c.b16 %v2711, %v2675
    %v3396 = vpack.c.b16 %v2712, %v2676
    %v3397 = vpack.c.b16 %v2713, %v2677
    %v3398 = vpack.c.b16 %v2714, %v2678
    %v3399 = vpack.c.b16 %v2715, %v2679
    %v3400 = vpack.c.b16 %v2716, %v2680
    %v3401 = vpack.c.b16 %v2717, %v2681
    %v3402 = vpack.c.b16 %v2718, %v2682
    %v3403 = vpack.c.b16 %v2719, %v2683
    %v3404 = vpack.c.b16 %v2720, %v2684
    %v3405 = vpack.c.b16 %v2721, %v2685
    %v3406 = vpack.c.b16 %v2722, %v2686
    %v3407 = vpack.c.b16 %v2723, %v2687
    %v3408 = vpack.c.b16 %v2724, %v2688
    %v3409 = vpack.c.b16 %v2725, %v2689
    %v3410 = vpack.c.b16 %v2726, %v2690
    %v3411 = vpack.c.b16 %v2727, %v2691
    %v3412 = vpack.c.b16 %v2764, %v2728
    %v3413 = vpack.c.b16 %v2765, %v2729
    %v3414 = vpack.c.b16 %v2766, %v2730
    %v3415 = vpack.c.b16 %v2767, %v2731
    %v3416 = vpack.c.b16 %v2768, %v2732
    %v3417 = vpack.c.b16 %v2769, %v2733
    %v3418 = vpack.c.b16 %v2770, %v2734
    %v3419 = vpack.c.b16 %v2771, %v2735
    %v3420 = vpack.c.b16 %v2772, %v2736
    %v3421 = vpack.c.b16 %v2773, %v2737
    %v3422 = vpack.c.b16 %v2774, %v2738
    %v3423 = vpack.c.b16 %v2775, %v2739
    %v3424 = vpack.c.b16 %v2776, %v2740
    %v3425 = vpack.c.b16 %v2777, %v2741
    %v3426 = vpack.c.b16 %v2778, %v2742
    %v3427 = vpack.c.b16 %v2779, %v2743
    %v3428 = vpack.c.b16 %v2780, %v2744
    %v3429 = vpack.c.b16 %v2781, %v2745
    %v3430 = vpack.c.b16 %v2782, %v2746
    %v3431 = vpack.c.b16 %v2783, %v2747
    %v3432 = vpack.c.b16 %v2784, %v2748
    %v3433 = vpack.c.b16 %v2785, %v2749
    %v3434 = vpack.c.b16 %v2786, %v2750
    %v3435 = vpack.c.b16 %v2787, %v2751
    %v3436 = vpack.c.b16 %v2788, %v2752
    %v3437 = vpack.c.b16 %v2789, %v2753
    %v3438 = vpack.c.b16 %v2790, %v2754
    %v3439 = vpack.c.b16 %v2791, %v2755
    %v3440 = vpack.c.b16 %v2792, %v2756
    %v3441 = vpack.c.b16 %v2793, %v2757
    %v3442 = vpack.c.b16 %v2794, %v2758
    %v3443 = vpack.c.b16 %v2795, %v2759
    %v3444 = vpack.c.b16 %v2796, %v2760
    %v3445 = vpack.c.b16 %v2797, %v2761
    %v3446 = vpack.c.b16 %v2798, %v2762
    %v3447 = vpack.c.b16 %v2799, %v2763
    %v3448 = vpack.c.b16 %v2836, %v2800
    %v3449 = vpack.c.b16 %v2837, %v2801
    %v3450 = vpack.c.b16 %v2838, %v2802
    %v3451 = vpack.c.b16 %v2839, %v2803
    %v3452 = vpack.c.b16 %v2840, %v2804
    %v3453 = vpack.c.b16 %v2841, %v2805
    %v3454 = vpack.c.b16 %v2842, %v2806
    %v3455 = vpack.c.b16 %v2843, %v2807
    %v3456 = vpack.c.b16 %v2844, %v2808
    %v3457 = vpack.c.b16 %v2845, %v2809
    %v3458 = vpack.c.b16 %v2846, %v2810
    %v3459 = vpack.c.b16 %v2847, %v2811
    %v3460 = vpack.c.b16 %v2848, %v2812
    %v3461 = vpack.c.b16 %v2849, %v2813
    %v3462 = vpack.c.b16 %v2850, %v2814
    %v3463 = vpack.c.b16 %v2851, %v2815
    %v3464 = vpack.c.b16 %v2852, %v2816
    %v3465 = vpack.c.b16 %v2853, %v2817
    %v3466 = vpack.c.b16 %v2854, %v2818
    %v3467 = vpack.c.b16 %v2855, %v2819
    %v3468 = vpack.c.b16 %v2856, %v2820
    %v3469 = vpack.c.b16 %v2857, %v2821
    %v3470 = vpack.c.b16 %v2858, %v2822
    %v3471 = vpack.c.b16 %v2859, %v2823
    %v3472 = vpack.c.b16 %v2860, %v2824
    %v3473 = vpack.c.b16 %v2861, %v2825
    %v3474 = vpack.c.b16 %v2862, %v2826
    %v3475 = vpack.c.b16 %v2863, %v2827
    %v3476 = vpack.c.b16 %v2864, %v2828
    %v3477 = vpack.c.b16 %v2865, %v2829
    %v3478 = vpack.c.b16 %v2866, %v2830
    %v3479 = vpack.c.b16 %v2867, %v2831
    %v3480 = vpack.c.b16 %v2868, %v2832
    %v3481 = vpack.c.b16 %v2869, %v2833
    %v3482 = vpack.c.b16 %v2870, %v2834
    %v3483 = vpack.c.b16 %v2871, %v2835
    %v3484 = vpack.c.b16 %v2908, %v2872
    %v3485 = vpack.c.b16 %v2909, %v2873
    %v3486 = vpack.c.b16 %v2910, %v2874
    %v3487 = vpack.c.b16 %v2911, %v2875
    %v3488 = vpack.c.b16 %v2912, %v2876
    %v3489 = vpack.c.b16 %v2913, %v2877
    %v3490 = vpack.c.b16 %v2914, %v2878
    %v3491 = vpack.c.b16 %v2915, %v2879
    %v3492 = vpack.c.b16 %v2916, %v2880
    %v3493 = vpack.c.b16 %v2917, %v2881
    %v3494 = vpack.c.b16 %v2918, %v2882
    %v3495 = vpack.c.b16 %v2919, %v2883
    %v3496 = vpack.c.b16 %v2920, %v2884
    %v3497 = vpack.c.b16 %v2921, %v2885
    %v3498 = vpack.c.b16 %v2922, %v2886
    %v3499 = vpack.c.b16 %v2923, %v2887
    %v3500 = vpack.c.b16 %v2924, %v2888
    %v3501 = vpack.c.b16 %v2925, %v2889
    %v3502 = vpack.c.b16 %v2926, %v2890
    %v3503 = vpack.c.b16 %v2927, %v2891
    %v3504 = vpack.c.b16 %v2928, %v2892
    %v3505 = vpack.c.b16 %v2929, %v2893
    %v3506 = vpack.c.b16 %v2930, %v2894
    %v3507 = vpack.c.b16 %v2931, %v2895
    %v3508 = vpack.c.b16 %v2932, %v2896
    %v3509 = vpack.c.b16 %v2933, %v2897
    %v3510 = vpack.c.b16 %v2934, %v2898
    %v3511 = vpack.c.b16 %v2935, %v2899
    %v3512 = vpack.c.b16 %v2936, %v2900
    %v3513 = vpack.c.b16 %v2937, %v2901
    %v3514 = vpack.c.b16 %v2938, %v2902
    %v3515 = vpack.c.b16 %v2939, %v2903
    %v3516 = vpack.c.b16 %v2940, %v2904
    %v3517 = vpack.c.b16 %v2941, %v2905
    %v3518 = vpack.c.b16 %v2942, %v2906
    %v3519 = vpack.c.b16 %v2943, %v2907
    %4096 = vmatprep.subr.bf16.mxu0 %v3197
    %4097 = vmatpush1.bf16.msra.mxu0 %v3196
    %4098 = vmatprep.subr.bf16.mxu0 %v3161
    %4099 = vmatpush1.bf16.msra.mxu0 %v3160
    %4100 = vmatprep.subr.bf16.mxu0 %v3125
    %4101 = vmatpush1.bf16.msra.mxu0 %v3124
    %4102 = vmatprep.subr.bf16.mxu0 %v3089
    %4103 = vmatpush1.bf16.msra.mxu0 %v3088
    %4104 = vmatprep.subr.bf16.mxu0 %v3053
    %4105 = vmatpush1.bf16.msra.mxu0 %v3052
    %4106 = vmatprep.subr.bf16.mxu0 %v3017
    %4107 = vmatpush1.bf16.msra.mxu0 %v3016
    %4108 = vmatprep.subr.bf16.mxu0 %v2981
    %4109 = vmatpush1.bf16.msra.mxu0 %v2980
    %4110 = vmatprep.subr.bf16.mxu0 %v2945
    %4111 = vmatpush1.bf16.msra.mxu0 %v2944
    %4112 = vmatprep.subr.bf16.mxu0 %v3485
    %4113 = vmatpush2.bf16.msra.mxu0 %v3484
    %4114 = vmatprep.subr.bf16.mxu0 %v3449
    %4115 = vmatpush2.bf16.msra.mxu0 %v3448
    %4116 = vmatprep.subr.bf16.mxu0 %v3413
    %4117 = vmatpush2.bf16.msra.mxu0 %v3412
    %4118 = vmatprep.subr.bf16.mxu0 %v3377
    %4119 = vmatpush2.bf16.msra.mxu0 %v3376
    %4120 = vmatprep.subr.bf16.mxu0 %v3341
    %4121 = vmatpush2.bf16.msra.mxu0 %v3340
    %4122 = vmatprep.subr.bf16.mxu0 %v3305
    %4123 = vmatpush2.bf16.msra.mxu0 %v3304
    %4124 = vmatprep.subr.bf16.mxu0 %v3269
    %4125 = vmatpush2.bf16.msra.mxu0 %v3268
    %4126 = vmatprep.subr.bf16.mxu0 %v3233
    %4127 = vmatpush2.bf16.msra.mxu0 %v3232
    %4128 = vmatprep.mubr.bf16.mxu0 %v639
    %4129 = vmatmul.mubr.bf16.gmra.mxu0 %v638
    %v4130 = vpop.f32.mrf.mxu0
    %v4131 = vadd.f32 0.0, %v4130
    %v4132 = vpop.f32.mrf.mxu0
    %v4133 = vadd.f32 0.0, %v4132
    %v4134 = vpop.f32.mrf.mxu0
    %v4135 = vpop.f32.mrf.mxu0
    %4136 = vdwg.mxu0
    %4137 = vmatprep.subr.bf16.mxu0 %v3199
    %4138 = vmatpush1.bf16.msra.mxu0 %v3198
    %4139 = vmatprep.subr.bf16.mxu0 %v3163
    %4140 = vmatpush1.bf16.msra.mxu0 %v3162
    %4141 = vmatprep.subr.bf16.mxu0 %v3127
    %4142 = vmatpush1.bf16.msra.mxu0 %v3126
    %4143 = vmatprep.subr.bf16.mxu0 %v3091
    %4144 = vmatpush1.bf16.msra.mxu0 %v3090
    %4145 = vmatprep.subr.bf16.mxu0 %v3055
    %4146 = vmatpush1.bf16.msra.mxu0 %v3054
    %4147 = vmatprep.subr.bf16.mxu0 %v3019
    %4148 = vmatpush1.bf16.msra.mxu0 %v3018
    %4149 = vmatprep.subr.bf16.mxu0 %v2983
    %4150 = vmatpush1.bf16.msra.mxu0 %v2982
    %4151 = vmatprep.subr.bf16.mxu0 %v2947
    %4152 = vmatpush1.bf16.msra.mxu0 %v2946
    %4153 = vmatprep.subr.bf16.mxu0 %v3487
    %4154 = vmatpush2.bf16.msra.mxu0 %v3486
    %4155 = vmatprep.subr.bf16.mxu0 %v3451
    %4156 = vmatpush2.bf16.msra.mxu0 %v3450
    %4157 = vmatprep.subr.bf16.mxu0 %v3415
    %4158 = vmatpush2.bf16.msra.mxu0 %v3414
    %4159 = vmatprep.subr.bf16.mxu0 %v3379
    %4160 = vmatpush2.bf16.msra.mxu0 %v3378
    %4161 = vmatprep.subr.bf16.mxu0 %v3343
    %4162 = vmatpush2.bf16.msra.mxu0 %v3342
    %4163 = vmatprep.subr.bf16.mxu0 %v3307
    %4164 = vmatpush2.bf16.msra.mxu0 %v3306
    %4165 = vmatprep.subr.bf16.mxu0 %v3271
    %4166 = vmatpush2.bf16.msra.mxu0 %v3270
    %4167 = vmatprep.subr.bf16.mxu0 %v3235
    %4168 = vmatpush2.bf16.msra.mxu0 %v3234
    %4169 = vmatprep.mubr.bf16.mxu0 %v639
    %4170 = vmatmul.mubr.bf16.gmra.mxu0 %v638
    %v4171 = vpop.f32.mrf.mxu0
    %v4172 = vadd.f32 0.0, %v4171
    %v4173 = vpop.f32.mrf.mxu0
    %v4174 = vadd.f32 0.0, %v4173
    %v4175 = vpop.f32.mrf.mxu0
    %v4176 = vpop.f32.mrf.mxu0
    %4177 = vdwg.mxu0
    %4178 = vmatprep.subr.bf16.mxu0 %v3201
    %4179 = vmatpush1.bf16.msra.mxu0 %v3200
    %4180 = vmatprep.subr.bf16.mxu0 %v3165
    %4181 = vmatpush1.bf16.msra.mxu0 %v3164
    %4182 = vmatprep.subr.bf16.mxu0 %v3129
    %4183 = vmatpush1.bf16.msra.mxu0 %v3128
    %4184 = vmatprep.subr.bf16.mxu0 %v3093
    %4185 = vmatpush1.bf16.msra.mxu0 %v3092
    %4186 = vmatprep.subr.bf16.mxu0 %v3057
    %4187 = vmatpush1.bf16.msra.mxu0 %v3056
    %4188 = vmatprep.subr.bf16.mxu0 %v3021
    %4189 = vmatpush1.bf16.msra.mxu0 %v3020
    %4190 = vmatprep.subr.bf16.mxu0 %v2985
    %4191 = vmatpush1.bf16.msra.mxu0 %v2984
    %4192 = vmatprep.subr.bf16.mxu0 %v2949
    %4193 = vmatpush1.bf16.msra.mxu0 %v2948
    %4194 = vmatprep.subr.bf16.mxu0 %v3489
    %4195 = vmatpush2.bf16.msra.mxu0 %v3488
    %4196 = vmatprep.subr.bf16.mxu0 %v3453
    %4197 = vmatpush2.bf16.msra.mxu0 %v3452
    %4198 = vmatprep.subr.bf16.mxu0 %v3417
    %4199 = vmatpush2.bf16.msra.mxu0 %v3416
    %4200 = vmatprep.subr.bf16.mxu0 %v3381
    %4201 = vmatpush2.bf16.msra.mxu0 %v3380
    %4202 = vmatprep.subr.bf16.mxu0 %v3345
    %4203 = vmatpush2.bf16.msra.mxu0 %v3344
    %4204 = vmatprep.subr.bf16.mxu0 %v3309
    %4205 = vmatpush2.bf16.msra.mxu0 %v3308
    %4206 = vmatprep.subr.bf16.mxu0 %v3273
    %4207 = vmatpush2.bf16.msra.mxu0 %v3272
    %4208 = vmatprep.subr.bf16.mxu0 %v3237
    %4209 = vmatpush2.bf16.msra.mxu0 %v3236
    %4210 = vmatprep.mubr.bf16.mxu0 %v639
    %4211 = vmatmul.mubr.bf16.gmra.mxu0 %v638
    %v4212 = vpop.f32.mrf.mxu0
    %v4213 = vadd.f32 0.0, %v4212
    %v4214 = vpop.f32.mrf.mxu0
    %v4215 = vadd.f32 0.0, %v4214
    %v4216 = vpop.f32.mrf.mxu0
    %v4217 = vpop.f32.mrf.mxu0
    %4218 = vdwg.mxu0
    %4219 = vmatprep.subr.bf16.mxu0 %v3203
    %4220 = vmatpush1.bf16.msra.mxu0 %v3202
    %4221 = vmatprep.subr.bf16.mxu0 %v3167
    %4222 = vmatpush1.bf16.msra.mxu0 %v3166
    %4223 = vmatprep.subr.bf16.mxu0 %v3131
    %4224 = vmatpush1.bf16.msra.mxu0 %v3130
    %4225 = vmatprep.subr.bf16.mxu0 %v3095
    %4226 = vmatpush1.bf16.msra.mxu0 %v3094
    %4227 = vmatprep.subr.bf16.mxu0 %v3059
    %4228 = vmatpush1.bf16.msra.mxu0 %v3058
    %4229 = vmatprep.subr.bf16.mxu0 %v3023
    %4230 = vmatpush1.bf16.msra.mxu0 %v3022
    %4231 = vmatprep.subr.bf16.mxu0 %v2987
    %4232 = vmatpush1.bf16.msra.mxu0 %v2986
    %4233 = vmatprep.subr.bf16.mxu0 %v2951
    %4234 = vmatpush1.bf16.msra.mxu0 %v2950
    %4235 = vmatprep.subr.bf16.mxu0 %v3491
    %4236 = vmatpush2.bf16.msra.mxu0 %v3490
    %4237 = vmatprep.subr.bf16.mxu0 %v3455
    %4238 = vmatpush2.bf16.msra.mxu0 %v3454
    %4239 = vmatprep.subr.bf16.mxu0 %v3419
    %4240 = vmatpush2.bf16.msra.mxu0 %v3418
    %4241 = vmatprep.subr.bf16.mxu0 %v3383
    %4242 = vmatpush2.bf16.msra.mxu0 %v3382
    %4243 = vmatprep.subr.bf16.mxu0 %v3347
    %4244 = vmatpush2.bf16.msra.mxu0 %v3346
    %4245 = vmatprep.subr.bf16.mxu0 %v3311
    %4246 = vmatpush2.bf16.msra.mxu0 %v3310
    %4247 = vmatprep.subr.bf16.mxu0 %v3275
    %4248 = vmatpush2.bf16.msra.mxu0 %v3274
    %4249 = vmatprep.subr.bf16.mxu0 %v3239
    %4250 = vmatpush2.bf16.msra.mxu0 %v3238
    %4251 = vmatprep.mubr.bf16.mxu0 %v639
    %4252 = vmatmul.mubr.bf16.gmra.mxu0 %v638
    %v4253 = vpop.f32.mrf.mxu0
    %v4254 = vadd.f32 0.0, %v4253
    %v4255 = vpop.f32.mrf.mxu0
    %v4256 = vadd.f32 0.0, %v4255
    %v4257 = vpop.f32.mrf.mxu0
    %v4258 = vpop.f32.mrf.mxu0
    %4259 = vdwg.mxu0
    %4260 = vmatprep.subr.bf16.mxu0 %v3205
    %4261 = vmatpush1.bf16.msra.mxu0 %v3204
    %4262 = vmatprep.subr.bf16.mxu0 %v3169
    %4263 = vmatpush1.bf16.msra.mxu0 %v3168
    %4264 = vmatprep.subr.bf16.mxu0 %v3133
    %4265 = vmatpush1.bf16.msra.mxu0 %v3132
    %4266 = vmatprep.subr.bf16.mxu0 %v3097
    %4267 = vmatpush1.bf16.msra.mxu0 %v3096
    %4268 = vmatprep.subr.bf16.mxu0 %v3061
    %4269 = vmatpush1.bf16.msra.mxu0 %v3060
    %4270 = vmatprep.subr.bf16.mxu0 %v3025
    %4271 = vmatpush1.bf16.msra.mxu0 %v3024
    %4272 = vmatprep.subr.bf16.mxu0 %v2989
    %4273 = vmatpush1.bf16.msra.mxu0 %v2988
    %4274 = vmatprep.subr.bf16.mxu0 %v2953
    %4275 = vmatpush1.bf16.msra.mxu0 %v2952
    %4276 = vmatprep.subr.bf16.mxu0 %v3493
    %4277 = vmatpush2.bf16.msra.mxu0 %v3492
    %4278 = vmatprep.subr.bf16.mxu0 %v3457
    %4279 = vmatpush2.bf16.msra.mxu0 %v3456
    %4280 = vmatprep.subr.bf16.mxu0 %v3421
    %4281 = vmatpush2.bf16.msra.mxu0 %v3420
    %4282 = vmatprep.subr.bf16.mxu0 %v3385
    %4283 = vmatpush2.bf16.msra.mxu0 %v3384
    %4284 = vmatprep.subr.bf16.mxu0 %v3349
    %4285 = vmatpush2.bf16.msra.mxu0 %v3348
    %4286 = vmatprep.subr.bf16.mxu0 %v3313
    %4287 = vmatpush2.bf16.msra.mxu0 %v3312
    %4288 = vmatprep.subr.bf16.mxu0 %v3277
    %4289 = vmatpush2.bf16.msra.mxu0 %v3276
    %4290 = vmatprep.subr.bf16.mxu0 %v3241
    %4291 = vmatpush2.bf16.msra.mxu0 %v3240
    %4292 = vmatprep.mubr.bf16.mxu0 %v639
    %4293 = vmatmul.mubr.bf16.gmra.mxu0 %v638
    %v4294 = vpop.f32.mrf.mxu0
    %v4295 = vadd.f32 0.0, %v4294
    %v4296 = vpop.f32.mrf.mxu0
    %v4297 = vadd.f32 0.0, %v4296
    %v4298 = vpop.f32.mrf.mxu0
    %v4299 = vpop.f32.mrf.mxu0
    %4300 = vdwg.mxu0
    %4301 = vmatprep.subr.bf16.mxu0 %v3207
    %4302 = vmatpush1.bf16.msra.mxu0 %v3206
    %4303 = vmatprep.subr.bf16.mxu0 %v3171
    %4304 = vmatpush1.bf16.msra.mxu0 %v3170
    %4305 = vmatprep.subr.bf16.mxu0 %v3135
    %4306 = vmatpush1.bf16.msra.mxu0 %v3134
    %4307 = vmatprep.subr.bf16.mxu0 %v3099
    %4308 = vmatpush1.bf16.msra.mxu0 %v3098
    %4309 = vmatprep.subr.bf16.mxu0 %v3063
    %4310 = vmatpush1.bf16.msra.mxu0 %v3062
    %4311 = vmatprep.subr.bf16.mxu0 %v3027
    %4312 = vmatpush1.bf16.msra.mxu0 %v3026
    %4313 = vmatprep.subr.bf16.mxu0 %v2991
    %4314 = vmatpush1.bf16.msra.mxu0 %v2990
    %4315 = vmatprep.subr.bf16.mxu0 %v2955
    %4316 = vmatpush1.bf16.msra.mxu0 %v2954
    %4317 = vmatprep.subr.bf16.mxu0 %v3495
    %4318 = vmatpush2.bf16.msra.mxu0 %v3494
    %4319 = vmatprep.subr.bf16.mxu0 %v3459
    %4320 = vmatpush2.bf16.msra.mxu0 %v3458
    %4321 = vmatprep.subr.bf16.mxu0 %v3423
    %4322 = vmatpush2.bf16.msra.mxu0 %v3422
    %4323 = vmatprep.subr.bf16.mxu0 %v3387
    %4324 = vmatpush2.bf16.msra.mxu0 %v3386
    %4325 = vmatprep.subr.bf16.mxu0 %v3351
    %4326 = vmatpush2.bf16.msra.mxu0 %v3350
    %4327 = vmatprep.subr.bf16.mxu0 %v3315
    %4328 = vmatpush2.bf16.msra.mxu0 %v3314
    %4329 = vmatprep.subr.bf16.mxu0 %v3279
    %4330 = vmatpush2.bf16.msra.mxu0 %v3278
    %4331 = vmatprep.subr.bf16.mxu0 %v3243
    %4332 = vmatpush2.bf16.msra.mxu0 %v3242
    %4333 = vmatprep.mubr.bf16.mxu0 %v639
    %4334 = vmatmul.mubr.bf16.gmra.mxu0 %v638
    %v4335 = vpop.f32.mrf.mxu0
    %v4336 = vadd.f32 0.0, %v4335
    %v4337 = vpop.f32.mrf.mxu0
    %v4338 = vadd.f32 0.0, %v4337
    %v4339 = vpop.f32.mrf.mxu0
    %v4340 = vpop.f32.mrf.mxu0
    %4341 = vdwg.mxu0
    %4342 = vmatprep.subr.bf16.mxu0 %v3209
    %4343 = vmatpush1.bf16.msra.mxu0 %v3208
    %4344 = vmatprep.subr.bf16.mxu0 %v3173
    %4345 = vmatpush1.bf16.msra.mxu0 %v3172
    %4346 = vmatprep.subr.bf16.mxu0 %v3137
    %4347 = vmatpush1.bf16.msra.mxu0 %v3136
    %4348 = vmatprep.subr.bf16.mxu0 %v3101
    %4349 = vmatpush1.bf16.msra.mxu0 %v3100
    %4350 = vmatprep.subr.bf16.mxu0 %v3065
    %4351 = vmatpush1.bf16.msra.mxu0 %v3064
    %4352 = vmatprep.subr.bf16.mxu0 %v3029
    %4353 = vmatpush1.bf16.msra.mxu0 %v3028
    %4354 = vmatprep.subr.bf16.mxu0 %v2993
    %4355 = vmatpush1.bf16.msra.mxu0 %v2992
    %4356 = vmatprep.subr.bf16.mxu0 %v2957
    %4357 = vmatpush1.bf16.msra.mxu0 %v2956
    %4358 = vmatprep.subr.bf16.mxu0 %v3497
    %4359 = vmatpush2.bf16.msra.mxu0 %v3496
    %4360 = vmatprep.subr.bf16.mxu0 %v3461
    %4361 = vmatpush2.bf16.msra.mxu0 %v3460
    %4362 = vmatprep.subr.bf16.mxu0 %v3425
    %4363 = vmatpush2.bf16.msra.mxu0 %v3424
    %4364 = vmatprep.subr.bf16.mxu0 %v3389
    %4365 = vmatpush2.bf16.msra.mxu0 %v3388
    %4366 = vmatprep.subr.bf16.mxu0 %v3353
    %4367 = vmatpush2.bf16.msra.mxu0 %v3352
    %4368 = vmatprep.subr.bf16.mxu0 %v3317
    %4369 = vmatpush2.bf16.msra.mxu0 %v3316
    %4370 = vmatprep.subr.bf16.mxu0 %v3281
    %4371 = vmatpush2.bf16.msra.mxu0 %v3280
    %4372 = vmatprep.subr.bf16.mxu0 %v3245
    %4373 = vmatpush2.bf16.msra.mxu0 %v3244
    %4374 = vmatprep.mubr.bf16.mxu0 %v639
    %4375 = vmatmul.mubr.bf16.gmra.mxu0 %v638
    %v4376 = vpop.f32.mrf.mxu0
    %v4377 = vadd.f32 0.0, %v4376
    %v4378 = vpop.f32.mrf.mxu0
    %v4379 = vadd.f32 0.0, %v4378
    %v4380 = vpop.f32.mrf.mxu0
    %v4381 = vpop.f32.mrf.mxu0
    %4382 = vdwg.mxu0
    %4383 = vmatprep.subr.bf16.mxu0 %v3211
    %4384 = vmatpush1.bf16.msra.mxu0 %v3210
    %4385 = vmatprep.subr.bf16.mxu0 %v3175
    %4386 = vmatpush1.bf16.msra.mxu0 %v3174
    %4387 = vmatprep.subr.bf16.mxu0 %v3139
    %4388 = vmatpush1.bf16.msra.mxu0 %v3138
    %4389 = vmatprep.subr.bf16.mxu0 %v3103
    %4390 = vmatpush1.bf16.msra.mxu0 %v3102
    %4391 = vmatprep.subr.bf16.mxu0 %v3067
    %4392 = vmatpush1.bf16.msra.mxu0 %v3066
    %4393 = vmatprep.subr.bf16.mxu0 %v3031
    %4394 = vmatpush1.bf16.msra.mxu0 %v3030
    %4395 = vmatprep.subr.bf16.mxu0 %v2995
    %4396 = vmatpush1.bf16.msra.mxu0 %v2994
    %4397 = vmatprep.subr.bf16.mxu0 %v2959
    %4398 = vmatpush1.bf16.msra.mxu0 %v2958
    %4399 = vmatprep.subr.bf16.mxu0 %v3499
    %4400 = vmatpush2.bf16.msra.mxu0 %v3498
    %4401 = vmatprep.subr.bf16.mxu0 %v3463
    %4402 = vmatpush2.bf16.msra.mxu0 %v3462
    %4403 = vmatprep.subr.bf16.mxu0 %v3427
    %4404 = vmatpush2.bf16.msra.mxu0 %v3426
    %4405 = vmatprep.subr.bf16.mxu0 %v3391
    %4406 = vmatpush2.bf16.msra.mxu0 %v3390
    %4407 = vmatprep.subr.bf16.mxu0 %v3355
    %4408 = vmatpush2.bf16.msra.mxu0 %v3354
    %4409 = vmatprep.subr.bf16.mxu0 %v3319
    %4410 = vmatpush2.bf16.msra.mxu0 %v3318
    %4411 = vmatprep.subr.bf16.mxu0 %v3283
    %4412 = vmatpush2.bf16.msra.mxu0 %v3282
    %4413 = vmatprep.subr.bf16.mxu0 %v3247
    %4414 = vmatpush2.bf16.msra.mxu0 %v3246
    %4415 = vmatprep.mubr.bf16.mxu0 %v639
    %4416 = vmatmul.mubr.bf16.gmra.mxu0 %v638
    %v4417 = vpop.f32.mrf.mxu0
    %v4418 = vadd.f32 0.0, %v4417
    %v4419 = vpop.f32.mrf.mxu0
    %v4420 = vadd.f32 0.0, %v4419
    %v4421 = vpop.f32.mrf.mxu0
    %v4422 = vpop.f32.mrf.mxu0
    %4423 = vdwg.mxu0
    %4424 = vmatprep.subr.bf16.mxu0 %v3213
    %4425 = vmatpush1.bf16.msra.mxu0 %v3212
    %4426 = vmatprep.subr.bf16.mxu0 %v3177
    %4427 = vmatpush1.bf16.msra.mxu0 %v3176
    %4428 = vmatprep.subr.bf16.mxu0 %v3141
    %4429 = vmatpush1.bf16.msra.mxu0 %v3140
    %4430 = vmatprep.subr.bf16.mxu0 %v3105
    %4431 = vmatpush1.bf16.msra.mxu0 %v3104
    %4432 = vmatprep.subr.bf16.mxu0 %v3069
    %4433 = vmatpush1.bf16.msra.mxu0 %v3068
    %4434 = vmatprep.subr.bf16.mxu0 %v3033
    %4435 = vmatpush1.bf16.msra.mxu0 %v3032
    %4436 = vmatprep.subr.bf16.mxu0 %v2997
    %4437 = vmatpush1.bf16.msra.mxu0 %v2996
    %4438 = vmatprep.subr.bf16.mxu0 %v2961
    %4439 = vmatpush1.bf16.msra.mxu0 %v2960
    %4440 = vmatprep.subr.bf16.mxu0 %v3501
    %4441 = vmatpush2.bf16.msra.mxu0 %v3500
    %4442 = vmatprep.subr.bf16.mxu0 %v3465
    %4443 = vmatpush2.bf16.msra.mxu0 %v3464
    %4444 = vmatprep.subr.bf16.mxu0 %v3429
    %4445 = vmatpush2.bf16.msra.mxu0 %v3428
    %4446 = vmatprep.subr.bf16.mxu0 %v3393
    %4447 = vmatpush2.bf16.msra.mxu0 %v3392
    %4448 = vmatprep.subr.bf16.mxu0 %v3357
    %4449 = vmatpush2.bf16.msra.mxu0 %v3356
    %4450 = vmatprep.subr.bf16.mxu0 %v3321
    %4451 = vmatpush2.bf16.msra.mxu0 %v3320
    %4452 = vmatprep.subr.bf16.mxu0 %v3285
    %4453 = vmatpush2.bf16.msra.mxu0 %v3284
    %4454 = vmatprep.subr.bf16.mxu0 %v3249
    %4455 = vmatpush2.bf16.msra.mxu0 %v3248
    %4456 = vmatprep.mubr.bf16.mxu0 %v639
    %4457 = vmatmul.mubr.bf16.gmra.mxu0 %v638
    %v4458 = vpop.f32.mrf.mxu0
    %v4459 = vadd.f32 0.0, %v4458
    %v4460 = vpop.f32.mrf.mxu0
    %v4461 = vadd.f32 0.0, %v4460
    %v4462 = vpop.f32.mrf.mxu0
    %v4463 = vpop.f32.mrf.mxu0
    %4464 = vdwg.mxu0
    %4465 = vmatprep.subr.bf16.mxu0 %v3215
    %4466 = vmatpush1.bf16.msra.mxu0 %v3214
    %4467 = vmatprep.subr.bf16.mxu0 %v3179
    %4468 = vmatpush1.bf16.msra.mxu0 %v3178
    %4469 = vmatprep.subr.bf16.mxu0 %v3143
    %4470 = vmatpush1.bf16.msra.mxu0 %v3142
    %4471 = vmatprep.subr.bf16.mxu0 %v3107
    %4472 = vmatpush1.bf16.msra.mxu0 %v3106
    %4473 = vmatprep.subr.bf16.mxu0 %v3071
    %4474 = vmatpush1.bf16.msra.mxu0 %v3070
    %4475 = vmatprep.subr.bf16.mxu0 %v3035
    %4476 = vmatpush1.bf16.msra.mxu0 %v3034
    %4477 = vmatprep.subr.bf16.mxu0 %v2999
    %4478 = vmatpush1.bf16.msra.mxu0 %v2998
    %4479 = vmatprep.subr.bf16.mxu0 %v2963
    %4480 = vmatpush1.bf16.msra.mxu0 %v2962
    %4481 = vmatprep.subr.bf16.mxu0 %v3503
    %4482 = vmatpush2.bf16.msra.mxu0 %v3502
    %4483 = vmatprep.subr.bf16.mxu0 %v3467
    %4484 = vmatpush2.bf16.msra.mxu0 %v3466
    %4485 = vmatprep.subr.bf16.mxu0 %v3431
    %4486 = vmatpush2.bf16.msra.mxu0 %v3430
    %4487 = vmatprep.subr.bf16.mxu0 %v3395
    %4488 = vmatpush2.bf16.msra.mxu0 %v3394
    %4489 = vmatprep.subr.bf16.mxu0 %v3359
    %4490 = vmatpush2.bf16.msra.mxu0 %v3358
    %4491 = vmatprep.subr.bf16.mxu0 %v3323
    %4492 = vmatpush2.bf16.msra.mxu0 %v3322
    %4493 = vmatprep.subr.bf16.mxu0 %v3287
    %4494 = vmatpush2.bf16.msra.mxu0 %v3286
    %4495 = vmatprep.subr.bf16.mxu0 %v3251
    %4496 = vmatpush2.bf16.msra.mxu0 %v3250
    %4497 = vmatprep.mubr.bf16.mxu0 %v639
    %4498 = vmatmul.mubr.bf16.gmra.mxu0 %v638
    %v4499 = vpop.f32.mrf.mxu0
    %v4500 = vadd.f32 0.0, %v4499
    %v4501 = vpop.f32.mrf.mxu0
    %v4502 = vadd.f32 0.0, %v4501
    %v4503 = vpop.f32.mrf.mxu0
    %v4504 = vpop.f32.mrf.mxu0
    %4505 = vdwg.mxu0
    %4506 = vmatprep.subr.bf16.mxu0 %v3217
    %4507 = vmatpush1.bf16.msra.mxu0 %v3216
    %4508 = vmatprep.subr.bf16.mxu0 %v3181
    %4509 = vmatpush1.bf16.msra.mxu0 %v3180
    %4510 = vmatprep.subr.bf16.mxu0 %v3145
    %4511 = vmatpush1.bf16.msra.mxu0 %v3144
    %4512 = vmatprep.subr.bf16.mxu0 %v3109
    %4513 = vmatpush1.bf16.msra.mxu0 %v3108
    %4514 = vmatprep.subr.bf16.mxu0 %v3073
    %4515 = vmatpush1.bf16.msra.mxu0 %v3072
    %4516 = vmatprep.subr.bf16.mxu0 %v3037
    %4517 = vmatpush1.bf16.msra.mxu0 %v3036
    %4518 = vmatprep.subr.bf16.mxu0 %v3001
    %4519 = vmatpush1.bf16.msra.mxu0 %v3000
    %4520 = vmatprep.subr.bf16.mxu0 %v2965
    %4521 = vmatpush1.bf16.msra.mxu0 %v2964
    %4522 = vmatprep.subr.bf16.mxu0 %v3505
    %4523 = vmatpush2.bf16.msra.mxu0 %v3504
    %4524 = vmatprep.subr.bf16.mxu0 %v3469
    %4525 = vmatpush2.bf16.msra.mxu0 %v3468
    %4526 = vmatprep.subr.bf16.mxu0 %v3433
    %4527 = vmatpush2.bf16.msra.mxu0 %v3432
    %4528 = vmatprep.subr.bf16.mxu0 %v3397
    %4529 = vmatpush2.bf16.msra.mxu0 %v3396
    %4530 = vmatprep.subr.bf16.mxu0 %v3361
    %4531 = vmatpush2.bf16.msra.mxu0 %v3360
    %4532 = vmatprep.subr.bf16.mxu0 %v3325
    %4533 = vmatpush2.bf16.msra.mxu0 %v3324
    %4534 = vmatprep.subr.bf16.mxu0 %v3289
    %4535 = vmatpush2.bf16.msra.mxu0 %v3288
    %4536 = vmatprep.subr.bf16.mxu0 %v3253
    %4537 = vmatpush2.bf16.msra.mxu0 %v3252
    %4538 = vmatprep.mubr.bf16.mxu0 %v639
    %4539 = vmatmul.mubr.bf16.gmra.mxu0 %v638
    %v4540 = vpop.f32.mrf.mxu0
    %v4541 = vadd.f32 0.0, %v4540
    %v4542 = vpop.f32.mrf.mxu0
    %v4543 = vadd.f32 0.0, %v4542
    %v4544 = vpop.f32.mrf.mxu0
    %v4545 = vpop.f32.mrf.mxu0
    %4546 = vdwg.mxu0
    %4547 = vmatprep.subr.bf16.mxu0 %v3219
    %4548 = vmatpush1.bf16.msra.mxu0 %v3218
    %4549 = vmatprep.subr.bf16.mxu0 %v3183
    %4550 = vmatpush1.bf16.msra.mxu0 %v3182
    %4551 = vmatprep.subr.bf16.mxu0 %v3147
    %4552 = vmatpush1.bf16.msra.mxu0 %v3146
    %4553 = vmatprep.subr.bf16.mxu0 %v3111
    %4554 = vmatpush1.bf16.msra.mxu0 %v3110
    %4555 = vmatprep.subr.bf16.mxu0 %v3075
    %4556 = vmatpush1.bf16.msra.mxu0 %v3074
    %4557 = vmatprep.subr.bf16.mxu0 %v3039
    %4558 = vmatpush1.bf16.msra.mxu0 %v3038
    %4559 = vmatprep.subr.bf16.mxu0 %v3003
    %4560 = vmatpush1.bf16.msra.mxu0 %v3002
    %4561 = vmatprep.subr.bf16.mxu0 %v2967
    %4562 = vmatpush1.bf16.msra.mxu0 %v2966
    %4563 = vmatprep.subr.bf16.mxu0 %v3507
    %4564 = vmatpush2.bf16.msra.mxu0 %v3506
    %4565 = vmatprep.subr.bf16.mxu0 %v3471
    %4566 = vmatpush2.bf16.msra.mxu0 %v3470
    %4567 = vmatprep.subr.bf16.mxu0 %v3435
    %4568 = vmatpush2.bf16.msra.mxu0 %v3434
    %4569 = vmatprep.subr.bf16.mxu0 %v3399
    %4570 = vmatpush2.bf16.msra.mxu0 %v3398
    %4571 = vmatprep.subr.bf16.mxu0 %v3363
    %4572 = vmatpush2.bf16.msra.mxu0 %v3362
    %4573 = vmatprep.subr.bf16.mxu0 %v3327
    %4574 = vmatpush2.bf16.msra.mxu0 %v3326
    %4575 = vmatprep.subr.bf16.mxu0 %v3291
    %4576 = vmatpush2.bf16.msra.mxu0 %v3290
    %4577 = vmatprep.subr.bf16.mxu0 %v3255
    %4578 = vmatpush2.bf16.msra.mxu0 %v3254
    %4579 = vmatprep.mubr.bf16.mxu0 %v639
    %4580 = vmatmul.mubr.bf16.gmra.mxu0 %v638
    %v4581 = vpop.f32.mrf.mxu0
    %v4582 = vadd.f32 0.0, %v4581
    %v4583 = vpop.f32.mrf.mxu0
    %v4584 = vadd.f32 0.0, %v4583
    %v4585 = vpop.f32.mrf.mxu0
    %v4586 = vpop.f32.mrf.mxu0
    %4587 = vdwg.mxu0
    %4588 = vmatprep.subr.bf16.mxu0 %v3221
    %4589 = vmatpush1.bf16.msra.mxu0 %v3220
    %4590 = vmatprep.subr.bf16.mxu0 %v3185
    %4591 = vmatpush1.bf16.msra.mxu0 %v3184
    %4592 = vmatprep.subr.bf16.mxu0 %v3149
    %4593 = vmatpush1.bf16.msra.mxu0 %v3148
    %4594 = vmatprep.subr.bf16.mxu0 %v3113
    %4595 = vmatpush1.bf16.msra.mxu0 %v3112
    %4596 = vmatprep.subr.bf16.mxu0 %v3077
    %4597 = vmatpush1.bf16.msra.mxu0 %v3076
    %4598 = vmatprep.subr.bf16.mxu0 %v3041
    %4599 = vmatpush1.bf16.msra.mxu0 %v3040
    %4600 = vmatprep.subr.bf16.mxu0 %v3005
    %4601 = vmatpush1.bf16.msra.mxu0 %v3004
    %4602 = vmatprep.subr.bf16.mxu0 %v2969
    %4603 = vmatpush1.bf16.msra.mxu0 %v2968
    %4604 = vmatprep.subr.bf16.mxu0 %v3509
    %4605 = vmatpush2.bf16.msra.mxu0 %v3508
    %4606 = vmatprep.subr.bf16.mxu0 %v3473
    %4607 = vmatpush2.bf16.msra.mxu0 %v3472
    %4608 = vmatprep.subr.bf16.mxu0 %v3437
    %4609 = vmatpush2.bf16.msra.mxu0 %v3436
    %4610 = vmatprep.subr.bf16.mxu0 %v3401
    %4611 = vmatpush2.bf16.msra.mxu0 %v3400
    %4612 = vmatprep.subr.bf16.mxu0 %v3365
    %4613 = vmatpush2.bf16.msra.mxu0 %v3364
    %4614 = vmatprep.subr.bf16.mxu0 %v3329
    %4615 = vmatpush2.bf16.msra.mxu0 %v3328
    %4616 = vmatprep.subr.bf16.mxu0 %v3293
    %4617 = vmatpush2.bf16.msra.mxu0 %v3292
    %4618 = vmatprep.subr.bf16.mxu0 %v3257
    %4619 = vmatpush2.bf16.msra.mxu0 %v3256
    %4620 = vmatprep.mubr.bf16.mxu0 %v639
    %4621 = vmatmul.mubr.bf16.gmra.mxu0 %v638
    %v4622 = vpop.f32.mrf.mxu0
    %v4623 = vadd.f32 0.0, %v4622
    %v4624 = vpop.f32.mrf.mxu0
    %v4625 = vadd.f32 0.0, %v4624
    %v4626 = vpop.f32.mrf.mxu0
    %v4627 = vpop.f32.mrf.mxu0
    %4628 = vdwg.mxu0
    %4629 = vmatprep.subr.bf16.mxu0 %v3223
    %4630 = vmatpush1.bf16.msra.mxu0 %v3222
    %4631 = vmatprep.subr.bf16.mxu0 %v3187
    %4632 = vmatpush1.bf16.msra.mxu0 %v3186
    %4633 = vmatprep.subr.bf16.mxu0 %v3151
    %4634 = vmatpush1.bf16.msra.mxu0 %v3150
    %4635 = vmatprep.subr.bf16.mxu0 %v3115
    %4636 = vmatpush1.bf16.msra.mxu0 %v3114
    %4637 = vmatprep.subr.bf16.mxu0 %v3079
    %4638 = vmatpush1.bf16.msra.mxu0 %v3078
    %4639 = vmatprep.subr.bf16.mxu0 %v3043
    %4640 = vmatpush1.bf16.msra.mxu0 %v3042
    %4641 = vmatprep.subr.bf16.mxu0 %v3007
    %4642 = vmatpush1.bf16.msra.mxu0 %v3006
    %4643 = vmatprep.subr.bf16.mxu0 %v2971
    %4644 = vmatpush1.bf16.msra.mxu0 %v2970
    %4645 = vmatprep.subr.bf16.mxu0 %v3511
    %4646 = vmatpush2.bf16.msra.mxu0 %v3510
    %4647 = vmatprep.subr.bf16.mxu0 %v3475
    %4648 = vmatpush2.bf16.msra.mxu0 %v3474
    %4649 = vmatprep.subr.bf16.mxu0 %v3439
    %4650 = vmatpush2.bf16.msra.mxu0 %v3438
    %4651 = vmatprep.subr.bf16.mxu0 %v3403
    %4652 = vmatpush2.bf16.msra.mxu0 %v3402
    %4653 = vmatprep.subr.bf16.mxu0 %v3367
    %4654 = vmatpush2.bf16.msra.mxu0 %v3366
    %4655 = vmatprep.subr.bf16.mxu0 %v3331
    %4656 = vmatpush2.bf16.msra.mxu0 %v3330
    %4657 = vmatprep.subr.bf16.mxu0 %v3295
    %4658 = vmatpush2.bf16.msra.mxu0 %v3294
    %4659 = vmatprep.subr.bf16.mxu0 %v3259
    %4660 = vmatpush2.bf16.msra.mxu0 %v3258
    %4661 = vmatprep.mubr.bf16.mxu0 %v639
    %4662 = vmatmul.mubr.bf16.gmra.mxu0 %v638
    %v4663 = vpop.f32.mrf.mxu0
    %v4664 = vadd.f32 0.0, %v4663
    %v4665 = vpop.f32.mrf.mxu0
    %v4666 = vadd.f32 0.0, %v4665
    %v4667 = vpop.f32.mrf.mxu0
    %v4668 = vpop.f32.mrf.mxu0
    %4669 = vdwg.mxu0
    %4670 = vmatprep.subr.bf16.mxu0 %v3225
    %4671 = vmatpush1.bf16.msra.mxu0 %v3224
    %4672 = vmatprep.subr.bf16.mxu0 %v3189
    %4673 = vmatpush1.bf16.msra.mxu0 %v3188
    %4674 = vmatprep.subr.bf16.mxu0 %v3153
    %4675 = vmatpush1.bf16.msra.mxu0 %v3152
    %4676 = vmatprep.subr.bf16.mxu0 %v3117
    %4677 = vmatpush1.bf16.msra.mxu0 %v3116
    %4678 = vmatprep.subr.bf16.mxu0 %v3081
    %4679 = vmatpush1.bf16.msra.mxu0 %v3080
    %4680 = vmatprep.subr.bf16.mxu0 %v3045
    %4681 = vmatpush1.bf16.msra.mxu0 %v3044
    %4682 = vmatprep.subr.bf16.mxu0 %v3009
    %4683 = vmatpush1.bf16.msra.mxu0 %v3008
    %4684 = vmatprep.subr.bf16.mxu0 %v2973
    %4685 = vmatpush1.bf16.msra.mxu0 %v2972
    %4686 = vmatprep.subr.bf16.mxu0 %v3513
    %4687 = vmatpush2.bf16.msra.mxu0 %v3512
    %4688 = vmatprep.subr.bf16.mxu0 %v3477
    %4689 = vmatpush2.bf16.msra.mxu0 %v3476
    %4690 = vmatprep.subr.bf16.mxu0 %v3441
    %4691 = vmatpush2.bf16.msra.mxu0 %v3440
    %4692 = vmatprep.subr.bf16.mxu0 %v3405
    %4693 = vmatpush2.bf16.msra.mxu0 %v3404
    %4694 = vmatprep.subr.bf16.mxu0 %v3369
    %4695 = vmatpush2.bf16.msra.mxu0 %v3368
    %4696 = vmatprep.subr.bf16.mxu0 %v3333
    %4697 = vmatpush2.bf16.msra.mxu0 %v3332
    %4698 = vmatprep.subr.bf16.mxu0 %v3297
    %4699 = vmatpush2.bf16.msra.mxu0 %v3296
    %4700 = vmatprep.subr.bf16.mxu0 %v3261
    %4701 = vmatpush2.bf16.msra.mxu0 %v3260
    %4702 = vmatprep.mubr.bf16.mxu0 %v639
    %4703 = vmatmul.mubr.bf16.gmra.mxu0 %v638
    %v4704 = vpop.f32.mrf.mxu0
    %v4705 = vadd.f32 0.0, %v4704
    %v4706 = vpop.f32.mrf.mxu0
    %v4707 = vadd.f32 0.0, %v4706
    %v4708 = vpop.f32.mrf.mxu0
    %v4709 = vpop.f32.mrf.mxu0
    %4710 = vdwg.mxu0
    %4711 = vmatprep.subr.bf16.mxu0 %v3227
    %4712 = vmatpush1.bf16.msra.mxu0 %v3226
    %4713 = vmatprep.subr.bf16.mxu0 %v3191
    %4714 = vmatpush1.bf16.msra.mxu0 %v3190
    %4715 = vmatprep.subr.bf16.mxu0 %v3155
    %4716 = vmatpush1.bf16.msra.mxu0 %v3154
    %4717 = vmatprep.subr.bf16.mxu0 %v3119
    %4718 = vmatpush1.bf16.msra.mxu0 %v3118
    %4719 = vmatprep.subr.bf16.mxu0 %v3083
    %4720 = vmatpush1.bf16.msra.mxu0 %v3082
    %4721 = vmatprep.subr.bf16.mxu0 %v3047
    %4722 = vmatpush1.bf16.msra.mxu0 %v3046
    %4723 = vmatprep.subr.bf16.mxu0 %v3011
    %4724 = vmatpush1.bf16.msra.mxu0 %v3010
    %4725 = vmatprep.subr.bf16.mxu0 %v2975
    %4726 = vmatpush1.bf16.msra.mxu0 %v2974
    %4727 = vmatprep.subr.bf16.mxu0 %v3515
    %4728 = vmatpush2.bf16.msra.mxu0 %v3514
    %4729 = vmatprep.subr.bf16.mxu0 %v3479
    %4730 = vmatpush2.bf16.msra.mxu0 %v3478
    %4731 = vmatprep.subr.bf16.mxu0 %v3443
    %4732 = vmatpush2.bf16.msra.mxu0 %v3442
    %4733 = vmatprep.subr.bf16.mxu0 %v3407
    %4734 = vmatpush2.bf16.msra.mxu0 %v3406
    %4735 = vmatprep.subr.bf16.mxu0 %v3371
    %4736 = vmatpush2.bf16.msra.mxu0 %v3370
    %4737 = vmatprep.subr.bf16.mxu0 %v3335
    %4738 = vmatpush2.bf16.msra.mxu0 %v3334
    %4739 = vmatprep.subr.bf16.mxu0 %v3299
    %4740 = vmatpush2.bf16.msra.mxu0 %v3298
    %4741 = vmatprep.subr.bf16.mxu0 %v3263
    %4742 = vmatpush2.bf16.msra.mxu0 %v3262
    %4743 = vmatprep.mubr.bf16.mxu0 %v639
    %4744 = vmatmul.mubr.bf16.gmra.mxu0 %v638
    %v4745 = vpop.f32.mrf.mxu0
    %v4746 = vadd.f32 0.0, %v4745
    %v4747 = vpop.f32.mrf.mxu0
    %v4748 = vadd.f32 0.0, %v4747
    %v4749 = vpop.f32.mrf.mxu0
    %v4750 = vpop.f32.mrf.mxu0
    %4751 = vdwg.mxu0
    %4752 = vmatprep.subr.bf16.mxu0 %v3229
    %4753 = vmatpush1.bf16.msra.mxu0 %v3228
    %4754 = vmatprep.subr.bf16.mxu0 %v3193
    %4755 = vmatpush1.bf16.msra.mxu0 %v3192
    %4756 = vmatprep.subr.bf16.mxu0 %v3157
    %4757 = vmatpush1.bf16.msra.mxu0 %v3156
    %4758 = vmatprep.subr.bf16.mxu0 %v3121
    %4759 = vmatpush1.bf16.msra.mxu0 %v3120
    %4760 = vmatprep.subr.bf16.mxu0 %v3085
    %4761 = vmatpush1.bf16.msra.mxu0 %v3084
    %4762 = vmatprep.subr.bf16.mxu0 %v3049
    %4763 = vmatpush1.bf16.msra.mxu0 %v3048
    %4764 = vmatprep.subr.bf16.mxu0 %v3013
    %4765 = vmatpush1.bf16.msra.mxu0 %v3012
    %4766 = vmatprep.subr.bf16.mxu0 %v2977
    %4767 = vmatpush1.bf16.msra.mxu0 %v2976
    %4768 = vmatprep.subr.bf16.mxu0 %v3517
    %4769 = vmatpush2.bf16.msra.mxu0 %v3516
    %4770 = vmatprep.subr.bf16.mxu0 %v3481
    %4771 = vmatpush2.bf16.msra.mxu0 %v3480
    %4772 = vmatprep.subr.bf16.mxu0 %v3445
    %4773 = vmatpush2.bf16.msra.mxu0 %v3444
    %4774 = vmatprep.subr.bf16.mxu0 %v3409
    %4775 = vmatpush2.bf16.msra.mxu0 %v3408
    %4776 = vmatprep.subr.bf16.mxu0 %v3373
    %4777 = vmatpush2.bf16.msra.mxu0 %v3372
    %4778 = vmatprep.subr.bf16.mxu0 %v3337
    %4779 = vmatpush2.bf16.msra.mxu0 %v3336
    %4780 = vmatprep.subr.bf16.mxu0 %v3301
    %4781 = vmatpush2.bf16.msra.mxu0 %v3300
    %4782 = vmatprep.subr.bf16.mxu0 %v3265
    %4783 = vmatpush2.bf16.msra.mxu0 %v3264
    %4784 = vmatprep.mubr.bf16.mxu0 %v639
    %4785 = vmatmul.mubr.bf16.gmra.mxu0 %v638
    %v4786 = vpop.f32.mrf.mxu0
    %v4787 = vadd.f32 0.0, %v4786
    %v4788 = vpop.f32.mrf.mxu0
    %v4789 = vadd.f32 0.0, %v4788
    %v4790 = vpop.f32.mrf.mxu0
    %v4791 = vpop.f32.mrf.mxu0
    %4792 = vdwg.mxu0
    %4793 = vmatprep.subr.bf16.mxu0 %v3231
    %4794 = vmatpush1.bf16.msra.mxu0 %v3230
    %4795 = vmatprep.subr.bf16.mxu0 %v3195
    %4796 = vmatpush1.bf16.msra.mxu0 %v3194
    %4797 = vmatprep.subr.bf16.mxu0 %v3159
    %4798 = vmatpush1.bf16.msra.mxu0 %v3158
    %4799 = vmatprep.subr.bf16.mxu0 %v3123
    %4800 = vmatpush1.bf16.msra.mxu0 %v3122
    %4801 = vmatprep.subr.bf16.mxu0 %v3087
    %4802 = vmatpush1.bf16.msra.mxu0 %v3086
    %4803 = vmatprep.subr.bf16.mxu0 %v3051
    %4804 = vmatpush1.bf16.msra.mxu0 %v3050
    %4805 = vmatprep.subr.bf16.mxu0 %v3015
    %4806 = vmatpush1.bf16.msra.mxu0 %v3014
    %4807 = vmatprep.subr.bf16.mxu0 %v2979
    %4808 = vmatpush1.bf16.msra.mxu0 %v2978
    %4809 = vmatprep.subr.bf16.mxu0 %v3519
    %4810 = vmatpush2.bf16.msra.mxu0 %v3518
    %4811 = vmatprep.subr.bf16.mxu0 %v3483
    %4812 = vmatpush2.bf16.msra.mxu0 %v3482
    %4813 = vmatprep.subr.bf16.mxu0 %v3447
    %4814 = vmatpush2.bf16.msra.mxu0 %v3446
    %4815 = vmatprep.subr.bf16.mxu0 %v3411
    %4816 = vmatpush2.bf16.msra.mxu0 %v3410
    %4817 = vmatprep.subr.bf16.mxu0 %v3375
    %4818 = vmatpush2.bf16.msra.mxu0 %v3374
    %4819 = vmatprep.subr.bf16.mxu0 %v3339
    %4820 = vmatpush2.bf16.msra.mxu0 %v3338
    %4821 = vmatprep.subr.bf16.mxu0 %v3303
    %4822 = vmatpush2.bf16.msra.mxu0 %v3302
    %4823 = vmatprep.subr.bf16.mxu0 %v3267
    %4824 = vmatpush2.bf16.msra.mxu0 %v3266
    %4825 = vmatprep.mubr.bf16.mxu0 %v639
    %4826 = vmatmul.mubr.bf16.gmra.mxu0 %v638
    %v4827 = vpop.f32.mrf.mxu0
    %v4828 = vadd.f32 0.0, %v4827
    %v4829 = vpop.f32.mrf.mxu0
    %v4830 = vadd.f32 0.0, %v4829
    %v4831 = vpop.f32.mrf.mxu0
    %v4832 = vpop.f32.mrf.mxu0
    %4833 = vdwg.mxu0
    %v4834 = vld [vmem:[#allocation16] sm:$0xff]
    %v4835 = vld [vmem:[#allocation16 + $0x8] sm:$0xff]
    %v4836 = vld [vmem:[#allocation16 + $0x10] sm:$0xff]
    %v4837 = vld [vmem:[#allocation16 + $0x18] sm:$0xff]
    %v4838 = vld [vmem:[#allocation16 + $0x20] sm:$0xf]
    %v4844 = vlaneseq
    %v4845 = vshrl.u32 %v4844, 7
    %v4846 = vsub.s32 0, %v4845
    %v4847 = vrot.slane %v4834, %v4846
    %v4848 = vlaneseq
    %v4849 = vshrl.u32 %v4848, 7
    %v4850 = vsub.s32 1, %v4849
    %v4851 = vrot.slane %v4834, %v4850
    %v4852 = vlaneseq
    %v4853 = vshrl.u32 %v4852, 7
    %v4854 = vsub.s32 2, %v4853
    %v4855 = vrot.slane %v4834, %v4854
    %v4856 = vlaneseq
    %v4857 = vshrl.u32 %v4856, 7
    %v4858 = vsub.s32 3, %v4857
    %v4859 = vrot.slane %v4834, %v4858
    %v4860 = vlaneseq
    %v4861 = vshrl.u32 %v4860, 7
    %v4862 = vsub.s32 4, %v4861
    %v4863 = vrot.slane %v4834, %v4862
    %v4864 = vlaneseq
    %v4865 = vshrl.u32 %v4864, 7
    %v4866 = vsub.s32 5, %v4865
    %v4867 = vrot.slane %v4834, %v4866
    %v4868 = vlaneseq
    %v4869 = vshrl.u32 %v4868, 7
    %v4870 = vsub.s32 6, %v4869
    %v4871 = vrot.slane %v4834, %v4870
    %v4872 = vlaneseq
    %v4873 = vshrl.u32 %v4872, 7
    %v4874 = vsub.s32 7, %v4873
    %v4875 = vrot.slane %v4834, %v4874
    %v4876 = vlaneseq
    %v4877 = vshrl.u32 %v4876, 7
    %v4878 = vsub.s32 0, %v4877
    %v4879 = vrot.slane %v4835, %v4878
    %v4880 = vlaneseq
    %v4881 = vshrl.u32 %v4880, 7
    %v4882 = vsub.s32 1, %v4881
    %v4883 = vrot.slane %v4835, %v4882
    %v4884 = vlaneseq
    %v4885 = vshrl.u32 %v4884, 7
    %v4886 = vsub.s32 2, %v4885
    %v4887 = vrot.slane %v4835, %v4886
    %v4888 = vlaneseq
    %v4889 = vshrl.u32 %v4888, 7
    %v4890 = vsub.s32 3, %v4889
    %v4891 = vrot.slane %v4835, %v4890
    %v4892 = vlaneseq
    %v4893 = vshrl.u32 %v4892, 7
    %v4894 = vsub.s32 4, %v4893
    %v4895 = vrot.slane %v4835, %v4894
    %v4896 = vlaneseq
    %v4897 = vshrl.u32 %v4896, 7
    %v4898 = vsub.s32 5, %v4897
    %v4899 = vrot.slane %v4835, %v4898
    %v4900 = vlaneseq
    %v4901 = vshrl.u32 %v4900, 7
    %v4902 = vsub.s32 6, %v4901
    %v4903 = vrot.slane %v4835, %v4902
    %v4904 = vlaneseq
    %v4905 = vshrl.u32 %v4904, 7
    %v4906 = vsub.s32 7, %v4905
    %v4907 = vrot.slane %v4835, %v4906
    %v4908 = vlaneseq
    %v4909 = vshrl.u32 %v4908, 7
    %v4910 = vsub.s32 0, %v4909
    %v4911 = vrot.slane %v4836, %v4910
    %v4912 = vlaneseq
    %v4913 = vshrl.u32 %v4912, 7
    %v4914 = vsub.s32 1, %v4913
    %v4915 = vrot.slane %v4836, %v4914
    %v4916 = vlaneseq
    %v4917 = vshrl.u32 %v4916, 7
    %v4918 = vsub.s32 2, %v4917
    %v4919 = vrot.slane %v4836, %v4918
    %v4920 = vlaneseq
    %v4921 = vshrl.u32 %v4920, 7
    %v4922 = vsub.s32 3, %v4921
    %v4923 = vrot.slane %v4836, %v4922
    %v4924 = vlaneseq
    %v4925 = vshrl.u32 %v4924, 7
    %v4926 = vsub.s32 4, %v4925
    %v4927 = vrot.slane %v4836, %v4926
    %v4928 = vlaneseq
    %v4929 = vshrl.u32 %v4928, 7
    %v4930 = vsub.s32 5, %v4929
    %v4931 = vrot.slane %v4836, %v4930
    %v4932 = vlaneseq
    %v4933 = vshrl.u32 %v4932, 7
    %v4934 = vsub.s32 6, %v4933
    %v4935 = vrot.slane %v4836, %v4934
    %v4936 = vlaneseq
    %v4937 = vshrl.u32 %v4936, 7
    %v4938 = vsub.s32 7, %v4937
    %v4939 = vrot.slane %v4836, %v4938
    %v4940 = vlaneseq
    %v4941 = vshrl.u32 %v4940, 7
    %v4942 = vsub.s32 0, %v4941
    %v4943 = vrot.slane %v4837, %v4942
    %v4944 = vlaneseq
    %v4945 = vshrl.u32 %v4944, 7
    %v4946 = vsub.s32 1, %v4945
    %v4947 = vrot.slane %v4837, %v4946
    %v4948 = vlaneseq
    %v4949 = vshrl.u32 %v4948, 7
    %v4950 = vsub.s32 2, %v4949
    %v4951 = vrot.slane %v4837, %v4950
    %v4952 = vlaneseq
    %v4953 = vshrl.u32 %v4952, 7
    %v4954 = vsub.s32 3, %v4953
    %v4955 = vrot.slane %v4837, %v4954
    %v4956 = vlaneseq
    %v4957 = vshrl.u32 %v4956, 7
    %v4958 = vsub.s32 4, %v4957
    %v4959 = vrot.slane %v4837, %v4958
    %v4960 = vlaneseq
    %v4961 = vshrl.u32 %v4960, 7
    %v4962 = vsub.s32 5, %v4961
    %v4963 = vrot.slane %v4837, %v4962
    %v4964 = vlaneseq
    %v4965 = vshrl.u32 %v4964, 7
    %v4966 = vsub.s32 6, %v4965
    %v4967 = vrot.slane %v4837, %v4966
    %v4968 = vlaneseq
    %v4969 = vshrl.u32 %v4968, 7
    %v4970 = vsub.s32 7, %v4969
    %v4971 = vrot.slane %v4837, %v4970
    %v4972 = vlaneseq
    %v4973 = vshrl.u32 %v4972, 7
    %v4974 = vsub.s32 0, %v4973
    %v4975 = vrot.slane %v4838, %v4974
    %v4976 = vlaneseq
    %v4977 = vshrl.u32 %v4976, 7
    %v4978 = vsub.s32 1, %v4977
    %v4979 = vrot.slane %v4838, %v4978
    %v4980 = vlaneseq
    %v4981 = vshrl.u32 %v4980, 7
    %v4982 = vsub.s32 2, %v4981
    %v4983 = vrot.slane %v4838, %v4982
    %v4984 = vlaneseq
    %v4985 = vshrl.u32 %v4984, 7
    %v4986 = vsub.s32 3, %v4985
    %v4987 = vrot.slane %v4838, %v4986
    %v5024 = vmul.f32 %v4131, %v4847
    %v5025 = vmul.f32 %v4133, %v4851
    %v5026 = vmul.f32 %v4172, %v4855
    %v5027 = vmul.f32 %v4174, %v4859
    %v5028 = vmul.f32 %v4213, %v4863
    %v5029 = vmul.f32 %v4215, %v4867
    %v5030 = vmul.f32 %v4254, %v4871
    %v5031 = vmul.f32 %v4256, %v4875
    %v5032 = vmul.f32 %v4295, %v4879
    %v5033 = vmul.f32 %v4297, %v4883
    %v5034 = vmul.f32 %v4336, %v4887
    %v5035 = vmul.f32 %v4338, %v4891
    %v5036 = vmul.f32 %v4377, %v4895
    %v5037 = vmul.f32 %v4379, %v4899
    %v5038 = vmul.f32 %v4418, %v4903
    %v5039 = vmul.f32 %v4420, %v4907
    %v5040 = vmul.f32 %v4459, %v4911
    %v5041 = vmul.f32 %v4461, %v4915
    %v5042 = vmul.f32 %v4500, %v4919
    %v5043 = vmul.f32 %v4502, %v4923
    %v5044 = vmul.f32 %v4541, %v4927
    %v5045 = vmul.f32 %v4543, %v4931
    %v5046 = vmul.f32 %v4582, %v4935
    %v5047 = vmul.f32 %v4584, %v4939
    %v5048 = vmul.f32 %v4623, %v4943
    %v5049 = vmul.f32 %v4625, %v4947
    %v5050 = vmul.f32 %v4664, %v4951
    %v5051 = vmul.f32 %v4666, %v4955
    %v5052 = vmul.f32 %v4705, %v4959
    %v5053 = vmul.f32 %v4707, %v4963
    %v5054 = vmul.f32 %v4746, %v4967
    %v5055 = vmul.f32 %v4748, %v4971
    %v5056 = vmul.f32 %v4787, %v4975
    %v5057 = vmul.f32 %v4789, %v4979
    %v5058 = vmul.f32 %v4828, %v4983
    %v5059 = vmul.f32 %v4830, %v4987
    %v5060 = vld [vmem:[#allocation18] sm:$0xff]
    %v5061 = vld [vmem:[#allocation18 + $0x8] sm:$0xff]
    %v5062 = vld [vmem:[#allocation18 + $0x10] sm:$0xff]
    %v5063 = vld [vmem:[#allocation18 + $0x18] sm:$0xff]
    %v5064 = vld [vmem:[#allocation18 + $0x20] sm:$0xf]
    %v5070 = vlaneseq
    %v5071 = vshrl.u32 %v5070, 7
    %v5072 = vsub.s32 0, %v5071
    %v5073 = vrot.slane %v5060, %v5072
    %v5074 = vlaneseq
    %v5075 = vshrl.u32 %v5074, 7
    %v5076 = vsub.s32 1, %v5075
    %v5077 = vrot.slane %v5060, %v5076
    %v5078 = vlaneseq
    %v5079 = vshrl.u32 %v5078, 7
    %v5080 = vsub.s32 2, %v5079
    %v5081 = vrot.slane %v5060, %v5080
    %v5082 = vlaneseq
    %v5083 = vshrl.u32 %v5082, 7
    %v5084 = vsub.s32 3, %v5083
    %v5085 = vrot.slane %v5060, %v5084
    %v5086 = vlaneseq
    %v5087 = vshrl.u32 %v5086, 7
    %v5088 = vsub.s32 4, %v5087
    %v5089 = vrot.slane %v5060, %v5088
    %v5090 = vlaneseq
    %v5091 = vshrl.u32 %v5090, 7
    %v5092 = vsub.s32 5, %v5091
    %v5093 = vrot.slane %v5060, %v5092
    %v5094 = vlaneseq
    %v5095 = vshrl.u32 %v5094, 7
    %v5096 = vsub.s32 6, %v5095
    %v5097 = vrot.slane %v5060, %v5096
    %v5098 = vlaneseq
    %v5099 = vshrl.u32 %v5098, 7
    %v5100 = vsub.s32 7, %v5099
    %v5101 = vrot.slane %v5060, %v5100
    %v5102 = vlaneseq
    %v5103 = vshrl.u32 %v5102, 7
    %v5104 = vsub.s32 0, %v5103
    %v5105 = vrot.slane %v5061, %v5104
    %v5106 = vlaneseq
    %v5107 = vshrl.u32 %v5106, 7
    %v5108 = vsub.s32 1, %v5107
    %v5109 = vrot.slane %v5061, %v5108
    %v5110 = vlaneseq
    %v5111 = vshrl.u32 %v5110, 7
    %v5112 = vsub.s32 2, %v5111
    %v5113 = vrot.slane %v5061, %v5112
    %v5114 = vlaneseq
    %v5115 = vshrl.u32 %v5114, 7
    %v5116 = vsub.s32 3, %v5115
    %v5117 = vrot.slane %v5061, %v5116
    %v5118 = vlaneseq
    %v5119 = vshrl.u32 %v5118, 7
    %v5120 = vsub.s32 4, %v5119
    %v5121 = vrot.slane %v5061, %v5120
    %v5122 = vlaneseq
    %v5123 = vshrl.u32 %v5122, 7
    %v5124 = vsub.s32 5, %v5123
    %v5125 = vrot.slane %v5061, %v5124
    %v5126 = vlaneseq
    %v5127 = vshrl.u32 %v5126, 7
    %v5128 = vsub.s32 6, %v5127
    %v5129 = vrot.slane %v5061, %v5128
    %v5130 = vlaneseq
    %v5131 = vshrl.u32 %v5130, 7
    %v5132 = vsub.s32 7, %v5131
    %v5133 = vrot.slane %v5061, %v5132
    %v5134 = vlaneseq
    %v5135 = vshrl.u32 %v5134, 7
    %v5136 = vsub.s32 0, %v5135
    %v5137 = vrot.slane %v5062, %v5136
    %v5138 = vlaneseq
    %v5139 = vshrl.u32 %v5138, 7
    %v5140 = vsub.s32 1, %v5139
    %v5141 = vrot.slane %v5062, %v5140
    %v5142 = vlaneseq
    %v5143 = vshrl.u32 %v5142, 7
    %v5144 = vsub.s32 2, %v5143
    %v5145 = vrot.slane %v5062, %v5144
    %v5146 = vlaneseq
    %v5147 = vshrl.u32 %v5146, 7
    %v5148 = vsub.s32 3, %v5147
    %v5149 = vrot.slane %v5062, %v5148
    %v5150 = vlaneseq
    %v5151 = vshrl.u32 %v5150, 7
    %v5152 = vsub.s32 4, %v5151
    %v5153 = vrot.slane %v5062, %v5152
    %v5154 = vlaneseq
    %v5155 = vshrl.u32 %v5154, 7
    %v5156 = vsub.s32 5, %v5155
    %v5157 = vrot.slane %v5062, %v5156
    %v5158 = vlaneseq
    %v5159 = vshrl.u32 %v5158, 7
    %v5160 = vsub.s32 6, %v5159
    %v5161 = vrot.slane %v5062, %v5160
    %v5162 = vlaneseq
    %v5163 = vshrl.u32 %v5162, 7
    %v5164 = vsub.s32 7, %v5163
    %v5165 = vrot.slane %v5062, %v5164
    %v5166 = vlaneseq
    %v5167 = vshrl.u32 %v5166, 7
    %v5168 = vsub.s32 0, %v5167
    %v5169 = vrot.slane %v5063, %v5168
    %v5170 = vlaneseq
    %v5171 = vshrl.u32 %v5170, 7
    %v5172 = vsub.s32 1, %v5171
    %v5173 = vrot.slane %v5063, %v5172
    %v5174 = vlaneseq
    %v5175 = vshrl.u32 %v5174, 7
    %v5176 = vsub.s32 2, %v5175
    %v5177 = vrot.slane %v5063, %v5176
    %v5178 = vlaneseq
    %v5179 = vshrl.u32 %v5178, 7
    %v5180 = vsub.s32 3, %v5179
    %v5181 = vrot.slane %v5063, %v5180
    %v5182 = vlaneseq
    %v5183 = vshrl.u32 %v5182, 7
    %v5184 = vsub.s32 4, %v5183
    %v5185 = vrot.slane %v5063, %v5184
    %v5186 = vlaneseq
    %v5187 = vshrl.u32 %v5186, 7
    %v5188 = vsub.s32 5, %v5187
    %v5189 = vrot.slane %v5063, %v5188
    %v5190 = vlaneseq
    %v5191 = vshrl.u32 %v5190, 7
    %v5192 = vsub.s32 6, %v5191
    %v5193 = vrot.slane %v5063, %v5192
    %v5194 = vlaneseq
    %v5195 = vshrl.u32 %v5194, 7
    %v5196 = vsub.s32 7, %v5195
    %v5197 = vrot.slane %v5063, %v5196
    %v5198 = vlaneseq
    %v5199 = vshrl.u32 %v5198, 7
    %v5200 = vsub.s32 0, %v5199
    %v5201 = vrot.slane %v5064, %v5200
    %v5202 = vlaneseq
    %v5203 = vshrl.u32 %v5202, 7
    %v5204 = vsub.s32 1, %v5203
    %v5205 = vrot.slane %v5064, %v5204
    %v5206 = vlaneseq
    %v5207 = vshrl.u32 %v5206, 7
    %v5208 = vsub.s32 2, %v5207
    %v5209 = vrot.slane %v5064, %v5208
    %v5210 = vlaneseq
    %v5211 = vshrl.u32 %v5210, 7
    %v5212 = vsub.s32 3, %v5211
    %v5213 = vrot.slane %v5064, %v5212
    %v5250 = vadd.f32 %v5024, %v5073
    %v5251 = vadd.f32 %v5025, %v5077
    %v5252 = vadd.f32 %v5026, %v5081
    %v5253 = vadd.f32 %v5027, %v5085
    %v5254 = vadd.f32 %v5028, %v5089
    %v5255 = vadd.f32 %v5029, %v5093
    %v5256 = vadd.f32 %v5030, %v5097
    %v5257 = vadd.f32 %v5031, %v5101
    %v5258 = vadd.f32 %v5032, %v5105
    %v5259 = vadd.f32 %v5033, %v5109
    %v5260 = vadd.f32 %v5034, %v5113
    %v5261 = vadd.f32 %v5035, %v5117
    %v5262 = vadd.f32 %v5036, %v5121
    %v5263 = vadd.f32 %v5037, %v5125
    %v5264 = vadd.f32 %v5038, %v5129
    %v5265 = vadd.f32 %v5039, %v5133
    %v5266 = vadd.f32 %v5040, %v5137
    %v5267 = vadd.f32 %v5041, %v5141
    %v5268 = vadd.f32 %v5042, %v5145
    %v5269 = vadd.f32 %v5043, %v5149
    %v5270 = vadd.f32 %v5044, %v5153
    %v5271 = vadd.f32 %v5045, %v5157
    %v5272 = vadd.f32 %v5046, %v5161
    %v5273 = vadd.f32 %v5047, %v5165
    %v5274 = vadd.f32 %v5048, %v5169
    %v5275 = vadd.f32 %v5049, %v5173
    %v5276 = vadd.f32 %v5050, %v5177
    %v5277 = vadd.f32 %v5051, %v5181
    %v5278 = vadd.f32 %v5052, %v5185
    %v5279 = vadd.f32 %v5053, %v5189
    %v5280 = vadd.f32 %v5054, %v5193
    %v5281 = vadd.f32 %v5055, %v5197
    %v5282 = vadd.f32 %v5056, %v5201
    %v5283 = vadd.f32 %v5057, %v5205
    %v5284 = vadd.f32 %v5058, %v5209
    %v5285 = vadd.f32 %v5059, %v5213
    %vm5286 = vcmp.ge.f32.partialorder %v5250, 0.0
    %vm5287 = vcmp.ge.f32.partialorder %v5251, 0.0
    %vm5288 = vcmp.ge.f32.partialorder %v5252, 0.0
    %vm5289 = vcmp.ge.f32.partialorder %v5253, 0.0
    %vm5290 = vcmp.ge.f32.partialorder %v5254, 0.0
    %vm5291 = vcmp.ge.f32.partialorder %v5255, 0.0
    %vm5292 = vcmp.ge.f32.partialorder %v5256, 0.0
    %vm5293 = vcmp.ge.f32.partialorder %v5257, 0.0
    %vm5294 = vcmp.ge.f32.partialorder %v5258, 0.0
    %vm5295 = vcmp.ge.f32.partialorder %v5259, 0.0
    %vm5296 = vcmp.ge.f32.partialorder %v5260, 0.0
    %vm5297 = vcmp.ge.f32.partialorder %v5261, 0.0
    %vm5298 = vcmp.ge.f32.partialorder %v5262, 0.0
    %vm5299 = vcmp.ge.f32.partialorder %v5263, 0.0
    %vm5300 = vcmp.ge.f32.partialorder %v5264, 0.0
    %vm5301 = vcmp.ge.f32.partialorder %v5265, 0.0
    %vm5302 = vcmp.ge.f32.partialorder %v5266, 0.0
    %vm5303 = vcmp.ge.f32.partialorder %v5267, 0.0
    %vm5304 = vcmp.ge.f32.partialorder %v5268, 0.0
    %vm5305 = vcmp.ge.f32.partialorder %v5269, 0.0
    %vm5306 = vcmp.ge.f32.partialorder %v5270, 0.0
    %vm5307 = vcmp.ge.f32.partialorder %v5271, 0.0
    %vm5308 = vcmp.ge.f32.partialorder %v5272, 0.0
    %vm5309 = vcmp.ge.f32.partialorder %v5273, 0.0
    %vm5310 = vcmp.ge.f32.partialorder %v5274, 0.0
    %vm5311 = vcmp.ge.f32.partialorder %v5275, 0.0
    %vm5312 = vcmp.ge.f32.partialorder %v5276, 0.0
    %vm5313 = vcmp.ge.f32.partialorder %v5277, 0.0
    %vm5314 = vcmp.ge.f32.partialorder %v5278, 0.0
    %vm5315 = vcmp.ge.f32.partialorder %v5279, 0.0
    %vm5316 = vcmp.ge.f32.partialorder %v5280, 0.0
    %vm5317 = vcmp.ge.f32.partialorder %v5281, 0.0
    %vm5318 = vcmp.ge.f32.partialorder %v5282, 0.0
    %vm5319 = vcmp.ge.f32.partialorder %v5283, 0.0
    %vm5320 = vcmp.ge.f32.partialorder %v5284, 0.0
    %vm5321 = vcmp.ge.f32.partialorder %v5285, 0.0
    %v5322 = vmul.f32 %v5250, 0.01
    %v5323 = vmul.f32 %v5251, 0.01
    %v5324 = vmul.f32 %v5252, 0.01
    %v5325 = vmul.f32 %v5253, 0.01
    %v5326 = vmul.f32 %v5254, 0.01
    %v5327 = vmul.f32 %v5255, 0.01
    %v5328 = vmul.f32 %v5256, 0.01
    %v5329 = vmul.f32 %v5257, 0.01
    %v5330 = vmul.f32 %v5258, 0.01
    %v5331 = vmul.f32 %v5259, 0.01
    %v5332 = vmul.f32 %v5260, 0.01
    %v5333 = vmul.f32 %v5261, 0.01
    %v5334 = vmul.f32 %v5262, 0.01
    %v5335 = vmul.f32 %v5263, 0.01
    %v5336 = vmul.f32 %v5264, 0.01
    %v5337 = vmul.f32 %v5265, 0.01
    %v5338 = vmul.f32 %v5266, 0.01
    %v5339 = vmul.f32 %v5267, 0.01
    %v5340 = vmul.f32 %v5268, 0.01
    %v5341 = vmul.f32 %v5269, 0.01
    %v5342 = vmul.f32 %v5270, 0.01
    %v5343 = vmul.f32 %v5271, 0.01
    %v5344 = vmul.f32 %v5272, 0.01
    %v5345 = vmul.f32 %v5273, 0.01
    %v5346 = vmul.f32 %v5274, 0.01
    %v5347 = vmul.f32 %v5275, 0.01
    %v5348 = vmul.f32 %v5276, 0.01
    %v5349 = vmul.f32 %v5277, 0.01
    %v5350 = vmul.f32 %v5278, 0.01
    %v5351 = vmul.f32 %v5279, 0.01
    %v5352 = vmul.f32 %v5280, 0.01
    %v5353 = vmul.f32 %v5281, 0.01
    %v5354 = vmul.f32 %v5282, 0.01
    %v5355 = vmul.f32 %v5283, 0.01
    %v5356 = vmul.f32 %v5284, 0.01
    %v5357 = vmul.f32 %v5285, 0.01
    %v5358 = vsel %vm5286, %v5250, %v5322
    %v5359 = vsel %vm5287, %v5251, %v5323
    %v5360 = vsel %vm5288, %v5252, %v5324
    %v5361 = vsel %vm5289, %v5253, %v5325
    %v5362 = vsel %vm5290, %v5254, %v5326
    %v5363 = vsel %vm5291, %v5255, %v5327
    %v5364 = vsel %vm5292, %v5256, %v5328
    %v5365 = vsel %vm5293, %v5257, %v5329
    %v5366 = vsel %vm5294, %v5258, %v5330
    %v5367 = vsel %vm5295, %v5259, %v5331
    %v5368 = vsel %vm5296, %v5260, %v5332
    %v5369 = vsel %vm5297, %v5261, %v5333
    %v5370 = vsel %vm5298, %v5262, %v5334
    %v5371 = vsel %vm5299, %v5263, %v5335
    %v5372 = vsel %vm5300, %v5264, %v5336
    %v5373 = vsel %vm5301, %v5265, %v5337
    %v5374 = vsel %vm5302, %v5266, %v5338
    %v5375 = vsel %vm5303, %v5267, %v5339
    %v5376 = vsel %vm5304, %v5268, %v5340
    %v5377 = vsel %vm5305, %v5269, %v5341
    %v5378 = vsel %vm5306, %v5270, %v5342
    %v5379 = vsel %vm5307, %v5271, %v5343
    %v5380 = vsel %vm5308, %v5272, %v5344
    %v5381 = vsel %vm5309, %v5273, %v5345
    %v5382 = vsel %vm5310, %v5274, %v5346
    %v5383 = vsel %vm5311, %v5275, %v5347
    %v5384 = vsel %vm5312, %v5276, %v5348
    %v5385 = vsel %vm5313, %v5277, %v5349
    %v5386 = vsel %vm5314, %v5278, %v5350
    %v5387 = vsel %vm5315, %v5279, %v5351
    %v5388 = vsel %vm5316, %v5280, %v5352
    %v5389 = vsel %vm5317, %v5281, %v5353
    %v5390 = vsel %vm5318, %v5282, %v5354
    %v5391 = vsel %vm5319, %v5283, %v5355
    %v5392 = vsel %vm5320, %v5284, %v5356
    %v5393 = vsel %vm5321, %v5285, %v5357
    %v5394 = vpack.c.bf16 %v5358, %v5358
    %v5395 = vpack.c.bf16 %v5359, %v5359
    %v5396 = vpack.c.bf16 %v5360, %v5360
    %v5397 = vpack.c.bf16 %v5361, %v5361
    %v5398 = vpack.c.bf16 %v5362, %v5362
    %v5399 = vpack.c.bf16 %v5363, %v5363
    %v5400 = vpack.c.bf16 %v5364, %v5364
    %v5401 = vpack.c.bf16 %v5365, %v5365
    %v5402 = vpack.c.bf16 %v5366, %v5366
    %v5403 = vpack.c.bf16 %v5367, %v5367
    %v5404 = vpack.c.bf16 %v5368, %v5368
    %v5405 = vpack.c.bf16 %v5369, %v5369
    %v5406 = vpack.c.bf16 %v5370, %v5370
    %v5407 = vpack.c.bf16 %v5371, %v5371
    %v5408 = vpack.c.bf16 %v5372, %v5372
    %v5409 = vpack.c.bf16 %v5373, %v5373
    %v5410 = vpack.c.bf16 %v5374, %v5374
    %v5411 = vpack.c.bf16 %v5375, %v5375
    %v5412 = vpack.c.bf16 %v5376, %v5376
    %v5413 = vpack.c.bf16 %v5377, %v5377
    %v5414 = vpack.c.bf16 %v5378, %v5378
    %v5415 = vpack.c.bf16 %v5379, %v5379
    %v5416 = vpack.c.bf16 %v5380, %v5380
    %v5417 = vpack.c.bf16 %v5381, %v5381
    %v5418 = vpack.c.bf16 %v5382, %v5382
    %v5419 = vpack.c.bf16 %v5383, %v5383
    %v5420 = vpack.c.bf16 %v5384, %v5384
    %v5421 = vpack.c.bf16 %v5385, %v5385
    %v5422 = vpack.c.bf16 %v5386, %v5386
    %v5423 = vpack.c.bf16 %v5387, %v5387
    %v5424 = vpack.c.bf16 %v5388, %v5388
    %v5425 = vpack.c.bf16 %v5389, %v5389
    %v5426 = vpack.c.bf16 %v5390, %v5390
    %v5427 = vpack.c.bf16 %v5391, %v5391
    %v5428 = vpack.c.bf16 %v5392, %v5392
    %v5429 = vpack.c.bf16 %v5393, %v5393
    %v5466 = vunpack.c.l.b16 %v5394
    %v5467 = vunpack.c.l.b16 %v5395
    %v5468 = vunpack.c.l.b16 %v5396
    %v5469 = vunpack.c.l.b16 %v5397
    %v5470 = vunpack.c.l.b16 %v5398
    %v5471 = vunpack.c.l.b16 %v5399
    %v5472 = vunpack.c.l.b16 %v5400
    %v5473 = vunpack.c.l.b16 %v5401
    %v5474 = vunpack.c.l.b16 %v5402
    %v5475 = vunpack.c.l.b16 %v5403
    %v5476 = vunpack.c.l.b16 %v5404
    %v5477 = vunpack.c.l.b16 %v5405
    %v5478 = vunpack.c.l.b16 %v5406
    %v5479 = vunpack.c.l.b16 %v5407
    %v5480 = vunpack.c.l.b16 %v5408
    %v5481 = vunpack.c.l.b16 %v5409
    %v5482 = vunpack.c.l.b16 %v5410
    %v5483 = vunpack.c.l.b16 %v5411
    %v5484 = vunpack.c.l.b16 %v5412
    %v5485 = vunpack.c.l.b16 %v5413
    %v5486 = vunpack.c.l.b16 %v5414
    %v5487 = vunpack.c.l.b16 %v5415
    %v5488 = vunpack.c.l.b16 %v5416
    %v5489 = vunpack.c.l.b16 %v5417
    %v5490 = vunpack.c.l.b16 %v5418
    %v5491 = vunpack.c.l.b16 %v5419
    %v5492 = vunpack.c.l.b16 %v5420
    %v5493 = vunpack.c.l.b16 %v5421
    %v5494 = vunpack.c.l.b16 %v5422
    %v5495 = vunpack.c.l.b16 %v5423
    %v5496 = vunpack.c.l.b16 %v5424
    %v5497 = vunpack.c.l.b16 %v5425
    %v5498 = vunpack.c.l.b16 %v5426
    %v5499 = vunpack.c.l.b16 %v5427
    %v5500 = vunpack.c.l.b16 %v5428
    %v5501 = vunpack.c.l.b16 %v5429
    %v5502 = vpack.c.b16 %v5467, %v5466
    %v5503 = vpack.c.b16 %v5469, %v5468
    %v5504 = vpack.c.b16 %v5471, %v5470
    %v5505 = vpack.c.b16 %v5473, %v5472
    %v5506 = vpack.c.b16 %v5475, %v5474
    %v5507 = vpack.c.b16 %v5477, %v5476
    %v5508 = vpack.c.b16 %v5479, %v5478
    %v5509 = vpack.c.b16 %v5481, %v5480
    %v5510 = vpack.c.b16 %v5483, %v5482
    %v5511 = vpack.c.b16 %v5485, %v5484
    %v5512 = vpack.c.b16 %v5487, %v5486
    %v5513 = vpack.c.b16 %v5489, %v5488
    %v5514 = vpack.c.b16 %v5491, %v5490
    %v5515 = vpack.c.b16 %v5493, %v5492
    %v5516 = vpack.c.b16 %v5495, %v5494
    %v5517 = vpack.c.b16 %v5497, %v5496
    %v5518 = vpack.c.b16 %v5499, %v5498
    %v5519 = vpack.c.b16 %v5501, %v5500
    %5538 = vst [vmem:[%s12] sm:$0xff] %v5502
    %5539 = vst [vmem:[%s12 + $0x8] sm:$0xff] %v5503
    %5540 = vst [vmem:[%s12 + $0x10] sm:$0xff] %v5504
    %5541 = vst [vmem:[%s12 + $0x18] sm:$0xff] %v5505
    %5542 = vst [vmem:[%s12 + $0x20] sm:$0xff] %v5506
    %5543 = vst [vmem:[%s12 + $0x28] sm:$0xff] %v5507
    %5544 = vst [vmem:[%s12 + $0x30] sm:$0xff] %v5508
    %5545 = vst [vmem:[%s12 + $0x38] sm:$0xff] %v5509
    %5546 = vst [vmem:[%s12 + $0x40] sm:$0xff] %v5510
    %5547 = vst [vmem:[%s12 + $0x48] sm:$0xff] %v5511
    %5548 = vst [vmem:[%s12 + $0x50] sm:$0xff] %v5512
    %5549 = vst [vmem:[%s12 + $0x58] sm:$0xff] %v5513
    %5550 = vst [vmem:[%s12 + $0x60] sm:$0xff] %v5514
    %5551 = vst [vmem:[%s12 + $0x68] sm:$0xff] %v5515
    %5552 = vst [vmem:[%s12 + $0x70] sm:$0xff] %v5516
    %5553 = vst [vmem:[%s12 + $0x78] sm:$0xff] %v5517
    %5554 = vst [vmem:[%s12 + $0x80] sm:$0xff] %v5518
    %5555 = vst [vmem:[%s12 + $0x88] sm:$0xff] %v5519
    // Predicated region
    $region94: #{decoder_forward.3} parent=1 // pred_check
      _
    $region95: #{decoder_forward.3} parent=1 // pred_check_branch
      %5557 = sbr.rel (0) target = $region97
    $region96: #{decoder_forward.3} parent=1 // pred_region
      _
    $region97: #{decoder_forward.3} parent=1 // pred_fallthru
      _
    // Predicated region
    $region98: #{decoder_forward.3} parent=1 // pred_check
      _
    $region99: #{decoder_forward.3} parent=1 // pred_check_branch
      %5559 = sbr.rel (0) target = $region101
    $region100: #{decoder_forward.3} parent=1 // pred_region
      _
    $region101: #{decoder_forward.3} parent=1 // pred_fallthru
      _
    %5560 = vsyncpa [#allocation3], 1
    %5561 = vsyncpa [#allocation5], 1
    %5562 = vsyncpa [#allocation8], 1
    %5563 = vsyncpa [#allocation11], 1
    %5564 = vsyncpa [#allocation14], 1
    %5565 = vsyncpa [#allocation17], 1

// kernel: decoder_forward.5
$region0: #{decoder_forward.5}
  #allocation0 [shape = 'u32[]', space=smem, size = 0x4, offset = 0x4, fixed_abs, tag = 'smem constant byte address 0x4 - core index']
  #allocation1 [shape = 'u32[144,128]{1,0:T(1,128)}', space=vmem, size = 0x12000, scoped, tag = 'internal scratch']
  %s0 = inlined_call_operand.vmem [shape: bf16[512,800], index: 0, kind: input, shape index: {}]
  %s1 = inlined_call_operand.vmem [shape: bf16[800,128], index: 1, kind: input, shape index: {}]
  %s2 = inlined_call_operand.vmem [shape: f32[1,128], index: 2, kind: input, shape index: {}]
  %s3 = inlined_call_operand.vmem [shape: f32[1,128], index: 3, kind: input, shape index: {}]
  %s4 = inlined_call_operand.vmem [shape: f32[512,128], index: 4, kind: output, shape index: {}]
  %s5 = sld [smem:[#allocation0]]
  $region49: #{decoder_forward.5} parent=0
    _
  %s7 = ssub.s32 1, %s5
  %s8 = scalar_select 0, %s7, %s5
  loop: start=0, step=1, limit=4
  $region2: #{decoder_forward.5} parent=0 // loop_pre_header
    _
  $region3: #{decoder_forward.5} parent=0 // loop_header
    %s10 = sphi 0, %s14
    %p11 = scmp.ge.s32.totalorder %s10, 4
    %s20 = sphi 0, %s22
    %s23 = sphi 0, %s20
    %s24 = sphi 0, %s23
    %s40 = sphi 0, %s24
    %s44 = sphi 0, %s44
    %s46 = sphi 0, %s44
    %s47 = sphi 0, %s46
    %s61 = sphi 0, %s47
    %s65 = sphi 0, %s65
    %s67 = sphi 0, %s65
    %s68 = sphi 0, %s67
    %s82 = sphi 0, %s68
    %s86 = sphi 0, %s86
    %s88 = sphi 0, %s86
    %s89 = sphi 0, %s88
    %s103 = sphi 0, %s89
    %s109 = sphi 0, %s111
    %s112 = sphi 0, %s109
    %s113 = sphi 0, %s112
    %s129 = sphi 0, %s113
  $region4: #{decoder_forward.5} parent=0 // loop_header_branch
    %13 = sbr.rel (%p11) target = $region8
  $region5: #{decoder_forward.5} parent=0 // loop_body
    %s15 = ssub.s32 %s10, 1
    %s16 = ssub.s32 %s10, 2
    %s17 = sadd.s32 %s10, 1
    %s18 = ssub.s32 %s10, %s17
    %p19 = scmp.eq.s32.totalorder %s18, 0
    %s21 = sadd.s32 %s20, 1
    %s22 = scalar_select %p19, %s20, %s21
    %p25 = pneg %p19
    %p26 = scmp.eq.s32.totalorder %s10, 1
    %p27 = por %p25, %p26
    %p28 = scmp.ne.s32.totalorder %s20, %s23
    %p29 = scmp.eq.s32.totalorder %s10, 0
    %p30 = por %p28, %p29
    %p31 = scmp.ne.s32.totalorder %s20, %s23
    %p32 = scmp.eq.s32.totalorder %s15, 1
    %p33 = por %p31, %p32
    %p34 = scmp.ne.s32.totalorder %s23, %s24
    %p35 = scmp.eq.s32.totalorder %s15, 0
    %p36 = por %p34, %p35
    %p37 = scmp.ne.s32.totalorder %s23, %s24
    %p38 = scmp.eq.s32.totalorder %s16, 1
    %p39 = por %p37, %p38
    %p41 = scmp.ne.s32.totalorder %s24, %s40
    %p42 = scmp.eq.s32.totalorder %s16, 0
    %p43 = por %p41, %p42
    %s45 = sadd.s32 %s44, 1
    %p48 = scmp.eq.s32.totalorder %s10, 1
    %p49 = scmp.ne.s32.totalorder %s44, %s46
    %p50 = scmp.eq.s32.totalorder %s10, 0
    %p51 = por %p49, %p50
    %p52 = scmp.ne.s32.totalorder %s44, %s46
    %p53 = scmp.eq.s32.totalorder %s15, 1
    %p54 = por %p52, %p53
    %p55 = scmp.ne.s32.totalorder %s46, %s47
    %p56 = scmp.eq.s32.totalorder %s15, 0
    %p57 = por %p55, %p56
    %p58 = scmp.ne.s32.totalorder %s46, %s47
    %p59 = scmp.eq.s32.totalorder %s16, 1
    %p60 = por %p58, %p59
    %p62 = scmp.ne.s32.totalorder %s47, %s61
    %p63 = scmp.eq.s32.totalorder %s16, 0
    %p64 = por %p62, %p63
    %s66 = sadd.s32 %s65, 1
    %p69 = scmp.eq.s32.totalorder %s10, 1
    %p70 = scmp.ne.s32.totalorder %s65, %s67
    %p71 = scmp.eq.s32.totalorder %s10, 0
    %p72 = por %p70, %p71
    %p73 = scmp.ne.s32.totalorder %s65, %s67
    %p74 = scmp.eq.s32.totalorder %s15, 1
    %p75 = por %p73, %p74
    %p76 = scmp.ne.s32.totalorder %s67, %s68
    %p77 = scmp.eq.s32.totalorder %s15, 0
    %p78 = por %p76, %p77
    %p79 = scmp.ne.s32.totalorder %s67, %s68
    %p80 = scmp.eq.s32.totalorder %s16, 1
    %p81 = por %p79, %p80
    %p83 = scmp.ne.s32.totalorder %s68, %s82
    %p84 = scmp.eq.s32.totalorder %s16, 0
    %p85 = por %p83, %p84
    %s87 = sadd.s32 %s86, 1
    %p90 = scmp.eq.s32.totalorder %s10, 1
    %p91 = scmp.ne.s32.totalorder %s86, %s88
    %p92 = scmp.eq.s32.totalorder %s10, 0
    %p93 = por %p91, %p92
    %p94 = scmp.ne.s32.totalorder %s86, %s88
    %p95 = scmp.eq.s32.totalorder %s15, 1
    %p96 = por %p94, %p95
    %p97 = scmp.ne.s32.totalorder %s88, %s89
    %p98 = scmp.eq.s32.totalorder %s15, 0
    %p99 = por %p97, %p98
    %p100 = scmp.ne.s32.totalorder %s88, %s89
    %p101 = scmp.eq.s32.totalorder %s16, 1
    %p102 = por %p100, %p101
    %p104 = scmp.ne.s32.totalorder %s89, %s103
    %p105 = scmp.eq.s32.totalorder %s16, 0
    %p106 = por %p104, %p105
    %s107 = ssub.s32 %s10, %s17
    %p108 = scmp.eq.s32.totalorder %s107, 0
    %s110 = sadd.s32 %s109, 1
    %s111 = scalar_select %p108, %s109, %s110
    %p114 = pneg %p108
    %p115 = scmp.eq.s32.totalorder %s10, 1
    %p116 = por %p114, %p115
    %p117 = scmp.ne.s32.totalorder %s109, %s112
    %p118 = scmp.eq.s32.totalorder %s10, 0
    %p119 = por %p117, %p118
    %p120 = scmp.ne.s32.totalorder %s109, %s112
    %p121 = scmp.eq.s32.totalorder %s15, 1
    %p122 = por %p120, %p121
    %p123 = scmp.ne.s32.totalorder %s112, %s113
    %p124 = scmp.eq.s32.totalorder %s15, 0
    %p125 = por %p123, %p124
    %p126 = scmp.ne.s32.totalorder %s112, %s113
    %p127 = scmp.eq.s32.totalorder %s16, 1
    %p128 = por %p126, %p127
    %p130 = scmp.ne.s32.totalorder %s113, %s129
    %p131 = scmp.eq.s32.totalorder %s16, 0
    %p132 = por %p130, %p131
    %p133 = scmp.le.s32.totalorder 1, %s10
    %p134 = scmp.lt.s32.totalorder %s10, 3
    %p135 = pnand %p133, %p134
    %p136 = pneg %p135
    // Predicated region
    $region9: #{decoder_forward.5} parent=5 // pred_check
      _
    $region10: #{decoder_forward.5} parent=5 // pred_check_branch
      %138 = sbr.rel (%p135) target = $region12
    $region11: #{decoder_forward.5} parent=5 // pred_region
      %s139 = ssub.s32 %s10, 1
      // Predicated region
      $region13: #{decoder_forward.5} parent=11 // pred_check
        %p140 = pneg %p57
      $region14: #{decoder_forward.5} parent=11 // pred_check_branch
        %142 = sbr.rel (%p140) target = $region16
      $region15: #{decoder_forward.5} parent=11 // pred_region
        _
      $region16: #{decoder_forward.5} parent=11 // pred_fallthru
        _
      // Predicated region
      $region17: #{decoder_forward.5} parent=11 // pred_check
        %p143 = pneg %p78
      $region18: #{decoder_forward.5} parent=11 // pred_check_branch
        %145 = sbr.rel (%p143) target = $region20
      $region19: #{decoder_forward.5} parent=11 // pred_region
        _
      $region20: #{decoder_forward.5} parent=11 // pred_fallthru
        _
      // Predicated region
      $region21: #{decoder_forward.5} parent=11 // pred_check
        %p146 = pneg %p99
      $region22: #{decoder_forward.5} parent=11 // pred_check_branch
        %148 = sbr.rel (%p146) target = $region24
      $region23: #{decoder_forward.5} parent=11 // pred_region
        _
      $region24: #{decoder_forward.5} parent=11 // pred_fallthru
        _
    $region12: #{decoder_forward.5} parent=5 // pred_fallthru
      _
    %p149 = scmp.lt.s32.totalorder %s10, 2
    // Predicated region
    $region25: #{decoder_forward.5} parent=5 // pred_check
      %p150 = pneg %p149
    $region26: #{decoder_forward.5} parent=5 // pred_check_branch
      %152 = sbr.rel (%p150) target = $region28
    $region27: #{decoder_forward.5} parent=5 // pred_region
      // Predicated region
      $region29: #{decoder_forward.5} parent=27 // pred_check
        %p153 = pneg %p30
      $region30: #{decoder_forward.5} parent=27 // pred_check_branch
        %155 = sbr.rel (%p153) target = $region32
      $region31: #{decoder_forward.5} parent=27 // pred_region
        %s156 = smul.u32 32, %s10
        %p157 = scmp.lt.s32.totalorder %s156, 63
        %s158 = scalar_select %p157, %s156, 63
        %s159 = smul.addr %s158, 7
        %s160 = smul.addr %s159, 4
        %s161 = scalar_lea.vmem %s0, %s160
        %s162 = smul.u32 32, %s10
      $region32: #{decoder_forward.5} parent=27 // pred_fallthru
        _
    $region28: #{decoder_forward.5} parent=5 // pred_fallthru
      _
    %p163 = scmp.le.s32.totalorder 1, %s10
    %p164 = scmp.lt.s32.totalorder %s10, 3
    %p165 = pnand %p163, %p164
    %p166 = pneg %p165
    // Predicated region
    $region33: #{decoder_forward.5} parent=5 // pred_check
      _
    $region34: #{decoder_forward.5} parent=5 // pred_check_branch
      %168 = sbr.rel (%p165) target = $region36
    $region35: #{decoder_forward.5} parent=5 // pred_region
      %s169 = ssub.s32 %s10, 1
      %s170 = smul.u32 32, %s15
      %p171 = scmp.lt.s32.totalorder %s170, 63
      %s172 = scalar_select %p171, %s170, 63
      %s173 = smul.addr %s172, 7
      %s174 = smul.addr %s173, 4
      %s175 = scalar_lea.vmem %s0, %s174
      %p176 = pneg %p36
      %p177 = pneg %p33
      %p178 = pneg %p57
      %p179 = pneg %p54
      %p180 = pneg %p78
      %p181 = pneg %p75
      %p182 = pneg %p99
      %p183 = pneg %p96
      %p184 = pneg %p125
      %p185 = pneg %p122
      %s186 = smul.u32 32, %s15
      %p187 = scmp.lt.s32.totalorder %s186, 63
      %s188 = scalar_select %p187, %s186, 63
      %s189 = smul.addr %s188, 8
      %s190 = scalar_lea.vmem %s4, %s189
      %s191 = smul.u32 32, %s15
      %p192 = scmp.lt.s32.totalorder %s191, 63
      %s193 = scalar_select %p192, %s191, 63
      %s194 = smul.addr %s193, 7
      %s195 = smul.addr %s194, 4
      %s196 = scalar_lea.vmem %s0, %s195
      %s197 = smul.u32 32, %s15
      %s198 = smul.u32 32, %s15
      %p199 = scmp.lt.s32.totalorder %s198, 63
      %s200 = scalar_select %p199, %s198, 63
      %s201 = smul.addr %s200, 8
      %s202 = scalar_lea.vmem %s4, %s201
      %s203 = smul.u32 32, %s15
      %v205 = vld [vmem:[%s196] sm:$0xff]
      %v206 = vld [vmem:[%s196 + $0x8] sm:$0xff]
      %v207 = vld [vmem:[%s196 + $0x10] sm:$0xff]
      %v208 = vld [vmem:[%s196 + $0x18] sm:$0xf]
      %v209 = vld [vmem:[%s196 + $0x1c] sm:$0xff]
      %v210 = vld [vmem:[%s196 + $0x24] sm:$0xff]
      %v211 = vld [vmem:[%s196 + $0x2c] sm:$0xff]
      %v212 = vld [vmem:[%s196 + $0x34] sm:$0xf]
      %v213 = vld [vmem:[%s196 + $0x38] sm:$0xff]
      %v214 = vld [vmem:[%s196 + $0x40] sm:$0xff]
      %v215 = vld [vmem:[%s196 + $0x48] sm:$0xff]
      %v216 = vld [vmem:[%s196 + $0x50] sm:$0xf]
      %v217 = vld [vmem:[%s196 + $0x54] sm:$0xff]
      %v218 = vld [vmem:[%s196 + $0x5c] sm:$0xff]
      %v219 = vld [vmem:[%s196 + $0x64] sm:$0xff]
      %v220 = vld [vmem:[%s196 + $0x6c] sm:$0xf]
      %v221 = vld [vmem:[%s196 + $0x70] sm:$0xff]
      %v222 = vld [vmem:[%s196 + $0x78] sm:$0xff]
      %v223 = vld [vmem:[%s196 + $0x80] sm:$0xff]
      %v224 = vld [vmem:[%s196 + $0x88] sm:$0xf]
      %v225 = vld [vmem:[%s196 + $0x8c] sm:$0xff]
      %v226 = vld [vmem:[%s196 + $0x94] sm:$0xff]
      %v227 = vld [vmem:[%s196 + $0x9c] sm:$0xff]
      %v228 = vld [vmem:[%s196 + $0xa4] sm:$0xf]
      %v229 = vld [vmem:[%s196 + $0xa8] sm:$0xff]
      %v230 = vld [vmem:[%s196 + $0xb0] sm:$0xff]
      %v231 = vld [vmem:[%s196 + $0xb8] sm:$0xff]
      %v232 = vld [vmem:[%s196 + $0xc0] sm:$0xf]
      %v233 = vld [vmem:[%s196 + $0xc4] sm:$0xff]
      %v234 = vld [vmem:[%s196 + $0xcc] sm:$0xff]
      %v235 = vld [vmem:[%s196 + $0xd4] sm:$0xff]
      %v236 = vld [vmem:[%s196 + $0xdc] sm:$0xf]
      %v237 = vld [vmem:[%s196 + $0xe0] sm:$0xff]
      %v238 = vld [vmem:[%s196 + $0xe8] sm:$0xff]
      %v239 = vld [vmem:[%s196 + $0xf0] sm:$0xff]
      %v240 = vld [vmem:[%s196 + $0xf8] sm:$0xf]
      %v241 = vld [vmem:[%s196 + $0xfc] sm:$0xff]
      %v242 = vld [vmem:[%s196 + $0x104] sm:$0xff]
      %v243 = vld [vmem:[%s196 + $0x10c] sm:$0xff]
      %v244 = vld [vmem:[%s196 + $0x114] sm:$0xf]
      %v245 = vld [vmem:[%s196 + $0x118] sm:$0xff]
      %v246 = vld [vmem:[%s196 + $0x120] sm:$0xff]
      %v247 = vld [vmem:[%s196 + $0x128] sm:$0xff]
      %v248 = vld [vmem:[%s196 + $0x130] sm:$0xf]
      %v249 = vld [vmem:[%s196 + $0x134] sm:$0xff]
      %v250 = vld [vmem:[%s196 + $0x13c] sm:$0xff]
      %v251 = vld [vmem:[%s196 + $0x144] sm:$0xff]
      %v252 = vld [vmem:[%s196 + $0x14c] sm:$0xf]
      %v253 = vld [vmem:[%s196 + $0x150] sm:$0xff]
      %v254 = vld [vmem:[%s196 + $0x158] sm:$0xff]
      %v255 = vld [vmem:[%s196 + $0x160] sm:$0xff]
      %v256 = vld [vmem:[%s196 + $0x168] sm:$0xf]
      %v257 = vld [vmem:[%s196 + $0x16c] sm:$0xff]
      %v258 = vld [vmem:[%s196 + $0x174] sm:$0xff]
      %v259 = vld [vmem:[%s196 + $0x17c] sm:$0xff]
      %v260 = vld [vmem:[%s196 + $0x184] sm:$0xf]
      %v261 = vld [vmem:[%s196 + $0x188] sm:$0xff]
      %v262 = vld [vmem:[%s196 + $0x190] sm:$0xff]
      %v263 = vld [vmem:[%s196 + $0x198] sm:$0xff]
      %v264 = vld [vmem:[%s196 + $0x1a0] sm:$0xf]
      %v265 = vld [vmem:[%s196 + $0x1a4] sm:$0xff]
      %v266 = vld [vmem:[%s196 + $0x1ac] sm:$0xff]
      %v267 = vld [vmem:[%s196 + $0x1b4] sm:$0xff]
      %v268 = vld [vmem:[%s196 + $0x1bc] sm:$0xf]
      %v269 = vld [vmem:[%s196 + $0x1c0] sm:$0xff]
      %v270 = vld [vmem:[%s196 + $0x1c8] sm:$0xff]
      %v271 = vld [vmem:[%s196 + $0x1d0] sm:$0xff]
      %v272 = vld [vmem:[%s196 + $0x1d8] sm:$0xf]
      %v273 = vld [vmem:[%s196 + $0x1dc] sm:$0xff]
      %v274 = vld [vmem:[%s196 + $0x1e4] sm:$0xff]
      %v275 = vld [vmem:[%s196 + $0x1ec] sm:$0xff]
      %v276 = vld [vmem:[%s196 + $0x1f4] sm:$0xf]
      %v277 = vld [vmem:[%s196 + $0x1f8] sm:$0xff]
      %v278 = vld [vmem:[%s196 + $0x200] sm:$0xff]
      %v279 = vld [vmem:[%s196 + $0x208] sm:$0xff]
      %v280 = vld [vmem:[%s196 + $0x210] sm:$0xf]
      %v281 = vld [vmem:[%s196 + $0x214] sm:$0xff]
      %v282 = vld [vmem:[%s196 + $0x21c] sm:$0xff]
      %v283 = vld [vmem:[%s196 + $0x224] sm:$0xff]
      %v284 = vld [vmem:[%s196 + $0x22c] sm:$0xf]
      %v285 = vld [vmem:[%s196 + $0x230] sm:$0xff]
      %v286 = vld [vmem:[%s196 + $0x238] sm:$0xff]
      %v287 = vld [vmem:[%s196 + $0x240] sm:$0xff]
      %v288 = vld [vmem:[%s196 + $0x248] sm:$0xf]
      %v289 = vld [vmem:[%s196 + $0x24c] sm:$0xff]
      %v290 = vld [vmem:[%s196 + $0x254] sm:$0xff]
      %v291 = vld [vmem:[%s196 + $0x25c] sm:$0xff]
      %v292 = vld [vmem:[%s196 + $0x264] sm:$0xf]
      %v293 = vld [vmem:[%s196 + $0x268] sm:$0xff]
      %v294 = vld [vmem:[%s196 + $0x270] sm:$0xff]
      %v295 = vld [vmem:[%s196 + $0x278] sm:$0xff]
      %v296 = vld [vmem:[%s196 + $0x280] sm:$0xf]
      %v297 = vld [vmem:[%s196 + $0x284] sm:$0xff]
      %v298 = vld [vmem:[%s196 + $0x28c] sm:$0xff]
      %v299 = vld [vmem:[%s196 + $0x294] sm:$0xff]
      %v300 = vld [vmem:[%s196 + $0x29c] sm:$0xf]
      %v301 = vld [vmem:[%s196 + $0x2a0] sm:$0xff]
      %v302 = vld [vmem:[%s196 + $0x2a8] sm:$0xff]
      %v303 = vld [vmem:[%s196 + $0x2b0] sm:$0xff]
      %v304 = vld [vmem:[%s196 + $0x2b8] sm:$0xf]
      %v305 = vld [vmem:[%s196 + $0x2bc] sm:$0xff]
      %v306 = vld [vmem:[%s196 + $0x2c4] sm:$0xff]
      %v307 = vld [vmem:[%s196 + $0x2cc] sm:$0xff]
      %v308 = vld [vmem:[%s196 + $0x2d4] sm:$0xf]
      %v309 = vld [vmem:[%s196 + $0x2d8] sm:$0xff]
      %v310 = vld [vmem:[%s196 + $0x2e0] sm:$0xff]
      %v311 = vld [vmem:[%s196 + $0x2e8] sm:$0xff]
      %v312 = vld [vmem:[%s196 + $0x2f0] sm:$0xf]
      %v313 = vld [vmem:[%s196 + $0x2f4] sm:$0xff]
      %v314 = vld [vmem:[%s196 + $0x2fc] sm:$0xff]
      %v315 = vld [vmem:[%s196 + $0x304] sm:$0xff]
      %v316 = vld [vmem:[%s196 + $0x30c] sm:$0xf]
      %v317 = vld [vmem:[%s196 + $0x310] sm:$0xff]
      %v318 = vld [vmem:[%s196 + $0x318] sm:$0xff]
      %v319 = vld [vmem:[%s196 + $0x320] sm:$0xff]
      %v320 = vld [vmem:[%s196 + $0x328] sm:$0xf]
      %v321 = vld [vmem:[%s196 + $0x32c] sm:$0xff]
      %v322 = vld [vmem:[%s196 + $0x334] sm:$0xff]
      %v323 = vld [vmem:[%s196 + $0x33c] sm:$0xff]
      %v324 = vld [vmem:[%s196 + $0x344] sm:$0xf]
      %v325 = vld [vmem:[%s196 + $0x348] sm:$0xff]
      %v326 = vld [vmem:[%s196 + $0x350] sm:$0xff]
      %v327 = vld [vmem:[%s196 + $0x358] sm:$0xff]
      %v328 = vld [vmem:[%s196 + $0x360] sm:$0xf]
      %v329 = vld [vmem:[%s196 + $0x364] sm:$0xff]
      %v330 = vld [vmem:[%s196 + $0x36c] sm:$0xff]
      %v331 = vld [vmem:[%s196 + $0x374] sm:$0xff]
      %v332 = vld [vmem:[%s196 + $0x37c] sm:$0xf]
      %v333 = vld [vmem:[%s1] sm:$0xf]
      %v334 = vld [vmem:[%s1 + $0x4] sm:$0xf]
      %v335 = vld [vmem:[%s1 + $0x8] sm:$0xf]
      %v336 = vld [vmem:[%s1 + $0xc] sm:$0xf]
      %v337 = vld [vmem:[%s1 + $0x10] sm:$0xf]
      %v338 = vld [vmem:[%s1 + $0x14] sm:$0xf]
      %v339 = vld [vmem:[%s1 + $0x18] sm:$0xf]
      %v340 = vld [vmem:[%s1 + $0x1c] sm:$0xf]
      %v341 = vld [vmem:[%s1 + $0x20] sm:$0xf]
      %v342 = vld [vmem:[%s1 + $0x24] sm:$0xf]
      %v343 = vld [vmem:[%s1 + $0x28] sm:$0xf]
      %v344 = vld [vmem:[%s1 + $0x2c] sm:$0xf]
      %v345 = vld [vmem:[%s1 + $0x30] sm:$0xf]
      %v346 = vld [vmem:[%s1 + $0x34] sm:$0xf]
      %v347 = vld [vmem:[%s1 + $0x38] sm:$0xf]
      %v348 = vld [vmem:[%s1 + $0x3c] sm:$0xf]
      %v349 = vld [vmem:[%s1 + $0x40] sm:$0xf]
      %v350 = vld [vmem:[%s1 + $0x44] sm:$0xf]
      %v351 = vld [vmem:[%s1 + $0x48] sm:$0xf]
      %v352 = vld [vmem:[%s1 + $0x4c] sm:$0xf]
      %v353 = vld [vmem:[%s1 + $0x50] sm:$0xf]
      %v354 = vld [vmem:[%s1 + $0x54] sm:$0xf]
      %v355 = vld [vmem:[%s1 + $0x58] sm:$0xf]
      %v356 = vld [vmem:[%s1 + $0x5c] sm:$0xf]
      %v357 = vld [vmem:[%s1 + $0x60] sm:$0xf]
      %v358 = vld [vmem:[%s1 + $0x64] sm:$0xf]
      %v359 = vld [vmem:[%s1 + $0x68] sm:$0xf]
      %v360 = vld [vmem:[%s1 + $0x6c] sm:$0xf]
      %v361 = vld [vmem:[%s1 + $0x70] sm:$0xf]
      %v362 = vld [vmem:[%s1 + $0x74] sm:$0xf]
      %v363 = vld [vmem:[%s1 + $0x78] sm:$0xf]
      %v364 = vld [vmem:[%s1 + $0x7c] sm:$0xf]
      %v365 = vld [vmem:[%s1 + $0x80] sm:$0xf]
      %v366 = vld [vmem:[%s1 + $0x84] sm:$0xf]
      %v367 = vld [vmem:[%s1 + $0x88] sm:$0xf]
      %v368 = vld [vmem:[%s1 + $0x8c] sm:$0xf]
      %v369 = vld [vmem:[%s1 + $0x90] sm:$0xf]
      %v370 = vld [vmem:[%s1 + $0x94] sm:$0xf]
      %v371 = vld [vmem:[%s1 + $0x98] sm:$0xf]
      %v372 = vld [vmem:[%s1 + $0x9c] sm:$0xf]
      %v373 = vld [vmem:[%s1 + $0xa0] sm:$0xf]
      %v374 = vld [vmem:[%s1 + $0xa4] sm:$0xf]
      %v375 = vld [vmem:[%s1 + $0xa8] sm:$0xf]
      %v376 = vld [vmem:[%s1 + $0xac] sm:$0xf]
      %v377 = vld [vmem:[%s1 + $0xb0] sm:$0xf]
      %v378 = vld [vmem:[%s1 + $0xb4] sm:$0xf]
      %v379 = vld [vmem:[%s1 + $0xb8] sm:$0xf]
      %v380 = vld [vmem:[%s1 + $0xbc] sm:$0xf]
      %v381 = vld [vmem:[%s1 + $0xc0] sm:$0xf]
      %v382 = vld [vmem:[%s1 + $0xc4] sm:$0xf]
      %v383 = vld [vmem:[%s1 + $0xc8] sm:$0xf]
      %v384 = vld [vmem:[%s1 + $0xcc] sm:$0xf]
      %v385 = vld [vmem:[%s1 + $0xd0] sm:$0xf]
      %v386 = vld [vmem:[%s1 + $0xd4] sm:$0xf]
      %v387 = vld [vmem:[%s1 + $0xd8] sm:$0xf]
      %v388 = vld [vmem:[%s1 + $0xdc] sm:$0xf]
      %v389 = vld [vmem:[%s1 + $0xe0] sm:$0xf]
      %v390 = vld [vmem:[%s1 + $0xe4] sm:$0xf]
      %v391 = vld [vmem:[%s1 + $0xe8] sm:$0xf]
      %v392 = vld [vmem:[%s1 + $0xec] sm:$0xf]
      %v393 = vld [vmem:[%s1 + $0xf0] sm:$0xf]
      %v394 = vld [vmem:[%s1 + $0xf4] sm:$0xf]
      %v395 = vld [vmem:[%s1 + $0xf8] sm:$0xf]
      %v396 = vld [vmem:[%s1 + $0xfc] sm:$0xf]
      %v397 = vld [vmem:[%s1 + $0x100] sm:$0xf]
      %v398 = vld [vmem:[%s1 + $0x104] sm:$0xf]
      %v399 = vld [vmem:[%s1 + $0x108] sm:$0xf]
      %v400 = vld [vmem:[%s1 + $0x10c] sm:$0xf]
      %v401 = vld [vmem:[%s1 + $0x110] sm:$0xf]
      %v402 = vld [vmem:[%s1 + $0x114] sm:$0xf]
      %v403 = vld [vmem:[%s1 + $0x118] sm:$0xf]
      %v404 = vld [vmem:[%s1 + $0x11c] sm:$0xf]
      %v405 = vld [vmem:[%s1 + $0x120] sm:$0xf]
      %v406 = vld [vmem:[%s1 + $0x124] sm:$0xf]
      %v407 = vld [vmem:[%s1 + $0x128] sm:$0xf]
      %v408 = vld [vmem:[%s1 + $0x12c] sm:$0xf]
      %v409 = vld [vmem:[%s1 + $0x130] sm:$0xf]
      %v410 = vld [vmem:[%s1 + $0x134] sm:$0xf]
      %v411 = vld [vmem:[%s1 + $0x138] sm:$0xf]
      %v412 = vld [vmem:[%s1 + $0x13c] sm:$0xf]
      %v413 = vld [vmem:[%s1 + $0x140] sm:$0xf]
      %v414 = vld [vmem:[%s1 + $0x144] sm:$0xf]
      %v415 = vld [vmem:[%s1 + $0x148] sm:$0xf]
      %v416 = vld [vmem:[%s1 + $0x14c] sm:$0xf]
      %v417 = vld [vmem:[%s1 + $0x150] sm:$0xf]
      %v418 = vld [vmem:[%s1 + $0x154] sm:$0xf]
      %v419 = vld [vmem:[%s1 + $0x158] sm:$0xf]
      %v420 = vld [vmem:[%s1 + $0x15c] sm:$0xf]
      %v421 = vld [vmem:[%s1 + $0x160] sm:$0xf]
      %v422 = vld [vmem:[%s1 + $0x164] sm:$0xf]
      %v423 = vld [vmem:[%s1 + $0x168] sm:$0xf]
      %v424 = vld [vmem:[%s1 + $0x16c] sm:$0xf]
      %v425 = vld [vmem:[%s1 + $0x170] sm:$0xf]
      %v426 = vld [vmem:[%s1 + $0x174] sm:$0xf]
      %v427 = vld [vmem:[%s1 + $0x178] sm:$0xf]
      %v428 = vld [vmem:[%s1 + $0x17c] sm:$0xf]
      %v429 = vld [vmem:[%s1 + $0x180] sm:$0xf]
      %v430 = vld [vmem:[%s1 + $0x184] sm:$0xf]
      %v431 = vld [vmem:[%s1 + $0x188] sm:$0xf]
      %v432 = vld [vmem:[%s1 + $0x18c] sm:$0xf]
      %v561 = vunpack.c.l.b16 %v205
      %v562 = vunpack.c.h.b16 %v205
      %v563 = vunpack.c.l.b16 %v206
      %v564 = vunpack.c.h.b16 %v206
      %v565 = vunpack.c.l.b16 %v207
      %v566 = vunpack.c.h.b16 %v207
      %v567 = vunpack.c.l.b16 %v208
      %v568 = vunpack.c.l.b16 %v209
      %v569 = vunpack.c.h.b16 %v209
      %v570 = vunpack.c.l.b16 %v210
      %v571 = vunpack.c.h.b16 %v210
      %v572 = vunpack.c.l.b16 %v211
      %v573 = vunpack.c.h.b16 %v211
      %v574 = vunpack.c.l.b16 %v212
      %v575 = vunpack.c.l.b16 %v213
      %v576 = vunpack.c.h.b16 %v213
      %v577 = vunpack.c.l.b16 %v214
      %v578 = vunpack.c.h.b16 %v214
      %v579 = vunpack.c.l.b16 %v215
      %v580 = vunpack.c.h.b16 %v215
      %v581 = vunpack.c.l.b16 %v216
      %v582 = vunpack.c.l.b16 %v217
      %v583 = vunpack.c.h.b16 %v217
      %v584 = vunpack.c.l.b16 %v218
      %v585 = vunpack.c.h.b16 %v218
      %v586 = vunpack.c.l.b16 %v219
      %v587 = vunpack.c.h.b16 %v219
      %v588 = vunpack.c.l.b16 %v220
      %v589 = vunpack.c.l.b16 %v221
      %v590 = vunpack.c.h.b16 %v221
      %v591 = vunpack.c.l.b16 %v222
      %v592 = vunpack.c.h.b16 %v222
      %v593 = vunpack.c.l.b16 %v223
      %v594 = vunpack.c.h.b16 %v223
      %v595 = vunpack.c.l.b16 %v224
      %v596 = vunpack.c.l.b16 %v225
      %v597 = vunpack.c.h.b16 %v225
      %v598 = vunpack.c.l.b16 %v226
      %v599 = vunpack.c.h.b16 %v226
      %v600 = vunpack.c.l.b16 %v227
      %v601 = vunpack.c.h.b16 %v227
      %v602 = vunpack.c.l.b16 %v228
      %v603 = vunpack.c.l.b16 %v229
      %v604 = vunpack.c.h.b16 %v229
      %v605 = vunpack.c.l.b16 %v230
      %v606 = vunpack.c.h.b16 %v230
      %v607 = vunpack.c.l.b16 %v231
      %v608 = vunpack.c.h.b16 %v231
      %v609 = vunpack.c.l.b16 %v232
      %v610 = vunpack.c.l.b16 %v233
      %v611 = vunpack.c.h.b16 %v233
      %v612 = vunpack.c.l.b16 %v234
      %v613 = vunpack.c.h.b16 %v234
      %v614 = vunpack.c.l.b16 %v235
      %v615 = vunpack.c.h.b16 %v235
      %v616 = vunpack.c.l.b16 %v236
      %v617 = vunpack.c.l.b16 %v237
      %v618 = vunpack.c.h.b16 %v237
      %v619 = vunpack.c.l.b16 %v238
      %v620 = vunpack.c.h.b16 %v238
      %v621 = vunpack.c.l.b16 %v239
      %v622 = vunpack.c.h.b16 %v239
      %v623 = vunpack.c.l.b16 %v240
      %v624 = vunpack.c.l.b16 %v241
      %v625 = vunpack.c.h.b16 %v241
      %v626 = vunpack.c.l.b16 %v242
      %v627 = vunpack.c.h.b16 %v242
      %v628 = vunpack.c.l.b16 %v243
      %v629 = vunpack.c.h.b16 %v243
      %v630 = vunpack.c.l.b16 %v244
      %v631 = vunpack.c.l.b16 %v245
      %v632 = vunpack.c.h.b16 %v245
      %v633 = vunpack.c.l.b16 %v246
      %v634 = vunpack.c.h.b16 %v246
      %v635 = vunpack.c.l.b16 %v247
      %v636 = vunpack.c.h.b16 %v247
      %v637 = vunpack.c.l.b16 %v248
      %v638 = vunpack.c.l.b16 %v249
      %v639 = vunpack.c.h.b16 %v249
      %v640 = vunpack.c.l.b16 %v250
      %v641 = vunpack.c.h.b16 %v250
      %v642 = vunpack.c.l.b16 %v251
      %v643 = vunpack.c.h.b16 %v251
      %v644 = vunpack.c.l.b16 %v252
      %v645 = vunpack.c.l.b16 %v253
      %v646 = vunpack.c.h.b16 %v253
      %v647 = vunpack.c.l.b16 %v254
      %v648 = vunpack.c.h.b16 %v254
      %v649 = vunpack.c.l.b16 %v255
      %v650 = vunpack.c.h.b16 %v255
      %v651 = vunpack.c.l.b16 %v256
      %v652 = vunpack.c.l.b16 %v257
      %v653 = vunpack.c.h.b16 %v257
      %v654 = vunpack.c.l.b16 %v258
      %v655 = vunpack.c.h.b16 %v258
      %v656 = vunpack.c.l.b16 %v259
      %v657 = vunpack.c.h.b16 %v259
      %v658 = vunpack.c.l.b16 %v260
      %v659 = vunpack.c.l.b16 %v261
      %v660 = vunpack.c.h.b16 %v261
      %v661 = vunpack.c.l.b16 %v262
      %v662 = vunpack.c.h.b16 %v262
      %v663 = vunpack.c.l.b16 %v263
      %v664 = vunpack.c.h.b16 %v263
      %v665 = vunpack.c.l.b16 %v264
      %v666 = vunpack.c.l.b16 %v265
      %v667 = vunpack.c.h.b16 %v265
      %v668 = vunpack.c.l.b16 %v266
      %v669 = vunpack.c.h.b16 %v266
      %v670 = vunpack.c.l.b16 %v267
      %v671 = vunpack.c.h.b16 %v267
      %v672 = vunpack.c.l.b16 %v268
      %v673 = vunpack.c.l.b16 %v269
      %v674 = vunpack.c.h.b16 %v269
      %v675 = vunpack.c.l.b16 %v270
      %v676 = vunpack.c.h.b16 %v270
      %v677 = vunpack.c.l.b16 %v271
      %v678 = vunpack.c.h.b16 %v271
      %v679 = vunpack.c.l.b16 %v272
      %v680 = vunpack.c.l.b16 %v273
      %v681 = vunpack.c.h.b16 %v273
      %v682 = vunpack.c.l.b16 %v274
      %v683 = vunpack.c.h.b16 %v274
      %v684 = vunpack.c.l.b16 %v275
      %v685 = vunpack.c.h.b16 %v275
      %v686 = vunpack.c.l.b16 %v276
      %v687 = vunpack.c.l.b16 %v277
      %v688 = vunpack.c.h.b16 %v277
      %v689 = vunpack.c.l.b16 %v278
      %v690 = vunpack.c.h.b16 %v278
      %v691 = vunpack.c.l.b16 %v279
      %v692 = vunpack.c.h.b16 %v279
      %v693 = vunpack.c.l.b16 %v280
      %v694 = vunpack.c.l.b16 %v281
      %v695 = vunpack.c.h.b16 %v281
      %v696 = vunpack.c.l.b16 %v282
      %v697 = vunpack.c.h.b16 %v282
      %v698 = vunpack.c.l.b16 %v283
      %v699 = vunpack.c.h.b16 %v283
      %v700 = vunpack.c.l.b16 %v284
      %v701 = vunpack.c.l.b16 %v285
      %v702 = vunpack.c.h.b16 %v285
      %v703 = vunpack.c.l.b16 %v286
      %v704 = vunpack.c.h.b16 %v286
      %v705 = vunpack.c.l.b16 %v287
      %v706 = vunpack.c.h.b16 %v287
      %v707 = vunpack.c.l.b16 %v288
      %v708 = vunpack.c.l.b16 %v289
      %v709 = vunpack.c.h.b16 %v289
      %v710 = vunpack.c.l.b16 %v290
      %v711 = vunpack.c.h.b16 %v290
      %v712 = vunpack.c.l.b16 %v291
      %v713 = vunpack.c.h.b16 %v291
      %v714 = vunpack.c.l.b16 %v292
      %v715 = vunpack.c.l.b16 %v293
      %v716 = vunpack.c.h.b16 %v293
      %v717 = vunpack.c.l.b16 %v294
      %v718 = vunpack.c.h.b16 %v294
      %v719 = vunpack.c.l.b16 %v295
      %v720 = vunpack.c.h.b16 %v295
      %v721 = vunpack.c.l.b16 %v296
      %v722 = vunpack.c.l.b16 %v297
      %v723 = vunpack.c.h.b16 %v297
      %v724 = vunpack.c.l.b16 %v298
      %v725 = vunpack.c.h.b16 %v298
      %v726 = vunpack.c.l.b16 %v299
      %v727 = vunpack.c.h.b16 %v299
      %v728 = vunpack.c.l.b16 %v300
      %v729 = vunpack.c.l.b16 %v301
      %v730 = vunpack.c.h.b16 %v301
      %v731 = vunpack.c.l.b16 %v302
      %v732 = vunpack.c.h.b16 %v302
      %v733 = vunpack.c.l.b16 %v303
      %v734 = vunpack.c.h.b16 %v303
      %v735 = vunpack.c.l.b16 %v304
      %v736 = vunpack.c.l.b16 %v305
      %v737 = vunpack.c.h.b16 %v305
      %v738 = vunpack.c.l.b16 %v306
      %v739 = vunpack.c.h.b16 %v306
      %v740 = vunpack.c.l.b16 %v307
      %v741 = vunpack.c.h.b16 %v307
      %v742 = vunpack.c.l.b16 %v308
      %v743 = vunpack.c.l.b16 %v309
      %v744 = vunpack.c.h.b16 %v309
      %v745 = vunpack.c.l.b16 %v310
      %v746 = vunpack.c.h.b16 %v310
      %v747 = vunpack.c.l.b16 %v311
      %v748 = vunpack.c.h.b16 %v311
      %v749 = vunpack.c.l.b16 %v312
      %v750 = vunpack.c.l.b16 %v313
      %v751 = vunpack.c.h.b16 %v313
      %v752 = vunpack.c.l.b16 %v314
      %v753 = vunpack.c.h.b16 %v314
      %v754 = vunpack.c.l.b16 %v315
      %v755 = vunpack.c.h.b16 %v315
      %v756 = vunpack.c.l.b16 %v316
      %v757 = vunpack.c.l.b16 %v317
      %v758 = vunpack.c.h.b16 %v317
      %v759 = vunpack.c.l.b16 %v318
      %v760 = vunpack.c.h.b16 %v318
      %v761 = vunpack.c.l.b16 %v319
      %v762 = vunpack.c.h.b16 %v319
      %v763 = vunpack.c.l.b16 %v320
      %v764 = vunpack.c.l.b16 %v321
      %v765 = vunpack.c.h.b16 %v321
      %v766 = vunpack.c.l.b16 %v322
      %v767 = vunpack.c.h.b16 %v322
      %v768 = vunpack.c.l.b16 %v323
      %v769 = vunpack.c.h.b16 %v323
      %v770 = vunpack.c.l.b16 %v324
      %v771 = vunpack.c.l.b16 %v325
      %v772 = vunpack.c.h.b16 %v325
      %v773 = vunpack.c.l.b16 %v326
      %v774 = vunpack.c.h.b16 %v326
      %v775 = vunpack.c.l.b16 %v327
      %v776 = vunpack.c.h.b16 %v327
      %v777 = vunpack.c.l.b16 %v328
      %v778 = vunpack.c.l.b16 %v329
      %v779 = vunpack.c.h.b16 %v329
      %v780 = vunpack.c.l.b16 %v330
      %v781 = vunpack.c.h.b16 %v330
      %v782 = vunpack.c.l.b16 %v331
      %v783 = vunpack.c.h.b16 %v331
      %v784 = vunpack.c.l.b16 %v332
      %v785 = vpack.c.b16 %v568, %v561
      %v786 = vpack.c.b16 %v569, %v562
      %v787 = vpack.c.b16 %v570, %v563
      %v788 = vpack.c.b16 %v571, %v564
      %v789 = vpack.c.b16 %v572, %v565
      %v790 = vpack.c.b16 %v573, %v566
      %v791 = vpack.c.b16 %v574, %v567
      %v792 = vpack.c.b16 %v582, %v575
      %v793 = vpack.c.b16 %v583, %v576
      %v794 = vpack.c.b16 %v584, %v577
      %v795 = vpack.c.b16 %v585, %v578
      %v796 = vpack.c.b16 %v586, %v579
      %v797 = vpack.c.b16 %v587, %v580
      %v798 = vpack.c.b16 %v588, %v581
      %v799 = vpack.c.b16 %v596, %v589
      %v800 = vpack.c.b16 %v597, %v590
      %v801 = vpack.c.b16 %v598, %v591
      %v802 = vpack.c.b16 %v599, %v592
      %v803 = vpack.c.b16 %v600, %v593
      %v804 = vpack.c.b16 %v601, %v594
      %v805 = vpack.c.b16 %v602, %v595
      %v806 = vpack.c.b16 %v610, %v603
      %v807 = vpack.c.b16 %v611, %v604
      %v808 = vpack.c.b16 %v612, %v605
      %v809 = vpack.c.b16 %v613, %v606
      %v810 = vpack.c.b16 %v614, %v607
      %v811 = vpack.c.b16 %v615, %v608
      %v812 = vpack.c.b16 %v616, %v609
      %v813 = vpack.c.b16 %v624, %v617
      %v814 = vpack.c.b16 %v625, %v618
      %v815 = vpack.c.b16 %v626, %v619
      %v816 = vpack.c.b16 %v627, %v620
      %v817 = vpack.c.b16 %v628, %v621
      %v818 = vpack.c.b16 %v629, %v622
      %v819 = vpack.c.b16 %v630, %v623
      %v820 = vpack.c.b16 %v638, %v631
      %v821 = vpack.c.b16 %v639, %v632
      %v822 = vpack.c.b16 %v640, %v633
      %v823 = vpack.c.b16 %v641, %v634
      %v824 = vpack.c.b16 %v642, %v635
      %v825 = vpack.c.b16 %v643, %v636
      %v826 = vpack.c.b16 %v644, %v637
      %v827 = vpack.c.b16 %v652, %v645
      %v828 = vpack.c.b16 %v653, %v646
      %v829 = vpack.c.b16 %v654, %v647
      %v830 = vpack.c.b16 %v655, %v648
      %v831 = vpack.c.b16 %v656, %v649
      %v832 = vpack.c.b16 %v657, %v650
      %v833 = vpack.c.b16 %v658, %v651
      %v834 = vpack.c.b16 %v666, %v659
      %v835 = vpack.c.b16 %v667, %v660
      %v836 = vpack.c.b16 %v668, %v661
      %v837 = vpack.c.b16 %v669, %v662
      %v838 = vpack.c.b16 %v670, %v663
      %v839 = vpack.c.b16 %v671, %v664
      %v840 = vpack.c.b16 %v672, %v665
      %v841 = vpack.c.b16 %v680, %v673
      %v842 = vpack.c.b16 %v681, %v674
      %v843 = vpack.c.b16 %v682, %v675
      %v844 = vpack.c.b16 %v683, %v676
      %v845 = vpack.c.b16 %v684, %v677
      %v846 = vpack.c.b16 %v685, %v678
      %v847 = vpack.c.b16 %v686, %v679
      %v848 = vpack.c.b16 %v694, %v687
      %v849 = vpack.c.b16 %v695, %v688
      %v850 = vpack.c.b16 %v696, %v689
      %v851 = vpack.c.b16 %v697, %v690
      %v852 = vpack.c.b16 %v698, %v691
      %v853 = vpack.c.b16 %v699, %v692
      %v854 = vpack.c.b16 %v700, %v693
      %v855 = vpack.c.b16 %v708, %v701
      %v856 = vpack.c.b16 %v709, %v702
      %v857 = vpack.c.b16 %v710, %v703
      %v858 = vpack.c.b16 %v711, %v704
      %v859 = vpack.c.b16 %v712, %v705
      %v860 = vpack.c.b16 %v713, %v706
      %v861 = vpack.c.b16 %v714, %v707
      %v862 = vpack.c.b16 %v722, %v715
      %v863 = vpack.c.b16 %v723, %v716
      %v864 = vpack.c.b16 %v724, %v717
      %v865 = vpack.c.b16 %v725, %v718
      %v866 = vpack.c.b16 %v726, %v719
      %v867 = vpack.c.b16 %v727, %v720
      %v868 = vpack.c.b16 %v728, %v721
      %v869 = vpack.c.b16 %v736, %v729
      %v870 = vpack.c.b16 %v737, %v730
      %v871 = vpack.c.b16 %v738, %v731
      %v872 = vpack.c.b16 %v739, %v732
      %v873 = vpack.c.b16 %v740, %v733
      %v874 = vpack.c.b16 %v741, %v734
      %v875 = vpack.c.b16 %v742, %v735
      %v876 = vpack.c.b16 %v750, %v743
      %v877 = vpack.c.b16 %v751, %v744
      %v878 = vpack.c.b16 %v752, %v745
      %v879 = vpack.c.b16 %v753, %v746
      %v880 = vpack.c.b16 %v754, %v747
      %v881 = vpack.c.b16 %v755, %v748
      %v882 = vpack.c.b16 %v756, %v749
      %v883 = vpack.c.b16 %v764, %v757
      %v884 = vpack.c.b16 %v765, %v758
      %v885 = vpack.c.b16 %v766, %v759
      %v886 = vpack.c.b16 %v767, %v760
      %v887 = vpack.c.b16 %v768, %v761
      %v888 = vpack.c.b16 %v769, %v762
      %v889 = vpack.c.b16 %v770, %v763
      %v890 = vpack.c.b16 %v778, %v771
      %v891 = vpack.c.b16 %v779, %v772
      %v892 = vpack.c.b16 %v780, %v773
      %v893 = vpack.c.b16 %v781, %v774
      %v894 = vpack.c.b16 %v782, %v775
      %v895 = vpack.c.b16 %v783, %v776
      %v896 = vpack.c.b16 %v784, %v777
      %v1093 = vunpack.c.l.b16 %v333
      %v1094 = vunpack.c.l.b16 %v334
      %v1095 = vunpack.c.l.b16 %v335
      %v1096 = vunpack.c.l.b16 %v336
      %v1097 = vunpack.c.l.b16 %v337
      %v1098 = vunpack.c.l.b16 %v338
      %v1099 = vunpack.c.l.b16 %v339
      %v1100 = vunpack.c.l.b16 %v340
      %v1101 = vunpack.c.l.b16 %v341
      %v1102 = vunpack.c.l.b16 %v342
      %v1103 = vunpack.c.l.b16 %v343
      %v1104 = vunpack.c.l.b16 %v344
      %v1105 = vunpack.c.l.b16 %v345
      %v1106 = vunpack.c.l.b16 %v346
      %v1107 = vunpack.c.l.b16 %v347
      %v1108 = vunpack.c.l.b16 %v348
      %v1109 = vunpack.c.l.b16 %v349
      %v1110 = vunpack.c.l.b16 %v350
      %v1111 = vunpack.c.l.b16 %v351
      %v1112 = vunpack.c.l.b16 %v352
      %v1113 = vunpack.c.l.b16 %v353
      %v1114 = vunpack.c.l.b16 %v354
      %v1115 = vunpack.c.l.b16 %v355
      %v1116 = vunpack.c.l.b16 %v356
      %v1117 = vunpack.c.l.b16 %v357
      %v1118 = vunpack.c.l.b16 %v358
      %v1119 = vunpack.c.l.b16 %v359
      %v1120 = vunpack.c.l.b16 %v360
      %v1121 = vunpack.c.l.b16 %v361
      %v1122 = vunpack.c.l.b16 %v362
      %v1123 = vunpack.c.l.b16 %v363
      %v1124 = vunpack.c.l.b16 %v364
      %v1125 = vunpack.c.l.b16 %v365
      %v1126 = vunpack.c.l.b16 %v366
      %v1127 = vunpack.c.l.b16 %v367
      %v1128 = vunpack.c.l.b16 %v368
      %v1129 = vunpack.c.l.b16 %v369
      %v1130 = vunpack.c.l.b16 %v370
      %v1131 = vunpack.c.l.b16 %v371
      %v1132 = vunpack.c.l.b16 %v372
      %v1133 = vunpack.c.l.b16 %v373
      %v1134 = vunpack.c.l.b16 %v374
      %v1135 = vunpack.c.l.b16 %v375
      %v1136 = vunpack.c.l.b16 %v376
      %v1137 = vunpack.c.l.b16 %v377
      %v1138 = vunpack.c.l.b16 %v378
      %v1139 = vunpack.c.l.b16 %v379
      %v1140 = vunpack.c.l.b16 %v380
      %v1141 = vunpack.c.l.b16 %v381
      %v1142 = vunpack.c.l.b16 %v382
      %v1143 = vunpack.c.l.b16 %v383
      %v1144 = vunpack.c.l.b16 %v384
      %v1145 = vunpack.c.l.b16 %v385
      %v1146 = vunpack.c.l.b16 %v386
      %v1147 = vunpack.c.l.b16 %v387
      %v1148 = vunpack.c.l.b16 %v388
      %v1149 = vunpack.c.l.b16 %v389
      %v1150 = vunpack.c.l.b16 %v390
      %v1151 = vunpack.c.l.b16 %v391
      %v1152 = vunpack.c.l.b16 %v392
      %v1153 = vunpack.c.l.b16 %v393
      %v1154 = vunpack.c.l.b16 %v394
      %v1155 = vunpack.c.l.b16 %v395
      %v1156 = vunpack.c.l.b16 %v396
      %v1157 = vunpack.c.l.b16 %v397
      %v1158 = vunpack.c.l.b16 %v398
      %v1159 = vunpack.c.l.b16 %v399
      %v1160 = vunpack.c.l.b16 %v400
      %v1161 = vunpack.c.l.b16 %v401
      %v1162 = vunpack.c.l.b16 %v402
      %v1163 = vunpack.c.l.b16 %v403
      %v1164 = vunpack.c.l.b16 %v404
      %v1165 = vunpack.c.l.b16 %v405
      %v1166 = vunpack.c.l.b16 %v406
      %v1167 = vunpack.c.l.b16 %v407
      %v1168 = vunpack.c.l.b16 %v408
      %v1169 = vunpack.c.l.b16 %v409
      %v1170 = vunpack.c.l.b16 %v410
      %v1171 = vunpack.c.l.b16 %v411
      %v1172 = vunpack.c.l.b16 %v412
      %v1173 = vunpack.c.l.b16 %v413
      %v1174 = vunpack.c.l.b16 %v414
      %v1175 = vunpack.c.l.b16 %v415
      %v1176 = vunpack.c.l.b16 %v416
      %v1177 = vunpack.c.l.b16 %v417
      %v1178 = vunpack.c.l.b16 %v418
      %v1179 = vunpack.c.l.b16 %v419
      %v1180 = vunpack.c.l.b16 %v420
      %v1181 = vunpack.c.l.b16 %v421
      %v1182 = vunpack.c.l.b16 %v422
      %v1183 = vunpack.c.l.b16 %v423
      %v1184 = vunpack.c.l.b16 %v424
      %v1185 = vunpack.c.l.b16 %v425
      %v1186 = vunpack.c.l.b16 %v426
      %v1187 = vunpack.c.l.b16 %v427
      %v1188 = vunpack.c.l.b16 %v428
      %v1189 = vunpack.c.l.b16 %v429
      %v1190 = vunpack.c.l.b16 %v430
      %v1191 = vunpack.c.l.b16 %v431
      %v1192 = vunpack.c.l.b16 %v432
      %v1193 = vpack.c.b16 %v1094, %v1093
      %v1194 = vpack.c.b16 %v1096, %v1095
      %v1195 = vpack.c.b16 %v1098, %v1097
      %v1196 = vpack.c.b16 %v1100, %v1099
      %v1197 = vpack.c.b16 %v1102, %v1101
      %v1198 = vpack.c.b16 %v1104, %v1103
      %v1199 = vpack.c.b16 %v1106, %v1105
      %v1200 = vpack.c.b16 %v1108, %v1107
      %v1201 = vpack.c.b16 %v1110, %v1109
      %v1202 = vpack.c.b16 %v1112, %v1111
      %v1203 = vpack.c.b16 %v1114, %v1113
      %v1204 = vpack.c.b16 %v1116, %v1115
      %v1205 = vpack.c.b16 %v1118, %v1117
      %v1206 = vpack.c.b16 %v1120, %v1119
      %v1207 = vpack.c.b16 %v1122, %v1121
      %v1208 = vpack.c.b16 %v1124, %v1123
      %v1209 = vpack.c.b16 %v1126, %v1125
      %v1210 = vpack.c.b16 %v1128, %v1127
      %v1211 = vpack.c.b16 %v1130, %v1129
      %v1212 = vpack.c.b16 %v1132, %v1131
      %v1213 = vpack.c.b16 %v1134, %v1133
      %v1214 = vpack.c.b16 %v1136, %v1135
      %v1215 = vpack.c.b16 %v1138, %v1137
      %v1216 = vpack.c.b16 %v1140, %v1139
      %v1217 = vpack.c.b16 %v1142, %v1141
      %v1218 = vpack.c.b16 %v1144, %v1143
      %v1219 = vpack.c.b16 %v1146, %v1145
      %v1220 = vpack.c.b16 %v1148, %v1147
      %v1221 = vpack.c.b16 %v1150, %v1149
      %v1222 = vpack.c.b16 %v1152, %v1151
      %v1223 = vpack.c.b16 %v1154, %v1153
      %v1224 = vpack.c.b16 %v1156, %v1155
      %v1225 = vpack.c.b16 %v1158, %v1157
      %v1226 = vpack.c.b16 %v1160, %v1159
      %v1227 = vpack.c.b16 %v1162, %v1161
      %v1228 = vpack.c.b16 %v1164, %v1163
      %v1229 = vpack.c.b16 %v1166, %v1165
      %v1230 = vpack.c.b16 %v1168, %v1167
      %v1231 = vpack.c.b16 %v1170, %v1169
      %v1232 = vpack.c.b16 %v1172, %v1171
      %v1233 = vpack.c.b16 %v1174, %v1173
      %v1234 = vpack.c.b16 %v1176, %v1175
      %v1235 = vpack.c.b16 %v1178, %v1177
      %v1236 = vpack.c.b16 %v1180, %v1179
      %v1237 = vpack.c.b16 %v1182, %v1181
      %v1238 = vpack.c.b16 %v1184, %v1183
      %v1239 = vpack.c.b16 %v1186, %v1185
      %v1240 = vpack.c.b16 %v1188, %v1187
      %v1241 = vpack.c.b16 %v1190, %v1189
      %v1242 = vpack.c.b16 %v1192, %v1191
      %vm1293 = vcmask 261120
      %v1295 = vsel %vm1293, %v791, 0
      %v1298 = vsel %vm1293, %v798, 0
      %v1301 = vsel %vm1293, %v805, 0
      %v1304 = vsel %vm1293, %v812, 0
      %v1307 = vsel %vm1293, %v819, 0
      %v1310 = vsel %vm1293, %v826, 0
      %v1313 = vsel %vm1293, %v833, 0
      %v1316 = vsel %vm1293, %v840, 0
      %v1319 = vsel %vm1293, %v847, 0
      %v1322 = vsel %vm1293, %v854, 0
      %v1325 = vsel %vm1293, %v861, 0
      %v1328 = vsel %vm1293, %v868, 0
      %v1331 = vsel %vm1293, %v875, 0
      %v1334 = vsel %vm1293, %v882, 0
      %v1337 = vsel %vm1293, %v889, 0
      %v1340 = vsel %vm1293, %v896, 0
      %1342 = vmatprep.subr.bf16.mxu0 0
      %1343 = vmatpush1.bf16.msra.mxu0 %v1200
      %1344 = vmatprep.subr.bf16.mxu0 0
      %1345 = vmatpush1.bf16.msra.mxu0 %v1199
      %1346 = vmatprep.subr.bf16.mxu0 0
      %1347 = vmatpush1.bf16.msra.mxu0 %v1198
      %1348 = vmatprep.subr.bf16.mxu0 0
      %1349 = vmatpush1.bf16.msra.mxu0 %v1197
      %1350 = vmatprep.subr.bf16.mxu0 0
      %1351 = vmatpush1.bf16.msra.mxu0 %v1196
      %1352 = vmatprep.subr.bf16.mxu0 0
      %1353 = vmatpush1.bf16.msra.mxu0 %v1195
      %1354 = vmatprep.subr.bf16.mxu0 0
      %1355 = vmatpush1.bf16.msra.mxu0 %v1194
      %1356 = vmatprep.subr.bf16.mxu0 0
      %1357 = vmatpush1.bf16.msra.mxu0 %v1193
      %1358 = vmatprep.subr.bf16.mxu0 0
      %1359 = vmatpush2.bf16.msra.mxu0 %v1208
      %1360 = vmatprep.subr.bf16.mxu0 0
      %1361 = vmatpush2.bf16.msra.mxu0 %v1207
      %1362 = vmatprep.subr.bf16.mxu0 0
      %1363 = vmatpush2.bf16.msra.mxu0 %v1206
      %1364 = vmatprep.subr.bf16.mxu0 0
      %1365 = vmatpush2.bf16.msra.mxu0 %v1205
      %1366 = vmatprep.subr.bf16.mxu0 0
      %1367 = vmatpush2.bf16.msra.mxu0 %v1204
      %1368 = vmatprep.subr.bf16.mxu0 0
      %1369 = vmatpush2.bf16.msra.mxu0 %v1203
      %1370 = vmatprep.subr.bf16.mxu0 0
      %1371 = vmatpush2.bf16.msra.mxu0 %v1202
      %1372 = vmatprep.subr.bf16.mxu0 0
      %1373 = vmatpush2.bf16.msra.mxu0 %v1201
      %1374 = vmatprep.mubr.bf16.mxu0 %v786
      %1375 = vmatmul.mubr.bf16.gmra.mxu0 %v785
      %v1376 = vpop.f32.mrf.mxu0
      %v1377 = vadd.f32 0.0, %v1376
      %v1378 = vpop.f32.mrf.mxu0
      %v1379 = vpop.f32.mrf.mxu0
      %v1380 = vadd.f32 0.0, %v1379
      %v1381 = vpop.f32.mrf.mxu0
      %1382 = vmatprep.mubr.bf16.mxu0 %v793
      %1383 = vmatmul.mubr.bf16.gmra.mxu0 %v792
      %v1384 = vpop.f32.mrf.mxu0
      %v1385 = vadd.f32 0.0, %v1384
      %v1386 = vpop.f32.mrf.mxu0
      %v1387 = vpop.f32.mrf.mxu0
      %v1388 = vadd.f32 0.0, %v1387
      %v1389 = vpop.f32.mrf.mxu0
      %1390 = vmatprep.mubr.bf16.mxu0 %v800
      %1391 = vmatmul.mubr.bf16.gmra.mxu0 %v799
      %v1392 = vpop.f32.mrf.mxu0
      %v1393 = vadd.f32 0.0, %v1392
      %v1394 = vpop.f32.mrf.mxu0
      %v1395 = vpop.f32.mrf.mxu0
      %v1396 = vadd.f32 0.0, %v1395
      %v1397 = vpop.f32.mrf.mxu0
      %1398 = vmatprep.mubr.bf16.mxu0 %v807
      %1399 = vmatmul.mubr.bf16.gmra.mxu0 %v806
      %v1400 = vpop.f32.mrf.mxu0
      %v1401 = vadd.f32 0.0, %v1400
      %v1402 = vpop.f32.mrf.mxu0
      %v1403 = vpop.f32.mrf.mxu0
      %v1404 = vadd.f32 0.0, %v1403
      %v1405 = vpop.f32.mrf.mxu0
      %1406 = vmatprep.mubr.bf16.mxu0 %v814
      %1407 = vmatmul.mubr.bf16.gmra.mxu0 %v813
      %v1408 = vpop.f32.mrf.mxu0
      %v1409 = vadd.f32 0.0, %v1408
      %v1410 = vpop.f32.mrf.mxu0
      %v1411 = vpop.f32.mrf.mxu0
      %v1412 = vadd.f32 0.0, %v1411
      %v1413 = vpop.f32.mrf.mxu0
      %1414 = vmatprep.mubr.bf16.mxu0 %v821
      %1415 = vmatmul.mubr.bf16.gmra.mxu0 %v820
      %v1416 = vpop.f32.mrf.mxu0
      %v1417 = vadd.f32 0.0, %v1416
      %v1418 = vpop.f32.mrf.mxu0
      %v1419 = vpop.f32.mrf.mxu0
      %v1420 = vadd.f32 0.0, %v1419
      %v1421 = vpop.f32.mrf.mxu0
      %1422 = vmatprep.mubr.bf16.mxu0 %v828
      %1423 = vmatmul.mubr.bf16.gmra.mxu0 %v827
      %v1424 = vpop.f32.mrf.mxu0
      %v1425 = vadd.f32 0.0, %v1424
      %v1426 = vpop.f32.mrf.mxu0
      %v1427 = vpop.f32.mrf.mxu0
      %v1428 = vadd.f32 0.0, %v1427
      %v1429 = vpop.f32.mrf.mxu0
      %1430 = vmatprep.mubr.bf16.mxu0 %v835
      %1431 = vmatmul.mubr.bf16.gmra.mxu0 %v834
      %v1432 = vpop.f32.mrf.mxu0
      %v1433 = vadd.f32 0.0, %v1432
      %v1434 = vpop.f32.mrf.mxu0
      %v1435 = vpop.f32.mrf.mxu0
      %v1436 = vadd.f32 0.0, %v1435
      %v1437 = vpop.f32.mrf.mxu0
      %1438 = vmatprep.mubr.bf16.mxu0 %v842
      %1439 = vmatmul.mubr.bf16.gmra.mxu0 %v841
      %v1440 = vpop.f32.mrf.mxu0
      %v1441 = vadd.f32 0.0, %v1440
      %v1442 = vpop.f32.mrf.mxu0
      %v1443 = vpop.f32.mrf.mxu0
      %v1444 = vadd.f32 0.0, %v1443
      %v1445 = vpop.f32.mrf.mxu0
      %1446 = vmatprep.mubr.bf16.mxu0 %v849
      %1447 = vmatmul.mubr.bf16.gmra.mxu0 %v848
      %v1448 = vpop.f32.mrf.mxu0
      %v1449 = vadd.f32 0.0, %v1448
      %v1450 = vpop.f32.mrf.mxu0
      %v1451 = vpop.f32.mrf.mxu0
      %v1452 = vadd.f32 0.0, %v1451
      %v1453 = vpop.f32.mrf.mxu0
      %1454 = vmatprep.mubr.bf16.mxu0 %v856
      %1455 = vmatmul.mubr.bf16.gmra.mxu0 %v855
      %v1456 = vpop.f32.mrf.mxu0
      %v1457 = vadd.f32 0.0, %v1456
      %v1458 = vpop.f32.mrf.mxu0
      %v1459 = vpop.f32.mrf.mxu0
      %v1460 = vadd.f32 0.0, %v1459
      %v1461 = vpop.f32.mrf.mxu0
      %1462 = vmatprep.mubr.bf16.mxu0 %v863
      %1463 = vmatmul.mubr.bf16.gmra.mxu0 %v862
      %v1464 = vpop.f32.mrf.mxu0
      %v1465 = vadd.f32 0.0, %v1464
      %v1466 = vpop.f32.mrf.mxu0
      %v1467 = vpop.f32.mrf.mxu0
      %v1468 = vadd.f32 0.0, %v1467
      %v1469 = vpop.f32.mrf.mxu0
      %1470 = vmatprep.mubr.bf16.mxu0 %v870
      %1471 = vmatmul.mubr.bf16.gmra.mxu0 %v869
      %v1472 = vpop.f32.mrf.mxu0
      %v1473 = vadd.f32 0.0, %v1472
      %v1474 = vpop.f32.mrf.mxu0
      %v1475 = vpop.f32.mrf.mxu0
      %v1476 = vadd.f32 0.0, %v1475
      %v1477 = vpop.f32.mrf.mxu0
      %1478 = vmatprep.mubr.bf16.mxu0 %v877
      %1479 = vmatmul.mubr.bf16.gmra.mxu0 %v876
      %v1480 = vpop.f32.mrf.mxu0
      %v1481 = vadd.f32 0.0, %v1480
      %v1482 = vpop.f32.mrf.mxu0
      %v1483 = vpop.f32.mrf.mxu0
      %v1484 = vadd.f32 0.0, %v1483
      %v1485 = vpop.f32.mrf.mxu0
      %1486 = vmatprep.mubr.bf16.mxu0 %v884
      %1487 = vmatmul.mubr.bf16.gmra.mxu0 %v883
      %v1488 = vpop.f32.mrf.mxu0
      %v1489 = vadd.f32 0.0, %v1488
      %v1490 = vpop.f32.mrf.mxu0
      %v1491 = vpop.f32.mrf.mxu0
      %v1492 = vadd.f32 0.0, %v1491
      %v1493 = vpop.f32.mrf.mxu0
      %1494 = vmatprep.mubr.bf16.mxu0 %v891
      %1495 = vmatmul.mubr.bf16.gmra.mxu0 %v890
      %v1496 = vpop.f32.mrf.mxu0
      %v1497 = vadd.f32 0.0, %v1496
      %v1498 = vpop.f32.mrf.mxu0
      %v1499 = vpop.f32.mrf.mxu0
      %v1500 = vadd.f32 0.0, %v1499
      %v1501 = vpop.f32.mrf.mxu0
      %1502 = vdwg.mxu0
      %1503 = vmatprep.subr.bf16.mxu0 0
      %1504 = vmatpush1.bf16.msra.mxu0 %v1216
      %1505 = vmatprep.subr.bf16.mxu0 0
      %1506 = vmatpush1.bf16.msra.mxu0 %v1215
      %1507 = vmatprep.subr.bf16.mxu0 0
      %1508 = vmatpush1.bf16.msra.mxu0 %v1214
      %1509 = vmatprep.subr.bf16.mxu0 0
      %1510 = vmatpush1.bf16.msra.mxu0 %v1213
      %1511 = vmatprep.subr.bf16.mxu0 0
      %1512 = vmatpush1.bf16.msra.mxu0 %v1212
      %1513 = vmatprep.subr.bf16.mxu0 0
      %1514 = vmatpush1.bf16.msra.mxu0 %v1211
      %1515 = vmatprep.subr.bf16.mxu0 0
      %1516 = vmatpush1.bf16.msra.mxu0 %v1210
      %1517 = vmatprep.subr.bf16.mxu0 0
      %1518 = vmatpush1.bf16.msra.mxu0 %v1209
      %1519 = vmatprep.subr.bf16.mxu0 0
      %1520 = vmatpush2.bf16.msra.mxu0 %v1224
      %1521 = vmatprep.subr.bf16.mxu0 0
      %1522 = vmatpush2.bf16.msra.mxu0 %v1223
      %1523 = vmatprep.subr.bf16.mxu0 0
      %1524 = vmatpush2.bf16.msra.mxu0 %v1222
      %1525 = vmatprep.subr.bf16.mxu0 0
      %1526 = vmatpush2.bf16.msra.mxu0 %v1221
      %1527 = vmatprep.subr.bf16.mxu0 0
      %1528 = vmatpush2.bf16.msra.mxu0 %v1220
      %1529 = vmatprep.subr.bf16.mxu0 0
      %1530 = vmatpush2.bf16.msra.mxu0 %v1219
      %1531 = vmatprep.subr.bf16.mxu0 0
      %1532 = vmatpush2.bf16.msra.mxu0 %v1218
      %1533 = vmatprep.subr.bf16.mxu0 0
      %1534 = vmatpush2.bf16.msra.mxu0 %v1217
      %1535 = vmatprep.mubr.bf16.mxu0 %v788
      %1536 = vmatmul.mubr.bf16.gmra.mxu0 %v787
      %v1537 = vpop.f32.mrf.mxu0
      %v1538 = vadd.f32 %v1377, %v1537
      %v1539 = vpop.f32.mrf.mxu0
      %v1540 = vpop.f32.mrf.mxu0
      %v1541 = vadd.f32 %v1380, %v1540
      %v1542 = vpop.f32.mrf.mxu0
      %1543 = vmatprep.mubr.bf16.mxu0 %v795
      %1544 = vmatmul.mubr.bf16.gmra.mxu0 %v794
      %v1545 = vpop.f32.mrf.mxu0
      %v1546 = vadd.f32 %v1385, %v1545
      %v1547 = vpop.f32.mrf.mxu0
      %v1548 = vpop.f32.mrf.mxu0
      %v1549 = vadd.f32 %v1388, %v1548
      %v1550 = vpop.f32.mrf.mxu0
      %1551 = vmatprep.mubr.bf16.mxu0 %v802
      %1552 = vmatmul.mubr.bf16.gmra.mxu0 %v801
      %v1553 = vpop.f32.mrf.mxu0
      %v1554 = vadd.f32 %v1393, %v1553
      %v1555 = vpop.f32.mrf.mxu0
      %v1556 = vpop.f32.mrf.mxu0
      %v1557 = vadd.f32 %v1396, %v1556
      %v1558 = vpop.f32.mrf.mxu0
      %1559 = vmatprep.mubr.bf16.mxu0 %v809
      %1560 = vmatmul.mubr.bf16.gmra.mxu0 %v808
      %v1561 = vpop.f32.mrf.mxu0
      %v1562 = vadd.f32 %v1401, %v1561
      %v1563 = vpop.f32.mrf.mxu0
      %v1564 = vpop.f32.mrf.mxu0
      %v1565 = vadd.f32 %v1404, %v1564
      %v1566 = vpop.f32.mrf.mxu0
      %1567 = vmatprep.mubr.bf16.mxu0 %v816
      %1568 = vmatmul.mubr.bf16.gmra.mxu0 %v815
      %v1569 = vpop.f32.mrf.mxu0
      %v1570 = vadd.f32 %v1409, %v1569
      %v1571 = vpop.f32.mrf.mxu0
      %v1572 = vpop.f32.mrf.mxu0
      %v1573 = vadd.f32 %v1412, %v1572
      %v1574 = vpop.f32.mrf.mxu0
      %1575 = vmatprep.mubr.bf16.mxu0 %v823
      %1576 = vmatmul.mubr.bf16.gmra.mxu0 %v822
      %v1577 = vpop.f32.mrf.mxu0
      %v1578 = vadd.f32 %v1417, %v1577
      %v1579 = vpop.f32.mrf.mxu0
      %v1580 = vpop.f32.mrf.mxu0
      %v1581 = vadd.f32 %v1420, %v1580
      %v1582 = vpop.f32.mrf.mxu0
      %1583 = vmatprep.mubr.bf16.mxu0 %v830
      %1584 = vmatmul.mubr.bf16.gmra.mxu0 %v829
      %v1585 = vpop.f32.mrf.mxu0
      %v1586 = vadd.f32 %v1425, %v1585
      %v1587 = vpop.f32.mrf.mxu0
      %v1588 = vpop.f32.mrf.mxu0
      %v1589 = vadd.f32 %v1428, %v1588
      %v1590 = vpop.f32.mrf.mxu0
      %1591 = vmatprep.mubr.bf16.mxu0 %v837
      %1592 = vmatmul.mubr.bf16.gmra.mxu0 %v836
      %v1593 = vpop.f32.mrf.mxu0
      %v1594 = vadd.f32 %v1433, %v1593
      %v1595 = vpop.f32.mrf.mxu0
      %v1596 = vpop.f32.mrf.mxu0
      %v1597 = vadd.f32 %v1436, %v1596
      %v1598 = vpop.f32.mrf.mxu0
      %1599 = vmatprep.mubr.bf16.mxu0 %v844
      %1600 = vmatmul.mubr.bf16.gmra.mxu0 %v843
      %v1601 = vpop.f32.mrf.mxu0
      %v1602 = vadd.f32 %v1441, %v1601
      %v1603 = vpop.f32.mrf.mxu0
      %v1604 = vpop.f32.mrf.mxu0
      %v1605 = vadd.f32 %v1444, %v1604
      %v1606 = vpop.f32.mrf.mxu0
      %1607 = vmatprep.mubr.bf16.mxu0 %v851
      %1608 = vmatmul.mubr.bf16.gmra.mxu0 %v850
      %v1609 = vpop.f32.mrf.mxu0
      %v1610 = vadd.f32 %v1449, %v1609
      %v1611 = vpop.f32.mrf.mxu0
      %v1612 = vpop.f32.mrf.mxu0
      %v1613 = vadd.f32 %v1452, %v1612
      %v1614 = vpop.f32.mrf.mxu0
      %1615 = vmatprep.mubr.bf16.mxu0 %v858
      %1616 = vmatmul.mubr.bf16.gmra.mxu0 %v857
      %v1617 = vpop.f32.mrf.mxu0
      %v1618 = vadd.f32 %v1457, %v1617
      %v1619 = vpop.f32.mrf.mxu0
      %v1620 = vpop.f32.mrf.mxu0
      %v1621 = vadd.f32 %v1460, %v1620
      %v1622 = vpop.f32.mrf.mxu0
      %1623 = vmatprep.mubr.bf16.mxu0 %v865
      %1624 = vmatmul.mubr.bf16.gmra.mxu0 %v864
      %v1625 = vpop.f32.mrf.mxu0
      %v1626 = vadd.f32 %v1465, %v1625
      %v1627 = vpop.f32.mrf.mxu0
      %v1628 = vpop.f32.mrf.mxu0
      %v1629 = vadd.f32 %v1468, %v1628
      %v1630 = vpop.f32.mrf.mxu0
      %1631 = vmatprep.mubr.bf16.mxu0 %v872
      %1632 = vmatmul.mubr.bf16.gmra.mxu0 %v871
      %v1633 = vpop.f32.mrf.mxu0
      %v1634 = vadd.f32 %v1473, %v1633
      %v1635 = vpop.f32.mrf.mxu0
      %v1636 = vpop.f32.mrf.mxu0
      %v1637 = vadd.f32 %v1476, %v1636
      %v1638 = vpop.f32.mrf.mxu0
      %1639 = vmatprep.mubr.bf16.mxu0 %v879
      %1640 = vmatmul.mubr.bf16.gmra.mxu0 %v878
      %v1641 = vpop.f32.mrf.mxu0
      %v1642 = vadd.f32 %v1481, %v1641
      %v1643 = vpop.f32.mrf.mxu0
      %v1644 = vpop.f32.mrf.mxu0
      %v1645 = vadd.f32 %v1484, %v1644
      %v1646 = vpop.f32.mrf.mxu0
      %1647 = vmatprep.mubr.bf16.mxu0 %v886
      %1648 = vmatmul.mubr.bf16.gmra.mxu0 %v885
      %v1649 = vpop.f32.mrf.mxu0
      %v1650 = vadd.f32 %v1489, %v1649
      %v1651 = vpop.f32.mrf.mxu0
      %v1652 = vpop.f32.mrf.mxu0
      %v1653 = vadd.f32 %v1492, %v1652
      %v1654 = vpop.f32.mrf.mxu0
      %1655 = vmatprep.mubr.bf16.mxu0 %v893
      %1656 = vmatmul.mubr.bf16.gmra.mxu0 %v892
      %v1657 = vpop.f32.mrf.mxu0
      %v1658 = vadd.f32 %v1497, %v1657
      %v1659 = vpop.f32.mrf.mxu0
      %v1660 = vpop.f32.mrf.mxu0
      %v1661 = vadd.f32 %v1500, %v1660
      %v1662 = vpop.f32.mrf.mxu0
      %1663 = vdwg.mxu0
      %1664 = vmatprep.subr.bf16.mxu0 0
      %1665 = vmatpush1.bf16.msra.mxu0 %v1232
      %1666 = vmatprep.subr.bf16.mxu0 0
      %1667 = vmatpush1.bf16.msra.mxu0 %v1231
      %1668 = vmatprep.subr.bf16.mxu0 0
      %1669 = vmatpush1.bf16.msra.mxu0 %v1230
      %1670 = vmatprep.subr.bf16.mxu0 0
      %1671 = vmatpush1.bf16.msra.mxu0 %v1229
      %1672 = vmatprep.subr.bf16.mxu0 0
      %1673 = vmatpush1.bf16.msra.mxu0 %v1228
      %1674 = vmatprep.subr.bf16.mxu0 0
      %1675 = vmatpush1.bf16.msra.mxu0 %v1227
      %1676 = vmatprep.subr.bf16.mxu0 0
      %1677 = vmatpush1.bf16.msra.mxu0 %v1226
      %1678 = vmatprep.subr.bf16.mxu0 0
      %1679 = vmatpush1.bf16.msra.mxu0 %v1225
      %1680 = vmatprep.subr.bf16.mxu0 0
      %1681 = vmatpush2.bf16.msra.mxu0 %v1240
      %1682 = vmatprep.subr.bf16.mxu0 0
      %1683 = vmatpush2.bf16.msra.mxu0 %v1239
      %1684 = vmatprep.subr.bf16.mxu0 0
      %1685 = vmatpush2.bf16.msra.mxu0 %v1238
      %1686 = vmatprep.subr.bf16.mxu0 0
      %1687 = vmatpush2.bf16.msra.mxu0 %v1237
      %1688 = vmatprep.subr.bf16.mxu0 0
      %1689 = vmatpush2.bf16.msra.mxu0 %v1236
      %1690 = vmatprep.subr.bf16.mxu0 0
      %1691 = vmatpush2.bf16.msra.mxu0 %v1235
      %1692 = vmatprep.subr.bf16.mxu0 0
      %1693 = vmatpush2.bf16.msra.mxu0 %v1234
      %1694 = vmatprep.subr.bf16.mxu0 0
      %1695 = vmatpush2.bf16.msra.mxu0 %v1233
      %1696 = vmatprep.mubr.bf16.mxu0 %v790
      %1697 = vmatmul.mubr.bf16.gmra.mxu0 %v789
      %v1698 = vpop.f32.mrf.mxu0
      %v1699 = vadd.f32 %v1538, %v1698
      %v1700 = vpop.f32.mrf.mxu0
      %v1701 = vpop.f32.mrf.mxu0
      %v1702 = vadd.f32 %v1541, %v1701
      %v1703 = vpop.f32.mrf.mxu0
      %1704 = vmatprep.mubr.bf16.mxu0 %v797
      %1705 = vmatmul.mubr.bf16.gmra.mxu0 %v796
      %v1706 = vpop.f32.mrf.mxu0
      %v1707 = vadd.f32 %v1546, %v1706
      %v1708 = vpop.f32.mrf.mxu0
      %v1709 = vpop.f32.mrf.mxu0
      %v1710 = vadd.f32 %v1549, %v1709
      %v1711 = vpop.f32.mrf.mxu0
      %1712 = vmatprep.mubr.bf16.mxu0 %v804
      %1713 = vmatmul.mubr.bf16.gmra.mxu0 %v803
      %v1714 = vpop.f32.mrf.mxu0
      %v1715 = vadd.f32 %v1554, %v1714
      %v1716 = vpop.f32.mrf.mxu0
      %v1717 = vpop.f32.mrf.mxu0
      %v1718 = vadd.f32 %v1557, %v1717
      %v1719 = vpop.f32.mrf.mxu0
      %1720 = vmatprep.mubr.bf16.mxu0 %v811
      %1721 = vmatmul.mubr.bf16.gmra.mxu0 %v810
      %v1722 = vpop.f32.mrf.mxu0
      %v1723 = vadd.f32 %v1562, %v1722
      %v1724 = vpop.f32.mrf.mxu0
      %v1725 = vpop.f32.mrf.mxu0
      %v1726 = vadd.f32 %v1565, %v1725
      %v1727 = vpop.f32.mrf.mxu0
      %1728 = vmatprep.mubr.bf16.mxu0 %v818
      %1729 = vmatmul.mubr.bf16.gmra.mxu0 %v817
      %v1730 = vpop.f32.mrf.mxu0
      %v1731 = vadd.f32 %v1570, %v1730
      %v1732 = vpop.f32.mrf.mxu0
      %v1733 = vpop.f32.mrf.mxu0
      %v1734 = vadd.f32 %v1573, %v1733
      %v1735 = vpop.f32.mrf.mxu0
      %1736 = vmatprep.mubr.bf16.mxu0 %v825
      %1737 = vmatmul.mubr.bf16.gmra.mxu0 %v824
      %v1738 = vpop.f32.mrf.mxu0
      %v1739 = vadd.f32 %v1578, %v1738
      %v1740 = vpop.f32.mrf.mxu0
      %v1741 = vpop.f32.mrf.mxu0
      %v1742 = vadd.f32 %v1581, %v1741
      %v1743 = vpop.f32.mrf.mxu0
      %1744 = vmatprep.mubr.bf16.mxu0 %v832
      %1745 = vmatmul.mubr.bf16.gmra.mxu0 %v831
      %v1746 = vpop.f32.mrf.mxu0
      %v1747 = vadd.f32 %v1586, %v1746
      %v1748 = vpop.f32.mrf.mxu0
      %v1749 = vpop.f32.mrf.mxu0
      %v1750 = vadd.f32 %v1589, %v1749
      %v1751 = vpop.f32.mrf.mxu0
      %1752 = vmatprep.mubr.bf16.mxu0 %v839
      %1753 = vmatmul.mubr.bf16.gmra.mxu0 %v838
      %v1754 = vpop.f32.mrf.mxu0
      %v1755 = vadd.f32 %v1594, %v1754
      %v1756 = vpop.f32.mrf.mxu0
      %v1757 = vpop.f32.mrf.mxu0
      %v1758 = vadd.f32 %v1597, %v1757
      %v1759 = vpop.f32.mrf.mxu0
      %1760 = vmatprep.mubr.bf16.mxu0 %v846
      %1761 = vmatmul.mubr.bf16.gmra.mxu0 %v845
      %v1762 = vpop.f32.mrf.mxu0
      %v1763 = vadd.f32 %v1602, %v1762
      %v1764 = vpop.f32.mrf.mxu0
      %v1765 = vpop.f32.mrf.mxu0
      %v1766 = vadd.f32 %v1605, %v1765
      %v1767 = vpop.f32.mrf.mxu0
      %1768 = vmatprep.mubr.bf16.mxu0 %v853
      %1769 = vmatmul.mubr.bf16.gmra.mxu0 %v852
      %v1770 = vpop.f32.mrf.mxu0
      %v1771 = vadd.f32 %v1610, %v1770
      %v1772 = vpop.f32.mrf.mxu0
      %v1773 = vpop.f32.mrf.mxu0
      %v1774 = vadd.f32 %v1613, %v1773
      %v1775 = vpop.f32.mrf.mxu0
      %1776 = vmatprep.mubr.bf16.mxu0 %v860
      %1777 = vmatmul.mubr.bf16.gmra.mxu0 %v859
      %v1778 = vpop.f32.mrf.mxu0
      %v1779 = vadd.f32 %v1618, %v1778
      %v1780 = vpop.f32.mrf.mxu0
      %v1781 = vpop.f32.mrf.mxu0
      %v1782 = vadd.f32 %v1621, %v1781
      %v1783 = vpop.f32.mrf.mxu0
      %1784 = vmatprep.mubr.bf16.mxu0 %v867
      %1785 = vmatmul.mubr.bf16.gmra.mxu0 %v866
      %v1786 = vpop.f32.mrf.mxu0
      %v1787 = vadd.f32 %v1626, %v1786
      %v1788 = vpop.f32.mrf.mxu0
      %v1789 = vpop.f32.mrf.mxu0
      %v1790 = vadd.f32 %v1629, %v1789
      %v1791 = vpop.f32.mrf.mxu0
      %1792 = vmatprep.mubr.bf16.mxu0 %v874
      %1793 = vmatmul.mubr.bf16.gmra.mxu0 %v873
      %v1794 = vpop.f32.mrf.mxu0
      %v1795 = vadd.f32 %v1634, %v1794
      %v1796 = vpop.f32.mrf.mxu0
      %v1797 = vpop.f32.mrf.mxu0
      %v1798 = vadd.f32 %v1637, %v1797
      %v1799 = vpop.f32.mrf.mxu0
      %1800 = vmatprep.mubr.bf16.mxu0 %v881
      %1801 = vmatmul.mubr.bf16.gmra.mxu0 %v880
      %v1802 = vpop.f32.mrf.mxu0
      %v1803 = vadd.f32 %v1642, %v1802
      %v1804 = vpop.f32.mrf.mxu0
      %v1805 = vpop.f32.mrf.mxu0
      %v1806 = vadd.f32 %v1645, %v1805
      %v1807 = vpop.f32.mrf.mxu0
      %1808 = vmatprep.mubr.bf16.mxu0 %v888
      %1809 = vmatmul.mubr.bf16.gmra.mxu0 %v887
      %v1810 = vpop.f32.mrf.mxu0
      %v1811 = vadd.f32 %v1650, %v1810
      %v1812 = vpop.f32.mrf.mxu0
      %v1813 = vpop.f32.mrf.mxu0
      %v1814 = vadd.f32 %v1653, %v1813
      %v1815 = vpop.f32.mrf.mxu0
      %1816 = vmatprep.mubr.bf16.mxu0 %v895
      %1817 = vmatmul.mubr.bf16.gmra.mxu0 %v894
      %v1818 = vpop.f32.mrf.mxu0
      %v1819 = vadd.f32 %v1658, %v1818
      %v1820 = vpop.f32.mrf.mxu0
      %v1821 = vpop.f32.mrf.mxu0
      %v1822 = vadd.f32 %v1661, %v1821
      %v1823 = vpop.f32.mrf.mxu0
      %1824 = vdwg.mxu0
      %1825 = vmatprep.subr.bf16.mxu0 0
      %1826 = vmatpush1.bf16.msra.mxu0 0
      %1827 = vmatprep.subr.bf16.mxu0 0
      %1828 = vmatpush1.bf16.msra.mxu0 0
      %1829 = vmatprep.subr.bf16.mxu0 0
      %1830 = vmatpush1.bf16.msra.mxu0 0
      %1831 = vmatprep.subr.bf16.mxu0 0
      %1832 = vmatpush1.bf16.msra.mxu0 0
      %1833 = vmatprep.subr.bf16.mxu0 0
      %1834 = vmatpush1.bf16.msra.mxu0 0
      %1835 = vmatprep.subr.bf16.mxu0 0
      %1836 = vmatpush1.bf16.msra.mxu0 0
      %1837 = vmatprep.subr.bf16.mxu0 0
      %1838 = vmatpush1.bf16.msra.mxu0 %v1242
      %1839 = vmatprep.subr.bf16.mxu0 0
      %1840 = vmatpush1.bf16.msra.mxu0 %v1241
      %1841 = vmatprep.subr.bf16.mxu0 0
      %1842 = vmatpush2.bf16.msra.mxu0 0
      %1843 = vmatprep.subr.bf16.mxu0 0
      %1844 = vmatpush2.bf16.msra.mxu0 0
      %1845 = vmatprep.subr.bf16.mxu0 0
      %1846 = vmatpush2.bf16.msra.mxu0 0
      %1847 = vmatprep.subr.bf16.mxu0 0
      %1848 = vmatpush2.bf16.msra.mxu0 0
      %1849 = vmatprep.subr.bf16.mxu0 0
      %1850 = vmatpush2.bf16.msra.mxu0 0
      %1851 = vmatprep.subr.bf16.mxu0 0
      %1852 = vmatpush2.bf16.msra.mxu0 0
      %1853 = vmatprep.subr.bf16.mxu0 0
      %1854 = vmatpush2.bf16.msra.mxu0 0
      %1855 = vmatprep.subr.bf16.mxu0 0
      %1856 = vmatpush2.bf16.msra.mxu0 0
      %1857 = vmatprep.mubr.bf16.mxu0 0
      %1858 = vmatmul.mubr.bf16.gmra.mxu0 %v1295
      %v1859 = vpop.f32.mrf.mxu0
      %v1860 = vadd.f32 %v1699, %v1859
      %v1861 = vpop.f32.mrf.mxu0
      %v1862 = vpop.f32.mrf.mxu0
      %v1863 = vadd.f32 %v1702, %v1862
      %v1864 = vpop.f32.mrf.mxu0
      %1865 = vmatprep.mubr.bf16.mxu0 0
      %1866 = vmatmul.mubr.bf16.gmra.mxu0 %v1298
      %v1867 = vpop.f32.mrf.mxu0
      %v1868 = vadd.f32 %v1707, %v1867
      %v1869 = vpop.f32.mrf.mxu0
      %v1870 = vpop.f32.mrf.mxu0
      %v1871 = vadd.f32 %v1710, %v1870
      %v1872 = vpop.f32.mrf.mxu0
      %1873 = vmatprep.mubr.bf16.mxu0 0
      %1874 = vmatmul.mubr.bf16.gmra.mxu0 %v1301
      %v1875 = vpop.f32.mrf.mxu0
      %v1876 = vadd.f32 %v1715, %v1875
      %v1877 = vpop.f32.mrf.mxu0
      %v1878 = vpop.f32.mrf.mxu0
      %v1879 = vadd.f32 %v1718, %v1878
      %v1880 = vpop.f32.mrf.mxu0
      %1881 = vmatprep.mubr.bf16.mxu0 0
      %1882 = vmatmul.mubr.bf16.gmra.mxu0 %v1304
      %v1883 = vpop.f32.mrf.mxu0
      %v1884 = vadd.f32 %v1723, %v1883
      %v1885 = vpop.f32.mrf.mxu0
      %v1886 = vpop.f32.mrf.mxu0
      %v1887 = vadd.f32 %v1726, %v1886
      %v1888 = vpop.f32.mrf.mxu0
      %1889 = vmatprep.mubr.bf16.mxu0 0
      %1890 = vmatmul.mubr.bf16.gmra.mxu0 %v1307
      %v1891 = vpop.f32.mrf.mxu0
      %v1892 = vadd.f32 %v1731, %v1891
      %v1893 = vpop.f32.mrf.mxu0
      %v1894 = vpop.f32.mrf.mxu0
      %v1895 = vadd.f32 %v1734, %v1894
      %v1896 = vpop.f32.mrf.mxu0
      %1897 = vmatprep.mubr.bf16.mxu0 0
      %1898 = vmatmul.mubr.bf16.gmra.mxu0 %v1310
      %v1899 = vpop.f32.mrf.mxu0
      %v1900 = vadd.f32 %v1739, %v1899
      %v1901 = vpop.f32.mrf.mxu0
      %v1902 = vpop.f32.mrf.mxu0
      %v1903 = vadd.f32 %v1742, %v1902
      %v1904 = vpop.f32.mrf.mxu0
      %1905 = vmatprep.mubr.bf16.mxu0 0
      %1906 = vmatmul.mubr.bf16.gmra.mxu0 %v1313
      %v1907 = vpop.f32.mrf.mxu0
      %v1908 = vadd.f32 %v1747, %v1907
      %v1909 = vpop.f32.mrf.mxu0
      %v1910 = vpop.f32.mrf.mxu0
      %v1911 = vadd.f32 %v1750, %v1910
      %v1912 = vpop.f32.mrf.mxu0
      %1913 = vmatprep.mubr.bf16.mxu0 0
      %1914 = vmatmul.mubr.bf16.gmra.mxu0 %v1316
      %v1915 = vpop.f32.mrf.mxu0
      %v1916 = vadd.f32 %v1755, %v1915
      %v1917 = vpop.f32.mrf.mxu0
      %v1918 = vpop.f32.mrf.mxu0
      %v1919 = vadd.f32 %v1758, %v1918
      %v1920 = vpop.f32.mrf.mxu0
      %1921 = vmatprep.mubr.bf16.mxu0 0
      %1922 = vmatmul.mubr.bf16.gmra.mxu0 %v1319
      %v1923 = vpop.f32.mrf.mxu0
      %v1924 = vadd.f32 %v1763, %v1923
      %v1925 = vpop.f32.mrf.mxu0
      %v1926 = vpop.f32.mrf.mxu0
      %v1927 = vadd.f32 %v1766, %v1926
      %v1928 = vpop.f32.mrf.mxu0
      %1929 = vmatprep.mubr.bf16.mxu0 0
      %1930 = vmatmul.mubr.bf16.gmra.mxu0 %v1322
      %v1931 = vpop.f32.mrf.mxu0
      %v1932 = vadd.f32 %v1771, %v1931
      %v1933 = vpop.f32.mrf.mxu0
      %v1934 = vpop.f32.mrf.mxu0
      %v1935 = vadd.f32 %v1774, %v1934
      %v1936 = vpop.f32.mrf.mxu0
      %1937 = vmatprep.mubr.bf16.mxu0 0
      %1938 = vmatmul.mubr.bf16.gmra.mxu0 %v1325
      %v1939 = vpop.f32.mrf.mxu0
      %v1940 = vadd.f32 %v1779, %v1939
      %v1941 = vpop.f32.mrf.mxu0
      %v1942 = vpop.f32.mrf.mxu0
      %v1943 = vadd.f32 %v1782, %v1942
      %v1944 = vpop.f32.mrf.mxu0
      %1945 = vmatprep.mubr.bf16.mxu0 0
      %1946 = vmatmul.mubr.bf16.gmra.mxu0 %v1328
      %v1947 = vpop.f32.mrf.mxu0
      %v1948 = vadd.f32 %v1787, %v1947
      %v1949 = vpop.f32.mrf.mxu0
      %v1950 = vpop.f32.mrf.mxu0
      %v1951 = vadd.f32 %v1790, %v1950
      %v1952 = vpop.f32.mrf.mxu0
      %1953 = vmatprep.mubr.bf16.mxu0 0
      %1954 = vmatmul.mubr.bf16.gmra.mxu0 %v1331
      %v1955 = vpop.f32.mrf.mxu0
      %v1956 = vadd.f32 %v1795, %v1955
      %v1957 = vpop.f32.mrf.mxu0
      %v1958 = vpop.f32.mrf.mxu0
      %v1959 = vadd.f32 %v1798, %v1958
      %v1960 = vpop.f32.mrf.mxu0
      %1961 = vmatprep.mubr.bf16.mxu0 0
      %1962 = vmatmul.mubr.bf16.gmra.mxu0 %v1334
      %v1963 = vpop.f32.mrf.mxu0
      %v1964 = vadd.f32 %v1803, %v1963
      %v1965 = vpop.f32.mrf.mxu0
      %v1966 = vpop.f32.mrf.mxu0
      %v1967 = vadd.f32 %v1806, %v1966
      %v1968 = vpop.f32.mrf.mxu0
      %1969 = vmatprep.mubr.bf16.mxu0 0
      %1970 = vmatmul.mubr.bf16.gmra.mxu0 %v1337
      %v1971 = vpop.f32.mrf.mxu0
      %v1972 = vadd.f32 %v1811, %v1971
      %v1973 = vpop.f32.mrf.mxu0
      %v1974 = vpop.f32.mrf.mxu0
      %v1975 = vadd.f32 %v1814, %v1974
      %v1976 = vpop.f32.mrf.mxu0
      %1977 = vmatprep.mubr.bf16.mxu0 0
      %1978 = vmatmul.mubr.bf16.gmra.mxu0 %v1340
      %v1979 = vpop.f32.mrf.mxu0
      %v1980 = vadd.f32 %v1819, %v1979
      %v1981 = vpop.f32.mrf.mxu0
      %v1982 = vpop.f32.mrf.mxu0
      %v1983 = vadd.f32 %v1822, %v1982
      %v1984 = vpop.f32.mrf.mxu0
      %1985 = vdwg.mxu0
      %v1986 = vld [vmem:[%s2] sm:$0x1]
      %v1988 = vlaneseq
      %v1989 = vshrl.u32 %v1988, 7
      %v1990 = vsub.s32 0, %v1989
      %v1991 = vrot.slane %v1986, %v1990
      %v1993 = vmul.f32 %v1860, %v1991
      %v1994 = vmul.f32 %v1863, %v1991
      %v1995 = vmul.f32 %v1868, %v1991
      %v1996 = vmul.f32 %v1871, %v1991
      %v1997 = vmul.f32 %v1876, %v1991
      %v1998 = vmul.f32 %v1879, %v1991
      %v1999 = vmul.f32 %v1884, %v1991
      %v2000 = vmul.f32 %v1887, %v1991
      %v2001 = vmul.f32 %v1892, %v1991
      %v2002 = vmul.f32 %v1895, %v1991
      %v2003 = vmul.f32 %v1900, %v1991
      %v2004 = vmul.f32 %v1903, %v1991
      %v2005 = vmul.f32 %v1908, %v1991
      %v2006 = vmul.f32 %v1911, %v1991
      %v2007 = vmul.f32 %v1916, %v1991
      %v2008 = vmul.f32 %v1919, %v1991
      %v2009 = vmul.f32 %v1924, %v1991
      %v2010 = vmul.f32 %v1927, %v1991
      %v2011 = vmul.f32 %v1932, %v1991
      %v2012 = vmul.f32 %v1935, %v1991
      %v2013 = vmul.f32 %v1940, %v1991
      %v2014 = vmul.f32 %v1943, %v1991
      %v2015 = vmul.f32 %v1948, %v1991
      %v2016 = vmul.f32 %v1951, %v1991
      %v2017 = vmul.f32 %v1956, %v1991
      %v2018 = vmul.f32 %v1959, %v1991
      %v2019 = vmul.f32 %v1964, %v1991
      %v2020 = vmul.f32 %v1967, %v1991
      %v2021 = vmul.f32 %v1972, %v1991
      %v2022 = vmul.f32 %v1975, %v1991
      %v2023 = vmul.f32 %v1980, %v1991
      %v2024 = vmul.f32 %v1983, %v1991
      %v2025 = vld [vmem:[%s3] sm:$0x1]
      %v2027 = vlaneseq
      %v2028 = vshrl.u32 %v2027, 7
      %v2029 = vsub.s32 0, %v2028
      %v2030 = vrot.slane %v2025, %v2029
      %v2032 = vadd.f32 %v1993, %v2030
      %v2033 = vadd.f32 %v1994, %v2030
      %v2034 = vadd.f32 %v1995, %v2030
      %v2035 = vadd.f32 %v1996, %v2030
      %v2036 = vadd.f32 %v1997, %v2030
      %v2037 = vadd.f32 %v1998, %v2030
      %v2038 = vadd.f32 %v1999, %v2030
      %v2039 = vadd.f32 %v2000, %v2030
      %v2040 = vadd.f32 %v2001, %v2030
      %v2041 = vadd.f32 %v2002, %v2030
      %v2042 = vadd.f32 %v2003, %v2030
      %v2043 = vadd.f32 %v2004, %v2030
      %v2044 = vadd.f32 %v2005, %v2030
      %v2045 = vadd.f32 %v2006, %v2030
      %v2046 = vadd.f32 %v2007, %v2030
      %v2047 = vadd.f32 %v2008, %v2030
      %v2048 = vadd.f32 %v2009, %v2030
      %v2049 = vadd.f32 %v2010, %v2030
      %v2050 = vadd.f32 %v2011, %v2030
      %v2051 = vadd.f32 %v2012, %v2030
      %v2052 = vadd.f32 %v2013, %v2030
      %v2053 = vadd.f32 %v2014, %v2030
      %v2054 = vadd.f32 %v2015, %v2030
      %v2055 = vadd.f32 %v2016, %v2030
      %v2056 = vadd.f32 %v2017, %v2030
      %v2057 = vadd.f32 %v2018, %v2030
      %v2058 = vadd.f32 %v2019, %v2030
      %v2059 = vadd.f32 %v2020, %v2030
      %v2060 = vadd.f32 %v2021, %v2030
      %v2061 = vadd.f32 %v2022, %v2030
      %v2062 = vadd.f32 %v2023, %v2030
      %v2063 = vadd.f32 %v2024, %v2030
      %v2064 = vtanh.pop %v2032
      %v2065 = vtanh.pop %v2033
      %v2066 = vtanh.pop %v2034
      %v2067 = vtanh.pop %v2035
      %v2068 = vtanh.pop %v2036
      %v2069 = vtanh.pop %v2037
      %v2070 = vtanh.pop %v2038
      %v2071 = vtanh.pop %v2039
      %v2072 = vtanh.pop %v2040
      %v2073 = vtanh.pop %v2041
      %v2074 = vtanh.pop %v2042
      %v2075 = vtanh.pop %v2043
      %v2076 = vtanh.pop %v2044
      %v2077 = vtanh.pop %v2045
      %v2078 = vtanh.pop %v2046
      %v2079 = vtanh.pop %v2047
      %v2080 = vtanh.pop %v2048
      %v2081 = vtanh.pop %v2049
      %v2082 = vtanh.pop %v2050
      %v2083 = vtanh.pop %v2051
      %v2084 = vtanh.pop %v2052
      %v2085 = vtanh.pop %v2053
      %v2086 = vtanh.pop %v2054
      %v2087 = vtanh.pop %v2055
      %v2088 = vtanh.pop %v2056
      %v2089 = vtanh.pop %v2057
      %v2090 = vtanh.pop %v2058
      %v2091 = vtanh.pop %v2059
      %v2092 = vtanh.pop %v2060
      %v2093 = vtanh.pop %v2061
      %v2094 = vtanh.pop %v2062
      %v2095 = vtanh.pop %v2063
      %2096 = vst [vmem:[%s202] sm:$0xff] %v2064
      %2097 = vst [vmem:[%s202 + $0x8] sm:$0xff] %v2065
      %2098 = vst [vmem:[%s202 + $0x10] sm:$0xff] %v2066
      %2099 = vst [vmem:[%s202 + $0x18] sm:$0xff] %v2067
      %2100 = vst [vmem:[%s202 + $0x20] sm:$0xff] %v2068
      %2101 = vst [vmem:[%s202 + $0x28] sm:$0xff] %v2069
      %2102 = vst [vmem:[%s202 + $0x30] sm:$0xff] %v2070
      %2103 = vst [vmem:[%s202 + $0x38] sm:$0xff] %v2071
      %2104 = vst [vmem:[%s202 + $0x40] sm:$0xff] %v2072
      %2105 = vst [vmem:[%s202 + $0x48] sm:$0xff] %v2073
      %2106 = vst [vmem:[%s202 + $0x50] sm:$0xff] %v2074
      %2107 = vst [vmem:[%s202 + $0x58] sm:$0xff] %v2075
      %2108 = vst [vmem:[%s202 + $0x60] sm:$0xff] %v2076
      %2109 = vst [vmem:[%s202 + $0x68] sm:$0xff] %v2077
      %2110 = vst [vmem:[%s202 + $0x70] sm:$0xff] %v2078
      %2111 = vst [vmem:[%s202 + $0x78] sm:$0xff] %v2079
      %2112 = vst [vmem:[%s202 + $0x80] sm:$0xff] %v2080
      %2113 = vst [vmem:[%s202 + $0x88] sm:$0xff] %v2081
      %2114 = vst [vmem:[%s202 + $0x90] sm:$0xff] %v2082
      %2115 = vst [vmem:[%s202 + $0x98] sm:$0xff] %v2083
      %2116 = vst [vmem:[%s202 + $0xa0] sm:$0xff] %v2084
      %2117 = vst [vmem:[%s202 + $0xa8] sm:$0xff] %v2085
      %2118 = vst [vmem:[%s202 + $0xb0] sm:$0xff] %v2086
      %2119 = vst [vmem:[%s202 + $0xb8] sm:$0xff] %v2087
      %2120 = vst [vmem:[%s202 + $0xc0] sm:$0xff] %v2088
      %2121 = vst [vmem:[%s202 + $0xc8] sm:$0xff] %v2089
      %2122 = vst [vmem:[%s202 + $0xd0] sm:$0xff] %v2090
      %2123 = vst [vmem:[%s202 + $0xd8] sm:$0xff] %v2091
      %2124 = vst [vmem:[%s202 + $0xe0] sm:$0xff] %v2092
      %2125 = vst [vmem:[%s202 + $0xe8] sm:$0xff] %v2093
      %2126 = vst [vmem:[%s202 + $0xf0] sm:$0xff] %v2094
      %2127 = vst [vmem:[%s202 + $0xf8] sm:$0xff] %v2095
      %s2128 = smul.u32 32, %s15
      %p2129 = scmp.lt.s32.totalorder %s2128, 63
      %s2130 = scalar_select %p2129, %s2128, 63
      %s2131 = smul.addr %s2130, 8
      %s2132 = scalar_lea.vmem %s4, %s2131
      // Predicated region
      $region37: #{decoder_forward.5} parent=35 // pred_check
        %p2133 = pneg %p122
      $region38: #{decoder_forward.5} parent=35 // pred_check_branch
        %2135 = sbr.rel (%p2133) target = $region40
      $region39: #{decoder_forward.5} parent=35 // pred_region
        %s2136 = smul.u32 32, %s15
      $region40: #{decoder_forward.5} parent=35 // pred_fallthru
        _
    $region36: #{decoder_forward.5} parent=5 // pred_fallthru
      _
    %p2137 = scmp.le.s32.totalorder 2, %s10
    // Predicated region
    $region41: #{decoder_forward.5} parent=5 // pred_check
      %p2138 = pneg %p2137
    $region42: #{decoder_forward.5} parent=5 // pred_check_branch
      %2140 = sbr.rel (%p2138) target = $region44
    $region43: #{decoder_forward.5} parent=5 // pred_region
      %s2141 = ssub.s32 %s10, 2
      // Predicated region
      $region45: #{decoder_forward.5} parent=43 // pred_check
        %p2142 = pneg %p128
      $region46: #{decoder_forward.5} parent=43 // pred_check_branch
        %2144 = sbr.rel (%p2142) target = $region48
      $region47: #{decoder_forward.5} parent=43 // pred_region
        %s2145 = smul.u32 32, %s16
        %p2146 = scmp.lt.s32.totalorder %s2145, 63
        %s2147 = scalar_select %p2146, %s2145, 63
        %s2148 = smul.addr %s2147, 8
        %s2149 = scalar_lea.vmem %s4, %s2148
      $region48: #{decoder_forward.5} parent=43 // pred_fallthru
        _
    $region44: #{decoder_forward.5} parent=5 // pred_fallthru
      _
  $region6: #{decoder_forward.5} parent=0 // loop_footer
    %s14 = sadd.s32 1, %s10
  $region7: #{decoder_forward.5} parent=0 // loop_footer_branch
    %9 = sbr.rel target = $region3
  $region8: #{decoder_forward.5} parent=0 // loop_exit
    _

</llo_original>
